<compile_context>
chip_gen: v7x
topology: tpu7x:2x2x1
jax: 0.10.0
libtpu: 0.0.40
codegen_flags: <defaults>
</compile_context>

<pallas_src>
import functools

import jax
import jax.numpy as jnp
from jax import lax
from jax.experimental import pallas as pl
from jax.experimental.pallas import tpu as pltpu


def _umod_kernel(x_ref, w_ref, b_ref, ymod_ref, ydisk_ref, *, H, W, L):
    """Fused Conv2d(3x3,'same') + Conv1d(3,'same') for one (batch, Cout-tile) block.

    x_ref    : (Cin, Hp*Wp + L+2)  flattened zero-padded grid input ++ padded disk input
    w_ref    : (12, TCO, Cin)      taps 0..8 = 3x3 kernel (row major), 9..11 = 1-D kernel
    b_ref    : (TCO, 2)            column 0 = conv2d bias, column 1 = conv1d bias
    ymod_ref : (TCO, Lout)         Lout = (H-1)*Wp + W   (padded-flat layout; wrapper crops)
    ydisk_ref: (TCO, L)
    """
    Wp = W + 2
    HpWp = (H + 2) * Wp
    Lout = ymod_ref.shape[1]

    # ---- 2-D conv: 9 channel-contraction matmuls over statically shifted views ----
    acc = jnp.zeros(ymod_ref.shape, jnp.float32)
    for ky in range(3):
        for kx in range(3):
            t = ky * 3 + kx
            s = ky * Wp + kx                       # static flat shift of this tap
            x_tap = x_ref[:, pl.ds(s, Lout)]       # (Cin, Lout)
            acc += jnp.dot(w_ref[t], x_tap,
                           preferred_element_type=jnp.float32,
                           precision=lax.Precision.HIGHEST)
    ymod_ref[...] = (acc + b_ref[:, 0:1].astype(jnp.float32)).astype(ymod_ref.dtype)

    # ---- 1-D "disk" conv: 3 tiny matmuls ------------------------------------------
    accd = jnp.zeros(ydisk_ref.shape, jnp.float32)
    for k in range(3):
        x_tap = x_ref[:, pl.ds(HpWp + k, L)]       # (Cin, L)
        accd += jnp.dot(w_ref[9 + k], x_tap,
                        preferred_element_type=jnp.float32,
                        precision=lax.Precision.HIGHEST)
    ydisk_ref[...] = (accd + b_ref[:, 1:2].astype(jnp.float32)).astype(ydisk_ref.dtype)


def input_layer_forward(upper_y, upper_ymod, inputs, params, *, tco=None):
    """Pallas port of InputLayer.forward.

    upper_ymod = (ymod_grid (N, Cin, H, W), ymod_disk (N, Cin, L))
    inputs     = (Y, Y_disk)                      -- passed through untouched
    params     = (w2 (Cout, Cin, 3, 3), b2 (Cout,), w1 (Cout, Cin, 3), b1 (Cout,))
    returns ((Y, Y_disk), (Ymod (N, Cout, H, W), Ymod_disk (N, Cout, L)))
    """
    del upper_y  # unused by the PyTorch forward as well
    Y, Y_disk = inputs
    xg, xd = upper_ymod
    w2, b2, w1, b1 = params

    N, Cin, H, W = xg.shape
    Cout = w2.shape[0]
    assert w2.shape == (Cout, Cin, 3, 3) and w1.shape == (Cout, Cin, 3)
    Nd, Cind, L = xd.shape
    assert Nd == N and Cind == Cin

    Hp, Wp = H + 2, W + 2
    HpWp = Hp * Wp
    Lout = (H - 1) * Wp + W
    dtype = xg.dtype

    # --- consolidate inputs (single input DMA + single weight DMA + single bias DMA) ---
    xg_flat = jnp.pad(xg, ((0, 0), (0, 0), (1, 1), (1, 1))).reshape(N, Cin, HpWp)
    xd_pad = jnp.pad(xd, ((0, 0), (0, 0), (1, 1)))
    x_all = jnp.concatenate([xg_flat, xd_pad], axis=-1).astype(dtype)     # (N,Cin,HpWp+L+2)

    w_all = jnp.concatenate(
        [jnp.transpose(w2.reshape(Cout, Cin, 9), (2, 0, 1)),
         jnp.transpose(w1, (2, 0, 1))], axis=0).astype(dtype)             # (12, Cout, Cin)
    b_all = jnp.stack([b2, b1], axis=-1).astype(dtype)                    # (Cout, 2)

    # --- output-channel tile: pipelining lever for large Cout, whole Cout when small ---
    if tco is None:
        tco = 128 if (Cout > 128 and Cout % 128 == 0) else Cout
    assert Cout % tco == 0
    grid = (N, Cout // tco)

    kernel = functools.partial(_umod_kernel, H=H, W=W, L=L)

    ymod_flat, ymod_disk = pl.pallas_call(
        kernel,
        grid_spec=pl.GridSpec(
            grid=grid,
            in_specs=[
                pl.BlockSpec((pl.Squeezed(), Cin, HpWp + L + 2),
                             lambda n, c: (n, 0, 0)),
                pl.BlockSpec((12, tco, Cin), lambda n, c: (0, c, 0)),
                pl.BlockSpec((tco, 2), lambda n, c: (c, 0)),
            ],
            out_specs=[
                pl.BlockSpec((pl.Squeezed(), tco, Lout), lambda n, c: (n, c, 0)),
                pl.BlockSpec((pl.Squeezed(), tco, L), lambda n, c: (n, c, 0)),
            ],
        ),
        out_shape=(
            jax.ShapeDtypeStruct((N, Cout, Lout), dtype),
            jax.ShapeDtypeStruct((N, Cout, L), dtype),
        ),
        compiler_params=pltpu.CompilerParams(
            dimension_semantics=("parallel", "parallel")),
    )(x_all, w_all, b_all)

    # un-flatten: Ymod[n, co, i, j] = ymod_flat[n, co, i*Wp + j]   (pure layout plumbing)
    ymod = jnp.pad(ymod_flat, ((0, 0), (0, 0), (0, H * Wp - Lout)))
    ymod = ymod.reshape(N, Cout, H, Wp)[:, :, :, :W]

    return (Y, Y_disk), (ymod, ymod_disk)


def init_params(key, feature_in, feature_out):
    """Deterministic re-implementation of InputLayer weight init (weight_sharing=True)."""
    init_range = 0.1
    Cout, Cin = feature_in, feature_out
    k1, k2, k3, k4, k5 = jax.random.split(key, 5)
    # umod[0] Conv2d weight: centre + 4-neighbour taps random, rest zero; bias random.
    w2 = jnp.zeros((Cout, Cin, 3, 3), jnp.float32)
    w2 = w2.at[:, :, 1, 1].set(init_range * jax.random.uniform(k1, (Cout, Cin)))
    w2 = w2.at[:, :, jnp.array([0, 1, 1, 2]), jnp.array([1, 0, 2, 1])].set(
        init_range * jax.random.uniform(k2, (Cout, Cin, 4)))
    b2 = init_range * jax.random.uniform(k3, (Cout,))
    # umod[1] Conv1d weight: all three taps random (marker=True path); bias random.
    w1 = init_range * jax.random.uniform(k4, (Cout, Cin, 3))
    b1 = init_range * jax.random.uniform(k5, (Cout,))
    return w2, b2, w1, b1


def reference_forward(upper_ymod, inputs, params):
    """Pure-JAX reference (lax conv) matching the PyTorch Conv2d/Conv1d forward."""
    Y, Y_disk = inputs
    xg, xd = upper_ymod
    w2, b2, w1, b1 = params
    ymod = lax.conv_general_dilated(
        xg.astype(jnp.float32), w2.astype(jnp.float32),
        window_strides=(1, 1), padding=((1, 1), (1, 1)),
        dimension_numbers=("NCHW", "OIHW", "NCHW"),
        precision=lax.Precision.HIGHEST) + b2[None, :, None, None]
    ymod_disk = lax.conv_general_dilated(
        xd[:, :, :, None].astype(jnp.float32), w1[:, :, :, None].astype(jnp.float32),
        window_strides=(1, 1), padding=((1, 1), (0, 0)),
        dimension_numbers=("NCHW", "OIHW", "NCHW"),
        precision=lax.Precision.HIGHEST)[..., 0] + b1[None, :, None]
    return (Y, Y_disk), (ymod, ymod_disk)


if __name__ == "__main__":
    feature_in, feature_out = 8, 16   # Cout, Cin of the umod convs
    grid_size = 16
    disk_len = 2
    batch = 2

    key = jax.random.PRNGKey(0)
    kp, k1, k2, k3, k4 = jax.random.split(key, 5)
    params = init_params(kp, feature_in, feature_out)

    # pass-through activations and modulatory inputs (the conv operands)
    Y = jax.random.normal(k1, (batch, feature_in, grid_size, grid_size), jnp.float32)
    Y_disk = jax.random.normal(k2, (batch, feature_in, disk_len), jnp.float32)
    ymod_in = jax.random.normal(k3, (batch, feature_out, grid_size, grid_size), jnp.float32)
    ymod_disk_in = jax.random.normal(k4, (batch, feature_out, disk_len), jnp.float32)

    (y_out, ydisk_out), (ymod, ymod_disk) = input_layer_forward(
        None, (ymod_in, ymod_disk_in), (Y, Y_disk), params)
    jax.block_until_ready((ymod, ymod_disk))

    (_, _), (ref_ymod, ref_ymod_disk) = reference_forward(
        (ymod_in, ymod_disk_in), (Y, Y_disk), params)

    assert y_out is Y and ydisk_out is Y_disk          # pass-through is untouched
    assert jnp.allclose(ymod, ref_ymod, atol=1e-4, rtol=1e-4)
    assert jnp.allclose(ymod_disk, ref_ymod_disk, atol=1e-4, rtol=1e-4)

    print("KERNEL_OK")
</pallas_src>

<mosaic_0001>
module attributes {stable_mosaic.version = 11 : i64} {
  func.func @_umod_kernel(%arg0: i32, %arg1: i32, %arg2: memref<1x16x328xf32, #tpu.memory_space<vmem>>, %arg3: memref<12x8x16xf32, #tpu.memory_space<vmem>>, %arg4: memref<8x2xf32, #tpu.memory_space<vmem>>, %arg5: memref<1x8x286xf32, #tpu.memory_space<vmem>>, %arg6: memref<1x8x2xf32, #tpu.memory_space<vmem>>) attributes {dimension_semantics = [#tpu.dimension_semantics<parallel>, #tpu.dimension_semantics<parallel>], iteration_bounds = array<i64: 2, 1>, scalar_prefetch = 0 : i64, scratch_operands = 0 : i64, tpu.core_type = #tpu.core_type<tc>, window_params = [{transform_indices = @transform_0, window_bounds = array<i64: 1, 16, 328>}, {transform_indices = @transform_1, window_bounds = array<i64: 12, 8, 16>}, {transform_indices = @transform_2, window_bounds = array<i64: 8, 2>}, {transform_indices = @transform_3, window_bounds = array<i64: 1, 8, 286>}, {transform_indices = @transform_4, window_bounds = array<i64: 1, 8, 2>}]} {
    %cst = arith.constant 0.000000e+00 : f32
    %0 = vector.broadcast %cst : f32 to vector<8x286xf32>
    %c0 = arith.constant 0 : index
    %c0_0 = arith.constant 0 : index
    %c0_1 = arith.constant 0 : index
    %1 = vector.load %arg2[%c0, %c0_0, %c0_1] : memref<1x16x328xf32, #tpu.memory_space<vmem>>, vector<1x16x286xf32>
    %2 = vector.shape_cast %1 : vector<1x16x286xf32> to vector<16x286xf32>
    %c0_2 = arith.constant 0 : index
    %c0_3 = arith.constant 0 : index
    %c0_4 = arith.constant 0 : index
    %3 = vector.load %arg3[%c0_2, %c0_3, %c0_4] : memref<12x8x16xf32, #tpu.memory_space<vmem>>, vector<1x8x16xf32>
    %4 = vector.shape_cast %3 : vector<1x8x16xf32> to vector<8x16xf32>
    %cst_5 = arith.constant dense<0.000000e+00> : vector<8x286xf32>
    %5 = tpu.matmul %4, %2, %cst_5 {dimension_numbers = #tpu.dot_dimension_numbers<[1], [0], [0], [1], [0, 0, 1, 1], [], []>, precision = #tpu.contract_precision<fp32>} : vector<8x16xf32>, vector<16x286xf32>, vector<8x286xf32> -> vector<8x286xf32>
    %6 = arith.addf %0, %5 : vector<8x286xf32>
    %c0_6 = arith.constant 0 : index
    %c0_7 = arith.constant 0 : index
    %c1 = arith.constant 1 : index
    %7 = vector.load %arg2[%c0_6, %c0_7, %c1] : memref<1x16x328xf32, #tpu.memory_space<vmem>>, vector<1x16x286xf32>
    %8 = vector.shape_cast %7 : vector<1x16x286xf32> to vector<16x286xf32>
    %c1_8 = arith.constant 1 : index
    %c0_9 = arith.constant 0 : index
    %c0_10 = arith.constant 0 : index
    %9 = vector.load %arg3[%c1_8, %c0_9, %c0_10] : memref<12x8x16xf32, #tpu.memory_space<vmem>>, vector<1x8x16xf32>
    %10 = vector.shape_cast %9 : vector<1x8x16xf32> to vector<8x16xf32>
    %cst_11 = arith.constant dense<0.000000e+00> : vector<8x286xf32>
    %11 = tpu.matmul %10, %8, %cst_11 {dimension_numbers = #tpu.dot_dimension_numbers<[1], [0], [0], [1], [0, 0, 1, 1], [], []>, precision = #tpu.contract_precision<fp32>} : vector<8x16xf32>, vector<16x286xf32>, vector<8x286xf32> -> vector<8x286xf32>
    %12 = arith.addf %6, %11 : vector<8x286xf32>
    %c0_12 = arith.constant 0 : index
    %c0_13 = arith.constant 0 : index
    %c2 = arith.constant 2 : index
    %13 = vector.load %arg2[%c0_12, %c0_13, %c2] : memref<1x16x328xf32, #tpu.memory_space<vmem>>, vector<1x16x286xf32>
    %14 = vector.shape_cast %13 : vector<1x16x286xf32> to vector<16x286xf32>
    %c2_14 = arith.constant 2 : index
    %c0_15 = arith.constant 0 : index
    %c0_16 = arith.constant 0 : index
    %15 = vector.load %arg3[%c2_14, %c0_15, %c0_16] : memref<12x8x16xf32, #tpu.memory_space<vmem>>, vector<1x8x16xf32>
    %16 = vector.shape_cast %15 : vector<1x8x16xf32> to vector<8x16xf32>
    %cst_17 = arith.constant dense<0.000000e+00> : vector<8x286xf32>
    %17 = tpu.matmul %16, %14, %cst_17 {dimension_numbers = #tpu.dot_dimension_numbers<[1], [0], [0], [1], [0, 0, 1, 1], [], []>, precision = #tpu.contract_precision<fp32>} : vector<8x16xf32>, vector<16x286xf32>, vector<8x286xf32> -> vector<8x286xf32>
    %18 = arith.addf %12, %17 : vector<8x286xf32>
    %c0_18 = arith.constant 0 : index
    %c0_19 = arith.constant 0 : index
    %c18 = arith.constant 18 : index
    %19 = vector.load %arg2[%c0_18, %c0_19, %c18] : memref<1x16x328xf32, #tpu.memory_space<vmem>>, vector<1x16x286xf32>
    %20 = vector.shape_cast %19 : vector<1x16x286xf32> to vector<16x286xf32>
    %c3 = arith.constant 3 : index
    %c0_20 = arith.constant 0 : index
    %c0_21 = arith.constant 0 : index
    %21 = vector.load %arg3[%c3, %c0_20, %c0_21] : memref<12x8x16xf32, #tpu.memory_space<vmem>>, vector<1x8x16xf32>
    %22 = vector.shape_cast %21 : vector<1x8x16xf32> to vector<8x16xf32>
    %cst_22 = arith.constant dense<0.000000e+00> : vector<8x286xf32>
    %23 = tpu.matmul %22, %20, %cst_22 {dimension_numbers = #tpu.dot_dimension_numbers<[1], [0], [0], [1], [0, 0, 1, 1], [], []>, precision = #tpu.contract_precision<fp32>} : vector<8x16xf32>, vector<16x286xf32>, vector<8x286xf32> -> vector<8x286xf32>
    %24 = arith.addf %18, %23 : vector<8x286xf32>
    %c0_23 = arith.constant 0 : index
    %c0_24 = arith.constant 0 : index
    %c19 = arith.constant 19 : index
    %25 = vector.load %arg2[%c0_23, %c0_24, %c19] : memref<1x16x328xf32, #tpu.memory_space<vmem>>, vector<1x16x286xf32>
    %26 = vector.shape_cast %25 : vector<1x16x286xf32> to vector<16x286xf32>
    %c4 = arith.constant 4 : index
    %c0_25 = arith.constant 0 : index
    %c0_26 = arith.constant 0 : index
    %27 = vector.load %arg3[%c4, %c0_25, %c0_26] : memref<12x8x16xf32, #tpu.memory_space<vmem>>, vector<1x8x16xf32>
    %28 = vector.shape_cast %27 : vector<1x8x16xf32> to vector<8x16xf32>
    %cst_27 = arith.constant dense<0.000000e+00> : vector<8x286xf32>
    %29 = tpu.matmul %28, %26, %cst_27 {dimension_numbers = #tpu.dot_dimension_numbers<[1], [0], [0], [1], [0, 0, 1, 1], [], []>, precision = #tpu.contract_precision<fp32>} : vector<8x16xf32>, vector<16x286xf32>, vector<8x286xf32> -> vector<8x286xf32>
    %30 = arith.addf %24, %29 : vector<8x286xf32>
    %c0_28 = arith.constant 0 : index
    %c0_29 = arith.constant 0 : index
    %c20 = arith.constant 20 : index
    %31 = vector.load %arg2[%c0_28, %c0_29, %c20] : memref<1x16x328xf32, #tpu.memory_space<vmem>>, vector<1x16x286xf32>
    %32 = vector.shape_cast %31 : vector<1x16x286xf32> to vector<16x286xf32>
    %c5 = arith.constant 5 : index
    %c0_30 = arith.constant 0 : index
    %c0_31 = arith.constant 0 : index
    %33 = vector.load %arg3[%c5, %c0_30, %c0_31] : memref<12x8x16xf32, #tpu.memory_space<vmem>>, vector<1x8x16xf32>
    %34 = vector.shape_cast %33 : vector<1x8x16xf32> to vector<8x16xf32>
    %cst_32 = arith.constant dense<0.000000e+00> : vector<8x286xf32>
    %35 = tpu.matmul %34, %32, %cst_32 {dimension_numbers = #tpu.dot_dimension_numbers<[1], [0], [0], [1], [0, 0, 1, 1], [], []>, precision = #tpu.contract_precision<fp32>} : vector<8x16xf32>, vector<16x286xf32>, vector<8x286xf32> -> vector<8x286xf32>
    %36 = arith.addf %30, %35 : vector<8x286xf32>
    %c0_33 = arith.constant 0 : index
    %c0_34 = arith.constant 0 : index
    %c36 = arith.constant 36 : index
    %37 = vector.load %arg2[%c0_33, %c0_34, %c36] : memref<1x16x328xf32, #tpu.memory_space<vmem>>, vector<1x16x286xf32>
    %38 = vector.shape_cast %37 : vector<1x16x286xf32> to vector<16x286xf32>
    %c6 = arith.constant 6 : index
    %c0_35 = arith.constant 0 : index
    %c0_36 = arith.constant 0 : index
    %39 = vector.load %arg3[%c6, %c0_35, %c0_36] : memref<12x8x16xf32, #tpu.memory_space<vmem>>, vector<1x8x16xf32>
    %40 = vector.shape_cast %39 : vector<1x8x16xf32> to vector<8x16xf32>
    %cst_37 = arith.constant dense<0.000000e+00> : vector<8x286xf32>
    %41 = tpu.matmul %40, %38, %cst_37 {dimension_numbers = #tpu.dot_dimension_numbers<[1], [0], [0], [1], [0, 0, 1, 1], [], []>, precision = #tpu.contract_precision<fp32>} : vector<8x16xf32>, vector<16x286xf32>, vector<8x286xf32> -> vector<8x286xf32>
    %42 = arith.addf %36, %41 : vector<8x286xf32>
    %c0_38 = arith.constant 0 : index
    %c0_39 = arith.constant 0 : index
    %c37 = arith.constant 37 : index
    %43 = vector.load %arg2[%c0_38, %c0_39, %c37] : memref<1x16x328xf32, #tpu.memory_space<vmem>>, vector<1x16x286xf32>
    %44 = vector.shape_cast %43 : vector<1x16x286xf32> to vector<16x286xf32>
    %c7 = arith.constant 7 : index
    %c0_40 = arith.constant 0 : index
    %c0_41 = arith.constant 0 : index
    %45 = vector.load %arg3[%c7, %c0_40, %c0_41] : memref<12x8x16xf32, #tpu.memory_space<vmem>>, vector<1x8x16xf32>
    %46 = vector.shape_cast %45 : vector<1x8x16xf32> to vector<8x16xf32>
    %cst_42 = arith.constant dense<0.000000e+00> : vector<8x286xf32>
    %47 = tpu.matmul %46, %44, %cst_42 {dimension_numbers = #tpu.dot_dimension_numbers<[1], [0], [0], [1], [0, 0, 1, 1], [], []>, precision = #tpu.contract_precision<fp32>} : vector<8x16xf32>, vector<16x286xf32>, vector<8x286xf32> -> vector<8x286xf32>
    %48 = arith.addf %42, %47 : vector<8x286xf32>
    %c0_43 = arith.constant 0 : index
    %c0_44 = arith.constant 0 : index
    %c38 = arith.constant 38 : index
    %49 = vector.load %arg2[%c0_43, %c0_44, %c38] : memref<1x16x328xf32, #tpu.memory_space<vmem>>, vector<1x16x286xf32>
    %50 = vector.shape_cast %49 : vector<1x16x286xf32> to vector<16x286xf32>
    %c8 = arith.constant 8 : index
    %c0_45 = arith.constant 0 : index
    %c0_46 = arith.constant 0 : index
    %51 = vector.load %arg3[%c8, %c0_45, %c0_46] : memref<12x8x16xf32, #tpu.memory_space<vmem>>, vector<1x8x16xf32>
    %52 = vector.shape_cast %51 : vector<1x8x16xf32> to vector<8x16xf32>
    %cst_47 = arith.constant dense<0.000000e+00> : vector<8x286xf32>
    %53 = tpu.matmul %52, %50, %cst_47 {dimension_numbers = #tpu.dot_dimension_numbers<[1], [0], [0], [1], [0, 0, 1, 1], [], []>, precision = #tpu.contract_precision<fp32>} : vector<8x16xf32>, vector<16x286xf32>, vector<8x286xf32> -> vector<8x286xf32>
    %54 = arith.addf %48, %53 : vector<8x286xf32>
    %c0_48 = arith.constant 0 : index
    %c0_49 = arith.constant 0 : index
    %55 = vector.load %arg4[%c0_48, %c0_49] : memref<8x2xf32, #tpu.memory_space<vmem>>, vector<8x1xf32>
    %56 = vector.broadcast %55 : vector<8x1xf32> to vector<8x286xf32>
    %57 = arith.addf %54, %56 : vector<8x286xf32>
    %c0_50 = arith.constant 0 : index
    %c0_51 = arith.constant 0 : index
    %c0_52 = arith.constant 0 : index
    %58 = vector.load %arg5[%c0_50, %c0_51, %c0_52] : memref<1x8x286xf32, #tpu.memory_space<vmem>>, vector<1x8x286xf32>
    %59 = vector.shape_cast %58 : vector<1x8x286xf32> to vector<8x286xf32>
    %60 = vector.shape_cast %57 : vector<8x286xf32> to vector<1x8x286xf32>
    tpu.vector_store %arg5[%c0_50, %c0_51, %c0_52], %60 {strides = array<i32>} : memref<1x8x286xf32, #tpu.memory_space<vmem>>, vector<1x8x286xf32>,
    %cst_53 = arith.constant 0.000000e+00 : f32
    %61 = vector.broadcast %cst_53 : f32 to vector<8x2xf32>
    %c0_54 = arith.constant 0 : index
    %c0_55 = arith.constant 0 : index
    %c324 = arith.constant 324 : index
    %62 = vector.load %arg2[%c0_54, %c0_55, %c324] : memref<1x16x328xf32, #tpu.memory_space<vmem>>, vector<1x16x2xf32>
    %63 = vector.shape_cast %62 : vector<1x16x2xf32> to vector<16x2xf32>
    %c9 = arith.constant 9 : index
    %c0_56 = arith.constant 0 : index
    %c0_57 = arith.constant 0 : index
    %64 = vector.load %arg3[%c9, %c0_56, %c0_57] : memref<12x8x16xf32, #tpu.memory_space<vmem>>, vector<1x8x16xf32>
    %65 = vector.shape_cast %64 : vector<1x8x16xf32> to vector<8x16xf32>
    %cst_58 = arith.constant dense<0.000000e+00> : vector<8x2xf32>
    %66 = tpu.matmul %65, %63, %cst_58 {dimension_numbers = #tpu.dot_dimension_numbers<[1], [0], [0], [1], [0, 0, 1, 1], [], []>, precision = #tpu.contract_precision<fp32>} : vector<8x16xf32>, vector<16x2xf32>, vector<8x2xf32> -> vector<8x2xf32>
    %67 = arith.addf %61, %66 : vector<8x2xf32>
    %c0_59 = arith.constant 0 : index
    %c0_60 = arith.constant 0 : index
    %c325 = arith.constant 325 : index
    %68 = vector.load %arg2[%c0_59, %c0_60, %c325] : memref<1x16x328xf32, #tpu.memory_space<vmem>>, vector<1x16x2xf32>
    %69 = vector.shape_cast %68 : vector<1x16x2xf32> to vector<16x2xf32>
    %c10 = arith.constant 10 : index
    %c0_61 = arith.constant 0 : index
    %c0_62 = arith.constant 0 : index
    %70 = vector.load %arg3[%c10, %c0_61, %c0_62] : memref<12x8x16xf32, #tpu.memory_space<vmem>>, vector<1x8x16xf32>
    %71 = vector.shape_cast %70 : vector<1x8x16xf32> to vector<8x16xf32>
    %cst_63 = arith.constant dense<0.000000e+00> : vector<8x2xf32>
    %72 = tpu.matmul %71, %69, %cst_63 {dimension_numbers = #tpu.dot_dimension_numbers<[1], [0], [0], [1], [0, 0, 1, 1], [], []>, precision = #tpu.contract_precision<fp32>} : vector<8x16xf32>, vector<16x2xf32>, vector<8x2xf32> -> vector<8x2xf32>
    %73 = arith.addf %67, %72 : vector<8x2xf32>
    %c0_64 = arith.constant 0 : index
    %c0_65 = arith.constant 0 : index
    %c326 = arith.constant 326 : index
    %74 = vector.load %arg2[%c0_64, %c0_65, %c326] : memref<1x16x328xf32, #tpu.memory_space<vmem>>, vector<1x16x2xf32>
    %75 = vector.shape_cast %74 : vector<1x16x2xf32> to vector<16x2xf32>
    %c11 = arith.constant 11 : index
    %c0_66 = arith.constant 0 : index
    %c0_67 = arith.constant 0 : index
    %76 = vector.load %arg3[%c11, %c0_66, %c0_67] : memref<12x8x16xf32, #tpu.memory_space<vmem>>, vector<1x8x16xf32>
    %77 = vector.shape_cast %76 : vector<1x8x16xf32> to vector<8x16xf32>
    %cst_68 = arith.constant dense<0.000000e+00> : vector<8x2xf32>
    %78 = tpu.matmul %77, %75, %cst_68 {dimension_numbers = #tpu.dot_dimension_numbers<[1], [0], [0], [1], [0, 0, 1, 1], [], []>, precision = #tpu.contract_precision<fp32>} : vector<8x16xf32>, vector<16x2xf32>, vector<8x2xf32> -> vector<8x2xf32>
    %79 = arith.addf %73, %78 : vector<8x2xf32>
    %c0_69 = arith.constant 0 : index
    %c1_70 = arith.constant 1 : index
    %80 = vector.load %arg4[%c0_69, %c1_70] : memref<8x2xf32, #tpu.memory_space<vmem>>, vector<8x1xf32>
    %81 = vector.broadcast %80 : vector<8x1xf32> to vector<8x2xf32>
    %82 = arith.addf %79, %81 : vector<8x2xf32>
    %c0_71 = arith.constant 0 : index
    %c0_72 = arith.constant 0 : index
    %c0_73 = arith.constant 0 : index
    %83 = vector.load %arg6[%c0_71, %c0_72, %c0_73] : memref<1x8x2xf32, #tpu.memory_space<vmem>>, vector<1x8x2xf32>
    %84 = vector.shape_cast %83 : vector<1x8x2xf32> to vector<8x2xf32>
    %85 = vector.shape_cast %82 : vector<8x2xf32> to vector<1x8x2xf32>
    tpu.vector_store %arg6[%c0_71, %c0_72, %c0_73], %85 {strides = array<i32>} : memref<1x8x2xf32, #tpu.memory_space<vmem>>, vector<1x8x2xf32>,
    return
  }
  func.func @transform_0(%arg0: i32, %arg1: i32) -> (i32, i32, i32) {
    %c0_i32 = arith.constant 0 : i32
    %c0_i32_0 = arith.constant 0 : i32
    %c0_i32_1 = arith.constant 0 : i32
    return %arg0, %c0_i32, %c0_i32_0 : i32, i32, i32
  }
  func.func @transform_1(%arg0: i32, %arg1: i32) -> (i32, i32, i32) {
    %c0_i32 = arith.constant 0 : i32
    %c0_i32_0 = arith.constant 0 : i32
    %c0_i32_1 = arith.constant 0 : i32
    return %c0_i32, %arg1, %c0_i32_0 : i32, i32, i32
  }
  func.func @transform_2(%arg0: i32, %arg1: i32) -> (i32, i32) {
    %c0_i32 = arith.constant 0 : i32
    %c0_i32_0 = arith.constant 0 : i32
    return %arg1, %c0_i32 : i32, i32
  }
  func.func @transform_3(%arg0: i32, %arg1: i32) -> (i32, i32, i32) {
    %c0_i32 = arith.constant 0 : i32
    %c0_i32_0 = arith.constant 0 : i32
    return %arg0, %arg1, %c0_i32 : i32, i32, i32
  }
  func.func @transform_4(%arg0: i32, %arg1: i32) -> (i32, i32, i32) {
    %c0_i32 = arith.constant 0 : i32
    %c0_i32_0 = arith.constant 0 : i32
    return %arg0, %arg1, %c0_i32 : i32, i32, i32
  }
}

</mosaic_0001>

<llo_original>
// kernel: tpu_custom_call.1
$region0: #{tpu_custom_call.1}
  #allocation0 [shape = 'u32[]', space=smem, size = 0x4, offset = 0x4, fixed_abs, tag = 'smem constant byte address 0x4 - core index']
  #allocation1 [shape = 'u32[144,128]{1,0:T(1,128)}', space=vmem, size = 0x12000, scoped, tag = 'internal scratch']
  %s0 = inlined_call_operand.hbm [shape: f32[2,16,328], index: 0, kind: input, shape index: {}]
  %s1 = inlined_call_operand.hbm [shape: f32[12,8,16], index: 1, kind: input, shape index: {}]
  %s2 = inlined_call_operand.vmem [shape: f32[8,2], index: 2, kind: input, shape index: {}]
  %s3 = inlined_call_operand.hbm [shape: f32[2,8,286], index: 3, kind: output, shape index: {0}]
  %s4 = inlined_call_operand.vmem [shape: f32[2,8,2], index: 4, kind: output, shape index: {1}]
  %5 = xla_tuple %s3, %s4
  %s6 = sld [smem:[#allocation0]]
  $region61: #{tpu_custom_call.1} parent=0
    _
  %s8 = ssub.s32 1, %s6
  %s9 = scalar_select 0, %s8, %s6
  $region1: #{tpu_custom_call.1} parent=0
    #allocation2 [shape = 'u8[49152]{0}', space=vmem, size = 0xc000, scoped, tag = 'input window, operand 0']
    #allocation3 [shape = 's32[2]{0}', space=sflag, size = 0x8, scoped, tag = 'scoped memory for tpu_custom_call.1']
    #allocation4 [shape = 's32[2]{0}', space=sflag, size = 0x8, scoped, tag = 'scoped memory for tpu_custom_call.1']
    #allocation5 [shape = 'u8[49152]{0}', space=vmem, size = 0xc000, scoped, tag = 'input window, operand 1, single buffered']
    #allocation6 [shape = 's32[1]{0}', space=sflag, size = 0x4, scoped, tag = 'scoped memory for tpu_custom_call.1']
    #allocation7 [shape = 'u8[24576]{0}', space=vmem, size = 0x6000, scoped, tag = 'output window, operand 0']
    %10 = vsyncpa [#allocation3], 0
    %s11 = scalar_lea.sflag [#allocation3], 1
    %12 = vsyncpa %s11, 0
    %13 = vsyncpa [#allocation6], 0
    %14 = vsyncpa [#allocation4], 0
    %s15 = scalar_lea.sflag [#allocation4], 1
    %16 = vsyncpa %s15, 0
    loop: start=0, step=1, limit=4
    $region2: #{tpu_custom_call.1} parent=1 // loop_pre_header
      _
    $region3: #{tpu_custom_call.1} parent=1 // loop_header
      %s18 = sphi 0, %s22
      %p19 = scmp.ge.s32.totalorder %s18, 4
      %s25 = sphi 0, %s37
      %s26 = sphi 0, %s33
      %s27 = sphi 0, %s25
      %s28 = sphi 0, %s26
      %s29 = sphi 0, %s27
      %s30 = sphi 0, %s28
      %s40 = sphi 0, %s42
      %s43 = sphi 0, %s40
      %s44 = sphi 0, %s43
      %s60 = sphi 0, %s44
      %s66 = sphi 0, %s68
      %s69 = sphi 0, %s66
      %s70 = sphi 0, %s69
      %s86 = sphi 0, %s70
      %s92 = sphi 0, %s94
      %s95 = sphi 0, %s92
      %s96 = sphi 0, %s95
      %s112 = sphi 0, %s96
      %s120 = sphi 0, %s122
      %s123 = sphi 0, %s120
      %s124 = sphi 0, %s123
      %s140 = sphi 0, %s124
      %s148 = sphi 0, %s150
      %s151 = sphi 0, %s148
      %s152 = sphi 0, %s151
      %s168 = sphi 0, %s152
    $region4: #{tpu_custom_call.1} parent=1 // loop_header_branch
      %21 = sbr.rel (%p19) target = $region8
    $region5: #{tpu_custom_call.1} parent=1 // loop_body
      %s23 = ssub.s32 %s18, 1
      %s24 = ssub.s32 %s18, 2
      %s31 = sadd.s32 1, %s26
      %p32 = scmp.ge.s32.totalorder %s31, 1
      %s33 = scalar_select %p32, 0, %s31
      %s34 = sadd.s32 1, %s25
      %s35 = scalar_select %p32, %s34, %s25
      %p36 = scmp.ge.s32.totalorder %s35, 2
      %s37 = scalar_select %p36, 0, %s35
      %s38 = ssub.s32 %s25, %s37
      %p39 = scmp.eq.s32.totalorder %s38, 0
      %s41 = sadd.s32 %s40, 1
      %s42 = scalar_select %p39, %s40, %s41
      %p45 = pneg %p39
      %p46 = scmp.eq.s32.totalorder %s18, 1
      %p47 = por %p45, %p46
      %p48 = scmp.ne.s32.totalorder %s40, %s43
      %p49 = scmp.eq.s32.totalorder %s18, 0
      %p50 = por %p48, %p49
      %p51 = scmp.ne.s32.totalorder %s40, %s43
      %p52 = scmp.eq.s32.totalorder %s23, 1
      %p53 = por %p51, %p52
      %p54 = scmp.ne.s32.totalorder %s43, %s44
      %p55 = scmp.eq.s32.totalorder %s23, 0
      %p56 = por %p54, %p55
      %p57 = scmp.ne.s32.totalorder %s43, %s44
      %p58 = scmp.eq.s32.totalorder %s24, 1
      %p59 = por %p57, %p58
      %p61 = scmp.ne.s32.totalorder %s44, %s60
      %p62 = scmp.eq.s32.totalorder %s24, 0
      %p63 = por %p61, %p62
      %s64 = ssub.s32 %s26, %s33
      %p65 = scmp.eq.s32.totalorder %s64, 0
      %s67 = sadd.s32 %s66, 1
      %s68 = scalar_select %p65, %s66, %s67
      %p71 = pneg %p65
      %p72 = scmp.eq.s32.totalorder %s18, 1
      %p73 = por %p71, %p72
      %p74 = scmp.ne.s32.totalorder %s66, %s69
      %p75 = scmp.eq.s32.totalorder %s18, 0
      %p76 = por %p74, %p75
      %p77 = scmp.ne.s32.totalorder %s66, %s69
      %p78 = scmp.eq.s32.totalorder %s23, 1
      %p79 = por %p77, %p78
      %p80 = scmp.ne.s32.totalorder %s69, %s70
      %p81 = scmp.eq.s32.totalorder %s23, 0
      %p82 = por %p80, %p81
      %p83 = scmp.ne.s32.totalorder %s69, %s70
      %p84 = scmp.eq.s32.totalorder %s24, 1
      %p85 = por %p83, %p84
      %p87 = scmp.ne.s32.totalorder %s70, %s86
      %p88 = scmp.eq.s32.totalorder %s24, 0
      %p89 = por %p87, %p88
      %s90 = ssub.s32 %s26, %s33
      %p91 = scmp.eq.s32.totalorder %s90, 0
      %s93 = sadd.s32 %s92, 1
      %s94 = scalar_select %p91, %s92, %s93
      %p97 = pneg %p91
      %p98 = scmp.eq.s32.totalorder %s18, 1
      %p99 = por %p97, %p98
      %p100 = scmp.ne.s32.totalorder %s92, %s95
      %p101 = scmp.eq.s32.totalorder %s18, 0
      %p102 = por %p100, %p101
      %p103 = scmp.ne.s32.totalorder %s92, %s95
      %p104 = scmp.eq.s32.totalorder %s23, 1
      %p105 = por %p103, %p104
      %p106 = scmp.ne.s32.totalorder %s95, %s96
      %p107 = scmp.eq.s32.totalorder %s23, 0
      %p108 = por %p106, %p107
      %p109 = scmp.ne.s32.totalorder %s95, %s96
      %p110 = scmp.eq.s32.totalorder %s24, 1
      %p111 = por %p109, %p110
      %p113 = scmp.ne.s32.totalorder %s96, %s112
      %p114 = scmp.eq.s32.totalorder %s24, 0
      %p115 = por %p113, %p114
      %s116 = ssub.s32 %s25, %s37
      %s117 = ssub.s32 %s26, %s33
      %s118 = sor.u32 %s116, %s117
      %p119 = scmp.eq.s32.totalorder %s118, 0
      %s121 = sadd.s32 %s120, 1
      %s122 = scalar_select %p119, %s120, %s121
      %p125 = pneg %p119
      %p126 = scmp.eq.s32.totalorder %s18, 1
      %p127 = por %p125, %p126
      %p128 = scmp.ne.s32.totalorder %s120, %s123
      %p129 = scmp.eq.s32.totalorder %s18, 0
      %p130 = por %p128, %p129
      %p131 = scmp.ne.s32.totalorder %s120, %s123
      %p132 = scmp.eq.s32.totalorder %s23, 1
      %p133 = por %p131, %p132
      %p134 = scmp.ne.s32.totalorder %s123, %s124
      %p135 = scmp.eq.s32.totalorder %s23, 0
      %p136 = por %p134, %p135
      %p137 = scmp.ne.s32.totalorder %s123, %s124
      %p138 = scmp.eq.s32.totalorder %s24, 1
      %p139 = por %p137, %p138
      %p141 = scmp.ne.s32.totalorder %s124, %s140
      %p142 = scmp.eq.s32.totalorder %s24, 0
      %p143 = por %p141, %p142
      %s144 = ssub.s32 %s25, %s37
      %s145 = ssub.s32 %s26, %s33
      %s146 = sor.u32 %s144, %s145
      %p147 = scmp.eq.s32.totalorder %s146, 0
      %s149 = sadd.s32 %s148, 1
      %s150 = scalar_select %p147, %s148, %s149
      %p153 = pneg %p147
      %p154 = scmp.eq.s32.totalorder %s18, 1
      %p155 = por %p153, %p154
      %p156 = scmp.ne.s32.totalorder %s148, %s151
      %p157 = scmp.eq.s32.totalorder %s18, 0
      %p158 = por %p156, %p157
      %p159 = scmp.ne.s32.totalorder %s148, %s151
      %p160 = scmp.eq.s32.totalorder %s23, 1
      %p161 = por %p159, %p160
      %p162 = scmp.ne.s32.totalorder %s151, %s152
      %p163 = scmp.eq.s32.totalorder %s23, 0
      %p164 = por %p162, %p163
      %p165 = scmp.ne.s32.totalorder %s151, %s152
      %p166 = scmp.eq.s32.totalorder %s24, 1
      %p167 = por %p165, %p166
      %p169 = scmp.ne.s32.totalorder %s152, %s168
      %p170 = scmp.eq.s32.totalorder %s24, 0
      %p171 = por %p169, %p170
      %p172 = scmp.le.s32.totalorder 1, %s18
      %p173 = scmp.lt.s32.totalorder %s18, 3
      %p174 = pnand %p172, %p173
      %p175 = pneg %p174
      // Predicated region
      $region9: #{tpu_custom_call.1} parent=5 // pred_check
        _
      $region10: #{tpu_custom_call.1} parent=5 // pred_check_branch
        %177 = sbr.rel (%p174) target = $region12
      $region11: #{tpu_custom_call.1} parent=5 // pred_region
        %s178 = ssub.s32 %s18, 1
        // Predicated region
        $region13: #{tpu_custom_call.1} parent=11 // pred_check
          %p179 = pneg %p82
        $region14: #{tpu_custom_call.1} parent=11 // pred_check_branch
          %181 = sbr.rel (%p179) target = $region16
        $region15: #{tpu_custom_call.1} parent=11 // pred_region
          %s183 = ssub.s32 1536, 1536
          %184 = vsyncadd [#allocation6], %s183
          %s185 = smul.addr %s28, 128
          %s186 = scalar_lea.hbm %s1, %s185
          %s187 = sshll.u32 [#allocation5], 4
          %s188 = int_to_ptr.vmem [resolvable:$true] %s187
          %193 = dma.hbm_to_vmem [thread:$0]  %s186, 1536, %s188, [#allocation6], 128, 128, 8
        $region16: #{tpu_custom_call.1} parent=11 // pred_fallthru
          _
        // Predicated region
        $region17: #{tpu_custom_call.1} parent=11 // pred_check
          %p194 = pneg %p108
        $region18: #{tpu_custom_call.1} parent=11 // pred_check_branch
          %196 = sbr.rel (%p194) target = $region20
        $region19: #{tpu_custom_call.1} parent=11 // pred_region
          %p197 = scmp.lt.s32.totalorder %s28, 0
          %s198 = scalar_select %p197, %s28, 0
          %s199 = smul.addr %s198, 8
          %s200 = scalar_lea.vmem %s2, %s199
        $region20: #{tpu_custom_call.1} parent=11 // pred_fallthru
          _
      $region12: #{tpu_custom_call.1} parent=5 // pred_fallthru
        _
      %p201 = scmp.lt.s32.totalorder %s18, 2
      // Predicated region
      $region21: #{tpu_custom_call.1} parent=5 // pred_check
        %p202 = pneg %p201
      $region22: #{tpu_custom_call.1} parent=5 // pred_check_branch
        %204 = sbr.rel (%p202) target = $region24
      $region23: #{tpu_custom_call.1} parent=5 // pred_region
        // Predicated region
        $region25: #{tpu_custom_call.1} parent=23 // pred_check
          %p205 = pneg %p50
        $region26: #{tpu_custom_call.1} parent=23 // pred_check_branch
          %207 = sbr.rel (%p205) target = $region28
        $region27: #{tpu_custom_call.1} parent=23 // pred_region
          %s208 = sand.u32 %s40, 1
          %s209 = scalar_lea.sflag [#allocation3], %s208
          %s210 = sand.u32 %s40, 1
          %s211 = smul.addr %s210, 48
          %s212 = scalar_lea.vmem [#allocation2], %s211
          %s214 = ssub.s32 768, 768
          %215 = vsyncadd %s209, %s214
          %s216 = smul.addr %s25, 6
          %s217 = smul.addr %s216, 128
          %s218 = scalar_lea.hbm %s0, %s217
          %s219 = sshll.u32 %s212, 4
          %s220 = int_to_ptr.vmem [resolvable:$true] %s219
          %225 = dma.hbm_to_vmem [thread:$0]  %s218, 768, %s220, %s209, 384, 384, 24
        $region28: #{tpu_custom_call.1} parent=23 // pred_fallthru
          _
      $region24: #{tpu_custom_call.1} parent=5 // pred_fallthru
        _
      %p226 = scmp.le.s32.totalorder 1, %s18
      %p227 = scmp.lt.s32.totalorder %s18, 3
      %p228 = pnand %p226, %p227
      %p229 = pneg %p228
      // Predicated region
      $region29: #{tpu_custom_call.1} parent=5 // pred_check
        _
      $region30: #{tpu_custom_call.1} parent=5 // pred_check_branch
        %231 = sbr.rel (%p228) target = $region32
      $region31: #{tpu_custom_call.1} parent=5 // pred_region
        %s232 = ssub.s32 %s18, 1
        %s233 = sand.u32 %s43, 1
        %s234 = scalar_lea.sflag [#allocation3], %s233
        %s235 = sand.u32 %s43, 1
        %s236 = smul.addr %s235, 48
        %s237 = scalar_lea.vmem [#allocation2], %s236
        // Predicated region
        $region33: #{tpu_custom_call.1} parent=31 // pred_check
          %p238 = pneg %p56
        $region34: #{tpu_custom_call.1} parent=31 // pred_check_branch
          %240 = sbr.rel (%p238) target = $region36
        $region35: #{tpu_custom_call.1} parent=31 // pred_region
          %241 = dma.done %s234, 768
        $region36: #{tpu_custom_call.1} parent=31 // pred_fallthru
          _
        // Predicated region
        $region37: #{tpu_custom_call.1} parent=31 // pred_check
          %p242 = pneg %p82
        $region38: #{tpu_custom_call.1} parent=31 // pred_check_branch
          %244 = sbr.rel (%p242) target = $region40
        $region39: #{tpu_custom_call.1} parent=31 // pred_region
          %245 = dma.done [#allocation6], 1536
        $region40: #{tpu_custom_call.1} parent=31 // pred_fallthru
          _
        %s246 = sand.u32 %s43, 1
        %s247 = scalar_lea.sflag [#allocation3], %s246
        %s248 = sand.u32 %s43, 1
        %s249 = smul.addr %s248, 48
        %s250 = scalar_lea.vmem [#allocation2], %s249
        %p251 = pneg %p56
        %p252 = pneg %p53
        %p253 = pneg %p82
        %p254 = pneg %p79
        %p255 = scmp.lt.s32.totalorder %s28, 0
        %s256 = scalar_select %p255, %s28, 0
        %s257 = smul.addr %s256, 8
        %s258 = scalar_lea.vmem %s2, %s257
        %p259 = pneg %p108
        %p260 = pneg %p105
        %p261 = pneg %p136
        %p262 = pneg %p133
        %s263 = sand.u32 %s123, 1
        %s264 = scalar_lea.sflag [#allocation4], %s263
        %s265 = sand.u32 %s123, 1
        %s266 = smul.addr %s265, 24
        %s267 = scalar_lea.vmem [#allocation7], %s266
        %p268 = pneg %p164
        %p269 = pneg %p161
        %p270 = scmp.lt.s32.totalorder %s27, 1
        %s271 = scalar_select %p270, %s27, 1
        %p272 = scmp.lt.s32.totalorder %s28, 0
        %s273 = scalar_select %p272, %s28, 0
        %s274 = sadd.s32 %s273, %s271
        %s275 = smul.addr %s274, 8
        %s276 = scalar_lea.vmem %s4, %s275
        %p277 = scmp.lt.s32.totalorder %s28, 0
        %s278 = scalar_select %p277, %s28, 0
        %s279 = smul.addr %s278, 8
        %s280 = scalar_lea.vmem %s2, %s279
        %p281 = scmp.lt.s32.totalorder %s27, 1
        %s282 = scalar_select %p281, %s27, 1
        %p283 = scmp.lt.s32.totalorder %s28, 0
        %s284 = scalar_select %p283, %s28, 0
        %s285 = sadd.s32 %s284, %s282
        %s286 = smul.addr %s285, 8
        %s287 = scalar_lea.vmem %s4, %s286
        %v288 = vld [vmem:[%s237] sm:$0xff]
        %v289 = vld [vmem:[%s237 + $0x8] sm:$0xff]
        %v290 = vld [vmem:[%s237 + $0x10] sm:$0xff]
        %v291 = vld [vmem:[%s237 + $0x18] sm:$0xff]
        %v292 = vld [vmem:[%s237 + $0x20] sm:$0xff]
        %v293 = vld [vmem:[%s237 + $0x28] sm:$0xff]
        %v294 = vld [vmem:[#allocation5] sm:$0xff]
        %s295 = scalar_lea.vmem [#allocation5], 8
        %v296 = vld [vmem:[%s295] sm:$0xff]
        %303 = vrot.lane.b32.xlu0 %v288, 127
        %v304 = vpop.permute.xlu0 %303
        %305 = vrot.lane.b32.xlu0 %v289, 127
        %v306 = vpop.permute.xlu0 %305
        %307 = vrot.lane.b32.xlu0 %v290, 127
        %v308 = vpop.permute.xlu0 %307
        %309 = vrot.lane.b32.xlu0 %v291, 127
        %v310 = vpop.permute.xlu0 %309
        %311 = vrot.lane.b32.xlu0 %v292, 127
        %v312 = vpop.permute.xlu0 %311
        %313 = vrot.lane.b32.xlu0 %v293, 127
        %v314 = vpop.permute.xlu0 %313
        %vm315 = vcmask 1039360
        %v316 = vsel %vm315, %v304, %v306
        %v317 = vsel %vm315, %v306, %v308
        %v318 = vsel %vm315, %v310, %v312
        %v319 = vsel %vm315, %v312, %v314
        %vm326 = vcmask 130048
        %v328 = vsel %vm326, %v296, 0
        %v330 = vand.u32 %v317, 4294901760
        %331 = vmatprep.subr.mxu0 %v330
        %v332 = vand.u32 %v316, 4294901760
        %333 = vmatpush1.msra.mxu0 %v332
        %v334 = vand.u32 %v319, 4294901760
        %335 = vmatprep.subr.mxu0 %v334
        %v336 = vand.u32 %v318, 4294901760
        %337 = vmatpush1.msra.mxu0 %v336
        %338 = vmatprep.subr.mxu0 0.0
        %339 = vmatpush1.msra.mxu0 0.0
        %340 = vmatprep.subr.mxu0 0.0
        %341 = vmatpush1.msra.mxu0 0.0
        %342 = vmatprep.subr.mxu0 0.0
        %343 = vmatpush1.msra.mxu0 0.0
        %344 = vmatprep.subr.mxu0 0.0
        %345 = vmatpush1.msra.mxu0 0.0
        %346 = vmatprep.subr.mxu0 0.0
        %347 = vmatpush1.msra.mxu0 0.0
        %348 = vmatprep.subr.mxu0 0.0
        %349 = vmatpush1.msra.mxu0 0.0
        %350 = vmatprep.subr.mxu0 0.0
        %351 = vmatpush1.msra.mxu0 0.0
        %352 = vmatprep.subr.mxu0 0.0
        %353 = vmatpush1.msra.mxu0 0.0
        %354 = vmatprep.subr.mxu0 0.0
        %355 = vmatpush1.msra.mxu0 0.0
        %356 = vmatprep.subr.mxu0 0.0
        %357 = vmatpush1.msra.mxu0 0.0
        %358 = vmatprep.subr.mxu0 0.0
        %359 = vmatpush1.msra.mxu0 0.0
        %360 = vmatprep.subr.mxu0 0.0
        %361 = vmatpush1.msra.mxu0 0.0
        %362 = vmatprep.subr.mxu0 0.0
        %363 = vmatpush1.msra.mxu0 0.0
        %364 = vmatprep.subr.mxu0 0.0
        %365 = vmatpush1.msra.mxu0 0.0
        %366 = vmatprep.subr.mxu0 0.0
        %367 = vmatpush1.msra.mxu0 0.0
        %368 = vmatprep.subr.mxu0 0.0
        %369 = vmatpush1.msra.mxu0 0.0
        %370 = vmatprep.subr.mxu0 0.0
        %371 = vmatpush1.msra.mxu0 0.0
        %372 = vmatprep.subr.mxu0 0.0
        %373 = vmatpush1.msra.mxu0 0.0
        %374 = vmatprep.subr.mxu0 0.0
        %375 = vmatpush1.msra.mxu0 0.0
        %376 = vmatprep.subr.mxu0 0.0
        %377 = vmatpush1.msra.mxu0 0.0
        %378 = vmatprep.subr.mxu0 0.0
        %379 = vmatpush1.msra.mxu0 0.0
        %380 = vmatprep.subr.mxu0 0.0
        %381 = vmatpush1.msra.mxu0 0.0
        %382 = vmatprep.subr.mxu0 0.0
        %383 = vmatpush1.msra.mxu0 0.0
        %384 = vmatprep.subr.mxu0 0.0
        %385 = vmatpush1.msra.mxu0 0.0
        %386 = vmatprep.subr.mxu0 0.0
        %387 = vmatpush1.msra.mxu0 0.0
        %388 = vmatprep.subr.mxu0 0.0
        %389 = vmatpush1.msra.mxu0 0.0
        %390 = vmatprep.subr.mxu0 0.0
        %391 = vmatpush1.msra.mxu0 0.0
        %392 = vmatprep.subr.mxu0 0.0
        %393 = vmatpush1.msra.mxu0 0.0
        %394 = vmatprep.subr.mxu0 0.0
        %395 = vmatpush1.msra.mxu0 0.0
        %396 = vmatprep.subr.mxu0 0.0
        %397 = vmatpush1.msra.mxu0 0.0
        %398 = vmatprep.mubr.f32.mxu0 0.0
        %v399 = vand.u32 %v328, 4294901760
        %v400 = vsub.f32 %v328, %v399
        %v401 = vand.u32 %v400, 4294901760
        %v402 = vsub.f32 %v400, %v401
        %v403 = vand.u32 %v402, 4294901760
        %404 = vmatmul.mubr.f32.gmra.mrb[0].mxu0 %v403
        %v405 = vpop.f32.mrb[0].mxu0
        %v406 = vadd.f32 0.0, %v405
        %v407 = vpop.f32.mrb[0].mxu0
        %v408 = vadd.f32 0.0, %v407
        %409 = vdwg.mxu0
        %v410 = vand.u32 %v317, 4294901760
        %v411 = vsub.f32 %v317, %v410
        %v412 = vand.u32 %v411, 4294901760
        %v413 = vsub.f32 %v411, %v412
        %v414 = vand.u32 %v413, 4294901760
        %415 = vmatprep.subr.mxu0 %v414
        %v416 = vand.u32 %v316, 4294901760
        %v417 = vsub.f32 %v316, %v416
        %v418 = vand.u32 %v417, 4294901760
        %v419 = vsub.f32 %v417, %v418
        %v420 = vand.u32 %v419, 4294901760
        %421 = vmatpush1.msra.mxu0 %v420
        %v422 = vand.u32 %v319, 4294901760
        %v423 = vsub.f32 %v319, %v422
        %v424 = vand.u32 %v423, 4294901760
        %v425 = vsub.f32 %v423, %v424
        %v426 = vand.u32 %v425, 4294901760
        %427 = vmatprep.subr.mxu0 %v426
        %v428 = vand.u32 %v318, 4294901760
        %v429 = vsub.f32 %v318, %v428
        %v430 = vand.u32 %v429, 4294901760
        %v431 = vsub.f32 %v429, %v430
        %v432 = vand.u32 %v431, 4294901760
        %433 = vmatpush1.msra.mxu0 %v432
        %434 = vmatprep.subr.mxu0 0.0
        %435 = vmatpush1.msra.mxu0 0.0
        %436 = vmatprep.subr.mxu0 0.0
        %437 = vmatpush1.msra.mxu0 0.0
        %438 = vmatprep.subr.mxu0 0.0
        %439 = vmatpush1.msra.mxu0 0.0
        %440 = vmatprep.subr.mxu0 0.0
        %441 = vmatpush1.msra.mxu0 0.0
        %442 = vmatprep.subr.mxu0 0.0
        %443 = vmatpush1.msra.mxu0 0.0
        %444 = vmatprep.subr.mxu0 0.0
        %445 = vmatpush1.msra.mxu0 0.0
        %446 = vmatprep.subr.mxu0 0.0
        %447 = vmatpush1.msra.mxu0 0.0
        %448 = vmatprep.subr.mxu0 0.0
        %449 = vmatpush1.msra.mxu0 0.0
        %450 = vmatprep.subr.mxu0 0.0
        %451 = vmatpush1.msra.mxu0 0.0
        %452 = vmatprep.subr.mxu0 0.0
        %453 = vmatpush1.msra.mxu0 0.0
        %454 = vmatprep.subr.mxu0 0.0
        %455 = vmatpush1.msra.mxu0 0.0
        %456 = vmatprep.subr.mxu0 0.0
        %457 = vmatpush1.msra.mxu0 0.0
        %458 = vmatprep.subr.mxu0 0.0
        %459 = vmatpush1.msra.mxu0 0.0
        %460 = vmatprep.subr.mxu0 0.0
        %461 = vmatpush1.msra.mxu0 0.0
        %462 = vmatprep.subr.mxu0 0.0
        %463 = vmatpush1.msra.mxu0 0.0
        %464 = vmatprep.subr.mxu0 0.0
        %465 = vmatpush1.msra.mxu0 0.0
        %466 = vmatprep.subr.mxu0 0.0
        %467 = vmatpush1.msra.mxu0 0.0
        %468 = vmatprep.subr.mxu0 0.0
        %469 = vmatpush1.msra.mxu0 0.0
        %470 = vmatprep.subr.mxu0 0.0
        %471 = vmatpush1.msra.mxu0 0.0
        %472 = vmatprep.subr.mxu0 0.0
        %473 = vmatpush1.msra.mxu0 0.0
        %474 = vmatprep.subr.mxu0 0.0
        %475 = vmatpush1.msra.mxu0 0.0
        %476 = vmatprep.subr.mxu0 0.0
        %477 = vmatpush1.msra.mxu0 0.0
        %478 = vmatprep.subr.mxu0 0.0
        %479 = vmatpush1.msra.mxu0 0.0
        %480 = vmatprep.subr.mxu0 0.0
        %481 = vmatpush1.msra.mxu0 0.0
        %482 = vmatprep.subr.mxu0 0.0
        %483 = vmatpush1.msra.mxu0 0.0
        %484 = vmatprep.subr.mxu0 0.0
        %485 = vmatpush1.msra.mxu0 0.0
        %486 = vmatprep.subr.mxu0 0.0
        %487 = vmatpush1.msra.mxu0 0.0
        %488 = vmatprep.subr.mxu0 0.0
        %489 = vmatpush1.msra.mxu0 0.0
        %490 = vmatprep.subr.mxu0 0.0
        %491 = vmatpush1.msra.mxu0 0.0
        %492 = vmatprep.subr.mxu0 0.0
        %493 = vmatpush1.msra.mxu0 0.0
        %494 = vmatprep.mubr.f32.mxu0 0.0
        %v495 = vand.u32 %v328, 4294901760
        %496 = vmatmul.mubr.f32.gmra.mrb[0].mxu0 %v495
        %v497 = vpop.f32.mrb[0].mxu0
        %v498 = vadd.f32 %v406, %v497
        %v499 = vpop.f32.mrb[0].mxu0
        %v500 = vadd.f32 %v408, %v499
        %501 = vdwg.mxu0
        %v502 = vand.u32 %v317, 4294901760
        %v503 = vsub.f32 %v317, %v502
        %504 = vmatprep.subr.mxu0 %v503
        %v505 = vand.u32 %v316, 4294901760
        %v506 = vsub.f32 %v316, %v505
        %507 = vmatpush1.msra.mxu0 %v506
        %v508 = vand.u32 %v319, 4294901760
        %v509 = vsub.f32 %v319, %v508
        %510 = vmatprep.subr.mxu0 %v509
        %v511 = vand.u32 %v318, 4294901760
        %v512 = vsub.f32 %v318, %v511
        %513 = vmatpush1.msra.mxu0 %v512
        %514 = vmatprep.subr.mxu0 0.0
        %515 = vmatpush1.msra.mxu0 0.0
        %516 = vmatprep.subr.mxu0 0.0
        %517 = vmatpush1.msra.mxu0 0.0
        %518 = vmatprep.subr.mxu0 0.0
        %519 = vmatpush1.msra.mxu0 0.0
        %520 = vmatprep.subr.mxu0 0.0
        %521 = vmatpush1.msra.mxu0 0.0
        %522 = vmatprep.subr.mxu0 0.0
        %523 = vmatpush1.msra.mxu0 0.0
        %524 = vmatprep.subr.mxu0 0.0
        %525 = vmatpush1.msra.mxu0 0.0
        %526 = vmatprep.subr.mxu0 0.0
        %527 = vmatpush1.msra.mxu0 0.0
        %528 = vmatprep.subr.mxu0 0.0
        %529 = vmatpush1.msra.mxu0 0.0
        %530 = vmatprep.subr.mxu0 0.0
        %531 = vmatpush1.msra.mxu0 0.0
        %532 = vmatprep.subr.mxu0 0.0
        %533 = vmatpush1.msra.mxu0 0.0
        %534 = vmatprep.subr.mxu0 0.0
        %535 = vmatpush1.msra.mxu0 0.0
        %536 = vmatprep.subr.mxu0 0.0
        %537 = vmatpush1.msra.mxu0 0.0
        %538 = vmatprep.subr.mxu0 0.0
        %539 = vmatpush1.msra.mxu0 0.0
        %540 = vmatprep.subr.mxu0 0.0
        %541 = vmatpush1.msra.mxu0 0.0
        %542 = vmatprep.subr.mxu0 0.0
        %543 = vmatpush1.msra.mxu0 0.0
        %544 = vmatprep.subr.mxu0 0.0
        %545 = vmatpush1.msra.mxu0 0.0
        %546 = vmatprep.subr.mxu0 0.0
        %547 = vmatpush1.msra.mxu0 0.0
        %548 = vmatprep.subr.mxu0 0.0
        %549 = vmatpush1.msra.mxu0 0.0
        %550 = vmatprep.subr.mxu0 0.0
        %551 = vmatpush1.msra.mxu0 0.0
        %552 = vmatprep.subr.mxu0 0.0
        %553 = vmatpush1.msra.mxu0 0.0
        %554 = vmatprep.subr.mxu0 0.0
        %555 = vmatpush1.msra.mxu0 0.0
        %556 = vmatprep.subr.mxu0 0.0
        %557 = vmatpush1.msra.mxu0 0.0
        %558 = vmatprep.subr.mxu0 0.0
        %559 = vmatpush1.msra.mxu0 0.0
        %560 = vmatprep.subr.mxu0 0.0
        %561 = vmatpush1.msra.mxu0 0.0
        %562 = vmatprep.subr.mxu0 0.0
        %563 = vmatpush1.msra.mxu0 0.0
        %564 = vmatprep.subr.mxu0 0.0
        %565 = vmatpush1.msra.mxu0 0.0
        %566 = vmatprep.subr.mxu0 0.0
        %567 = vmatpush1.msra.mxu0 0.0
        %568 = vmatprep.subr.mxu0 0.0
        %569 = vmatpush1.msra.mxu0 0.0
        %570 = vmatprep.subr.mxu0 0.0
        %571 = vmatpush1.msra.mxu0 0.0
        %572 = vmatprep.subr.mxu0 0.0
        %573 = vmatpush1.msra.mxu0 0.0
        %574 = vmatprep.mubr.f32.mxu0 0.0
        %v575 = vand.u32 %v328, 4294901760
        %v576 = vsub.f32 %v328, %v575
        %577 = vmatmul.mubr.f32.gmra.mrb[0].mxu0 %v576
        %v578 = vpop.f32.mrb[0].mxu0
        %v579 = vadd.f32 %v498, %v578
        %v580 = vpop.f32.mrb[0].mxu0
        %v581 = vadd.f32 %v500, %v580
        %582 = vdwg.mxu0
        %v583 = vand.u32 %v317, 4294901760
        %584 = vmatprep.subr.mxu0 %v583
        %v585 = vand.u32 %v316, 4294901760
        %586 = vmatpush1.msra.mxu0 %v585
        %v587 = vand.u32 %v319, 4294901760
        %588 = vmatprep.subr.mxu0 %v587
        %v589 = vand.u32 %v318, 4294901760
        %590 = vmatpush1.msra.mxu0 %v589
        %591 = vmatprep.subr.mxu0 0.0
        %592 = vmatpush1.msra.mxu0 0.0
        %593 = vmatprep.subr.mxu0 0.0
        %594 = vmatpush1.msra.mxu0 0.0
        %595 = vmatprep.subr.mxu0 0.0
        %596 = vmatpush1.msra.mxu0 0.0
        %597 = vmatprep.subr.mxu0 0.0
        %598 = vmatpush1.msra.mxu0 0.0
        %599 = vmatprep.subr.mxu0 0.0
        %600 = vmatpush1.msra.mxu0 0.0
        %601 = vmatprep.subr.mxu0 0.0
        %602 = vmatpush1.msra.mxu0 0.0
        %603 = vmatprep.subr.mxu0 0.0
        %604 = vmatpush1.msra.mxu0 0.0
        %605 = vmatprep.subr.mxu0 0.0
        %606 = vmatpush1.msra.mxu0 0.0
        %607 = vmatprep.subr.mxu0 0.0
        %608 = vmatpush1.msra.mxu0 0.0
        %609 = vmatprep.subr.mxu0 0.0
        %610 = vmatpush1.msra.mxu0 0.0
        %611 = vmatprep.subr.mxu0 0.0
        %612 = vmatpush1.msra.mxu0 0.0
        %613 = vmatprep.subr.mxu0 0.0
        %614 = vmatpush1.msra.mxu0 0.0
        %615 = vmatprep.subr.mxu0 0.0
        %616 = vmatpush1.msra.mxu0 0.0
        %617 = vmatprep.subr.mxu0 0.0
        %618 = vmatpush1.msra.mxu0 0.0
        %619 = vmatprep.subr.mxu0 0.0
        %620 = vmatpush1.msra.mxu0 0.0
        %621 = vmatprep.subr.mxu0 0.0
        %622 = vmatpush1.msra.mxu0 0.0
        %623 = vmatprep.subr.mxu0 0.0
        %624 = vmatpush1.msra.mxu0 0.0
        %625 = vmatprep.subr.mxu0 0.0
        %626 = vmatpush1.msra.mxu0 0.0
        %627 = vmatprep.subr.mxu0 0.0
        %628 = vmatpush1.msra.mxu0 0.0
        %629 = vmatprep.subr.mxu0 0.0
        %630 = vmatpush1.msra.mxu0 0.0
        %631 = vmatprep.subr.mxu0 0.0
        %632 = vmatpush1.msra.mxu0 0.0
        %633 = vmatprep.subr.mxu0 0.0
        %634 = vmatpush1.msra.mxu0 0.0
        %635 = vmatprep.subr.mxu0 0.0
        %636 = vmatpush1.msra.mxu0 0.0
        %637 = vmatprep.subr.mxu0 0.0
        %638 = vmatpush1.msra.mxu0 0.0
        %639 = vmatprep.subr.mxu0 0.0
        %640 = vmatpush1.msra.mxu0 0.0
        %641 = vmatprep.subr.mxu0 0.0
        %642 = vmatpush1.msra.mxu0 0.0
        %643 = vmatprep.subr.mxu0 0.0
        %644 = vmatpush1.msra.mxu0 0.0
        %645 = vmatprep.subr.mxu0 0.0
        %646 = vmatpush1.msra.mxu0 0.0
        %647 = vmatprep.subr.mxu0 0.0
        %648 = vmatpush1.msra.mxu0 0.0
        %649 = vmatprep.subr.mxu0 0.0
        %650 = vmatpush1.msra.mxu0 0.0
        %651 = vmatprep.mubr.f32.mxu0 0.0
        %v652 = vand.u32 %v328, 4294901760
        %v653 = vsub.f32 %v328, %v652
        %v654 = vand.u32 %v653, 4294901760
        %655 = vmatmul.mubr.f32.gmra.mrb[0].mxu0 %v654
        %v656 = vpop.f32.mrb[0].mxu0
        %v657 = vadd.f32 %v579, %v656
        %v658 = vpop.f32.mrb[0].mxu0
        %v659 = vadd.f32 %v581, %v658
        %660 = vdwg.mxu0
        %v661 = vand.u32 %v317, 4294901760
        %v662 = vsub.f32 %v317, %v661
        %v663 = vand.u32 %v662, 4294901760
        %664 = vmatprep.subr.mxu0 %v663
        %v665 = vand.u32 %v316, 4294901760
        %v666 = vsub.f32 %v316, %v665
        %v667 = vand.u32 %v666, 4294901760
        %668 = vmatpush1.msra.mxu0 %v667
        %v669 = vand.u32 %v319, 4294901760
        %v670 = vsub.f32 %v319, %v669
        %v671 = vand.u32 %v670, 4294901760
        %672 = vmatprep.subr.mxu0 %v671
        %v673 = vand.u32 %v318, 4294901760
        %v674 = vsub.f32 %v318, %v673
        %v675 = vand.u32 %v674, 4294901760
        %676 = vmatpush1.msra.mxu0 %v675
        %677 = vmatprep.subr.mxu0 0.0
        %678 = vmatpush1.msra.mxu0 0.0
        %679 = vmatprep.subr.mxu0 0.0
        %680 = vmatpush1.msra.mxu0 0.0
        %681 = vmatprep.subr.mxu0 0.0
        %682 = vmatpush1.msra.mxu0 0.0
        %683 = vmatprep.subr.mxu0 0.0
        %684 = vmatpush1.msra.mxu0 0.0
        %685 = vmatprep.subr.mxu0 0.0
        %686 = vmatpush1.msra.mxu0 0.0
        %687 = vmatprep.subr.mxu0 0.0
        %688 = vmatpush1.msra.mxu0 0.0
        %689 = vmatprep.subr.mxu0 0.0
        %690 = vmatpush1.msra.mxu0 0.0
        %691 = vmatprep.subr.mxu0 0.0
        %692 = vmatpush1.msra.mxu0 0.0
        %693 = vmatprep.subr.mxu0 0.0
        %694 = vmatpush1.msra.mxu0 0.0
        %695 = vmatprep.subr.mxu0 0.0
        %696 = vmatpush1.msra.mxu0 0.0
        %697 = vmatprep.subr.mxu0 0.0
        %698 = vmatpush1.msra.mxu0 0.0
        %699 = vmatprep.subr.mxu0 0.0
        %700 = vmatpush1.msra.mxu0 0.0
        %701 = vmatprep.subr.mxu0 0.0
        %702 = vmatpush1.msra.mxu0 0.0
        %703 = vmatprep.subr.mxu0 0.0
        %704 = vmatpush1.msra.mxu0 0.0
        %705 = vmatprep.subr.mxu0 0.0
        %706 = vmatpush1.msra.mxu0 0.0
        %707 = vmatprep.subr.mxu0 0.0
        %708 = vmatpush1.msra.mxu0 0.0
        %709 = vmatprep.subr.mxu0 0.0
        %710 = vmatpush1.msra.mxu0 0.0
        %711 = vmatprep.subr.mxu0 0.0
        %712 = vmatpush1.msra.mxu0 0.0
        %713 = vmatprep.subr.mxu0 0.0
        %714 = vmatpush1.msra.mxu0 0.0
        %715 = vmatprep.subr.mxu0 0.0
        %716 = vmatpush1.msra.mxu0 0.0
        %717 = vmatprep.subr.mxu0 0.0
        %718 = vmatpush1.msra.mxu0 0.0
        %719 = vmatprep.subr.mxu0 0.0
        %720 = vmatpush1.msra.mxu0 0.0
        %721 = vmatprep.subr.mxu0 0.0
        %722 = vmatpush1.msra.mxu0 0.0
        %723 = vmatprep.subr.mxu0 0.0
        %724 = vmatpush1.msra.mxu0 0.0
        %725 = vmatprep.subr.mxu0 0.0
        %726 = vmatpush1.msra.mxu0 0.0
        %727 = vmatprep.subr.mxu0 0.0
        %728 = vmatpush1.msra.mxu0 0.0
        %729 = vmatprep.subr.mxu0 0.0
        %730 = vmatpush1.msra.mxu0 0.0
        %731 = vmatprep.subr.mxu0 0.0
        %732 = vmatpush1.msra.mxu0 0.0
        %733 = vmatprep.subr.mxu0 0.0
        %734 = vmatpush1.msra.mxu0 0.0
        %735 = vmatprep.subr.mxu0 0.0
        %736 = vmatpush1.msra.mxu0 0.0
        %737 = vmatprep.mubr.f32.mxu0 0.0
        %v738 = vand.u32 %v328, 4294901760
        %739 = vmatmul.mubr.f32.gmra.mrb[0].mxu0 %v738
        %v740 = vpop.f32.mrb[0].mxu0
        %v741 = vadd.f32 %v657, %v740
        %v742 = vpop.f32.mrb[0].mxu0
        %v743 = vadd.f32 %v659, %v742
        %744 = vdwg.mxu0
        %v745 = vand.u32 %v317, 4294901760
        %746 = vmatprep.subr.mxu0 %v745
        %v747 = vand.u32 %v316, 4294901760
        %748 = vmatpush1.msra.mxu0 %v747
        %v749 = vand.u32 %v319, 4294901760
        %750 = vmatprep.subr.mxu0 %v749
        %v751 = vand.u32 %v318, 4294901760
        %752 = vmatpush1.msra.mxu0 %v751
        %753 = vmatprep.subr.mxu0 0.0
        %754 = vmatpush1.msra.mxu0 0.0
        %755 = vmatprep.subr.mxu0 0.0
        %756 = vmatpush1.msra.mxu0 0.0
        %757 = vmatprep.subr.mxu0 0.0
        %758 = vmatpush1.msra.mxu0 0.0
        %759 = vmatprep.subr.mxu0 0.0
        %760 = vmatpush1.msra.mxu0 0.0
        %761 = vmatprep.subr.mxu0 0.0
        %762 = vmatpush1.msra.mxu0 0.0
        %763 = vmatprep.subr.mxu0 0.0
        %764 = vmatpush1.msra.mxu0 0.0
        %765 = vmatprep.subr.mxu0 0.0
        %766 = vmatpush1.msra.mxu0 0.0
        %767 = vmatprep.subr.mxu0 0.0
        %768 = vmatpush1.msra.mxu0 0.0
        %769 = vmatprep.subr.mxu0 0.0
        %770 = vmatpush1.msra.mxu0 0.0
        %771 = vmatprep.subr.mxu0 0.0
        %772 = vmatpush1.msra.mxu0 0.0
        %773 = vmatprep.subr.mxu0 0.0
        %774 = vmatpush1.msra.mxu0 0.0
        %775 = vmatprep.subr.mxu0 0.0
        %776 = vmatpush1.msra.mxu0 0.0
        %777 = vmatprep.subr.mxu0 0.0
        %778 = vmatpush1.msra.mxu0 0.0
        %779 = vmatprep.subr.mxu0 0.0
        %780 = vmatpush1.msra.mxu0 0.0
        %781 = vmatprep.subr.mxu0 0.0
        %782 = vmatpush1.msra.mxu0 0.0
        %783 = vmatprep.subr.mxu0 0.0
        %784 = vmatpush1.msra.mxu0 0.0
        %785 = vmatprep.subr.mxu0 0.0
        %786 = vmatpush1.msra.mxu0 0.0
        %787 = vmatprep.subr.mxu0 0.0
        %788 = vmatpush1.msra.mxu0 0.0
        %789 = vmatprep.subr.mxu0 0.0
        %790 = vmatpush1.msra.mxu0 0.0
        %791 = vmatprep.subr.mxu0 0.0
        %792 = vmatpush1.msra.mxu0 0.0
        %793 = vmatprep.subr.mxu0 0.0
        %794 = vmatpush1.msra.mxu0 0.0
        %795 = vmatprep.subr.mxu0 0.0
        %796 = vmatpush1.msra.mxu0 0.0
        %797 = vmatprep.subr.mxu0 0.0
        %798 = vmatpush1.msra.mxu0 0.0
        %799 = vmatprep.subr.mxu0 0.0
        %800 = vmatpush1.msra.mxu0 0.0
        %801 = vmatprep.subr.mxu0 0.0
        %802 = vmatpush1.msra.mxu0 0.0
        %803 = vmatprep.subr.mxu0 0.0
        %804 = vmatpush1.msra.mxu0 0.0
        %805 = vmatprep.subr.mxu0 0.0
        %806 = vmatpush1.msra.mxu0 0.0
        %807 = vmatprep.subr.mxu0 0.0
        %808 = vmatpush1.msra.mxu0 0.0
        %809 = vmatprep.subr.mxu0 0.0
        %810 = vmatpush1.msra.mxu0 0.0
        %811 = vmatprep.subr.mxu0 0.0
        %812 = vmatpush1.msra.mxu0 0.0
        %813 = vmatprep.mubr.f32.mxu0 0.0
        %v814 = vand.u32 %v328, 4294901760
        %815 = vmatmul.mubr.f32.gmra.mrb[0].mxu0 %v814
        %v816 = vpop.f32.mrb[0].mxu0
        %v817 = vadd.f32 %v741, %v816
        %v818 = vpop.f32.mrb[0].mxu0
        %v819 = vadd.f32 %v743, %v818
        %820 = vdwg.mxu0
        %821 = vmatprep.subr.mxu0 0.0
        %v822 = vand.u32 %v308, 4294901760
        %823 = vmatpush1.msra.mxu0 %v822
        %824 = vmatprep.subr.mxu0 0.0
        %v825 = vand.u32 %v314, 4294901760
        %826 = vmatpush1.msra.mxu0 %v825
        %827 = vmatprep.subr.mxu0 0.0
        %828 = vmatpush1.msra.mxu0 0.0
        %829 = vmatprep.subr.mxu0 0.0
        %830 = vmatpush1.msra.mxu0 0.0
        %831 = vmatprep.subr.mxu0 0.0
        %832 = vmatpush1.msra.mxu0 0.0
        %833 = vmatprep.subr.mxu0 0.0
        %834 = vmatpush1.msra.mxu0 0.0
        %835 = vmatprep.subr.mxu0 0.0
        %836 = vmatpush1.msra.mxu0 0.0
        %837 = vmatprep.subr.mxu0 0.0
        %838 = vmatpush1.msra.mxu0 0.0
        %839 = vmatprep.subr.mxu0 0.0
        %840 = vmatpush1.msra.mxu0 0.0
        %841 = vmatprep.subr.mxu0 0.0
        %842 = vmatpush1.msra.mxu0 0.0
        %843 = vmatprep.subr.mxu0 0.0
        %844 = vmatpush1.msra.mxu0 0.0
        %845 = vmatprep.subr.mxu0 0.0
        %846 = vmatpush1.msra.mxu0 0.0
        %847 = vmatprep.subr.mxu0 0.0
        %848 = vmatpush1.msra.mxu0 0.0
        %849 = vmatprep.subr.mxu0 0.0
        %850 = vmatpush1.msra.mxu0 0.0
        %851 = vmatprep.subr.mxu0 0.0
        %852 = vmatpush1.msra.mxu0 0.0
        %853 = vmatprep.subr.mxu0 0.0
        %854 = vmatpush1.msra.mxu0 0.0
        %855 = vmatprep.subr.mxu0 0.0
        %856 = vmatpush1.msra.mxu0 0.0
        %857 = vmatprep.subr.mxu0 0.0
        %858 = vmatpush1.msra.mxu0 0.0
        %859 = vmatprep.subr.mxu0 0.0
        %860 = vmatpush1.msra.mxu0 0.0
        %861 = vmatprep.subr.mxu0 0.0
        %862 = vmatpush1.msra.mxu0 0.0
        %863 = vmatprep.subr.mxu0 0.0
        %864 = vmatpush1.msra.mxu0 0.0
        %865 = vmatprep.subr.mxu0 0.0
        %866 = vmatpush1.msra.mxu0 0.0
        %867 = vmatprep.subr.mxu0 0.0
        %868 = vmatpush1.msra.mxu0 0.0
        %869 = vmatprep.subr.mxu0 0.0
        %870 = vmatpush1.msra.mxu0 0.0
        %871 = vmatprep.subr.mxu0 0.0
        %872 = vmatpush1.msra.mxu0 0.0
        %873 = vmatprep.subr.mxu0 0.0
        %874 = vmatpush1.msra.mxu0 0.0
        %875 = vmatprep.subr.mxu0 0.0
        %876 = vmatpush1.msra.mxu0 0.0
        %877 = vmatprep.subr.mxu0 0.0
        %878 = vmatpush1.msra.mxu0 0.0
        %879 = vmatprep.subr.mxu0 0.0
        %880 = vmatpush1.msra.mxu0 0.0
        %881 = vmatprep.subr.mxu0 0.0
        %882 = vmatpush1.msra.mxu0 0.0
        %883 = vmatprep.subr.mxu0 0.0
        %884 = vmatpush1.msra.mxu0 0.0
        %885 = vmatprep.subr.mxu0 0.0
        %886 = vmatpush1.msra.mxu0 0.0
        %887 = vmatprep.mubr.f32.mxu0 0.0
        %v888 = vand.u32 %v328, 4294901760
        %v889 = vsub.f32 %v328, %v888
        %v890 = vand.u32 %v889, 4294901760
        %v891 = vsub.f32 %v889, %v890
        %v892 = vand.u32 %v891, 4294901760
        %893 = vmatmul.mubr.f32.gmra.mrb[0].mxu0 %v892
        %v894 = vpop.f32.mrb[0].mxu0
        %v895 = vadd.f32 0.0, %v894
        %v896 = vpop.f32.mrb[0].mxu0
        %897 = vdwg.mxu0
        %898 = vmatprep.subr.mxu0 0.0
        %v899 = vand.u32 %v308, 4294901760
        %v900 = vsub.f32 %v308, %v899
        %v901 = vand.u32 %v900, 4294901760
        %v902 = vsub.f32 %v900, %v901
        %v903 = vand.u32 %v902, 4294901760
        %904 = vmatpush1.msra.mxu0 %v903
        %905 = vmatprep.subr.mxu0 0.0
        %v906 = vand.u32 %v314, 4294901760
        %v907 = vsub.f32 %v314, %v906
        %v908 = vand.u32 %v907, 4294901760
        %v909 = vsub.f32 %v907, %v908
        %v910 = vand.u32 %v909, 4294901760
        %911 = vmatpush1.msra.mxu0 %v910
        %912 = vmatprep.subr.mxu0 0.0
        %913 = vmatpush1.msra.mxu0 0.0
        %914 = vmatprep.subr.mxu0 0.0
        %915 = vmatpush1.msra.mxu0 0.0
        %916 = vmatprep.subr.mxu0 0.0
        %917 = vmatpush1.msra.mxu0 0.0
        %918 = vmatprep.subr.mxu0 0.0
        %919 = vmatpush1.msra.mxu0 0.0
        %920 = vmatprep.subr.mxu0 0.0
        %921 = vmatpush1.msra.mxu0 0.0
        %922 = vmatprep.subr.mxu0 0.0
        %923 = vmatpush1.msra.mxu0 0.0
        %924 = vmatprep.subr.mxu0 0.0
        %925 = vmatpush1.msra.mxu0 0.0
        %926 = vmatprep.subr.mxu0 0.0
        %927 = vmatpush1.msra.mxu0 0.0
        %928 = vmatprep.subr.mxu0 0.0
        %929 = vmatpush1.msra.mxu0 0.0
        %930 = vmatprep.subr.mxu0 0.0
        %931 = vmatpush1.msra.mxu0 0.0
        %932 = vmatprep.subr.mxu0 0.0
        %933 = vmatpush1.msra.mxu0 0.0
        %934 = vmatprep.subr.mxu0 0.0
        %935 = vmatpush1.msra.mxu0 0.0
        %936 = vmatprep.subr.mxu0 0.0
        %937 = vmatpush1.msra.mxu0 0.0
        %938 = vmatprep.subr.mxu0 0.0
        %939 = vmatpush1.msra.mxu0 0.0
        %940 = vmatprep.subr.mxu0 0.0
        %941 = vmatpush1.msra.mxu0 0.0
        %942 = vmatprep.subr.mxu0 0.0
        %943 = vmatpush1.msra.mxu0 0.0
        %944 = vmatprep.subr.mxu0 0.0
        %945 = vmatpush1.msra.mxu0 0.0
        %946 = vmatprep.subr.mxu0 0.0
        %947 = vmatpush1.msra.mxu0 0.0
        %948 = vmatprep.subr.mxu0 0.0
        %949 = vmatpush1.msra.mxu0 0.0
        %950 = vmatprep.subr.mxu0 0.0
        %951 = vmatpush1.msra.mxu0 0.0
        %952 = vmatprep.subr.mxu0 0.0
        %953 = vmatpush1.msra.mxu0 0.0
        %954 = vmatprep.subr.mxu0 0.0
        %955 = vmatpush1.msra.mxu0 0.0
        %956 = vmatprep.subr.mxu0 0.0
        %957 = vmatpush1.msra.mxu0 0.0
        %958 = vmatprep.subr.mxu0 0.0
        %959 = vmatpush1.msra.mxu0 0.0
        %960 = vmatprep.subr.mxu0 0.0
        %961 = vmatpush1.msra.mxu0 0.0
        %962 = vmatprep.subr.mxu0 0.0
        %963 = vmatpush1.msra.mxu0 0.0
        %964 = vmatprep.subr.mxu0 0.0
        %965 = vmatpush1.msra.mxu0 0.0
        %966 = vmatprep.subr.mxu0 0.0
        %967 = vmatpush1.msra.mxu0 0.0
        %968 = vmatprep.subr.mxu0 0.0
        %969 = vmatpush1.msra.mxu0 0.0
        %970 = vmatprep.subr.mxu0 0.0
        %971 = vmatpush1.msra.mxu0 0.0
        %972 = vmatprep.mubr.f32.mxu0 0.0
        %v973 = vand.u32 %v328, 4294901760
        %974 = vmatmul.mubr.f32.gmra.mrb[0].mxu0 %v973
        %v975 = vpop.f32.mrb[0].mxu0
        %v976 = vadd.f32 %v895, %v975
        %v977 = vpop.f32.mrb[0].mxu0
        %978 = vdwg.mxu0
        %979 = vmatprep.subr.mxu0 0.0
        %v980 = vand.u32 %v308, 4294901760
        %v981 = vsub.f32 %v308, %v980
        %982 = vmatpush1.msra.mxu0 %v981
        %983 = vmatprep.subr.mxu0 0.0
        %v984 = vand.u32 %v314, 4294901760
        %v985 = vsub.f32 %v314, %v984
        %986 = vmatpush1.msra.mxu0 %v985
        %987 = vmatprep.subr.mxu0 0.0
        %988 = vmatpush1.msra.mxu0 0.0
        %989 = vmatprep.subr.mxu0 0.0
        %990 = vmatpush1.msra.mxu0 0.0
        %991 = vmatprep.subr.mxu0 0.0
        %992 = vmatpush1.msra.mxu0 0.0
        %993 = vmatprep.subr.mxu0 0.0
        %994 = vmatpush1.msra.mxu0 0.0
        %995 = vmatprep.subr.mxu0 0.0
        %996 = vmatpush1.msra.mxu0 0.0
        %997 = vmatprep.subr.mxu0 0.0
        %998 = vmatpush1.msra.mxu0 0.0
        %999 = vmatprep.subr.mxu0 0.0
        %1000 = vmatpush1.msra.mxu0 0.0
        %1001 = vmatprep.subr.mxu0 0.0
        %1002 = vmatpush1.msra.mxu0 0.0
        %1003 = vmatprep.subr.mxu0 0.0
        %1004 = vmatpush1.msra.mxu0 0.0
        %1005 = vmatprep.subr.mxu0 0.0
        %1006 = vmatpush1.msra.mxu0 0.0
        %1007 = vmatprep.subr.mxu0 0.0
        %1008 = vmatpush1.msra.mxu0 0.0
        %1009 = vmatprep.subr.mxu0 0.0
        %1010 = vmatpush1.msra.mxu0 0.0
        %1011 = vmatprep.subr.mxu0 0.0
        %1012 = vmatpush1.msra.mxu0 0.0
        %1013 = vmatprep.subr.mxu0 0.0
        %1014 = vmatpush1.msra.mxu0 0.0
        %1015 = vmatprep.subr.mxu0 0.0
        %1016 = vmatpush1.msra.mxu0 0.0
        %1017 = vmatprep.subr.mxu0 0.0
        %1018 = vmatpush1.msra.mxu0 0.0
        %1019 = vmatprep.subr.mxu0 0.0
        %1020 = vmatpush1.msra.mxu0 0.0
        %1021 = vmatprep.subr.mxu0 0.0
        %1022 = vmatpush1.msra.mxu0 0.0
        %1023 = vmatprep.subr.mxu0 0.0
        %1024 = vmatpush1.msra.mxu0 0.0
        %1025 = vmatprep.subr.mxu0 0.0
        %1026 = vmatpush1.msra.mxu0 0.0
        %1027 = vmatprep.subr.mxu0 0.0
        %1028 = vmatpush1.msra.mxu0 0.0
        %1029 = vmatprep.subr.mxu0 0.0
        %1030 = vmatpush1.msra.mxu0 0.0
        %1031 = vmatprep.subr.mxu0 0.0
        %1032 = vmatpush1.msra.mxu0 0.0
        %1033 = vmatprep.subr.mxu0 0.0
        %1034 = vmatpush1.msra.mxu0 0.0
        %1035 = vmatprep.subr.mxu0 0.0
        %1036 = vmatpush1.msra.mxu0 0.0
        %1037 = vmatprep.subr.mxu0 0.0
        %1038 = vmatpush1.msra.mxu0 0.0
        %1039 = vmatprep.subr.mxu0 0.0
        %1040 = vmatpush1.msra.mxu0 0.0
        %1041 = vmatprep.subr.mxu0 0.0
        %1042 = vmatpush1.msra.mxu0 0.0
        %1043 = vmatprep.subr.mxu0 0.0
        %1044 = vmatpush1.msra.mxu0 0.0
        %1045 = vmatprep.subr.mxu0 0.0
        %1046 = vmatpush1.msra.mxu0 0.0
        %1047 = vmatprep.mubr.f32.mxu0 0.0
        %v1048 = vand.u32 %v328, 4294901760
        %v1049 = vsub.f32 %v328, %v1048
        %1050 = vmatmul.mubr.f32.gmra.mrb[0].mxu0 %v1049
        %v1051 = vpop.f32.mrb[0].mxu0
        %v1052 = vadd.f32 %v976, %v1051
        %v1053 = vpop.f32.mrb[0].mxu0
        %1054 = vdwg.mxu0
        %1055 = vmatprep.subr.mxu0 0.0
        %v1056 = vand.u32 %v308, 4294901760
        %1057 = vmatpush1.msra.mxu0 %v1056
        %1058 = vmatprep.subr.mxu0 0.0
        %v1059 = vand.u32 %v314, 4294901760
        %1060 = vmatpush1.msra.mxu0 %v1059
        %1061 = vmatprep.subr.mxu0 0.0
        %1062 = vmatpush1.msra.mxu0 0.0
        %1063 = vmatprep.subr.mxu0 0.0
        %1064 = vmatpush1.msra.mxu0 0.0
        %1065 = vmatprep.subr.mxu0 0.0
        %1066 = vmatpush1.msra.mxu0 0.0
        %1067 = vmatprep.subr.mxu0 0.0
        %1068 = vmatpush1.msra.mxu0 0.0
        %1069 = vmatprep.subr.mxu0 0.0
        %1070 = vmatpush1.msra.mxu0 0.0
        %1071 = vmatprep.subr.mxu0 0.0
        %1072 = vmatpush1.msra.mxu0 0.0
        %1073 = vmatprep.subr.mxu0 0.0
        %1074 = vmatpush1.msra.mxu0 0.0
        %1075 = vmatprep.subr.mxu0 0.0
        %1076 = vmatpush1.msra.mxu0 0.0
        %1077 = vmatprep.subr.mxu0 0.0
        %1078 = vmatpush1.msra.mxu0 0.0
        %1079 = vmatprep.subr.mxu0 0.0
        %1080 = vmatpush1.msra.mxu0 0.0
        %1081 = vmatprep.subr.mxu0 0.0
        %1082 = vmatpush1.msra.mxu0 0.0
        %1083 = vmatprep.subr.mxu0 0.0
        %1084 = vmatpush1.msra.mxu0 0.0
        %1085 = vmatprep.subr.mxu0 0.0
        %1086 = vmatpush1.msra.mxu0 0.0
        %1087 = vmatprep.subr.mxu0 0.0
        %1088 = vmatpush1.msra.mxu0 0.0
        %1089 = vmatprep.subr.mxu0 0.0
        %1090 = vmatpush1.msra.mxu0 0.0
        %1091 = vmatprep.subr.mxu0 0.0
        %1092 = vmatpush1.msra.mxu0 0.0
        %1093 = vmatprep.subr.mxu0 0.0
        %1094 = vmatpush1.msra.mxu0 0.0
        %1095 = vmatprep.subr.mxu0 0.0
        %1096 = vmatpush1.msra.mxu0 0.0
        %1097 = vmatprep.subr.mxu0 0.0
        %1098 = vmatpush1.msra.mxu0 0.0
        %1099 = vmatprep.subr.mxu0 0.0
        %1100 = vmatpush1.msra.mxu0 0.0
        %1101 = vmatprep.subr.mxu0 0.0
        %1102 = vmatpush1.msra.mxu0 0.0
        %1103 = vmatprep.subr.mxu0 0.0
        %1104 = vmatpush1.msra.mxu0 0.0
        %1105 = vmatprep.subr.mxu0 0.0
        %1106 = vmatpush1.msra.mxu0 0.0
        %1107 = vmatprep.subr.mxu0 0.0
        %1108 = vmatpush1.msra.mxu0 0.0
        %1109 = vmatprep.subr.mxu0 0.0
        %1110 = vmatpush1.msra.mxu0 0.0
        %1111 = vmatprep.subr.mxu0 0.0
        %1112 = vmatpush1.msra.mxu0 0.0
        %1113 = vmatprep.subr.mxu0 0.0
        %1114 = vmatpush1.msra.mxu0 0.0
        %1115 = vmatprep.subr.mxu0 0.0
        %1116 = vmatpush1.msra.mxu0 0.0
        %1117 = vmatprep.subr.mxu0 0.0
        %1118 = vmatpush1.msra.mxu0 0.0
        %1119 = vmatprep.subr.mxu0 0.0
        %1120 = vmatpush1.msra.mxu0 0.0
        %1121 = vmatprep.mubr.f32.mxu0 0.0
        %v1122 = vand.u32 %v328, 4294901760
        %v1123 = vsub.f32 %v328, %v1122
        %v1124 = vand.u32 %v1123, 4294901760
        %1125 = vmatmul.mubr.f32.gmra.mrb[0].mxu0 %v1124
        %v1126 = vpop.f32.mrb[0].mxu0
        %v1127 = vadd.f32 %v1052, %v1126
        %v1128 = vpop.f32.mrb[0].mxu0
        %1129 = vdwg.mxu0
        %1130 = vmatprep.subr.mxu0 0.0
        %v1131 = vand.u32 %v308, 4294901760
        %v1132 = vsub.f32 %v308, %v1131
        %v1133 = vand.u32 %v1132, 4294901760
        %1134 = vmatpush1.msra.mxu0 %v1133
        %1135 = vmatprep.subr.mxu0 0.0
        %v1136 = vand.u32 %v314, 4294901760
        %v1137 = vsub.f32 %v314, %v1136
        %v1138 = vand.u32 %v1137, 4294901760
        %1139 = vmatpush1.msra.mxu0 %v1138
        %1140 = vmatprep.subr.mxu0 0.0
        %1141 = vmatpush1.msra.mxu0 0.0
        %1142 = vmatprep.subr.mxu0 0.0
        %1143 = vmatpush1.msra.mxu0 0.0
        %1144 = vmatprep.subr.mxu0 0.0
        %1145 = vmatpush1.msra.mxu0 0.0
        %1146 = vmatprep.subr.mxu0 0.0
        %1147 = vmatpush1.msra.mxu0 0.0
        %1148 = vmatprep.subr.mxu0 0.0
        %1149 = vmatpush1.msra.mxu0 0.0
        %1150 = vmatprep.subr.mxu0 0.0
        %1151 = vmatpush1.msra.mxu0 0.0
        %1152 = vmatprep.subr.mxu0 0.0
        %1153 = vmatpush1.msra.mxu0 0.0
        %1154 = vmatprep.subr.mxu0 0.0
        %1155 = vmatpush1.msra.mxu0 0.0
        %1156 = vmatprep.subr.mxu0 0.0
        %1157 = vmatpush1.msra.mxu0 0.0
        %1158 = vmatprep.subr.mxu0 0.0
        %1159 = vmatpush1.msra.mxu0 0.0
        %1160 = vmatprep.subr.mxu0 0.0
        %1161 = vmatpush1.msra.mxu0 0.0
        %1162 = vmatprep.subr.mxu0 0.0
        %1163 = vmatpush1.msra.mxu0 0.0
        %1164 = vmatprep.subr.mxu0 0.0
        %1165 = vmatpush1.msra.mxu0 0.0
        %1166 = vmatprep.subr.mxu0 0.0
        %1167 = vmatpush1.msra.mxu0 0.0
        %1168 = vmatprep.subr.mxu0 0.0
        %1169 = vmatpush1.msra.mxu0 0.0
        %1170 = vmatprep.subr.mxu0 0.0
        %1171 = vmatpush1.msra.mxu0 0.0
        %1172 = vmatprep.subr.mxu0 0.0
        %1173 = vmatpush1.msra.mxu0 0.0
        %1174 = vmatprep.subr.mxu0 0.0
        %1175 = vmatpush1.msra.mxu0 0.0
        %1176 = vmatprep.subr.mxu0 0.0
        %1177 = vmatpush1.msra.mxu0 0.0
        %1178 = vmatprep.subr.mxu0 0.0
        %1179 = vmatpush1.msra.mxu0 0.0
        %1180 = vmatprep.subr.mxu0 0.0
        %1181 = vmatpush1.msra.mxu0 0.0
        %1182 = vmatprep.subr.mxu0 0.0
        %1183 = vmatpush1.msra.mxu0 0.0
        %1184 = vmatprep.subr.mxu0 0.0
        %1185 = vmatpush1.msra.mxu0 0.0
        %1186 = vmatprep.subr.mxu0 0.0
        %1187 = vmatpush1.msra.mxu0 0.0
        %1188 = vmatprep.subr.mxu0 0.0
        %1189 = vmatpush1.msra.mxu0 0.0
        %1190 = vmatprep.subr.mxu0 0.0
        %1191 = vmatpush1.msra.mxu0 0.0
        %1192 = vmatprep.subr.mxu0 0.0
        %1193 = vmatpush1.msra.mxu0 0.0
        %1194 = vmatprep.subr.mxu0 0.0
        %1195 = vmatpush1.msra.mxu0 0.0
        %1196 = vmatprep.subr.mxu0 0.0
        %1197 = vmatpush1.msra.mxu0 0.0
        %1198 = vmatprep.subr.mxu0 0.0
        %1199 = vmatpush1.msra.mxu0 0.0
        %1200 = vmatprep.mubr.f32.mxu0 0.0
        %v1201 = vand.u32 %v328, 4294901760
        %1202 = vmatmul.mubr.f32.gmra.mrb[0].mxu0 %v1201
        %v1203 = vpop.f32.mrb[0].mxu0
        %v1204 = vadd.f32 %v1127, %v1203
        %v1205 = vpop.f32.mrb[0].mxu0
        %1206 = vdwg.mxu0
        %1207 = vmatprep.subr.mxu0 0.0
        %v1208 = vand.u32 %v308, 4294901760
        %1209 = vmatpush1.msra.mxu0 %v1208
        %1210 = vmatprep.subr.mxu0 0.0
        %v1211 = vand.u32 %v314, 4294901760
        %1212 = vmatpush1.msra.mxu0 %v1211
        %1213 = vmatprep.subr.mxu0 0.0
        %1214 = vmatpush1.msra.mxu0 0.0
        %1215 = vmatprep.subr.mxu0 0.0
        %1216 = vmatpush1.msra.mxu0 0.0
        %1217 = vmatprep.subr.mxu0 0.0
        %1218 = vmatpush1.msra.mxu0 0.0
        %1219 = vmatprep.subr.mxu0 0.0
        %1220 = vmatpush1.msra.mxu0 0.0
        %1221 = vmatprep.subr.mxu0 0.0
        %1222 = vmatpush1.msra.mxu0 0.0
        %1223 = vmatprep.subr.mxu0 0.0
        %1224 = vmatpush1.msra.mxu0 0.0
        %1225 = vmatprep.subr.mxu0 0.0
        %1226 = vmatpush1.msra.mxu0 0.0
        %1227 = vmatprep.subr.mxu0 0.0
        %1228 = vmatpush1.msra.mxu0 0.0
        %1229 = vmatprep.subr.mxu0 0.0
        %1230 = vmatpush1.msra.mxu0 0.0
        %1231 = vmatprep.subr.mxu0 0.0
        %1232 = vmatpush1.msra.mxu0 0.0
        %1233 = vmatprep.subr.mxu0 0.0
        %1234 = vmatpush1.msra.mxu0 0.0
        %1235 = vmatprep.subr.mxu0 0.0
        %1236 = vmatpush1.msra.mxu0 0.0
        %1237 = vmatprep.subr.mxu0 0.0
        %1238 = vmatpush1.msra.mxu0 0.0
        %1239 = vmatprep.subr.mxu0 0.0
        %1240 = vmatpush1.msra.mxu0 0.0
        %1241 = vmatprep.subr.mxu0 0.0
        %1242 = vmatpush1.msra.mxu0 0.0
        %1243 = vmatprep.subr.mxu0 0.0
        %1244 = vmatpush1.msra.mxu0 0.0
        %1245 = vmatprep.subr.mxu0 0.0
        %1246 = vmatpush1.msra.mxu0 0.0
        %1247 = vmatprep.subr.mxu0 0.0
        %1248 = vmatpush1.msra.mxu0 0.0
        %1249 = vmatprep.subr.mxu0 0.0
        %1250 = vmatpush1.msra.mxu0 0.0
        %1251 = vmatprep.subr.mxu0 0.0
        %1252 = vmatpush1.msra.mxu0 0.0
        %1253 = vmatprep.subr.mxu0 0.0
        %1254 = vmatpush1.msra.mxu0 0.0
        %1255 = vmatprep.subr.mxu0 0.0
        %1256 = vmatpush1.msra.mxu0 0.0
        %1257 = vmatprep.subr.mxu0 0.0
        %1258 = vmatpush1.msra.mxu0 0.0
        %1259 = vmatprep.subr.mxu0 0.0
        %1260 = vmatpush1.msra.mxu0 0.0
        %1261 = vmatprep.subr.mxu0 0.0
        %1262 = vmatpush1.msra.mxu0 0.0
        %1263 = vmatprep.subr.mxu0 0.0
        %1264 = vmatpush1.msra.mxu0 0.0
        %1265 = vmatprep.subr.mxu0 0.0
        %1266 = vmatpush1.msra.mxu0 0.0
        %1267 = vmatprep.subr.mxu0 0.0
        %1268 = vmatpush1.msra.mxu0 0.0
        %1269 = vmatprep.subr.mxu0 0.0
        %1270 = vmatpush1.msra.mxu0 0.0
        %1271 = vmatprep.subr.mxu0 0.0
        %1272 = vmatpush1.msra.mxu0 0.0
        %1273 = vmatprep.mubr.f32.mxu0 0.0
        %v1274 = vand.u32 %v328, 4294901760
        %1275 = vmatmul.mubr.f32.gmra.mrb[0].mxu0 %v1274
        %v1276 = vpop.f32.mrb[0].mxu0
        %v1277 = vadd.f32 %v1204, %v1276
        %v1278 = vpop.f32.mrb[0].mxu0
        %1279 = vdwg.mxu0
        %v1281 = vsel %vm326, %v294, 0
        %v1283 = vand.u32 %v289, 4294901760
        %1284 = vmatprep.subr.mxu0 %v1283
        %v1285 = vand.u32 %v288, 4294901760
        %1286 = vmatpush1.msra.mxu0 %v1285
        %v1287 = vand.u32 %v292, 4294901760
        %1288 = vmatprep.subr.mxu0 %v1287
        %v1289 = vand.u32 %v291, 4294901760
        %1290 = vmatpush1.msra.mxu0 %v1289
        %1291 = vmatprep.subr.mxu0 0.0
        %1292 = vmatpush1.msra.mxu0 0.0
        %1293 = vmatprep.subr.mxu0 0.0
        %1294 = vmatpush1.msra.mxu0 0.0
        %1295 = vmatprep.subr.mxu0 0.0
        %1296 = vmatpush1.msra.mxu0 0.0
        %1297 = vmatprep.subr.mxu0 0.0
        %1298 = vmatpush1.msra.mxu0 0.0
        %1299 = vmatprep.subr.mxu0 0.0
        %1300 = vmatpush1.msra.mxu0 0.0
        %1301 = vmatprep.subr.mxu0 0.0
        %1302 = vmatpush1.msra.mxu0 0.0
        %1303 = vmatprep.subr.mxu0 0.0
        %1304 = vmatpush1.msra.mxu0 0.0
        %1305 = vmatprep.subr.mxu0 0.0
        %1306 = vmatpush1.msra.mxu0 0.0
        %1307 = vmatprep.subr.mxu0 0.0
        %1308 = vmatpush1.msra.mxu0 0.0
        %1309 = vmatprep.subr.mxu0 0.0
        %1310 = vmatpush1.msra.mxu0 0.0
        %1311 = vmatprep.subr.mxu0 0.0
        %1312 = vmatpush1.msra.mxu0 0.0
        %1313 = vmatprep.subr.mxu0 0.0
        %1314 = vmatpush1.msra.mxu0 0.0
        %1315 = vmatprep.subr.mxu0 0.0
        %1316 = vmatpush1.msra.mxu0 0.0
        %1317 = vmatprep.subr.mxu0 0.0
        %1318 = vmatpush1.msra.mxu0 0.0
        %1319 = vmatprep.subr.mxu0 0.0
        %1320 = vmatpush1.msra.mxu0 0.0
        %1321 = vmatprep.subr.mxu0 0.0
        %1322 = vmatpush1.msra.mxu0 0.0
        %1323 = vmatprep.subr.mxu0 0.0
        %1324 = vmatpush1.msra.mxu0 0.0
        %1325 = vmatprep.subr.mxu0 0.0
        %1326 = vmatpush1.msra.mxu0 0.0
        %1327 = vmatprep.subr.mxu0 0.0
        %1328 = vmatpush1.msra.mxu0 0.0
        %1329 = vmatprep.subr.mxu0 0.0
        %1330 = vmatpush1.msra.mxu0 0.0
        %1331 = vmatprep.subr.mxu0 0.0
        %1332 = vmatpush1.msra.mxu0 0.0
        %1333 = vmatprep.subr.mxu0 0.0
        %1334 = vmatpush1.msra.mxu0 0.0
        %1335 = vmatprep.subr.mxu0 0.0
        %1336 = vmatpush1.msra.mxu0 0.0
        %1337 = vmatprep.subr.mxu0 0.0
        %1338 = vmatpush1.msra.mxu0 0.0
        %1339 = vmatprep.subr.mxu0 0.0
        %1340 = vmatpush1.msra.mxu0 0.0
        %1341 = vmatprep.subr.mxu0 0.0
        %1342 = vmatpush1.msra.mxu0 0.0
        %1343 = vmatprep.subr.mxu0 0.0
        %1344 = vmatpush1.msra.mxu0 0.0
        %1345 = vmatprep.subr.mxu0 0.0
        %1346 = vmatpush1.msra.mxu0 0.0
        %1347 = vmatprep.subr.mxu0 0.0
        %1348 = vmatpush1.msra.mxu0 0.0
        %1349 = vmatprep.subr.mxu0 0.0
        %1350 = vmatpush1.msra.mxu0 0.0
        %1351 = vmatprep.mubr.f32.mxu0 0.0
        %v1352 = vand.u32 %v1281, 4294901760
        %v1353 = vsub.f32 %v1281, %v1352
        %v1354 = vand.u32 %v1353, 4294901760
        %v1355 = vsub.f32 %v1353, %v1354
        %v1356 = vand.u32 %v1355, 4294901760
        %1357 = vmatmul.mubr.f32.gmra.mrb[0].mxu0 %v1356
        %v1358 = vpop.f32.mrb[0].mxu0
        %v1359 = vadd.f32 %v817, %v1358
        %v1360 = vpop.f32.mrb[0].mxu0
        %v1361 = vadd.f32 %v819, %v1360
        %1362 = vdwg.mxu0
        %v1363 = vand.u32 %v289, 4294901760
        %v1364 = vsub.f32 %v289, %v1363
        %v1365 = vand.u32 %v1364, 4294901760
        %v1366 = vsub.f32 %v1364, %v1365
        %v1367 = vand.u32 %v1366, 4294901760
        %1368 = vmatprep.subr.mxu0 %v1367
        %v1369 = vand.u32 %v288, 4294901760
        %v1370 = vsub.f32 %v288, %v1369
        %v1371 = vand.u32 %v1370, 4294901760
        %v1372 = vsub.f32 %v1370, %v1371
        %v1373 = vand.u32 %v1372, 4294901760
        %1374 = vmatpush1.msra.mxu0 %v1373
        %v1375 = vand.u32 %v292, 4294901760
        %v1376 = vsub.f32 %v292, %v1375
        %v1377 = vand.u32 %v1376, 4294901760
        %v1378 = vsub.f32 %v1376, %v1377
        %v1379 = vand.u32 %v1378, 4294901760
        %1380 = vmatprep.subr.mxu0 %v1379
        %v1381 = vand.u32 %v291, 4294901760
        %v1382 = vsub.f32 %v291, %v1381
        %v1383 = vand.u32 %v1382, 4294901760
        %v1384 = vsub.f32 %v1382, %v1383
        %v1385 = vand.u32 %v1384, 4294901760
        %1386 = vmatpush1.msra.mxu0 %v1385
        %1387 = vmatprep.subr.mxu0 0.0
        %1388 = vmatpush1.msra.mxu0 0.0
        %1389 = vmatprep.subr.mxu0 0.0
        %1390 = vmatpush1.msra.mxu0 0.0
        %1391 = vmatprep.subr.mxu0 0.0
        %1392 = vmatpush1.msra.mxu0 0.0
        %1393 = vmatprep.subr.mxu0 0.0
        %1394 = vmatpush1.msra.mxu0 0.0
        %1395 = vmatprep.subr.mxu0 0.0
        %1396 = vmatpush1.msra.mxu0 0.0
        %1397 = vmatprep.subr.mxu0 0.0
        %1398 = vmatpush1.msra.mxu0 0.0
        %1399 = vmatprep.subr.mxu0 0.0
        %1400 = vmatpush1.msra.mxu0 0.0
        %1401 = vmatprep.subr.mxu0 0.0
        %1402 = vmatpush1.msra.mxu0 0.0
        %1403 = vmatprep.subr.mxu0 0.0
        %1404 = vmatpush1.msra.mxu0 0.0
        %1405 = vmatprep.subr.mxu0 0.0
        %1406 = vmatpush1.msra.mxu0 0.0
        %1407 = vmatprep.subr.mxu0 0.0
        %1408 = vmatpush1.msra.mxu0 0.0
        %1409 = vmatprep.subr.mxu0 0.0
        %1410 = vmatpush1.msra.mxu0 0.0
        %1411 = vmatprep.subr.mxu0 0.0
        %1412 = vmatpush1.msra.mxu0 0.0
        %1413 = vmatprep.subr.mxu0 0.0
        %1414 = vmatpush1.msra.mxu0 0.0
        %1415 = vmatprep.subr.mxu0 0.0
        %1416 = vmatpush1.msra.mxu0 0.0
        %1417 = vmatprep.subr.mxu0 0.0
        %1418 = vmatpush1.msra.mxu0 0.0
        %1419 = vmatprep.subr.mxu0 0.0
        %1420 = vmatpush1.msra.mxu0 0.0
        %1421 = vmatprep.subr.mxu0 0.0
        %1422 = vmatpush1.msra.mxu0 0.0
        %1423 = vmatprep.subr.mxu0 0.0
        %1424 = vmatpush1.msra.mxu0 0.0
        %1425 = vmatprep.subr.mxu0 0.0
        %1426 = vmatpush1.msra.mxu0 0.0
        %1427 = vmatprep.subr.mxu0 0.0
        %1428 = vmatpush1.msra.mxu0 0.0
        %1429 = vmatprep.subr.mxu0 0.0
        %1430 = vmatpush1.msra.mxu0 0.0
        %1431 = vmatprep.subr.mxu0 0.0
        %1432 = vmatpush1.msra.mxu0 0.0
        %1433 = vmatprep.subr.mxu0 0.0
        %1434 = vmatpush1.msra.mxu0 0.0
        %1435 = vmatprep.subr.mxu0 0.0
        %1436 = vmatpush1.msra.mxu0 0.0
        %1437 = vmatprep.subr.mxu0 0.0
        %1438 = vmatpush1.msra.mxu0 0.0
        %1439 = vmatprep.subr.mxu0 0.0
        %1440 = vmatpush1.msra.mxu0 0.0
        %1441 = vmatprep.subr.mxu0 0.0
        %1442 = vmatpush1.msra.mxu0 0.0
        %1443 = vmatprep.subr.mxu0 0.0
        %1444 = vmatpush1.msra.mxu0 0.0
        %1445 = vmatprep.subr.mxu0 0.0
        %1446 = vmatpush1.msra.mxu0 0.0
        %1447 = vmatprep.mubr.f32.mxu0 0.0
        %v1448 = vand.u32 %v1281, 4294901760
        %1449 = vmatmul.mubr.f32.gmra.mrb[0].mxu0 %v1448
        %v1450 = vpop.f32.mrb[0].mxu0
        %v1451 = vadd.f32 %v1359, %v1450
        %v1452 = vpop.f32.mrb[0].mxu0
        %v1453 = vadd.f32 %v1361, %v1452
        %1454 = vdwg.mxu0
        %v1455 = vand.u32 %v289, 4294901760
        %v1456 = vsub.f32 %v289, %v1455
        %1457 = vmatprep.subr.mxu0 %v1456
        %v1458 = vand.u32 %v288, 4294901760
        %v1459 = vsub.f32 %v288, %v1458
        %1460 = vmatpush1.msra.mxu0 %v1459
        %v1461 = vand.u32 %v292, 4294901760
        %v1462 = vsub.f32 %v292, %v1461
        %1463 = vmatprep.subr.mxu0 %v1462
        %v1464 = vand.u32 %v291, 4294901760
        %v1465 = vsub.f32 %v291, %v1464
        %1466 = vmatpush1.msra.mxu0 %v1465
        %1467 = vmatprep.subr.mxu0 0.0
        %1468 = vmatpush1.msra.mxu0 0.0
        %1469 = vmatprep.subr.mxu0 0.0
        %1470 = vmatpush1.msra.mxu0 0.0
        %1471 = vmatprep.subr.mxu0 0.0
        %1472 = vmatpush1.msra.mxu0 0.0
        %1473 = vmatprep.subr.mxu0 0.0
        %1474 = vmatpush1.msra.mxu0 0.0
        %1475 = vmatprep.subr.mxu0 0.0
        %1476 = vmatpush1.msra.mxu0 0.0
        %1477 = vmatprep.subr.mxu0 0.0
        %1478 = vmatpush1.msra.mxu0 0.0
        %1479 = vmatprep.subr.mxu0 0.0
        %1480 = vmatpush1.msra.mxu0 0.0
        %1481 = vmatprep.subr.mxu0 0.0
        %1482 = vmatpush1.msra.mxu0 0.0
        %1483 = vmatprep.subr.mxu0 0.0
        %1484 = vmatpush1.msra.mxu0 0.0
        %1485 = vmatprep.subr.mxu0 0.0
        %1486 = vmatpush1.msra.mxu0 0.0
        %1487 = vmatprep.subr.mxu0 0.0
        %1488 = vmatpush1.msra.mxu0 0.0
        %1489 = vmatprep.subr.mxu0 0.0
        %1490 = vmatpush1.msra.mxu0 0.0
        %1491 = vmatprep.subr.mxu0 0.0
        %1492 = vmatpush1.msra.mxu0 0.0
        %1493 = vmatprep.subr.mxu0 0.0
        %1494 = vmatpush1.msra.mxu0 0.0
        %1495 = vmatprep.subr.mxu0 0.0
        %1496 = vmatpush1.msra.mxu0 0.0
        %1497 = vmatprep.subr.mxu0 0.0
        %1498 = vmatpush1.msra.mxu0 0.0
        %1499 = vmatprep.subr.mxu0 0.0
        %1500 = vmatpush1.msra.mxu0 0.0
        %1501 = vmatprep.subr.mxu0 0.0
        %1502 = vmatpush1.msra.mxu0 0.0
        %1503 = vmatprep.subr.mxu0 0.0
        %1504 = vmatpush1.msra.mxu0 0.0
        %1505 = vmatprep.subr.mxu0 0.0
        %1506 = vmatpush1.msra.mxu0 0.0
        %1507 = vmatprep.subr.mxu0 0.0
        %1508 = vmatpush1.msra.mxu0 0.0
        %1509 = vmatprep.subr.mxu0 0.0
        %1510 = vmatpush1.msra.mxu0 0.0
        %1511 = vmatprep.subr.mxu0 0.0
        %1512 = vmatpush1.msra.mxu0 0.0
        %1513 = vmatprep.subr.mxu0 0.0
        %1514 = vmatpush1.msra.mxu0 0.0
        %1515 = vmatprep.subr.mxu0 0.0
        %1516 = vmatpush1.msra.mxu0 0.0
        %1517 = vmatprep.subr.mxu0 0.0
        %1518 = vmatpush1.msra.mxu0 0.0
        %1519 = vmatprep.subr.mxu0 0.0
        %1520 = vmatpush1.msra.mxu0 0.0
        %1521 = vmatprep.subr.mxu0 0.0
        %1522 = vmatpush1.msra.mxu0 0.0
        %1523 = vmatprep.subr.mxu0 0.0
        %1524 = vmatpush1.msra.mxu0 0.0
        %1525 = vmatprep.subr.mxu0 0.0
        %1526 = vmatpush1.msra.mxu0 0.0
        %1527 = vmatprep.mubr.f32.mxu0 0.0
        %v1528 = vand.u32 %v1281, 4294901760
        %v1529 = vsub.f32 %v1281, %v1528
        %1530 = vmatmul.mubr.f32.gmra.mrb[0].mxu0 %v1529
        %v1531 = vpop.f32.mrb[0].mxu0
        %v1532 = vadd.f32 %v1451, %v1531
        %v1533 = vpop.f32.mrb[0].mxu0
        %v1534 = vadd.f32 %v1453, %v1533
        %1535 = vdwg.mxu0
        %v1536 = vand.u32 %v289, 4294901760
        %1537 = vmatprep.subr.mxu0 %v1536
        %v1538 = vand.u32 %v288, 4294901760
        %1539 = vmatpush1.msra.mxu0 %v1538
        %v1540 = vand.u32 %v292, 4294901760
        %1541 = vmatprep.subr.mxu0 %v1540
        %v1542 = vand.u32 %v291, 4294901760
        %1543 = vmatpush1.msra.mxu0 %v1542
        %1544 = vmatprep.subr.mxu0 0.0
        %1545 = vmatpush1.msra.mxu0 0.0
        %1546 = vmatprep.subr.mxu0 0.0
        %1547 = vmatpush1.msra.mxu0 0.0
        %1548 = vmatprep.subr.mxu0 0.0
        %1549 = vmatpush1.msra.mxu0 0.0
        %1550 = vmatprep.subr.mxu0 0.0
        %1551 = vmatpush1.msra.mxu0 0.0
        %1552 = vmatprep.subr.mxu0 0.0
        %1553 = vmatpush1.msra.mxu0 0.0
        %1554 = vmatprep.subr.mxu0 0.0
        %1555 = vmatpush1.msra.mxu0 0.0
        %1556 = vmatprep.subr.mxu0 0.0
        %1557 = vmatpush1.msra.mxu0 0.0
        %1558 = vmatprep.subr.mxu0 0.0
        %1559 = vmatpush1.msra.mxu0 0.0
        %1560 = vmatprep.subr.mxu0 0.0
        %1561 = vmatpush1.msra.mxu0 0.0
        %1562 = vmatprep.subr.mxu0 0.0
        %1563 = vmatpush1.msra.mxu0 0.0
        %1564 = vmatprep.subr.mxu0 0.0
        %1565 = vmatpush1.msra.mxu0 0.0
        %1566 = vmatprep.subr.mxu0 0.0
        %1567 = vmatpush1.msra.mxu0 0.0
        %1568 = vmatprep.subr.mxu0 0.0
        %1569 = vmatpush1.msra.mxu0 0.0
        %1570 = vmatprep.subr.mxu0 0.0
        %1571 = vmatpush1.msra.mxu0 0.0
        %1572 = vmatprep.subr.mxu0 0.0
        %1573 = vmatpush1.msra.mxu0 0.0
        %1574 = vmatprep.subr.mxu0 0.0
        %1575 = vmatpush1.msra.mxu0 0.0
        %1576 = vmatprep.subr.mxu0 0.0
        %1577 = vmatpush1.msra.mxu0 0.0
        %1578 = vmatprep.subr.mxu0 0.0
        %1579 = vmatpush1.msra.mxu0 0.0
        %1580 = vmatprep.subr.mxu0 0.0
        %1581 = vmatpush1.msra.mxu0 0.0
        %1582 = vmatprep.subr.mxu0 0.0
        %1583 = vmatpush1.msra.mxu0 0.0
        %1584 = vmatprep.subr.mxu0 0.0
        %1585 = vmatpush1.msra.mxu0 0.0
        %1586 = vmatprep.subr.mxu0 0.0
        %1587 = vmatpush1.msra.mxu0 0.0
        %1588 = vmatprep.subr.mxu0 0.0
        %1589 = vmatpush1.msra.mxu0 0.0
        %1590 = vmatprep.subr.mxu0 0.0
        %1591 = vmatpush1.msra.mxu0 0.0
        %1592 = vmatprep.subr.mxu0 0.0
        %1593 = vmatpush1.msra.mxu0 0.0
        %1594 = vmatprep.subr.mxu0 0.0
        %1595 = vmatpush1.msra.mxu0 0.0
        %1596 = vmatprep.subr.mxu0 0.0
        %1597 = vmatpush1.msra.mxu0 0.0
        %1598 = vmatprep.subr.mxu0 0.0
        %1599 = vmatpush1.msra.mxu0 0.0
        %1600 = vmatprep.subr.mxu0 0.0
        %1601 = vmatpush1.msra.mxu0 0.0
        %1602 = vmatprep.subr.mxu0 0.0
        %1603 = vmatpush1.msra.mxu0 0.0
        %1604 = vmatprep.mubr.f32.mxu0 0.0
        %v1605 = vand.u32 %v1281, 4294901760
        %v1606 = vsub.f32 %v1281, %v1605
        %v1607 = vand.u32 %v1606, 4294901760
        %1608 = vmatmul.mubr.f32.gmra.mrb[0].mxu0 %v1607
        %v1609 = vpop.f32.mrb[0].mxu0
        %v1610 = vadd.f32 %v1532, %v1609
        %v1611 = vpop.f32.mrb[0].mxu0
        %v1612 = vadd.f32 %v1534, %v1611
        %1613 = vdwg.mxu0
        %v1614 = vand.u32 %v289, 4294901760
        %v1615 = vsub.f32 %v289, %v1614
        %v1616 = vand.u32 %v1615, 4294901760
        %1617 = vmatprep.subr.mxu0 %v1616
        %v1618 = vand.u32 %v288, 4294901760
        %v1619 = vsub.f32 %v288, %v1618
        %v1620 = vand.u32 %v1619, 4294901760
        %1621 = vmatpush1.msra.mxu0 %v1620
        %v1622 = vand.u32 %v292, 4294901760
        %v1623 = vsub.f32 %v292, %v1622
        %v1624 = vand.u32 %v1623, 4294901760
        %1625 = vmatprep.subr.mxu0 %v1624
        %v1626 = vand.u32 %v291, 4294901760
        %v1627 = vsub.f32 %v291, %v1626
        %v1628 = vand.u32 %v1627, 4294901760
        %1629 = vmatpush1.msra.mxu0 %v1628
        %1630 = vmatprep.subr.mxu0 0.0
        %1631 = vmatpush1.msra.mxu0 0.0
        %1632 = vmatprep.subr.mxu0 0.0
        %1633 = vmatpush1.msra.mxu0 0.0
        %1634 = vmatprep.subr.mxu0 0.0
        %1635 = vmatpush1.msra.mxu0 0.0
        %1636 = vmatprep.subr.mxu0 0.0
        %1637 = vmatpush1.msra.mxu0 0.0
        %1638 = vmatprep.subr.mxu0 0.0
        %1639 = vmatpush1.msra.mxu0 0.0
        %1640 = vmatprep.subr.mxu0 0.0
        %1641 = vmatpush1.msra.mxu0 0.0
        %1642 = vmatprep.subr.mxu0 0.0
        %1643 = vmatpush1.msra.mxu0 0.0
        %1644 = vmatprep.subr.mxu0 0.0
        %1645 = vmatpush1.msra.mxu0 0.0
        %1646 = vmatprep.subr.mxu0 0.0
        %1647 = vmatpush1.msra.mxu0 0.0
        %1648 = vmatprep.subr.mxu0 0.0
        %1649 = vmatpush1.msra.mxu0 0.0
        %1650 = vmatprep.subr.mxu0 0.0
        %1651 = vmatpush1.msra.mxu0 0.0
        %1652 = vmatprep.subr.mxu0 0.0
        %1653 = vmatpush1.msra.mxu0 0.0
        %1654 = vmatprep.subr.mxu0 0.0
        %1655 = vmatpush1.msra.mxu0 0.0
        %1656 = vmatprep.subr.mxu0 0.0
        %1657 = vmatpush1.msra.mxu0 0.0
        %1658 = vmatprep.subr.mxu0 0.0
        %1659 = vmatpush1.msra.mxu0 0.0
        %1660 = vmatprep.subr.mxu0 0.0
        %1661 = vmatpush1.msra.mxu0 0.0
        %1662 = vmatprep.subr.mxu0 0.0
        %1663 = vmatpush1.msra.mxu0 0.0
        %1664 = vmatprep.subr.mxu0 0.0
        %1665 = vmatpush1.msra.mxu0 0.0
        %1666 = vmatprep.subr.mxu0 0.0
        %1667 = vmatpush1.msra.mxu0 0.0
        %1668 = vmatprep.subr.mxu0 0.0
        %1669 = vmatpush1.msra.mxu0 0.0
        %1670 = vmatprep.subr.mxu0 0.0
        %1671 = vmatpush1.msra.mxu0 0.0
        %1672 = vmatprep.subr.mxu0 0.0
        %1673 = vmatpush1.msra.mxu0 0.0
        %1674 = vmatprep.subr.mxu0 0.0
        %1675 = vmatpush1.msra.mxu0 0.0
        %1676 = vmatprep.subr.mxu0 0.0
        %1677 = vmatpush1.msra.mxu0 0.0
        %1678 = vmatprep.subr.mxu0 0.0
        %1679 = vmatpush1.msra.mxu0 0.0
        %1680 = vmatprep.subr.mxu0 0.0
        %1681 = vmatpush1.msra.mxu0 0.0
        %1682 = vmatprep.subr.mxu0 0.0
        %1683 = vmatpush1.msra.mxu0 0.0
        %1684 = vmatprep.subr.mxu0 0.0
        %1685 = vmatpush1.msra.mxu0 0.0
        %1686 = vmatprep.subr.mxu0 0.0
        %1687 = vmatpush1.msra.mxu0 0.0
        %1688 = vmatprep.subr.mxu0 0.0
        %1689 = vmatpush1.msra.mxu0 0.0
        %1690 = vmatprep.mubr.f32.mxu0 0.0
        %v1691 = vand.u32 %v1281, 4294901760
        %1692 = vmatmul.mubr.f32.gmra.mrb[0].mxu0 %v1691
        %v1693 = vpop.f32.mrb[0].mxu0
        %v1694 = vadd.f32 %v1610, %v1693
        %v1695 = vpop.f32.mrb[0].mxu0
        %v1696 = vadd.f32 %v1612, %v1695
        %1697 = vdwg.mxu0
        %v1698 = vand.u32 %v289, 4294901760
        %1699 = vmatprep.subr.mxu0 %v1698
        %v1700 = vand.u32 %v288, 4294901760
        %1701 = vmatpush1.msra.mxu0 %v1700
        %v1702 = vand.u32 %v292, 4294901760
        %1703 = vmatprep.subr.mxu0 %v1702
        %v1704 = vand.u32 %v291, 4294901760
        %1705 = vmatpush1.msra.mxu0 %v1704
        %1706 = vmatprep.subr.mxu0 0.0
        %1707 = vmatpush1.msra.mxu0 0.0
        %1708 = vmatprep.subr.mxu0 0.0
        %1709 = vmatpush1.msra.mxu0 0.0
        %1710 = vmatprep.subr.mxu0 0.0
        %1711 = vmatpush1.msra.mxu0 0.0
        %1712 = vmatprep.subr.mxu0 0.0
        %1713 = vmatpush1.msra.mxu0 0.0
        %1714 = vmatprep.subr.mxu0 0.0
        %1715 = vmatpush1.msra.mxu0 0.0
        %1716 = vmatprep.subr.mxu0 0.0
        %1717 = vmatpush1.msra.mxu0 0.0
        %1718 = vmatprep.subr.mxu0 0.0
        %1719 = vmatpush1.msra.mxu0 0.0
        %1720 = vmatprep.subr.mxu0 0.0
        %1721 = vmatpush1.msra.mxu0 0.0
        %1722 = vmatprep.subr.mxu0 0.0
        %1723 = vmatpush1.msra.mxu0 0.0
        %1724 = vmatprep.subr.mxu0 0.0
        %1725 = vmatpush1.msra.mxu0 0.0
        %1726 = vmatprep.subr.mxu0 0.0
        %1727 = vmatpush1.msra.mxu0 0.0
        %1728 = vmatprep.subr.mxu0 0.0
        %1729 = vmatpush1.msra.mxu0 0.0
        %1730 = vmatprep.subr.mxu0 0.0
        %1731 = vmatpush1.msra.mxu0 0.0
        %1732 = vmatprep.subr.mxu0 0.0
        %1733 = vmatpush1.msra.mxu0 0.0
        %1734 = vmatprep.subr.mxu0 0.0
        %1735 = vmatpush1.msra.mxu0 0.0
        %1736 = vmatprep.subr.mxu0 0.0
        %1737 = vmatpush1.msra.mxu0 0.0
        %1738 = vmatprep.subr.mxu0 0.0
        %1739 = vmatpush1.msra.mxu0 0.0
        %1740 = vmatprep.subr.mxu0 0.0
        %1741 = vmatpush1.msra.mxu0 0.0
        %1742 = vmatprep.subr.mxu0 0.0
        %1743 = vmatpush1.msra.mxu0 0.0
        %1744 = vmatprep.subr.mxu0 0.0
        %1745 = vmatpush1.msra.mxu0 0.0
        %1746 = vmatprep.subr.mxu0 0.0
        %1747 = vmatpush1.msra.mxu0 0.0
        %1748 = vmatprep.subr.mxu0 0.0
        %1749 = vmatpush1.msra.mxu0 0.0
        %1750 = vmatprep.subr.mxu0 0.0
        %1751 = vmatpush1.msra.mxu0 0.0
        %1752 = vmatprep.subr.mxu0 0.0
        %1753 = vmatpush1.msra.mxu0 0.0
        %1754 = vmatprep.subr.mxu0 0.0
        %1755 = vmatpush1.msra.mxu0 0.0
        %1756 = vmatprep.subr.mxu0 0.0
        %1757 = vmatpush1.msra.mxu0 0.0
        %1758 = vmatprep.subr.mxu0 0.0
        %1759 = vmatpush1.msra.mxu0 0.0
        %1760 = vmatprep.subr.mxu0 0.0
        %1761 = vmatpush1.msra.mxu0 0.0
        %1762 = vmatprep.subr.mxu0 0.0
        %1763 = vmatpush1.msra.mxu0 0.0
        %1764 = vmatprep.subr.mxu0 0.0
        %1765 = vmatpush1.msra.mxu0 0.0
        %1766 = vmatprep.mubr.f32.mxu0 0.0
        %v1767 = vand.u32 %v1281, 4294901760
        %1768 = vmatmul.mubr.f32.gmra.mrb[0].mxu0 %v1767
        %v1769 = vpop.f32.mrb[0].mxu0
        %v1770 = vadd.f32 %v1694, %v1769
        %v1771 = vpop.f32.mrb[0].mxu0
        %v1772 = vadd.f32 %v1696, %v1771
        %1773 = vdwg.mxu0
        %1774 = vmatprep.subr.mxu0 0.0
        %v1775 = vand.u32 %v290, 4294901760
        %1776 = vmatpush1.msra.mxu0 %v1775
        %1777 = vmatprep.subr.mxu0 0.0
        %v1778 = vand.u32 %v293, 4294901760
        %1779 = vmatpush1.msra.mxu0 %v1778
        %1780 = vmatprep.subr.mxu0 0.0
        %1781 = vmatpush1.msra.mxu0 0.0
        %1782 = vmatprep.subr.mxu0 0.0
        %1783 = vmatpush1.msra.mxu0 0.0
        %1784 = vmatprep.subr.mxu0 0.0
        %1785 = vmatpush1.msra.mxu0 0.0
        %1786 = vmatprep.subr.mxu0 0.0
        %1787 = vmatpush1.msra.mxu0 0.0
        %1788 = vmatprep.subr.mxu0 0.0
        %1789 = vmatpush1.msra.mxu0 0.0
        %1790 = vmatprep.subr.mxu0 0.0
        %1791 = vmatpush1.msra.mxu0 0.0
        %1792 = vmatprep.subr.mxu0 0.0
        %1793 = vmatpush1.msra.mxu0 0.0
        %1794 = vmatprep.subr.mxu0 0.0
        %1795 = vmatpush1.msra.mxu0 0.0
        %1796 = vmatprep.subr.mxu0 0.0
        %1797 = vmatpush1.msra.mxu0 0.0
        %1798 = vmatprep.subr.mxu0 0.0
        %1799 = vmatpush1.msra.mxu0 0.0
        %1800 = vmatprep.subr.mxu0 0.0
        %1801 = vmatpush1.msra.mxu0 0.0
        %1802 = vmatprep.subr.mxu0 0.0
        %1803 = vmatpush1.msra.mxu0 0.0
        %1804 = vmatprep.subr.mxu0 0.0
        %1805 = vmatpush1.msra.mxu0 0.0
        %1806 = vmatprep.subr.mxu0 0.0
        %1807 = vmatpush1.msra.mxu0 0.0
        %1808 = vmatprep.subr.mxu0 0.0
        %1809 = vmatpush1.msra.mxu0 0.0
        %1810 = vmatprep.subr.mxu0 0.0
        %1811 = vmatpush1.msra.mxu0 0.0
        %1812 = vmatprep.subr.mxu0 0.0
        %1813 = vmatpush1.msra.mxu0 0.0
        %1814 = vmatprep.subr.mxu0 0.0
        %1815 = vmatpush1.msra.mxu0 0.0
        %1816 = vmatprep.subr.mxu0 0.0
        %1817 = vmatpush1.msra.mxu0 0.0
        %1818 = vmatprep.subr.mxu0 0.0
        %1819 = vmatpush1.msra.mxu0 0.0
        %1820 = vmatprep.subr.mxu0 0.0
        %1821 = vmatpush1.msra.mxu0 0.0
        %1822 = vmatprep.subr.mxu0 0.0
        %1823 = vmatpush1.msra.mxu0 0.0
        %1824 = vmatprep.subr.mxu0 0.0
        %1825 = vmatpush1.msra.mxu0 0.0
        %1826 = vmatprep.subr.mxu0 0.0
        %1827 = vmatpush1.msra.mxu0 0.0
        %1828 = vmatprep.subr.mxu0 0.0
        %1829 = vmatpush1.msra.mxu0 0.0
        %1830 = vmatprep.subr.mxu0 0.0
        %1831 = vmatpush1.msra.mxu0 0.0
        %1832 = vmatprep.subr.mxu0 0.0
        %1833 = vmatpush1.msra.mxu0 0.0
        %1834 = vmatprep.subr.mxu0 0.0
        %1835 = vmatpush1.msra.mxu0 0.0
        %1836 = vmatprep.subr.mxu0 0.0
        %1837 = vmatpush1.msra.mxu0 0.0
        %1838 = vmatprep.subr.mxu0 0.0
        %1839 = vmatpush1.msra.mxu0 0.0
        %1840 = vmatprep.mubr.f32.mxu0 0.0
        %v1841 = vand.u32 %v1281, 4294901760
        %v1842 = vsub.f32 %v1281, %v1841
        %v1843 = vand.u32 %v1842, 4294901760
        %v1844 = vsub.f32 %v1842, %v1843
        %v1845 = vand.u32 %v1844, 4294901760
        %1846 = vmatmul.mubr.f32.gmra.mrb[0].mxu0 %v1845
        %v1847 = vpop.f32.mrb[0].mxu0
        %v1848 = vadd.f32 %v1277, %v1847
        %v1849 = vpop.f32.mrb[0].mxu0
        %1850 = vdwg.mxu0
        %1851 = vmatprep.subr.mxu0 0.0
        %v1852 = vand.u32 %v290, 4294901760
        %v1853 = vsub.f32 %v290, %v1852
        %v1854 = vand.u32 %v1853, 4294901760
        %v1855 = vsub.f32 %v1853, %v1854
        %v1856 = vand.u32 %v1855, 4294901760
        %1857 = vmatpush1.msra.mxu0 %v1856
        %1858 = vmatprep.subr.mxu0 0.0
        %v1859 = vand.u32 %v293, 4294901760
        %v1860 = vsub.f32 %v293, %v1859
        %v1861 = vand.u32 %v1860, 4294901760
        %v1862 = vsub.f32 %v1860, %v1861
        %v1863 = vand.u32 %v1862, 4294901760
        %1864 = vmatpush1.msra.mxu0 %v1863
        %1865 = vmatprep.subr.mxu0 0.0
        %1866 = vmatpush1.msra.mxu0 0.0
        %1867 = vmatprep.subr.mxu0 0.0
        %1868 = vmatpush1.msra.mxu0 0.0
        %1869 = vmatprep.subr.mxu0 0.0
        %1870 = vmatpush1.msra.mxu0 0.0
        %1871 = vmatprep.subr.mxu0 0.0
        %1872 = vmatpush1.msra.mxu0 0.0
        %1873 = vmatprep.subr.mxu0 0.0
        %1874 = vmatpush1.msra.mxu0 0.0
        %1875 = vmatprep.subr.mxu0 0.0
        %1876 = vmatpush1.msra.mxu0 0.0
        %1877 = vmatprep.subr.mxu0 0.0
        %1878 = vmatpush1.msra.mxu0 0.0
        %1879 = vmatprep.subr.mxu0 0.0
        %1880 = vmatpush1.msra.mxu0 0.0
        %1881 = vmatprep.subr.mxu0 0.0
        %1882 = vmatpush1.msra.mxu0 0.0
        %1883 = vmatprep.subr.mxu0 0.0
        %1884 = vmatpush1.msra.mxu0 0.0
        %1885 = vmatprep.subr.mxu0 0.0
        %1886 = vmatpush1.msra.mxu0 0.0
        %1887 = vmatprep.subr.mxu0 0.0
        %1888 = vmatpush1.msra.mxu0 0.0
        %1889 = vmatprep.subr.mxu0 0.0
        %1890 = vmatpush1.msra.mxu0 0.0
        %1891 = vmatprep.subr.mxu0 0.0
        %1892 = vmatpush1.msra.mxu0 0.0
        %1893 = vmatprep.subr.mxu0 0.0
        %1894 = vmatpush1.msra.mxu0 0.0
        %1895 = vmatprep.subr.mxu0 0.0
        %1896 = vmatpush1.msra.mxu0 0.0
        %1897 = vmatprep.subr.mxu0 0.0
        %1898 = vmatpush1.msra.mxu0 0.0
        %1899 = vmatprep.subr.mxu0 0.0
        %1900 = vmatpush1.msra.mxu0 0.0
        %1901 = vmatprep.subr.mxu0 0.0
        %1902 = vmatpush1.msra.mxu0 0.0
        %1903 = vmatprep.subr.mxu0 0.0
        %1904 = vmatpush1.msra.mxu0 0.0
        %1905 = vmatprep.subr.mxu0 0.0
        %1906 = vmatpush1.msra.mxu0 0.0
        %1907 = vmatprep.subr.mxu0 0.0
        %1908 = vmatpush1.msra.mxu0 0.0
        %1909 = vmatprep.subr.mxu0 0.0
        %1910 = vmatpush1.msra.mxu0 0.0
        %1911 = vmatprep.subr.mxu0 0.0
        %1912 = vmatpush1.msra.mxu0 0.0
        %1913 = vmatprep.subr.mxu0 0.0
        %1914 = vmatpush1.msra.mxu0 0.0
        %1915 = vmatprep.subr.mxu0 0.0
        %1916 = vmatpush1.msra.mxu0 0.0
        %1917 = vmatprep.subr.mxu0 0.0
        %1918 = vmatpush1.msra.mxu0 0.0
        %1919 = vmatprep.subr.mxu0 0.0
        %1920 = vmatpush1.msra.mxu0 0.0
        %1921 = vmatprep.subr.mxu0 0.0
        %1922 = vmatpush1.msra.mxu0 0.0
        %1923 = vmatprep.subr.mxu0 0.0
        %1924 = vmatpush1.msra.mxu0 0.0
        %1925 = vmatprep.mubr.f32.mxu0 0.0
        %v1926 = vand.u32 %v1281, 4294901760
        %1927 = vmatmul.mubr.f32.gmra.mrb[0].mxu0 %v1926
        %v1928 = vpop.f32.mrb[0].mxu0
        %v1929 = vadd.f32 %v1848, %v1928
        %v1930 = vpop.f32.mrb[0].mxu0
        %1931 = vdwg.mxu0
        %1932 = vmatprep.subr.mxu0 0.0
        %v1933 = vand.u32 %v290, 4294901760
        %v1934 = vsub.f32 %v290, %v1933
        %1935 = vmatpush1.msra.mxu0 %v1934
        %1936 = vmatprep.subr.mxu0 0.0
        %v1937 = vand.u32 %v293, 4294901760
        %v1938 = vsub.f32 %v293, %v1937
        %1939 = vmatpush1.msra.mxu0 %v1938
        %1940 = vmatprep.subr.mxu0 0.0
        %1941 = vmatpush1.msra.mxu0 0.0
        %1942 = vmatprep.subr.mxu0 0.0
        %1943 = vmatpush1.msra.mxu0 0.0
        %1944 = vmatprep.subr.mxu0 0.0
        %1945 = vmatpush1.msra.mxu0 0.0
        %1946 = vmatprep.subr.mxu0 0.0
        %1947 = vmatpush1.msra.mxu0 0.0
        %1948 = vmatprep.subr.mxu0 0.0
        %1949 = vmatpush1.msra.mxu0 0.0
        %1950 = vmatprep.subr.mxu0 0.0
        %1951 = vmatpush1.msra.mxu0 0.0
        %1952 = vmatprep.subr.mxu0 0.0
        %1953 = vmatpush1.msra.mxu0 0.0
        %1954 = vmatprep.subr.mxu0 0.0
        %1955 = vmatpush1.msra.mxu0 0.0
        %1956 = vmatprep.subr.mxu0 0.0
        %1957 = vmatpush1.msra.mxu0 0.0
        %1958 = vmatprep.subr.mxu0 0.0
        %1959 = vmatpush1.msra.mxu0 0.0
        %1960 = vmatprep.subr.mxu0 0.0
        %1961 = vmatpush1.msra.mxu0 0.0
        %1962 = vmatprep.subr.mxu0 0.0
        %1963 = vmatpush1.msra.mxu0 0.0
        %1964 = vmatprep.subr.mxu0 0.0
        %1965 = vmatpush1.msra.mxu0 0.0
        %1966 = vmatprep.subr.mxu0 0.0
        %1967 = vmatpush1.msra.mxu0 0.0
        %1968 = vmatprep.subr.mxu0 0.0
        %1969 = vmatpush1.msra.mxu0 0.0
        %1970 = vmatprep.subr.mxu0 0.0
        %1971 = vmatpush1.msra.mxu0 0.0
        %1972 = vmatprep.subr.mxu0 0.0
        %1973 = vmatpush1.msra.mxu0 0.0
        %1974 = vmatprep.subr.mxu0 0.0
        %1975 = vmatpush1.msra.mxu0 0.0
        %1976 = vmatprep.subr.mxu0 0.0
        %1977 = vmatpush1.msra.mxu0 0.0
        %1978 = vmatprep.subr.mxu0 0.0
        %1979 = vmatpush1.msra.mxu0 0.0
        %1980 = vmatprep.subr.mxu0 0.0
        %1981 = vmatpush1.msra.mxu0 0.0
        %1982 = vmatprep.subr.mxu0 0.0
        %1983 = vmatpush1.msra.mxu0 0.0
        %1984 = vmatprep.subr.mxu0 0.0
        %1985 = vmatpush1.msra.mxu0 0.0
        %1986 = vmatprep.subr.mxu0 0.0
        %1987 = vmatpush1.msra.mxu0 0.0
        %1988 = vmatprep.subr.mxu0 0.0
        %1989 = vmatpush1.msra.mxu0 0.0
        %1990 = vmatprep.subr.mxu0 0.0
        %1991 = vmatpush1.msra.mxu0 0.0
        %1992 = vmatprep.subr.mxu0 0.0
        %1993 = vmatpush1.msra.mxu0 0.0
        %1994 = vmatprep.subr.mxu0 0.0
        %1995 = vmatpush1.msra.mxu0 0.0
        %1996 = vmatprep.subr.mxu0 0.0
        %1997 = vmatpush1.msra.mxu0 0.0
        %1998 = vmatprep.subr.mxu0 0.0
        %1999 = vmatpush1.msra.mxu0 0.0
        %2000 = vmatprep.mubr.f32.mxu0 0.0
        %v2001 = vand.u32 %v1281, 4294901760
        %v2002 = vsub.f32 %v1281, %v2001
        %2003 = vmatmul.mubr.f32.gmra.mrb[0].mxu0 %v2002
        %v2004 = vpop.f32.mrb[0].mxu0
        %v2005 = vadd.f32 %v1929, %v2004
        %v2006 = vpop.f32.mrb[0].mxu0
        %2007 = vdwg.mxu0
        %2008 = vmatprep.subr.mxu0 0.0
        %v2009 = vand.u32 %v290, 4294901760
        %2010 = vmatpush1.msra.mxu0 %v2009
        %2011 = vmatprep.subr.mxu0 0.0
        %v2012 = vand.u32 %v293, 4294901760
        %2013 = vmatpush1.msra.mxu0 %v2012
        %2014 = vmatprep.subr.mxu0 0.0
        %2015 = vmatpush1.msra.mxu0 0.0
        %2016 = vmatprep.subr.mxu0 0.0
        %2017 = vmatpush1.msra.mxu0 0.0
        %2018 = vmatprep.subr.mxu0 0.0
        %2019 = vmatpush1.msra.mxu0 0.0
        %2020 = vmatprep.subr.mxu0 0.0
        %2021 = vmatpush1.msra.mxu0 0.0
        %2022 = vmatprep.subr.mxu0 0.0
        %2023 = vmatpush1.msra.mxu0 0.0
        %2024 = vmatprep.subr.mxu0 0.0
        %2025 = vmatpush1.msra.mxu0 0.0
        %2026 = vmatprep.subr.mxu0 0.0
        %2027 = vmatpush1.msra.mxu0 0.0
        %2028 = vmatprep.subr.mxu0 0.0
        %2029 = vmatpush1.msra.mxu0 0.0
        %2030 = vmatprep.subr.mxu0 0.0
        %2031 = vmatpush1.msra.mxu0 0.0
        %2032 = vmatprep.subr.mxu0 0.0
        %2033 = vmatpush1.msra.mxu0 0.0
        %2034 = vmatprep.subr.mxu0 0.0
        %2035 = vmatpush1.msra.mxu0 0.0
        %2036 = vmatprep.subr.mxu0 0.0
        %2037 = vmatpush1.msra.mxu0 0.0
        %2038 = vmatprep.subr.mxu0 0.0
        %2039 = vmatpush1.msra.mxu0 0.0
        %2040 = vmatprep.subr.mxu0 0.0
        %2041 = vmatpush1.msra.mxu0 0.0
        %2042 = vmatprep.subr.mxu0 0.0
        %2043 = vmatpush1.msra.mxu0 0.0
        %2044 = vmatprep.subr.mxu0 0.0
        %2045 = vmatpush1.msra.mxu0 0.0
        %2046 = vmatprep.subr.mxu0 0.0
        %2047 = vmatpush1.msra.mxu0 0.0
        %2048 = vmatprep.subr.mxu0 0.0
        %2049 = vmatpush1.msra.mxu0 0.0
        %2050 = vmatprep.subr.mxu0 0.0
        %2051 = vmatpush1.msra.mxu0 0.0
        %2052 = vmatprep.subr.mxu0 0.0
        %2053 = vmatpush1.msra.mxu0 0.0
        %2054 = vmatprep.subr.mxu0 0.0
        %2055 = vmatpush1.msra.mxu0 0.0
        %2056 = vmatprep.subr.mxu0 0.0
        %2057 = vmatpush1.msra.mxu0 0.0
        %2058 = vmatprep.subr.mxu0 0.0
        %2059 = vmatpush1.msra.mxu0 0.0
        %2060 = vmatprep.subr.mxu0 0.0
        %2061 = vmatpush1.msra.mxu0 0.0
        %2062 = vmatprep.subr.mxu0 0.0
        %2063 = vmatpush1.msra.mxu0 0.0
        %2064 = vmatprep.subr.mxu0 0.0
        %2065 = vmatpush1.msra.mxu0 0.0
        %2066 = vmatprep.subr.mxu0 0.0
        %2067 = vmatpush1.msra.mxu0 0.0
        %2068 = vmatprep.subr.mxu0 0.0
        %2069 = vmatpush1.msra.mxu0 0.0
        %2070 = vmatprep.subr.mxu0 0.0
        %2071 = vmatpush1.msra.mxu0 0.0
        %2072 = vmatprep.subr.mxu0 0.0
        %2073 = vmatpush1.msra.mxu0 0.0
        %2074 = vmatprep.mubr.f32.mxu0 0.0
        %v2075 = vand.u32 %v1281, 4294901760
        %v2076 = vsub.f32 %v1281, %v2075
        %v2077 = vand.u32 %v2076, 4294901760
        %2078 = vmatmul.mubr.f32.gmra.mrb[0].mxu0 %v2077
        %v2079 = vpop.f32.mrb[0].mxu0
        %v2080 = vadd.f32 %v2005, %v2079
        %v2081 = vpop.f32.mrb[0].mxu0
        %2082 = vdwg.mxu0
        %2083 = vmatprep.subr.mxu0 0.0
        %v2084 = vand.u32 %v290, 4294901760
        %v2085 = vsub.f32 %v290, %v2084
        %v2086 = vand.u32 %v2085, 4294901760
        %2087 = vmatpush1.msra.mxu0 %v2086
        %2088 = vmatprep.subr.mxu0 0.0
        %v2089 = vand.u32 %v293, 4294901760
        %v2090 = vsub.f32 %v293, %v2089
        %v2091 = vand.u32 %v2090, 4294901760
        %2092 = vmatpush1.msra.mxu0 %v2091
        %2093 = vmatprep.subr.mxu0 0.0
        %2094 = vmatpush1.msra.mxu0 0.0
        %2095 = vmatprep.subr.mxu0 0.0
        %2096 = vmatpush1.msra.mxu0 0.0
        %2097 = vmatprep.subr.mxu0 0.0
        %2098 = vmatpush1.msra.mxu0 0.0
        %2099 = vmatprep.subr.mxu0 0.0
        %2100 = vmatpush1.msra.mxu0 0.0
        %2101 = vmatprep.subr.mxu0 0.0
        %2102 = vmatpush1.msra.mxu0 0.0
        %2103 = vmatprep.subr.mxu0 0.0
        %2104 = vmatpush1.msra.mxu0 0.0
        %2105 = vmatprep.subr.mxu0 0.0
        %2106 = vmatpush1.msra.mxu0 0.0
        %2107 = vmatprep.subr.mxu0 0.0
        %2108 = vmatpush1.msra.mxu0 0.0
        %2109 = vmatprep.subr.mxu0 0.0
        %2110 = vmatpush1.msra.mxu0 0.0
        %2111 = vmatprep.subr.mxu0 0.0
        %2112 = vmatpush1.msra.mxu0 0.0
        %2113 = vmatprep.subr.mxu0 0.0
        %2114 = vmatpush1.msra.mxu0 0.0
        %2115 = vmatprep.subr.mxu0 0.0
        %2116 = vmatpush1.msra.mxu0 0.0
        %2117 = vmatprep.subr.mxu0 0.0
        %2118 = vmatpush1.msra.mxu0 0.0
        %2119 = vmatprep.subr.mxu0 0.0
        %2120 = vmatpush1.msra.mxu0 0.0
        %2121 = vmatprep.subr.mxu0 0.0
        %2122 = vmatpush1.msra.mxu0 0.0
        %2123 = vmatprep.subr.mxu0 0.0
        %2124 = vmatpush1.msra.mxu0 0.0
        %2125 = vmatprep.subr.mxu0 0.0
        %2126 = vmatpush1.msra.mxu0 0.0
        %2127 = vmatprep.subr.mxu0 0.0
        %2128 = vmatpush1.msra.mxu0 0.0
        %2129 = vmatprep.subr.mxu0 0.0
        %2130 = vmatpush1.msra.mxu0 0.0
        %2131 = vmatprep.subr.mxu0 0.0
        %2132 = vmatpush1.msra.mxu0 0.0
        %2133 = vmatprep.subr.mxu0 0.0
        %2134 = vmatpush1.msra.mxu0 0.0
        %2135 = vmatprep.subr.mxu0 0.0
        %2136 = vmatpush1.msra.mxu0 0.0
        %2137 = vmatprep.subr.mxu0 0.0
        %2138 = vmatpush1.msra.mxu0 0.0
        %2139 = vmatprep.subr.mxu0 0.0
        %2140 = vmatpush1.msra.mxu0 0.0
        %2141 = vmatprep.subr.mxu0 0.0
        %2142 = vmatpush1.msra.mxu0 0.0
        %2143 = vmatprep.subr.mxu0 0.0
        %2144 = vmatpush1.msra.mxu0 0.0
        %2145 = vmatprep.subr.mxu0 0.0
        %2146 = vmatpush1.msra.mxu0 0.0
        %2147 = vmatprep.subr.mxu0 0.0
        %2148 = vmatpush1.msra.mxu0 0.0
        %2149 = vmatprep.subr.mxu0 0.0
        %2150 = vmatpush1.msra.mxu0 0.0
        %2151 = vmatprep.subr.mxu0 0.0
        %2152 = vmatpush1.msra.mxu0 0.0
        %2153 = vmatprep.mubr.f32.mxu0 0.0
        %v2154 = vand.u32 %v1281, 4294901760
        %2155 = vmatmul.mubr.f32.gmra.mrb[0].mxu0 %v2154
        %v2156 = vpop.f32.mrb[0].mxu0
        %v2157 = vadd.f32 %v2080, %v2156
        %v2158 = vpop.f32.mrb[0].mxu0
        %2159 = vdwg.mxu0
        %2160 = vmatprep.subr.mxu0 0.0
        %v2161 = vand.u32 %v290, 4294901760
        %2162 = vmatpush1.msra.mxu0 %v2161
        %2163 = vmatprep.subr.mxu0 0.0
        %v2164 = vand.u32 %v293, 4294901760
        %2165 = vmatpush1.msra.mxu0 %v2164
        %2166 = vmatprep.subr.mxu0 0.0
        %2167 = vmatpush1.msra.mxu0 0.0
        %2168 = vmatprep.subr.mxu0 0.0
        %2169 = vmatpush1.msra.mxu0 0.0
        %2170 = vmatprep.subr.mxu0 0.0
        %2171 = vmatpush1.msra.mxu0 0.0
        %2172 = vmatprep.subr.mxu0 0.0
        %2173 = vmatpush1.msra.mxu0 0.0
        %2174 = vmatprep.subr.mxu0 0.0
        %2175 = vmatpush1.msra.mxu0 0.0
        %2176 = vmatprep.subr.mxu0 0.0
        %2177 = vmatpush1.msra.mxu0 0.0
        %2178 = vmatprep.subr.mxu0 0.0
        %2179 = vmatpush1.msra.mxu0 0.0
        %2180 = vmatprep.subr.mxu0 0.0
        %2181 = vmatpush1.msra.mxu0 0.0
        %2182 = vmatprep.subr.mxu0 0.0
        %2183 = vmatpush1.msra.mxu0 0.0
        %2184 = vmatprep.subr.mxu0 0.0
        %2185 = vmatpush1.msra.mxu0 0.0
        %2186 = vmatprep.subr.mxu0 0.0
        %2187 = vmatpush1.msra.mxu0 0.0
        %2188 = vmatprep.subr.mxu0 0.0
        %2189 = vmatpush1.msra.mxu0 0.0
        %2190 = vmatprep.subr.mxu0 0.0
        %2191 = vmatpush1.msra.mxu0 0.0
        %2192 = vmatprep.subr.mxu0 0.0
        %2193 = vmatpush1.msra.mxu0 0.0
        %2194 = vmatprep.subr.mxu0 0.0
        %2195 = vmatpush1.msra.mxu0 0.0
        %2196 = vmatprep.subr.mxu0 0.0
        %2197 = vmatpush1.msra.mxu0 0.0
        %2198 = vmatprep.subr.mxu0 0.0
        %2199 = vmatpush1.msra.mxu0 0.0
        %2200 = vmatprep.subr.mxu0 0.0
        %2201 = vmatpush1.msra.mxu0 0.0
        %2202 = vmatprep.subr.mxu0 0.0
        %2203 = vmatpush1.msra.mxu0 0.0
        %2204 = vmatprep.subr.mxu0 0.0
        %2205 = vmatpush1.msra.mxu0 0.0
        %2206 = vmatprep.subr.mxu0 0.0
        %2207 = vmatpush1.msra.mxu0 0.0
        %2208 = vmatprep.subr.mxu0 0.0
        %2209 = vmatpush1.msra.mxu0 0.0
        %2210 = vmatprep.subr.mxu0 0.0
        %2211 = vmatpush1.msra.mxu0 0.0
        %2212 = vmatprep.subr.mxu0 0.0
        %2213 = vmatpush1.msra.mxu0 0.0
        %2214 = vmatprep.subr.mxu0 0.0
        %2215 = vmatpush1.msra.mxu0 0.0
        %2216 = vmatprep.subr.mxu0 0.0
        %2217 = vmatpush1.msra.mxu0 0.0
        %2218 = vmatprep.subr.mxu0 0.0
        %2219 = vmatpush1.msra.mxu0 0.0
        %2220 = vmatprep.subr.mxu0 0.0
        %2221 = vmatpush1.msra.mxu0 0.0
        %2222 = vmatprep.subr.mxu0 0.0
        %2223 = vmatpush1.msra.mxu0 0.0
        %2224 = vmatprep.subr.mxu0 0.0
        %2225 = vmatpush1.msra.mxu0 0.0
        %2226 = vmatprep.mubr.f32.mxu0 0.0
        %v2227 = vand.u32 %v1281, 4294901760
        %2228 = vmatmul.mubr.f32.gmra.mrb[0].mxu0 %v2227
        %v2229 = vpop.f32.mrb[0].mxu0
        %v2230 = vadd.f32 %v2157, %v2229
        %v2231 = vpop.f32.mrb[0].mxu0
        %2232 = vdwg.mxu0
        %s2233 = scalar_lea.vmem [#allocation5], 16
        %v2234 = vld [vmem:[%s2233] sm:$0xff]
        %2235 = vrot.lane.b32.xlu0 %v288, 126
        %v2236 = vpop.permute.xlu0 %2235
        %2237 = vrot.lane.b32.xlu0 %v289, 126
        %v2238 = vpop.permute.xlu0 %2237
        %2239 = vrot.lane.b32.xlu0 %v290, 126
        %v2240 = vpop.permute.xlu0 %2239
        %2241 = vrot.lane.b32.xlu0 %v291, 126
        %v2242 = vpop.permute.xlu0 %2241
        %2243 = vrot.lane.b32.xlu0 %v292, 126
        %v2244 = vpop.permute.xlu0 %2243
        %2245 = vrot.lane.b32.xlu0 %v293, 126
        %v2246 = vpop.permute.xlu0 %2245
        %vm2247 = vcmask 1031168
        %v2248 = vsel %vm2247, %v2236, %v2238
        %v2249 = vsel %vm2247, %v2238, %v2240
        %v2250 = vsel %vm2247, %v2242, %v2244
        %v2251 = vsel %vm2247, %v2244, %v2246
        %v2259 = vsel %vm326, %v2234, 0
        %v2261 = vand.u32 %v2249, 4294901760
        %2262 = vmatprep.subr.mxu0 %v2261
        %v2263 = vand.u32 %v2248, 4294901760
        %2264 = vmatpush1.msra.mxu0 %v2263
        %v2265 = vand.u32 %v2251, 4294901760
        %2266 = vmatprep.subr.mxu0 %v2265
        %v2267 = vand.u32 %v2250, 4294901760
        %2268 = vmatpush1.msra.mxu0 %v2267
        %2269 = vmatprep.subr.mxu0 0.0
        %2270 = vmatpush1.msra.mxu0 0.0
        %2271 = vmatprep.subr.mxu0 0.0
        %2272 = vmatpush1.msra.mxu0 0.0
        %2273 = vmatprep.subr.mxu0 0.0
        %2274 = vmatpush1.msra.mxu0 0.0
        %2275 = vmatprep.subr.mxu0 0.0
        %2276 = vmatpush1.msra.mxu0 0.0
        %2277 = vmatprep.subr.mxu0 0.0
        %2278 = vmatpush1.msra.mxu0 0.0
        %2279 = vmatprep.subr.mxu0 0.0
        %2280 = vmatpush1.msra.mxu0 0.0
        %2281 = vmatprep.subr.mxu0 0.0
        %2282 = vmatpush1.msra.mxu0 0.0
        %2283 = vmatprep.subr.mxu0 0.0
        %2284 = vmatpush1.msra.mxu0 0.0
        %2285 = vmatprep.subr.mxu0 0.0
        %2286 = vmatpush1.msra.mxu0 0.0
        %2287 = vmatprep.subr.mxu0 0.0
        %2288 = vmatpush1.msra.mxu0 0.0
        %2289 = vmatprep.subr.mxu0 0.0
        %2290 = vmatpush1.msra.mxu0 0.0
        %2291 = vmatprep.subr.mxu0 0.0
        %2292 = vmatpush1.msra.mxu0 0.0
        %2293 = vmatprep.subr.mxu0 0.0
        %2294 = vmatpush1.msra.mxu0 0.0
        %2295 = vmatprep.subr.mxu0 0.0
        %2296 = vmatpush1.msra.mxu0 0.0
        %2297 = vmatprep.subr.mxu0 0.0
        %2298 = vmatpush1.msra.mxu0 0.0
        %2299 = vmatprep.subr.mxu0 0.0
        %2300 = vmatpush1.msra.mxu0 0.0
        %2301 = vmatprep.subr.mxu0 0.0
        %2302 = vmatpush1.msra.mxu0 0.0
        %2303 = vmatprep.subr.mxu0 0.0
        %2304 = vmatpush1.msra.mxu0 0.0
        %2305 = vmatprep.subr.mxu0 0.0
        %2306 = vmatpush1.msra.mxu0 0.0
        %2307 = vmatprep.subr.mxu0 0.0
        %2308 = vmatpush1.msra.mxu0 0.0
        %2309 = vmatprep.subr.mxu0 0.0
        %2310 = vmatpush1.msra.mxu0 0.0
        %2311 = vmatprep.subr.mxu0 0.0
        %2312 = vmatpush1.msra.mxu0 0.0
        %2313 = vmatprep.subr.mxu0 0.0
        %2314 = vmatpush1.msra.mxu0 0.0
        %2315 = vmatprep.subr.mxu0 0.0
        %2316 = vmatpush1.msra.mxu0 0.0
        %2317 = vmatprep.subr.mxu0 0.0
        %2318 = vmatpush1.msra.mxu0 0.0
        %2319 = vmatprep.subr.mxu0 0.0
        %2320 = vmatpush1.msra.mxu0 0.0
        %2321 = vmatprep.subr.mxu0 0.0
        %2322 = vmatpush1.msra.mxu0 0.0
        %2323 = vmatprep.subr.mxu0 0.0
        %2324 = vmatpush1.msra.mxu0 0.0
        %2325 = vmatprep.subr.mxu0 0.0
        %2326 = vmatpush1.msra.mxu0 0.0
        %2327 = vmatprep.subr.mxu0 0.0
        %2328 = vmatpush1.msra.mxu0 0.0
        %2329 = vmatprep.mubr.f32.mxu0 0.0
        %v2330 = vand.u32 %v2259, 4294901760
        %v2331 = vsub.f32 %v2259, %v2330
        %v2332 = vand.u32 %v2331, 4294901760
        %v2333 = vsub.f32 %v2331, %v2332
        %v2334 = vand.u32 %v2333, 4294901760
        %2335 = vmatmul.mubr.f32.gmra.mrb[0].mxu0 %v2334
        %v2336 = vpop.f32.mrb[0].mxu0
        %v2337 = vadd.f32 0.0, %v2336
        %v2338 = vpop.f32.mrb[0].mxu0
        %v2339 = vadd.f32 0.0, %v2338
        %2340 = vdwg.mxu0
        %v2341 = vand.u32 %v2249, 4294901760
        %v2342 = vsub.f32 %v2249, %v2341
        %v2343 = vand.u32 %v2342, 4294901760
        %v2344 = vsub.f32 %v2342, %v2343
        %v2345 = vand.u32 %v2344, 4294901760
        %2346 = vmatprep.subr.mxu0 %v2345
        %v2347 = vand.u32 %v2248, 4294901760
        %v2348 = vsub.f32 %v2248, %v2347
        %v2349 = vand.u32 %v2348, 4294901760
        %v2350 = vsub.f32 %v2348, %v2349
        %v2351 = vand.u32 %v2350, 4294901760
        %2352 = vmatpush1.msra.mxu0 %v2351
        %v2353 = vand.u32 %v2251, 4294901760
        %v2354 = vsub.f32 %v2251, %v2353
        %v2355 = vand.u32 %v2354, 4294901760
        %v2356 = vsub.f32 %v2354, %v2355
        %v2357 = vand.u32 %v2356, 4294901760
        %2358 = vmatprep.subr.mxu0 %v2357
        %v2359 = vand.u32 %v2250, 4294901760
        %v2360 = vsub.f32 %v2250, %v2359
        %v2361 = vand.u32 %v2360, 4294901760
        %v2362 = vsub.f32 %v2360, %v2361
        %v2363 = vand.u32 %v2362, 4294901760
        %2364 = vmatpush1.msra.mxu0 %v2363
        %2365 = vmatprep.subr.mxu0 0.0
        %2366 = vmatpush1.msra.mxu0 0.0
        %2367 = vmatprep.subr.mxu0 0.0
        %2368 = vmatpush1.msra.mxu0 0.0
        %2369 = vmatprep.subr.mxu0 0.0
        %2370 = vmatpush1.msra.mxu0 0.0
        %2371 = vmatprep.subr.mxu0 0.0
        %2372 = vmatpush1.msra.mxu0 0.0
        %2373 = vmatprep.subr.mxu0 0.0
        %2374 = vmatpush1.msra.mxu0 0.0
        %2375 = vmatprep.subr.mxu0 0.0
        %2376 = vmatpush1.msra.mxu0 0.0
        %2377 = vmatprep.subr.mxu0 0.0
        %2378 = vmatpush1.msra.mxu0 0.0
        %2379 = vmatprep.subr.mxu0 0.0
        %2380 = vmatpush1.msra.mxu0 0.0
        %2381 = vmatprep.subr.mxu0 0.0
        %2382 = vmatpush1.msra.mxu0 0.0
        %2383 = vmatprep.subr.mxu0 0.0
        %2384 = vmatpush1.msra.mxu0 0.0
        %2385 = vmatprep.subr.mxu0 0.0
        %2386 = vmatpush1.msra.mxu0 0.0
        %2387 = vmatprep.subr.mxu0 0.0
        %2388 = vmatpush1.msra.mxu0 0.0
        %2389 = vmatprep.subr.mxu0 0.0
        %2390 = vmatpush1.msra.mxu0 0.0
        %2391 = vmatprep.subr.mxu0 0.0
        %2392 = vmatpush1.msra.mxu0 0.0
        %2393 = vmatprep.subr.mxu0 0.0
        %2394 = vmatpush1.msra.mxu0 0.0
        %2395 = vmatprep.subr.mxu0 0.0
        %2396 = vmatpush1.msra.mxu0 0.0
        %2397 = vmatprep.subr.mxu0 0.0
        %2398 = vmatpush1.msra.mxu0 0.0
        %2399 = vmatprep.subr.mxu0 0.0
        %2400 = vmatpush1.msra.mxu0 0.0
        %2401 = vmatprep.subr.mxu0 0.0
        %2402 = vmatpush1.msra.mxu0 0.0
        %2403 = vmatprep.subr.mxu0 0.0
        %2404 = vmatpush1.msra.mxu0 0.0
        %2405 = vmatprep.subr.mxu0 0.0
        %2406 = vmatpush1.msra.mxu0 0.0
        %2407 = vmatprep.subr.mxu0 0.0
        %2408 = vmatpush1.msra.mxu0 0.0
        %2409 = vmatprep.subr.mxu0 0.0
        %2410 = vmatpush1.msra.mxu0 0.0
        %2411 = vmatprep.subr.mxu0 0.0
        %2412 = vmatpush1.msra.mxu0 0.0
        %2413 = vmatprep.subr.mxu0 0.0
        %2414 = vmatpush1.msra.mxu0 0.0
        %2415 = vmatprep.subr.mxu0 0.0
        %2416 = vmatpush1.msra.mxu0 0.0
        %2417 = vmatprep.subr.mxu0 0.0
        %2418 = vmatpush1.msra.mxu0 0.0
        %2419 = vmatprep.subr.mxu0 0.0
        %2420 = vmatpush1.msra.mxu0 0.0
        %2421 = vmatprep.subr.mxu0 0.0
        %2422 = vmatpush1.msra.mxu0 0.0
        %2423 = vmatprep.subr.mxu0 0.0
        %2424 = vmatpush1.msra.mxu0 0.0
        %2425 = vmatprep.mubr.f32.mxu0 0.0
        %v2426 = vand.u32 %v2259, 4294901760
        %2427 = vmatmul.mubr.f32.gmra.mrb[0].mxu0 %v2426
        %v2428 = vpop.f32.mrb[0].mxu0
        %v2429 = vadd.f32 %v2337, %v2428
        %v2430 = vpop.f32.mrb[0].mxu0
        %v2431 = vadd.f32 %v2339, %v2430
        %2432 = vdwg.mxu0
        %v2433 = vand.u32 %v2249, 4294901760
        %v2434 = vsub.f32 %v2249, %v2433
        %2435 = vmatprep.subr.mxu0 %v2434
        %v2436 = vand.u32 %v2248, 4294901760
        %v2437 = vsub.f32 %v2248, %v2436
        %2438 = vmatpush1.msra.mxu0 %v2437
        %v2439 = vand.u32 %v2251, 4294901760
        %v2440 = vsub.f32 %v2251, %v2439
        %2441 = vmatprep.subr.mxu0 %v2440
        %v2442 = vand.u32 %v2250, 4294901760
        %v2443 = vsub.f32 %v2250, %v2442
        %2444 = vmatpush1.msra.mxu0 %v2443
        %2445 = vmatprep.subr.mxu0 0.0
        %2446 = vmatpush1.msra.mxu0 0.0
        %2447 = vmatprep.subr.mxu0 0.0
        %2448 = vmatpush1.msra.mxu0 0.0
        %2449 = vmatprep.subr.mxu0 0.0
        %2450 = vmatpush1.msra.mxu0 0.0
        %2451 = vmatprep.subr.mxu0 0.0
        %2452 = vmatpush1.msra.mxu0 0.0
        %2453 = vmatprep.subr.mxu0 0.0
        %2454 = vmatpush1.msra.mxu0 0.0
        %2455 = vmatprep.subr.mxu0 0.0
        %2456 = vmatpush1.msra.mxu0 0.0
        %2457 = vmatprep.subr.mxu0 0.0
        %2458 = vmatpush1.msra.mxu0 0.0
        %2459 = vmatprep.subr.mxu0 0.0
        %2460 = vmatpush1.msra.mxu0 0.0
        %2461 = vmatprep.subr.mxu0 0.0
        %2462 = vmatpush1.msra.mxu0 0.0
        %2463 = vmatprep.subr.mxu0 0.0
        %2464 = vmatpush1.msra.mxu0 0.0
        %2465 = vmatprep.subr.mxu0 0.0
        %2466 = vmatpush1.msra.mxu0 0.0
        %2467 = vmatprep.subr.mxu0 0.0
        %2468 = vmatpush1.msra.mxu0 0.0
        %2469 = vmatprep.subr.mxu0 0.0
        %2470 = vmatpush1.msra.mxu0 0.0
        %2471 = vmatprep.subr.mxu0 0.0
        %2472 = vmatpush1.msra.mxu0 0.0
        %2473 = vmatprep.subr.mxu0 0.0
        %2474 = vmatpush1.msra.mxu0 0.0
        %2475 = vmatprep.subr.mxu0 0.0
        %2476 = vmatpush1.msra.mxu0 0.0
        %2477 = vmatprep.subr.mxu0 0.0
        %2478 = vmatpush1.msra.mxu0 0.0
        %2479 = vmatprep.subr.mxu0 0.0
        %2480 = vmatpush1.msra.mxu0 0.0
        %2481 = vmatprep.subr.mxu0 0.0
        %2482 = vmatpush1.msra.mxu0 0.0
        %2483 = vmatprep.subr.mxu0 0.0
        %2484 = vmatpush1.msra.mxu0 0.0
        %2485 = vmatprep.subr.mxu0 0.0
        %2486 = vmatpush1.msra.mxu0 0.0
        %2487 = vmatprep.subr.mxu0 0.0
        %2488 = vmatpush1.msra.mxu0 0.0
        %2489 = vmatprep.subr.mxu0 0.0
        %2490 = vmatpush1.msra.mxu0 0.0
        %2491 = vmatprep.subr.mxu0 0.0
        %2492 = vmatpush1.msra.mxu0 0.0
        %2493 = vmatprep.subr.mxu0 0.0
        %2494 = vmatpush1.msra.mxu0 0.0
        %2495 = vmatprep.subr.mxu0 0.0
        %2496 = vmatpush1.msra.mxu0 0.0
        %2497 = vmatprep.subr.mxu0 0.0
        %2498 = vmatpush1.msra.mxu0 0.0
        %2499 = vmatprep.subr.mxu0 0.0
        %2500 = vmatpush1.msra.mxu0 0.0
        %2501 = vmatprep.subr.mxu0 0.0
        %2502 = vmatpush1.msra.mxu0 0.0
        %2503 = vmatprep.subr.mxu0 0.0
        %2504 = vmatpush1.msra.mxu0 0.0
        %2505 = vmatprep.mubr.f32.mxu0 0.0
        %v2506 = vand.u32 %v2259, 4294901760
        %v2507 = vsub.f32 %v2259, %v2506
        %2508 = vmatmul.mubr.f32.gmra.mrb[0].mxu0 %v2507
        %v2509 = vpop.f32.mrb[0].mxu0
        %v2510 = vadd.f32 %v2429, %v2509
        %v2511 = vpop.f32.mrb[0].mxu0
        %v2512 = vadd.f32 %v2431, %v2511
        %2513 = vdwg.mxu0
        %v2514 = vand.u32 %v2249, 4294901760
        %2515 = vmatprep.subr.mxu0 %v2514
        %v2516 = vand.u32 %v2248, 4294901760
        %2517 = vmatpush1.msra.mxu0 %v2516
        %v2518 = vand.u32 %v2251, 4294901760
        %2519 = vmatprep.subr.mxu0 %v2518
        %v2520 = vand.u32 %v2250, 4294901760
        %2521 = vmatpush1.msra.mxu0 %v2520
        %2522 = vmatprep.subr.mxu0 0.0
        %2523 = vmatpush1.msra.mxu0 0.0
        %2524 = vmatprep.subr.mxu0 0.0
        %2525 = vmatpush1.msra.mxu0 0.0
        %2526 = vmatprep.subr.mxu0 0.0
        %2527 = vmatpush1.msra.mxu0 0.0
        %2528 = vmatprep.subr.mxu0 0.0
        %2529 = vmatpush1.msra.mxu0 0.0
        %2530 = vmatprep.subr.mxu0 0.0
        %2531 = vmatpush1.msra.mxu0 0.0
        %2532 = vmatprep.subr.mxu0 0.0
        %2533 = vmatpush1.msra.mxu0 0.0
        %2534 = vmatprep.subr.mxu0 0.0
        %2535 = vmatpush1.msra.mxu0 0.0
        %2536 = vmatprep.subr.mxu0 0.0
        %2537 = vmatpush1.msra.mxu0 0.0
        %2538 = vmatprep.subr.mxu0 0.0
        %2539 = vmatpush1.msra.mxu0 0.0
        %2540 = vmatprep.subr.mxu0 0.0
        %2541 = vmatpush1.msra.mxu0 0.0
        %2542 = vmatprep.subr.mxu0 0.0
        %2543 = vmatpush1.msra.mxu0 0.0
        %2544 = vmatprep.subr.mxu0 0.0
        %2545 = vmatpush1.msra.mxu0 0.0
        %2546 = vmatprep.subr.mxu0 0.0
        %2547 = vmatpush1.msra.mxu0 0.0
        %2548 = vmatprep.subr.mxu0 0.0
        %2549 = vmatpush1.msra.mxu0 0.0
        %2550 = vmatprep.subr.mxu0 0.0
        %2551 = vmatpush1.msra.mxu0 0.0
        %2552 = vmatprep.subr.mxu0 0.0
        %2553 = vmatpush1.msra.mxu0 0.0
        %2554 = vmatprep.subr.mxu0 0.0
        %2555 = vmatpush1.msra.mxu0 0.0
        %2556 = vmatprep.subr.mxu0 0.0
        %2557 = vmatpush1.msra.mxu0 0.0
        %2558 = vmatprep.subr.mxu0 0.0
        %2559 = vmatpush1.msra.mxu0 0.0
        %2560 = vmatprep.subr.mxu0 0.0
        %2561 = vmatpush1.msra.mxu0 0.0
        %2562 = vmatprep.subr.mxu0 0.0
        %2563 = vmatpush1.msra.mxu0 0.0
        %2564 = vmatprep.subr.mxu0 0.0
        %2565 = vmatpush1.msra.mxu0 0.0
        %2566 = vmatprep.subr.mxu0 0.0
        %2567 = vmatpush1.msra.mxu0 0.0
        %2568 = vmatprep.subr.mxu0 0.0
        %2569 = vmatpush1.msra.mxu0 0.0
        %2570 = vmatprep.subr.mxu0 0.0
        %2571 = vmatpush1.msra.mxu0 0.0
        %2572 = vmatprep.subr.mxu0 0.0
        %2573 = vmatpush1.msra.mxu0 0.0
        %2574 = vmatprep.subr.mxu0 0.0
        %2575 = vmatpush1.msra.mxu0 0.0
        %2576 = vmatprep.subr.mxu0 0.0
        %2577 = vmatpush1.msra.mxu0 0.0
        %2578 = vmatprep.subr.mxu0 0.0
        %2579 = vmatpush1.msra.mxu0 0.0
        %2580 = vmatprep.subr.mxu0 0.0
        %2581 = vmatpush1.msra.mxu0 0.0
        %2582 = vmatprep.mubr.f32.mxu0 0.0
        %v2583 = vand.u32 %v2259, 4294901760
        %v2584 = vsub.f32 %v2259, %v2583
        %v2585 = vand.u32 %v2584, 4294901760
        %2586 = vmatmul.mubr.f32.gmra.mrb[0].mxu0 %v2585
        %v2587 = vpop.f32.mrb[0].mxu0
        %v2588 = vadd.f32 %v2510, %v2587
        %v2589 = vpop.f32.mrb[0].mxu0
        %v2590 = vadd.f32 %v2512, %v2589
        %2591 = vdwg.mxu0
        %v2592 = vand.u32 %v2249, 4294901760
        %v2593 = vsub.f32 %v2249, %v2592
        %v2594 = vand.u32 %v2593, 4294901760
        %2595 = vmatprep.subr.mxu0 %v2594
        %v2596 = vand.u32 %v2248, 4294901760
        %v2597 = vsub.f32 %v2248, %v2596
        %v2598 = vand.u32 %v2597, 4294901760
        %2599 = vmatpush1.msra.mxu0 %v2598
        %v2600 = vand.u32 %v2251, 4294901760
        %v2601 = vsub.f32 %v2251, %v2600
        %v2602 = vand.u32 %v2601, 4294901760
        %2603 = vmatprep.subr.mxu0 %v2602
        %v2604 = vand.u32 %v2250, 4294901760
        %v2605 = vsub.f32 %v2250, %v2604
        %v2606 = vand.u32 %v2605, 4294901760
        %2607 = vmatpush1.msra.mxu0 %v2606
        %2608 = vmatprep.subr.mxu0 0.0
        %2609 = vmatpush1.msra.mxu0 0.0
        %2610 = vmatprep.subr.mxu0 0.0
        %2611 = vmatpush1.msra.mxu0 0.0
        %2612 = vmatprep.subr.mxu0 0.0
        %2613 = vmatpush1.msra.mxu0 0.0
        %2614 = vmatprep.subr.mxu0 0.0
        %2615 = vmatpush1.msra.mxu0 0.0
        %2616 = vmatprep.subr.mxu0 0.0
        %2617 = vmatpush1.msra.mxu0 0.0
        %2618 = vmatprep.subr.mxu0 0.0
        %2619 = vmatpush1.msra.mxu0 0.0
        %2620 = vmatprep.subr.mxu0 0.0
        %2621 = vmatpush1.msra.mxu0 0.0
        %2622 = vmatprep.subr.mxu0 0.0
        %2623 = vmatpush1.msra.mxu0 0.0
        %2624 = vmatprep.subr.mxu0 0.0
        %2625 = vmatpush1.msra.mxu0 0.0
        %2626 = vmatprep.subr.mxu0 0.0
        %2627 = vmatpush1.msra.mxu0 0.0
        %2628 = vmatprep.subr.mxu0 0.0
        %2629 = vmatpush1.msra.mxu0 0.0
        %2630 = vmatprep.subr.mxu0 0.0
        %2631 = vmatpush1.msra.mxu0 0.0
        %2632 = vmatprep.subr.mxu0 0.0
        %2633 = vmatpush1.msra.mxu0 0.0
        %2634 = vmatprep.subr.mxu0 0.0
        %2635 = vmatpush1.msra.mxu0 0.0
        %2636 = vmatprep.subr.mxu0 0.0
        %2637 = vmatpush1.msra.mxu0 0.0
        %2638 = vmatprep.subr.mxu0 0.0
        %2639 = vmatpush1.msra.mxu0 0.0
        %2640 = vmatprep.subr.mxu0 0.0
        %2641 = vmatpush1.msra.mxu0 0.0
        %2642 = vmatprep.subr.mxu0 0.0
        %2643 = vmatpush1.msra.mxu0 0.0
        %2644 = vmatprep.subr.mxu0 0.0
        %2645 = vmatpush1.msra.mxu0 0.0
        %2646 = vmatprep.subr.mxu0 0.0
        %2647 = vmatpush1.msra.mxu0 0.0
        %2648 = vmatprep.subr.mxu0 0.0
        %2649 = vmatpush1.msra.mxu0 0.0
        %2650 = vmatprep.subr.mxu0 0.0
        %2651 = vmatpush1.msra.mxu0 0.0
        %2652 = vmatprep.subr.mxu0 0.0
        %2653 = vmatpush1.msra.mxu0 0.0
        %2654 = vmatprep.subr.mxu0 0.0
        %2655 = vmatpush1.msra.mxu0 0.0
        %2656 = vmatprep.subr.mxu0 0.0
        %2657 = vmatpush1.msra.mxu0 0.0
        %2658 = vmatprep.subr.mxu0 0.0
        %2659 = vmatpush1.msra.mxu0 0.0
        %2660 = vmatprep.subr.mxu0 0.0
        %2661 = vmatpush1.msra.mxu0 0.0
        %2662 = vmatprep.subr.mxu0 0.0
        %2663 = vmatpush1.msra.mxu0 0.0
        %2664 = vmatprep.subr.mxu0 0.0
        %2665 = vmatpush1.msra.mxu0 0.0
        %2666 = vmatprep.subr.mxu0 0.0
        %2667 = vmatpush1.msra.mxu0 0.0
        %2668 = vmatprep.mubr.f32.mxu0 0.0
        %v2669 = vand.u32 %v2259, 4294901760
        %2670 = vmatmul.mubr.f32.gmra.mrb[0].mxu0 %v2669
        %v2671 = vpop.f32.mrb[0].mxu0
        %v2672 = vadd.f32 %v2588, %v2671
        %v2673 = vpop.f32.mrb[0].mxu0
        %v2674 = vadd.f32 %v2590, %v2673
        %2675 = vdwg.mxu0
        %v2676 = vand.u32 %v2249, 4294901760
        %2677 = vmatprep.subr.mxu0 %v2676
        %v2678 = vand.u32 %v2248, 4294901760
        %2679 = vmatpush1.msra.mxu0 %v2678
        %v2680 = vand.u32 %v2251, 4294901760
        %2681 = vmatprep.subr.mxu0 %v2680
        %v2682 = vand.u32 %v2250, 4294901760
        %2683 = vmatpush1.msra.mxu0 %v2682
        %2684 = vmatprep.subr.mxu0 0.0
        %2685 = vmatpush1.msra.mxu0 0.0
        %2686 = vmatprep.subr.mxu0 0.0
        %2687 = vmatpush1.msra.mxu0 0.0
        %2688 = vmatprep.subr.mxu0 0.0
        %2689 = vmatpush1.msra.mxu0 0.0
        %2690 = vmatprep.subr.mxu0 0.0
        %2691 = vmatpush1.msra.mxu0 0.0
        %2692 = vmatprep.subr.mxu0 0.0
        %2693 = vmatpush1.msra.mxu0 0.0
        %2694 = vmatprep.subr.mxu0 0.0
        %2695 = vmatpush1.msra.mxu0 0.0
        %2696 = vmatprep.subr.mxu0 0.0
        %2697 = vmatpush1.msra.mxu0 0.0
        %2698 = vmatprep.subr.mxu0 0.0
        %2699 = vmatpush1.msra.mxu0 0.0
        %2700 = vmatprep.subr.mxu0 0.0
        %2701 = vmatpush1.msra.mxu0 0.0
        %2702 = vmatprep.subr.mxu0 0.0
        %2703 = vmatpush1.msra.mxu0 0.0
        %2704 = vmatprep.subr.mxu0 0.0
        %2705 = vmatpush1.msra.mxu0 0.0
        %2706 = vmatprep.subr.mxu0 0.0
        %2707 = vmatpush1.msra.mxu0 0.0
        %2708 = vmatprep.subr.mxu0 0.0
        %2709 = vmatpush1.msra.mxu0 0.0
        %2710 = vmatprep.subr.mxu0 0.0
        %2711 = vmatpush1.msra.mxu0 0.0
        %2712 = vmatprep.subr.mxu0 0.0
        %2713 = vmatpush1.msra.mxu0 0.0
        %2714 = vmatprep.subr.mxu0 0.0
        %2715 = vmatpush1.msra.mxu0 0.0
        %2716 = vmatprep.subr.mxu0 0.0
        %2717 = vmatpush1.msra.mxu0 0.0
        %2718 = vmatprep.subr.mxu0 0.0
        %2719 = vmatpush1.msra.mxu0 0.0
        %2720 = vmatprep.subr.mxu0 0.0
        %2721 = vmatpush1.msra.mxu0 0.0
        %2722 = vmatprep.subr.mxu0 0.0
        %2723 = vmatpush1.msra.mxu0 0.0
        %2724 = vmatprep.subr.mxu0 0.0
        %2725 = vmatpush1.msra.mxu0 0.0
        %2726 = vmatprep.subr.mxu0 0.0
        %2727 = vmatpush1.msra.mxu0 0.0
        %2728 = vmatprep.subr.mxu0 0.0
        %2729 = vmatpush1.msra.mxu0 0.0
        %2730 = vmatprep.subr.mxu0 0.0
        %2731 = vmatpush1.msra.mxu0 0.0
        %2732 = vmatprep.subr.mxu0 0.0
        %2733 = vmatpush1.msra.mxu0 0.0
        %2734 = vmatprep.subr.mxu0 0.0
        %2735 = vmatpush1.msra.mxu0 0.0
        %2736 = vmatprep.subr.mxu0 0.0
        %2737 = vmatpush1.msra.mxu0 0.0
        %2738 = vmatprep.subr.mxu0 0.0
        %2739 = vmatpush1.msra.mxu0 0.0
        %2740 = vmatprep.subr.mxu0 0.0
        %2741 = vmatpush1.msra.mxu0 0.0
        %2742 = vmatprep.subr.mxu0 0.0
        %2743 = vmatpush1.msra.mxu0 0.0
        %2744 = vmatprep.mubr.f32.mxu0 0.0
        %v2745 = vand.u32 %v2259, 4294901760
        %2746 = vmatmul.mubr.f32.gmra.mrb[0].mxu0 %v2745
        %v2747 = vpop.f32.mrb[0].mxu0
        %v2748 = vadd.f32 %v2672, %v2747
        %v2749 = vpop.f32.mrb[0].mxu0
        %v2750 = vadd.f32 %v2674, %v2749
        %2751 = vdwg.mxu0
        %2752 = vmatprep.subr.mxu0 0.0
        %v2753 = vand.u32 %v2240, 4294901760
        %2754 = vmatpush1.msra.mxu0 %v2753
        %2755 = vmatprep.subr.mxu0 0.0
        %v2756 = vand.u32 %v2246, 4294901760
        %2757 = vmatpush1.msra.mxu0 %v2756
        %2758 = vmatprep.subr.mxu0 0.0
        %2759 = vmatpush1.msra.mxu0 0.0
        %2760 = vmatprep.subr.mxu0 0.0
        %2761 = vmatpush1.msra.mxu0 0.0
        %2762 = vmatprep.subr.mxu0 0.0
        %2763 = vmatpush1.msra.mxu0 0.0
        %2764 = vmatprep.subr.mxu0 0.0
        %2765 = vmatpush1.msra.mxu0 0.0
        %2766 = vmatprep.subr.mxu0 0.0
        %2767 = vmatpush1.msra.mxu0 0.0
        %2768 = vmatprep.subr.mxu0 0.0
        %2769 = vmatpush1.msra.mxu0 0.0
        %2770 = vmatprep.subr.mxu0 0.0
        %2771 = vmatpush1.msra.mxu0 0.0
        %2772 = vmatprep.subr.mxu0 0.0
        %2773 = vmatpush1.msra.mxu0 0.0
        %2774 = vmatprep.subr.mxu0 0.0
        %2775 = vmatpush1.msra.mxu0 0.0
        %2776 = vmatprep.subr.mxu0 0.0
        %2777 = vmatpush1.msra.mxu0 0.0
        %2778 = vmatprep.subr.mxu0 0.0
        %2779 = vmatpush1.msra.mxu0 0.0
        %2780 = vmatprep.subr.mxu0 0.0
        %2781 = vmatpush1.msra.mxu0 0.0
        %2782 = vmatprep.subr.mxu0 0.0
        %2783 = vmatpush1.msra.mxu0 0.0
        %2784 = vmatprep.subr.mxu0 0.0
        %2785 = vmatpush1.msra.mxu0 0.0
        %2786 = vmatprep.subr.mxu0 0.0
        %2787 = vmatpush1.msra.mxu0 0.0
        %2788 = vmatprep.subr.mxu0 0.0
        %2789 = vmatpush1.msra.mxu0 0.0
        %2790 = vmatprep.subr.mxu0 0.0
        %2791 = vmatpush1.msra.mxu0 0.0
        %2792 = vmatprep.subr.mxu0 0.0
        %2793 = vmatpush1.msra.mxu0 0.0
        %2794 = vmatprep.subr.mxu0 0.0
        %2795 = vmatpush1.msra.mxu0 0.0
        %2796 = vmatprep.subr.mxu0 0.0
        %2797 = vmatpush1.msra.mxu0 0.0
        %2798 = vmatprep.subr.mxu0 0.0
        %2799 = vmatpush1.msra.mxu0 0.0
        %2800 = vmatprep.subr.mxu0 0.0
        %2801 = vmatpush1.msra.mxu0 0.0
        %2802 = vmatprep.subr.mxu0 0.0
        %2803 = vmatpush1.msra.mxu0 0.0
        %2804 = vmatprep.subr.mxu0 0.0
        %2805 = vmatpush1.msra.mxu0 0.0
        %2806 = vmatprep.subr.mxu0 0.0
        %2807 = vmatpush1.msra.mxu0 0.0
        %2808 = vmatprep.subr.mxu0 0.0
        %2809 = vmatpush1.msra.mxu0 0.0
        %2810 = vmatprep.subr.mxu0 0.0
        %2811 = vmatpush1.msra.mxu0 0.0
        %2812 = vmatprep.subr.mxu0 0.0
        %2813 = vmatpush1.msra.mxu0 0.0
        %2814 = vmatprep.subr.mxu0 0.0
        %2815 = vmatpush1.msra.mxu0 0.0
        %2816 = vmatprep.subr.mxu0 0.0
        %2817 = vmatpush1.msra.mxu0 0.0
        %2818 = vmatprep.mubr.f32.mxu0 0.0
        %v2819 = vand.u32 %v2259, 4294901760
        %v2820 = vsub.f32 %v2259, %v2819
        %v2821 = vand.u32 %v2820, 4294901760
        %v2822 = vsub.f32 %v2820, %v2821
        %v2823 = vand.u32 %v2822, 4294901760
        %2824 = vmatmul.mubr.f32.gmra.mrb[0].mxu0 %v2823
        %v2825 = vpop.f32.mrb[0].mxu0
        %v2826 = vadd.f32 0.0, %v2825
        %v2827 = vpop.f32.mrb[0].mxu0
        %2828 = vdwg.mxu0
        %2829 = vmatprep.subr.mxu0 0.0
        %v2830 = vand.u32 %v2240, 4294901760
        %v2831 = vsub.f32 %v2240, %v2830
        %v2832 = vand.u32 %v2831, 4294901760
        %v2833 = vsub.f32 %v2831, %v2832
        %v2834 = vand.u32 %v2833, 4294901760
        %2835 = vmatpush1.msra.mxu0 %v2834
        %2836 = vmatprep.subr.mxu0 0.0
        %v2837 = vand.u32 %v2246, 4294901760
        %v2838 = vsub.f32 %v2246, %v2837
        %v2839 = vand.u32 %v2838, 4294901760
        %v2840 = vsub.f32 %v2838, %v2839
        %v2841 = vand.u32 %v2840, 4294901760
        %2842 = vmatpush1.msra.mxu0 %v2841
        %2843 = vmatprep.subr.mxu0 0.0
        %2844 = vmatpush1.msra.mxu0 0.0
        %2845 = vmatprep.subr.mxu0 0.0
        %2846 = vmatpush1.msra.mxu0 0.0
        %2847 = vmatprep.subr.mxu0 0.0
        %2848 = vmatpush1.msra.mxu0 0.0
        %2849 = vmatprep.subr.mxu0 0.0
        %2850 = vmatpush1.msra.mxu0 0.0
        %2851 = vmatprep.subr.mxu0 0.0
        %2852 = vmatpush1.msra.mxu0 0.0
        %2853 = vmatprep.subr.mxu0 0.0
        %2854 = vmatpush1.msra.mxu0 0.0
        %2855 = vmatprep.subr.mxu0 0.0
        %2856 = vmatpush1.msra.mxu0 0.0
        %2857 = vmatprep.subr.mxu0 0.0
        %2858 = vmatpush1.msra.mxu0 0.0
        %2859 = vmatprep.subr.mxu0 0.0
        %2860 = vmatpush1.msra.mxu0 0.0
        %2861 = vmatprep.subr.mxu0 0.0
        %2862 = vmatpush1.msra.mxu0 0.0
        %2863 = vmatprep.subr.mxu0 0.0
        %2864 = vmatpush1.msra.mxu0 0.0
        %2865 = vmatprep.subr.mxu0 0.0
        %2866 = vmatpush1.msra.mxu0 0.0
        %2867 = vmatprep.subr.mxu0 0.0
        %2868 = vmatpush1.msra.mxu0 0.0
        %2869 = vmatprep.subr.mxu0 0.0
        %2870 = vmatpush1.msra.mxu0 0.0
        %2871 = vmatprep.subr.mxu0 0.0
        %2872 = vmatpush1.msra.mxu0 0.0
        %2873 = vmatprep.subr.mxu0 0.0
        %2874 = vmatpush1.msra.mxu0 0.0
        %2875 = vmatprep.subr.mxu0 0.0
        %2876 = vmatpush1.msra.mxu0 0.0
        %2877 = vmatprep.subr.mxu0 0.0
        %2878 = vmatpush1.msra.mxu0 0.0
        %2879 = vmatprep.subr.mxu0 0.0
        %2880 = vmatpush1.msra.mxu0 0.0
        %2881 = vmatprep.subr.mxu0 0.0
        %2882 = vmatpush1.msra.mxu0 0.0
        %2883 = vmatprep.subr.mxu0 0.0
        %2884 = vmatpush1.msra.mxu0 0.0
        %2885 = vmatprep.subr.mxu0 0.0
        %2886 = vmatpush1.msra.mxu0 0.0
        %2887 = vmatprep.subr.mxu0 0.0
        %2888 = vmatpush1.msra.mxu0 0.0
        %2889 = vmatprep.subr.mxu0 0.0
        %2890 = vmatpush1.msra.mxu0 0.0
        %2891 = vmatprep.subr.mxu0 0.0
        %2892 = vmatpush1.msra.mxu0 0.0
        %2893 = vmatprep.subr.mxu0 0.0
        %2894 = vmatpush1.msra.mxu0 0.0
        %2895 = vmatprep.subr.mxu0 0.0
        %2896 = vmatpush1.msra.mxu0 0.0
        %2897 = vmatprep.subr.mxu0 0.0
        %2898 = vmatpush1.msra.mxu0 0.0
        %2899 = vmatprep.subr.mxu0 0.0
        %2900 = vmatpush1.msra.mxu0 0.0
        %2901 = vmatprep.subr.mxu0 0.0
        %2902 = vmatpush1.msra.mxu0 0.0
        %2903 = vmatprep.mubr.f32.mxu0 0.0
        %v2904 = vand.u32 %v2259, 4294901760
        %2905 = vmatmul.mubr.f32.gmra.mrb[0].mxu0 %v2904
        %v2906 = vpop.f32.mrb[0].mxu0
        %v2907 = vadd.f32 %v2826, %v2906
        %v2908 = vpop.f32.mrb[0].mxu0
        %2909 = vdwg.mxu0
        %2910 = vmatprep.subr.mxu0 0.0
        %v2911 = vand.u32 %v2240, 4294901760
        %v2912 = vsub.f32 %v2240, %v2911
        %2913 = vmatpush1.msra.mxu0 %v2912
        %2914 = vmatprep.subr.mxu0 0.0
        %v2915 = vand.u32 %v2246, 4294901760
        %v2916 = vsub.f32 %v2246, %v2915
        %2917 = vmatpush1.msra.mxu0 %v2916
        %2918 = vmatprep.subr.mxu0 0.0
        %2919 = vmatpush1.msra.mxu0 0.0
        %2920 = vmatprep.subr.mxu0 0.0
        %2921 = vmatpush1.msra.mxu0 0.0
        %2922 = vmatprep.subr.mxu0 0.0
        %2923 = vmatpush1.msra.mxu0 0.0
        %2924 = vmatprep.subr.mxu0 0.0
        %2925 = vmatpush1.msra.mxu0 0.0
        %2926 = vmatprep.subr.mxu0 0.0
        %2927 = vmatpush1.msra.mxu0 0.0
        %2928 = vmatprep.subr.mxu0 0.0
        %2929 = vmatpush1.msra.mxu0 0.0
        %2930 = vmatprep.subr.mxu0 0.0
        %2931 = vmatpush1.msra.mxu0 0.0
        %2932 = vmatprep.subr.mxu0 0.0
        %2933 = vmatpush1.msra.mxu0 0.0
        %2934 = vmatprep.subr.mxu0 0.0
        %2935 = vmatpush1.msra.mxu0 0.0
        %2936 = vmatprep.subr.mxu0 0.0
        %2937 = vmatpush1.msra.mxu0 0.0
        %2938 = vmatprep.subr.mxu0 0.0
        %2939 = vmatpush1.msra.mxu0 0.0
        %2940 = vmatprep.subr.mxu0 0.0
        %2941 = vmatpush1.msra.mxu0 0.0
        %2942 = vmatprep.subr.mxu0 0.0
        %2943 = vmatpush1.msra.mxu0 0.0
        %2944 = vmatprep.subr.mxu0 0.0
        %2945 = vmatpush1.msra.mxu0 0.0
        %2946 = vmatprep.subr.mxu0 0.0
        %2947 = vmatpush1.msra.mxu0 0.0
        %2948 = vmatprep.subr.mxu0 0.0
        %2949 = vmatpush1.msra.mxu0 0.0
        %2950 = vmatprep.subr.mxu0 0.0
        %2951 = vmatpush1.msra.mxu0 0.0
        %2952 = vmatprep.subr.mxu0 0.0
        %2953 = vmatpush1.msra.mxu0 0.0
        %2954 = vmatprep.subr.mxu0 0.0
        %2955 = vmatpush1.msra.mxu0 0.0
        %2956 = vmatprep.subr.mxu0 0.0
        %2957 = vmatpush1.msra.mxu0 0.0
        %2958 = vmatprep.subr.mxu0 0.0
        %2959 = vmatpush1.msra.mxu0 0.0
        %2960 = vmatprep.subr.mxu0 0.0
        %2961 = vmatpush1.msra.mxu0 0.0
        %2962 = vmatprep.subr.mxu0 0.0
        %2963 = vmatpush1.msra.mxu0 0.0
        %2964 = vmatprep.subr.mxu0 0.0
        %2965 = vmatpush1.msra.mxu0 0.0
        %2966 = vmatprep.subr.mxu0 0.0
        %2967 = vmatpush1.msra.mxu0 0.0
        %2968 = vmatprep.subr.mxu0 0.0
        %2969 = vmatpush1.msra.mxu0 0.0
        %2970 = vmatprep.subr.mxu0 0.0
        %2971 = vmatpush1.msra.mxu0 0.0
        %2972 = vmatprep.subr.mxu0 0.0
        %2973 = vmatpush1.msra.mxu0 0.0
        %2974 = vmatprep.subr.mxu0 0.0
        %2975 = vmatpush1.msra.mxu0 0.0
        %2976 = vmatprep.subr.mxu0 0.0
        %2977 = vmatpush1.msra.mxu0 0.0
        %2978 = vmatprep.mubr.f32.mxu0 0.0
        %v2979 = vand.u32 %v2259, 4294901760
        %v2980 = vsub.f32 %v2259, %v2979
        %2981 = vmatmul.mubr.f32.gmra.mrb[0].mxu0 %v2980
        %v2982 = vpop.f32.mrb[0].mxu0
        %v2983 = vadd.f32 %v2907, %v2982
        %v2984 = vpop.f32.mrb[0].mxu0
        %2985 = vdwg.mxu0
        %2986 = vmatprep.subr.mxu0 0.0
        %v2987 = vand.u32 %v2240, 4294901760
        %2988 = vmatpush1.msra.mxu0 %v2987
        %2989 = vmatprep.subr.mxu0 0.0
        %v2990 = vand.u32 %v2246, 4294901760
        %2991 = vmatpush1.msra.mxu0 %v2990
        %2992 = vmatprep.subr.mxu0 0.0
        %2993 = vmatpush1.msra.mxu0 0.0
        %2994 = vmatprep.subr.mxu0 0.0
        %2995 = vmatpush1.msra.mxu0 0.0
        %2996 = vmatprep.subr.mxu0 0.0
        %2997 = vmatpush1.msra.mxu0 0.0
        %2998 = vmatprep.subr.mxu0 0.0
        %2999 = vmatpush1.msra.mxu0 0.0
        %3000 = vmatprep.subr.mxu0 0.0
        %3001 = vmatpush1.msra.mxu0 0.0
        %3002 = vmatprep.subr.mxu0 0.0
        %3003 = vmatpush1.msra.mxu0 0.0
        %3004 = vmatprep.subr.mxu0 0.0
        %3005 = vmatpush1.msra.mxu0 0.0
        %3006 = vmatprep.subr.mxu0 0.0
        %3007 = vmatpush1.msra.mxu0 0.0
        %3008 = vmatprep.subr.mxu0 0.0
        %3009 = vmatpush1.msra.mxu0 0.0
        %3010 = vmatprep.subr.mxu0 0.0
        %3011 = vmatpush1.msra.mxu0 0.0
        %3012 = vmatprep.subr.mxu0 0.0
        %3013 = vmatpush1.msra.mxu0 0.0
        %3014 = vmatprep.subr.mxu0 0.0
        %3015 = vmatpush1.msra.mxu0 0.0
        %3016 = vmatprep.subr.mxu0 0.0
        %3017 = vmatpush1.msra.mxu0 0.0
        %3018 = vmatprep.subr.mxu0 0.0
        %3019 = vmatpush1.msra.mxu0 0.0
        %3020 = vmatprep.subr.mxu0 0.0
        %3021 = vmatpush1.msra.mxu0 0.0
        %3022 = vmatprep.subr.mxu0 0.0
        %3023 = vmatpush1.msra.mxu0 0.0
        %3024 = vmatprep.subr.mxu0 0.0
        %3025 = vmatpush1.msra.mxu0 0.0
        %3026 = vmatprep.subr.mxu0 0.0
        %3027 = vmatpush1.msra.mxu0 0.0
        %3028 = vmatprep.subr.mxu0 0.0
        %3029 = vmatpush1.msra.mxu0 0.0
        %3030 = vmatprep.subr.mxu0 0.0
        %3031 = vmatpush1.msra.mxu0 0.0
        %3032 = vmatprep.subr.mxu0 0.0
        %3033 = vmatpush1.msra.mxu0 0.0
        %3034 = vmatprep.subr.mxu0 0.0
        %3035 = vmatpush1.msra.mxu0 0.0
        %3036 = vmatprep.subr.mxu0 0.0
        %3037 = vmatpush1.msra.mxu0 0.0
        %3038 = vmatprep.subr.mxu0 0.0
        %3039 = vmatpush1.msra.mxu0 0.0
        %3040 = vmatprep.subr.mxu0 0.0
        %3041 = vmatpush1.msra.mxu0 0.0
        %3042 = vmatprep.subr.mxu0 0.0
        %3043 = vmatpush1.msra.mxu0 0.0
        %3044 = vmatprep.subr.mxu0 0.0
        %3045 = vmatpush1.msra.mxu0 0.0
        %3046 = vmatprep.subr.mxu0 0.0
        %3047 = vmatpush1.msra.mxu0 0.0
        %3048 = vmatprep.subr.mxu0 0.0
        %3049 = vmatpush1.msra.mxu0 0.0
        %3050 = vmatprep.subr.mxu0 0.0
        %3051 = vmatpush1.msra.mxu0 0.0
        %3052 = vmatprep.mubr.f32.mxu0 0.0
        %v3053 = vand.u32 %v2259, 4294901760
        %v3054 = vsub.f32 %v2259, %v3053
        %v3055 = vand.u32 %v3054, 4294901760
        %3056 = vmatmul.mubr.f32.gmra.mrb[0].mxu0 %v3055
        %v3057 = vpop.f32.mrb[0].mxu0
        %v3058 = vadd.f32 %v2983, %v3057
        %v3059 = vpop.f32.mrb[0].mxu0
        %3060 = vdwg.mxu0
        %3061 = vmatprep.subr.mxu0 0.0
        %v3062 = vand.u32 %v2240, 4294901760
        %v3063 = vsub.f32 %v2240, %v3062
        %v3064 = vand.u32 %v3063, 4294901760
        %3065 = vmatpush1.msra.mxu0 %v3064
        %3066 = vmatprep.subr.mxu0 0.0
        %v3067 = vand.u32 %v2246, 4294901760
        %v3068 = vsub.f32 %v2246, %v3067
        %v3069 = vand.u32 %v3068, 4294901760
        %3070 = vmatpush1.msra.mxu0 %v3069
        %3071 = vmatprep.subr.mxu0 0.0
        %3072 = vmatpush1.msra.mxu0 0.0
        %3073 = vmatprep.subr.mxu0 0.0
        %3074 = vmatpush1.msra.mxu0 0.0
        %3075 = vmatprep.subr.mxu0 0.0
        %3076 = vmatpush1.msra.mxu0 0.0
        %3077 = vmatprep.subr.mxu0 0.0
        %3078 = vmatpush1.msra.mxu0 0.0
        %3079 = vmatprep.subr.mxu0 0.0
        %3080 = vmatpush1.msra.mxu0 0.0
        %3081 = vmatprep.subr.mxu0 0.0
        %3082 = vmatpush1.msra.mxu0 0.0
        %3083 = vmatprep.subr.mxu0 0.0
        %3084 = vmatpush1.msra.mxu0 0.0
        %3085 = vmatprep.subr.mxu0 0.0
        %3086 = vmatpush1.msra.mxu0 0.0
        %3087 = vmatprep.subr.mxu0 0.0
        %3088 = vmatpush1.msra.mxu0 0.0
        %3089 = vmatprep.subr.mxu0 0.0
        %3090 = vmatpush1.msra.mxu0 0.0
        %3091 = vmatprep.subr.mxu0 0.0
        %3092 = vmatpush1.msra.mxu0 0.0
        %3093 = vmatprep.subr.mxu0 0.0
        %3094 = vmatpush1.msra.mxu0 0.0
        %3095 = vmatprep.subr.mxu0 0.0
        %3096 = vmatpush1.msra.mxu0 0.0
        %3097 = vmatprep.subr.mxu0 0.0
        %3098 = vmatpush1.msra.mxu0 0.0
        %3099 = vmatprep.subr.mxu0 0.0
        %3100 = vmatpush1.msra.mxu0 0.0
        %3101 = vmatprep.subr.mxu0 0.0
        %3102 = vmatpush1.msra.mxu0 0.0
        %3103 = vmatprep.subr.mxu0 0.0
        %3104 = vmatpush1.msra.mxu0 0.0
        %3105 = vmatprep.subr.mxu0 0.0
        %3106 = vmatpush1.msra.mxu0 0.0
        %3107 = vmatprep.subr.mxu0 0.0
        %3108 = vmatpush1.msra.mxu0 0.0
        %3109 = vmatprep.subr.mxu0 0.0
        %3110 = vmatpush1.msra.mxu0 0.0
        %3111 = vmatprep.subr.mxu0 0.0
        %3112 = vmatpush1.msra.mxu0 0.0
        %3113 = vmatprep.subr.mxu0 0.0
        %3114 = vmatpush1.msra.mxu0 0.0
        %3115 = vmatprep.subr.mxu0 0.0
        %3116 = vmatpush1.msra.mxu0 0.0
        %3117 = vmatprep.subr.mxu0 0.0
        %3118 = vmatpush1.msra.mxu0 0.0
        %3119 = vmatprep.subr.mxu0 0.0
        %3120 = vmatpush1.msra.mxu0 0.0
        %3121 = vmatprep.subr.mxu0 0.0
        %3122 = vmatpush1.msra.mxu0 0.0
        %3123 = vmatprep.subr.mxu0 0.0
        %3124 = vmatpush1.msra.mxu0 0.0
        %3125 = vmatprep.subr.mxu0 0.0
        %3126 = vmatpush1.msra.mxu0 0.0
        %3127 = vmatprep.subr.mxu0 0.0
        %3128 = vmatpush1.msra.mxu0 0.0
        %3129 = vmatprep.subr.mxu0 0.0
        %3130 = vmatpush1.msra.mxu0 0.0
        %3131 = vmatprep.mubr.f32.mxu0 0.0
        %v3132 = vand.u32 %v2259, 4294901760
        %3133 = vmatmul.mubr.f32.gmra.mrb[0].mxu0 %v3132
        %v3134 = vpop.f32.mrb[0].mxu0
        %v3135 = vadd.f32 %v3058, %v3134
        %v3136 = vpop.f32.mrb[0].mxu0
        %3137 = vdwg.mxu0
        %3138 = vmatprep.subr.mxu0 0.0
        %v3139 = vand.u32 %v2240, 4294901760
        %3140 = vmatpush1.msra.mxu0 %v3139
        %3141 = vmatprep.subr.mxu0 0.0
        %v3142 = vand.u32 %v2246, 4294901760
        %3143 = vmatpush1.msra.mxu0 %v3142
        %3144 = vmatprep.subr.mxu0 0.0
        %3145 = vmatpush1.msra.mxu0 0.0
        %3146 = vmatprep.subr.mxu0 0.0
        %3147 = vmatpush1.msra.mxu0 0.0
        %3148 = vmatprep.subr.mxu0 0.0
        %3149 = vmatpush1.msra.mxu0 0.0
        %3150 = vmatprep.subr.mxu0 0.0
        %3151 = vmatpush1.msra.mxu0 0.0
        %3152 = vmatprep.subr.mxu0 0.0
        %3153 = vmatpush1.msra.mxu0 0.0
        %3154 = vmatprep.subr.mxu0 0.0
        %3155 = vmatpush1.msra.mxu0 0.0
        %3156 = vmatprep.subr.mxu0 0.0
        %3157 = vmatpush1.msra.mxu0 0.0
        %3158 = vmatprep.subr.mxu0 0.0
        %3159 = vmatpush1.msra.mxu0 0.0
        %3160 = vmatprep.subr.mxu0 0.0
        %3161 = vmatpush1.msra.mxu0 0.0
        %3162 = vmatprep.subr.mxu0 0.0
        %3163 = vmatpush1.msra.mxu0 0.0
        %3164 = vmatprep.subr.mxu0 0.0
        %3165 = vmatpush1.msra.mxu0 0.0
        %3166 = vmatprep.subr.mxu0 0.0
        %3167 = vmatpush1.msra.mxu0 0.0
        %3168 = vmatprep.subr.mxu0 0.0
        %3169 = vmatpush1.msra.mxu0 0.0
        %3170 = vmatprep.subr.mxu0 0.0
        %3171 = vmatpush1.msra.mxu0 0.0
        %3172 = vmatprep.subr.mxu0 0.0
        %3173 = vmatpush1.msra.mxu0 0.0
        %3174 = vmatprep.subr.mxu0 0.0
        %3175 = vmatpush1.msra.mxu0 0.0
        %3176 = vmatprep.subr.mxu0 0.0
        %3177 = vmatpush1.msra.mxu0 0.0
        %3178 = vmatprep.subr.mxu0 0.0
        %3179 = vmatpush1.msra.mxu0 0.0
        %3180 = vmatprep.subr.mxu0 0.0
        %3181 = vmatpush1.msra.mxu0 0.0
        %3182 = vmatprep.subr.mxu0 0.0
        %3183 = vmatpush1.msra.mxu0 0.0
        %3184 = vmatprep.subr.mxu0 0.0
        %3185 = vmatpush1.msra.mxu0 0.0
        %3186 = vmatprep.subr.mxu0 0.0
        %3187 = vmatpush1.msra.mxu0 0.0
        %3188 = vmatprep.subr.mxu0 0.0
        %3189 = vmatpush1.msra.mxu0 0.0
        %3190 = vmatprep.subr.mxu0 0.0
        %3191 = vmatpush1.msra.mxu0 0.0
        %3192 = vmatprep.subr.mxu0 0.0
        %3193 = vmatpush1.msra.mxu0 0.0
        %3194 = vmatprep.subr.mxu0 0.0
        %3195 = vmatpush1.msra.mxu0 0.0
        %3196 = vmatprep.subr.mxu0 0.0
        %3197 = vmatpush1.msra.mxu0 0.0
        %3198 = vmatprep.subr.mxu0 0.0
        %3199 = vmatpush1.msra.mxu0 0.0
        %3200 = vmatprep.subr.mxu0 0.0
        %3201 = vmatpush1.msra.mxu0 0.0
        %3202 = vmatprep.subr.mxu0 0.0
        %3203 = vmatpush1.msra.mxu0 0.0
        %3204 = vmatprep.mubr.f32.mxu0 0.0
        %v3205 = vand.u32 %v2259, 4294901760
        %3206 = vmatmul.mubr.f32.gmra.mrb[0].mxu0 %v3205
        %v3207 = vpop.f32.mrb[0].mxu0
        %v3208 = vadd.f32 %v3135, %v3207
        %v3209 = vpop.f32.mrb[0].mxu0
        %3210 = vdwg.mxu0
        %v3211 = vadd.f32 %v1770, %v2748
        %v3212 = vadd.f32 %v1772, %v2750
        %v3213 = vadd.f32 %v2230, %v3208
        %s3214 = scalar_lea.vmem [#allocation5], 24
        %v3215 = vld [vmem:[%s3214] sm:$0xff]
        %3216 = vrot.lane.b32.xlu0 %v288, 110
        %v3217 = vpop.permute.xlu0 %3216
        %3218 = vrot.lane.b32.xlu0 %v289, 110
        %v3219 = vpop.permute.xlu0 %3218
        %3220 = vrot.lane.b32.xlu0 %v290, 110
        %v3221 = vpop.permute.xlu0 %3220
        %3222 = vrot.lane.b32.xlu0 %v291, 110
        %v3223 = vpop.permute.xlu0 %3222
        %3224 = vrot.lane.b32.xlu0 %v292, 110
        %v3225 = vpop.permute.xlu0 %3224
        %3226 = vrot.lane.b32.xlu0 %v293, 110
        %v3227 = vpop.permute.xlu0 %3226
        %vm3228 = vcmask 900096
        %v3229 = vsel %vm3228, %v3217, %v3219
        %v3230 = vsel %vm3228, %v3219, %v3221
        %v3231 = vsel %vm3228, %v3223, %v3225
        %v3232 = vsel %vm3228, %v3225, %v3227
        %v3240 = vsel %vm326, %v3215, 0
        %v3242 = vand.u32 %v3230, 4294901760
        %3243 = vmatprep.subr.mxu0 %v3242
        %v3244 = vand.u32 %v3229, 4294901760
        %3245 = vmatpush1.msra.mxu0 %v3244
        %v3246 = vand.u32 %v3232, 4294901760
        %3247 = vmatprep.subr.mxu0 %v3246
        %v3248 = vand.u32 %v3231, 4294901760
        %3249 = vmatpush1.msra.mxu0 %v3248
        %3250 = vmatprep.subr.mxu0 0.0
        %3251 = vmatpush1.msra.mxu0 0.0
        %3252 = vmatprep.subr.mxu0 0.0
        %3253 = vmatpush1.msra.mxu0 0.0
        %3254 = vmatprep.subr.mxu0 0.0
        %3255 = vmatpush1.msra.mxu0 0.0
        %3256 = vmatprep.subr.mxu0 0.0
        %3257 = vmatpush1.msra.mxu0 0.0
        %3258 = vmatprep.subr.mxu0 0.0
        %3259 = vmatpush1.msra.mxu0 0.0
        %3260 = vmatprep.subr.mxu0 0.0
        %3261 = vmatpush1.msra.mxu0 0.0
        %3262 = vmatprep.subr.mxu0 0.0
        %3263 = vmatpush1.msra.mxu0 0.0
        %3264 = vmatprep.subr.mxu0 0.0
        %3265 = vmatpush1.msra.mxu0 0.0
        %3266 = vmatprep.subr.mxu0 0.0
        %3267 = vmatpush1.msra.mxu0 0.0
        %3268 = vmatprep.subr.mxu0 0.0
        %3269 = vmatpush1.msra.mxu0 0.0
        %3270 = vmatprep.subr.mxu0 0.0
        %3271 = vmatpush1.msra.mxu0 0.0
        %3272 = vmatprep.subr.mxu0 0.0
        %3273 = vmatpush1.msra.mxu0 0.0
        %3274 = vmatprep.subr.mxu0 0.0
        %3275 = vmatpush1.msra.mxu0 0.0
        %3276 = vmatprep.subr.mxu0 0.0
        %3277 = vmatpush1.msra.mxu0 0.0
        %3278 = vmatprep.subr.mxu0 0.0
        %3279 = vmatpush1.msra.mxu0 0.0
        %3280 = vmatprep.subr.mxu0 0.0
        %3281 = vmatpush1.msra.mxu0 0.0
        %3282 = vmatprep.subr.mxu0 0.0
        %3283 = vmatpush1.msra.mxu0 0.0
        %3284 = vmatprep.subr.mxu0 0.0
        %3285 = vmatpush1.msra.mxu0 0.0
        %3286 = vmatprep.subr.mxu0 0.0
        %3287 = vmatpush1.msra.mxu0 0.0
        %3288 = vmatprep.subr.mxu0 0.0
        %3289 = vmatpush1.msra.mxu0 0.0
        %3290 = vmatprep.subr.mxu0 0.0
        %3291 = vmatpush1.msra.mxu0 0.0
        %3292 = vmatprep.subr.mxu0 0.0
        %3293 = vmatpush1.msra.mxu0 0.0
        %3294 = vmatprep.subr.mxu0 0.0
        %3295 = vmatpush1.msra.mxu0 0.0
        %3296 = vmatprep.subr.mxu0 0.0
        %3297 = vmatpush1.msra.mxu0 0.0
        %3298 = vmatprep.subr.mxu0 0.0
        %3299 = vmatpush1.msra.mxu0 0.0
        %3300 = vmatprep.subr.mxu0 0.0
        %3301 = vmatpush1.msra.mxu0 0.0
        %3302 = vmatprep.subr.mxu0 0.0
        %3303 = vmatpush1.msra.mxu0 0.0
        %3304 = vmatprep.subr.mxu0 0.0
        %3305 = vmatpush1.msra.mxu0 0.0
        %3306 = vmatprep.subr.mxu0 0.0
        %3307 = vmatpush1.msra.mxu0 0.0
        %3308 = vmatprep.subr.mxu0 0.0
        %3309 = vmatpush1.msra.mxu0 0.0
        %3310 = vmatprep.mubr.f32.mxu0 0.0
        %v3311 = vand.u32 %v3240, 4294901760
        %v3312 = vsub.f32 %v3240, %v3311
        %v3313 = vand.u32 %v3312, 4294901760
        %v3314 = vsub.f32 %v3312, %v3313
        %v3315 = vand.u32 %v3314, 4294901760
        %3316 = vmatmul.mubr.f32.gmra.mrb[0].mxu0 %v3315
        %v3317 = vpop.f32.mrb[0].mxu0
        %v3318 = vadd.f32 0.0, %v3317
        %v3319 = vpop.f32.mrb[0].mxu0
        %v3320 = vadd.f32 0.0, %v3319
        %3321 = vdwg.mxu0
        %v3322 = vand.u32 %v3230, 4294901760
        %v3323 = vsub.f32 %v3230, %v3322
        %v3324 = vand.u32 %v3323, 4294901760
        %v3325 = vsub.f32 %v3323, %v3324
        %v3326 = vand.u32 %v3325, 4294901760
        %3327 = vmatprep.subr.mxu0 %v3326
        %v3328 = vand.u32 %v3229, 4294901760
        %v3329 = vsub.f32 %v3229, %v3328
        %v3330 = vand.u32 %v3329, 4294901760
        %v3331 = vsub.f32 %v3329, %v3330
        %v3332 = vand.u32 %v3331, 4294901760
        %3333 = vmatpush1.msra.mxu0 %v3332
        %v3334 = vand.u32 %v3232, 4294901760
        %v3335 = vsub.f32 %v3232, %v3334
        %v3336 = vand.u32 %v3335, 4294901760
        %v3337 = vsub.f32 %v3335, %v3336
        %v3338 = vand.u32 %v3337, 4294901760
        %3339 = vmatprep.subr.mxu0 %v3338
        %v3340 = vand.u32 %v3231, 4294901760
        %v3341 = vsub.f32 %v3231, %v3340
        %v3342 = vand.u32 %v3341, 4294901760
        %v3343 = vsub.f32 %v3341, %v3342
        %v3344 = vand.u32 %v3343, 4294901760
        %3345 = vmatpush1.msra.mxu0 %v3344
        %3346 = vmatprep.subr.mxu0 0.0
        %3347 = vmatpush1.msra.mxu0 0.0
        %3348 = vmatprep.subr.mxu0 0.0
        %3349 = vmatpush1.msra.mxu0 0.0
        %3350 = vmatprep.subr.mxu0 0.0
        %3351 = vmatpush1.msra.mxu0 0.0
        %3352 = vmatprep.subr.mxu0 0.0
        %3353 = vmatpush1.msra.mxu0 0.0
        %3354 = vmatprep.subr.mxu0 0.0
        %3355 = vmatpush1.msra.mxu0 0.0
        %3356 = vmatprep.subr.mxu0 0.0
        %3357 = vmatpush1.msra.mxu0 0.0
        %3358 = vmatprep.subr.mxu0 0.0
        %3359 = vmatpush1.msra.mxu0 0.0
        %3360 = vmatprep.subr.mxu0 0.0
        %3361 = vmatpush1.msra.mxu0 0.0
        %3362 = vmatprep.subr.mxu0 0.0
        %3363 = vmatpush1.msra.mxu0 0.0
        %3364 = vmatprep.subr.mxu0 0.0
        %3365 = vmatpush1.msra.mxu0 0.0
        %3366 = vmatprep.subr.mxu0 0.0
        %3367 = vmatpush1.msra.mxu0 0.0
        %3368 = vmatprep.subr.mxu0 0.0
        %3369 = vmatpush1.msra.mxu0 0.0
        %3370 = vmatprep.subr.mxu0 0.0
        %3371 = vmatpush1.msra.mxu0 0.0
        %3372 = vmatprep.subr.mxu0 0.0
        %3373 = vmatpush1.msra.mxu0 0.0
        %3374 = vmatprep.subr.mxu0 0.0
        %3375 = vmatpush1.msra.mxu0 0.0
        %3376 = vmatprep.subr.mxu0 0.0
        %3377 = vmatpush1.msra.mxu0 0.0
        %3378 = vmatprep.subr.mxu0 0.0
        %3379 = vmatpush1.msra.mxu0 0.0
        %3380 = vmatprep.subr.mxu0 0.0
        %3381 = vmatpush1.msra.mxu0 0.0
        %3382 = vmatprep.subr.mxu0 0.0
        %3383 = vmatpush1.msra.mxu0 0.0
        %3384 = vmatprep.subr.mxu0 0.0
        %3385 = vmatpush1.msra.mxu0 0.0
        %3386 = vmatprep.subr.mxu0 0.0
        %3387 = vmatpush1.msra.mxu0 0.0
        %3388 = vmatprep.subr.mxu0 0.0
        %3389 = vmatpush1.msra.mxu0 0.0
        %3390 = vmatprep.subr.mxu0 0.0
        %3391 = vmatpush1.msra.mxu0 0.0
        %3392 = vmatprep.subr.mxu0 0.0
        %3393 = vmatpush1.msra.mxu0 0.0
        %3394 = vmatprep.subr.mxu0 0.0
        %3395 = vmatpush1.msra.mxu0 0.0
        %3396 = vmatprep.subr.mxu0 0.0
        %3397 = vmatpush1.msra.mxu0 0.0
        %3398 = vmatprep.subr.mxu0 0.0
        %3399 = vmatpush1.msra.mxu0 0.0
        %3400 = vmatprep.subr.mxu0 0.0
        %3401 = vmatpush1.msra.mxu0 0.0
        %3402 = vmatprep.subr.mxu0 0.0
        %3403 = vmatpush1.msra.mxu0 0.0
        %3404 = vmatprep.subr.mxu0 0.0
        %3405 = vmatpush1.msra.mxu0 0.0
        %3406 = vmatprep.mubr.f32.mxu0 0.0
        %v3407 = vand.u32 %v3240, 4294901760
        %3408 = vmatmul.mubr.f32.gmra.mrb[0].mxu0 %v3407
        %v3409 = vpop.f32.mrb[0].mxu0
        %v3410 = vadd.f32 %v3318, %v3409
        %v3411 = vpop.f32.mrb[0].mxu0
        %v3412 = vadd.f32 %v3320, %v3411
        %3413 = vdwg.mxu0
        %v3414 = vand.u32 %v3230, 4294901760
        %v3415 = vsub.f32 %v3230, %v3414
        %3416 = vmatprep.subr.mxu0 %v3415
        %v3417 = vand.u32 %v3229, 4294901760
        %v3418 = vsub.f32 %v3229, %v3417
        %3419 = vmatpush1.msra.mxu0 %v3418
        %v3420 = vand.u32 %v3232, 4294901760
        %v3421 = vsub.f32 %v3232, %v3420
        %3422 = vmatprep.subr.mxu0 %v3421
        %v3423 = vand.u32 %v3231, 4294901760
        %v3424 = vsub.f32 %v3231, %v3423
        %3425 = vmatpush1.msra.mxu0 %v3424
        %3426 = vmatprep.subr.mxu0 0.0
        %3427 = vmatpush1.msra.mxu0 0.0
        %3428 = vmatprep.subr.mxu0 0.0
        %3429 = vmatpush1.msra.mxu0 0.0
        %3430 = vmatprep.subr.mxu0 0.0
        %3431 = vmatpush1.msra.mxu0 0.0
        %3432 = vmatprep.subr.mxu0 0.0
        %3433 = vmatpush1.msra.mxu0 0.0
        %3434 = vmatprep.subr.mxu0 0.0
        %3435 = vmatpush1.msra.mxu0 0.0
        %3436 = vmatprep.subr.mxu0 0.0
        %3437 = vmatpush1.msra.mxu0 0.0
        %3438 = vmatprep.subr.mxu0 0.0
        %3439 = vmatpush1.msra.mxu0 0.0
        %3440 = vmatprep.subr.mxu0 0.0
        %3441 = vmatpush1.msra.mxu0 0.0
        %3442 = vmatprep.subr.mxu0 0.0
        %3443 = vmatpush1.msra.mxu0 0.0
        %3444 = vmatprep.subr.mxu0 0.0
        %3445 = vmatpush1.msra.mxu0 0.0
        %3446 = vmatprep.subr.mxu0 0.0
        %3447 = vmatpush1.msra.mxu0 0.0
        %3448 = vmatprep.subr.mxu0 0.0
        %3449 = vmatpush1.msra.mxu0 0.0
        %3450 = vmatprep.subr.mxu0 0.0
        %3451 = vmatpush1.msra.mxu0 0.0
        %3452 = vmatprep.subr.mxu0 0.0
        %3453 = vmatpush1.msra.mxu0 0.0
        %3454 = vmatprep.subr.mxu0 0.0
        %3455 = vmatpush1.msra.mxu0 0.0
        %3456 = vmatprep.subr.mxu0 0.0
        %3457 = vmatpush1.msra.mxu0 0.0
        %3458 = vmatprep.subr.mxu0 0.0
        %3459 = vmatpush1.msra.mxu0 0.0
        %3460 = vmatprep.subr.mxu0 0.0
        %3461 = vmatpush1.msra.mxu0 0.0
        %3462 = vmatprep.subr.mxu0 0.0
        %3463 = vmatpush1.msra.mxu0 0.0
        %3464 = vmatprep.subr.mxu0 0.0
        %3465 = vmatpush1.msra.mxu0 0.0
        %3466 = vmatprep.subr.mxu0 0.0
        %3467 = vmatpush1.msra.mxu0 0.0
        %3468 = vmatprep.subr.mxu0 0.0
        %3469 = vmatpush1.msra.mxu0 0.0
        %3470 = vmatprep.subr.mxu0 0.0
        %3471 = vmatpush1.msra.mxu0 0.0
        %3472 = vmatprep.subr.mxu0 0.0
        %3473 = vmatpush1.msra.mxu0 0.0
        %3474 = vmatprep.subr.mxu0 0.0
        %3475 = vmatpush1.msra.mxu0 0.0
        %3476 = vmatprep.subr.mxu0 0.0
        %3477 = vmatpush1.msra.mxu0 0.0
        %3478 = vmatprep.subr.mxu0 0.0
        %3479 = vmatpush1.msra.mxu0 0.0
        %3480 = vmatprep.subr.mxu0 0.0
        %3481 = vmatpush1.msra.mxu0 0.0
        %3482 = vmatprep.subr.mxu0 0.0
        %3483 = vmatpush1.msra.mxu0 0.0
        %3484 = vmatprep.subr.mxu0 0.0
        %3485 = vmatpush1.msra.mxu0 0.0
        %3486 = vmatprep.mubr.f32.mxu0 0.0
        %v3487 = vand.u32 %v3240, 4294901760
        %v3488 = vsub.f32 %v3240, %v3487
        %3489 = vmatmul.mubr.f32.gmra.mrb[0].mxu0 %v3488
        %v3490 = vpop.f32.mrb[0].mxu0
        %v3491 = vadd.f32 %v3410, %v3490
        %v3492 = vpop.f32.mrb[0].mxu0
        %v3493 = vadd.f32 %v3412, %v3492
        %3494 = vdwg.mxu0
        %v3495 = vand.u32 %v3230, 4294901760
        %3496 = vmatprep.subr.mxu0 %v3495
        %v3497 = vand.u32 %v3229, 4294901760
        %3498 = vmatpush1.msra.mxu0 %v3497
        %v3499 = vand.u32 %v3232, 4294901760
        %3500 = vmatprep.subr.mxu0 %v3499
        %v3501 = vand.u32 %v3231, 4294901760
        %3502 = vmatpush1.msra.mxu0 %v3501
        %3503 = vmatprep.subr.mxu0 0.0
        %3504 = vmatpush1.msra.mxu0 0.0
        %3505 = vmatprep.subr.mxu0 0.0
        %3506 = vmatpush1.msra.mxu0 0.0
        %3507 = vmatprep.subr.mxu0 0.0
        %3508 = vmatpush1.msra.mxu0 0.0
        %3509 = vmatprep.subr.mxu0 0.0
        %3510 = vmatpush1.msra.mxu0 0.0
        %3511 = vmatprep.subr.mxu0 0.0
        %3512 = vmatpush1.msra.mxu0 0.0
        %3513 = vmatprep.subr.mxu0 0.0
        %3514 = vmatpush1.msra.mxu0 0.0
        %3515 = vmatprep.subr.mxu0 0.0
        %3516 = vmatpush1.msra.mxu0 0.0
        %3517 = vmatprep.subr.mxu0 0.0
        %3518 = vmatpush1.msra.mxu0 0.0
        %3519 = vmatprep.subr.mxu0 0.0
        %3520 = vmatpush1.msra.mxu0 0.0
        %3521 = vmatprep.subr.mxu0 0.0
        %3522 = vmatpush1.msra.mxu0 0.0
        %3523 = vmatprep.subr.mxu0 0.0
        %3524 = vmatpush1.msra.mxu0 0.0
        %3525 = vmatprep.subr.mxu0 0.0
        %3526 = vmatpush1.msra.mxu0 0.0
        %3527 = vmatprep.subr.mxu0 0.0
        %3528 = vmatpush1.msra.mxu0 0.0
        %3529 = vmatprep.subr.mxu0 0.0
        %3530 = vmatpush1.msra.mxu0 0.0
        %3531 = vmatprep.subr.mxu0 0.0
        %3532 = vmatpush1.msra.mxu0 0.0
        %3533 = vmatprep.subr.mxu0 0.0
        %3534 = vmatpush1.msra.mxu0 0.0
        %3535 = vmatprep.subr.mxu0 0.0
        %3536 = vmatpush1.msra.mxu0 0.0
        %3537 = vmatprep.subr.mxu0 0.0
        %3538 = vmatpush1.msra.mxu0 0.0
        %3539 = vmatprep.subr.mxu0 0.0
        %3540 = vmatpush1.msra.mxu0 0.0
        %3541 = vmatprep.subr.mxu0 0.0
        %3542 = vmatpush1.msra.mxu0 0.0
        %3543 = vmatprep.subr.mxu0 0.0
        %3544 = vmatpush1.msra.mxu0 0.0
        %3545 = vmatprep.subr.mxu0 0.0
        %3546 = vmatpush1.msra.mxu0 0.0
        %3547 = vmatprep.subr.mxu0 0.0
        %3548 = vmatpush1.msra.mxu0 0.0
        %3549 = vmatprep.subr.mxu0 0.0
        %3550 = vmatpush1.msra.mxu0 0.0
        %3551 = vmatprep.subr.mxu0 0.0
        %3552 = vmatpush1.msra.mxu0 0.0
        %3553 = vmatprep.subr.mxu0 0.0
        %3554 = vmatpush1.msra.mxu0 0.0
        %3555 = vmatprep.subr.mxu0 0.0
        %3556 = vmatpush1.msra.mxu0 0.0
        %3557 = vmatprep.subr.mxu0 0.0
        %3558 = vmatpush1.msra.mxu0 0.0
        %3559 = vmatprep.subr.mxu0 0.0
        %3560 = vmatpush1.msra.mxu0 0.0
        %3561 = vmatprep.subr.mxu0 0.0
        %3562 = vmatpush1.msra.mxu0 0.0
        %3563 = vmatprep.mubr.f32.mxu0 0.0
        %v3564 = vand.u32 %v3240, 4294901760
        %v3565 = vsub.f32 %v3240, %v3564
        %v3566 = vand.u32 %v3565, 4294901760
        %3567 = vmatmul.mubr.f32.gmra.mrb[0].mxu0 %v3566
        %v3568 = vpop.f32.mrb[0].mxu0
        %v3569 = vadd.f32 %v3491, %v3568
        %v3570 = vpop.f32.mrb[0].mxu0
        %v3571 = vadd.f32 %v3493, %v3570
        %3572 = vdwg.mxu0
        %v3573 = vand.u32 %v3230, 4294901760
        %v3574 = vsub.f32 %v3230, %v3573
        %v3575 = vand.u32 %v3574, 4294901760
        %3576 = vmatprep.subr.mxu0 %v3575
        %v3577 = vand.u32 %v3229, 4294901760
        %v3578 = vsub.f32 %v3229, %v3577
        %v3579 = vand.u32 %v3578, 4294901760
        %3580 = vmatpush1.msra.mxu0 %v3579
        %v3581 = vand.u32 %v3232, 4294901760
        %v3582 = vsub.f32 %v3232, %v3581
        %v3583 = vand.u32 %v3582, 4294901760
        %3584 = vmatprep.subr.mxu0 %v3583
        %v3585 = vand.u32 %v3231, 4294901760
        %v3586 = vsub.f32 %v3231, %v3585
        %v3587 = vand.u32 %v3586, 4294901760
        %3588 = vmatpush1.msra.mxu0 %v3587
        %3589 = vmatprep.subr.mxu0 0.0
        %3590 = vmatpush1.msra.mxu0 0.0
        %3591 = vmatprep.subr.mxu0 0.0
        %3592 = vmatpush1.msra.mxu0 0.0
        %3593 = vmatprep.subr.mxu0 0.0
        %3594 = vmatpush1.msra.mxu0 0.0
        %3595 = vmatprep.subr.mxu0 0.0
        %3596 = vmatpush1.msra.mxu0 0.0
        %3597 = vmatprep.subr.mxu0 0.0
        %3598 = vmatpush1.msra.mxu0 0.0
        %3599 = vmatprep.subr.mxu0 0.0
        %3600 = vmatpush1.msra.mxu0 0.0
        %3601 = vmatprep.subr.mxu0 0.0
        %3602 = vmatpush1.msra.mxu0 0.0
        %3603 = vmatprep.subr.mxu0 0.0
        %3604 = vmatpush1.msra.mxu0 0.0
        %3605 = vmatprep.subr.mxu0 0.0
        %3606 = vmatpush1.msra.mxu0 0.0
        %3607 = vmatprep.subr.mxu0 0.0
        %3608 = vmatpush1.msra.mxu0 0.0
        %3609 = vmatprep.subr.mxu0 0.0
        %3610 = vmatpush1.msra.mxu0 0.0
        %3611 = vmatprep.subr.mxu0 0.0
        %3612 = vmatpush1.msra.mxu0 0.0
        %3613 = vmatprep.subr.mxu0 0.0
        %3614 = vmatpush1.msra.mxu0 0.0
        %3615 = vmatprep.subr.mxu0 0.0
        %3616 = vmatpush1.msra.mxu0 0.0
        %3617 = vmatprep.subr.mxu0 0.0
        %3618 = vmatpush1.msra.mxu0 0.0
        %3619 = vmatprep.subr.mxu0 0.0
        %3620 = vmatpush1.msra.mxu0 0.0
        %3621 = vmatprep.subr.mxu0 0.0
        %3622 = vmatpush1.msra.mxu0 0.0
        %3623 = vmatprep.subr.mxu0 0.0
        %3624 = vmatpush1.msra.mxu0 0.0
        %3625 = vmatprep.subr.mxu0 0.0
        %3626 = vmatpush1.msra.mxu0 0.0
        %3627 = vmatprep.subr.mxu0 0.0
        %3628 = vmatpush1.msra.mxu0 0.0
        %3629 = vmatprep.subr.mxu0 0.0
        %3630 = vmatpush1.msra.mxu0 0.0
        %3631 = vmatprep.subr.mxu0 0.0
        %3632 = vmatpush1.msra.mxu0 0.0
        %3633 = vmatprep.subr.mxu0 0.0
        %3634 = vmatpush1.msra.mxu0 0.0
        %3635 = vmatprep.subr.mxu0 0.0
        %3636 = vmatpush1.msra.mxu0 0.0
        %3637 = vmatprep.subr.mxu0 0.0
        %3638 = vmatpush1.msra.mxu0 0.0
        %3639 = vmatprep.subr.mxu0 0.0
        %3640 = vmatpush1.msra.mxu0 0.0
        %3641 = vmatprep.subr.mxu0 0.0
        %3642 = vmatpush1.msra.mxu0 0.0
        %3643 = vmatprep.subr.mxu0 0.0
        %3644 = vmatpush1.msra.mxu0 0.0
        %3645 = vmatprep.subr.mxu0 0.0
        %3646 = vmatpush1.msra.mxu0 0.0
        %3647 = vmatprep.subr.mxu0 0.0
        %3648 = vmatpush1.msra.mxu0 0.0
        %3649 = vmatprep.mubr.f32.mxu0 0.0
        %v3650 = vand.u32 %v3240, 4294901760
        %3651 = vmatmul.mubr.f32.gmra.mrb[0].mxu0 %v3650
        %v3652 = vpop.f32.mrb[0].mxu0
        %v3653 = vadd.f32 %v3569, %v3652
        %v3654 = vpop.f32.mrb[0].mxu0
        %v3655 = vadd.f32 %v3571, %v3654
        %3656 = vdwg.mxu0
        %v3657 = vand.u32 %v3230, 4294901760
        %3658 = vmatprep.subr.mxu0 %v3657
        %v3659 = vand.u32 %v3229, 4294901760
        %3660 = vmatpush1.msra.mxu0 %v3659
        %v3661 = vand.u32 %v3232, 4294901760
        %3662 = vmatprep.subr.mxu0 %v3661
        %v3663 = vand.u32 %v3231, 4294901760
        %3664 = vmatpush1.msra.mxu0 %v3663
        %3665 = vmatprep.subr.mxu0 0.0
        %3666 = vmatpush1.msra.mxu0 0.0
        %3667 = vmatprep.subr.mxu0 0.0
        %3668 = vmatpush1.msra.mxu0 0.0
        %3669 = vmatprep.subr.mxu0 0.0
        %3670 = vmatpush1.msra.mxu0 0.0
        %3671 = vmatprep.subr.mxu0 0.0
        %3672 = vmatpush1.msra.mxu0 0.0
        %3673 = vmatprep.subr.mxu0 0.0
        %3674 = vmatpush1.msra.mxu0 0.0
        %3675 = vmatprep.subr.mxu0 0.0
        %3676 = vmatpush1.msra.mxu0 0.0
        %3677 = vmatprep.subr.mxu0 0.0
        %3678 = vmatpush1.msra.mxu0 0.0
        %3679 = vmatprep.subr.mxu0 0.0
        %3680 = vmatpush1.msra.mxu0 0.0
        %3681 = vmatprep.subr.mxu0 0.0
        %3682 = vmatpush1.msra.mxu0 0.0
        %3683 = vmatprep.subr.mxu0 0.0
        %3684 = vmatpush1.msra.mxu0 0.0
        %3685 = vmatprep.subr.mxu0 0.0
        %3686 = vmatpush1.msra.mxu0 0.0
        %3687 = vmatprep.subr.mxu0 0.0
        %3688 = vmatpush1.msra.mxu0 0.0
        %3689 = vmatprep.subr.mxu0 0.0
        %3690 = vmatpush1.msra.mxu0 0.0
        %3691 = vmatprep.subr.mxu0 0.0
        %3692 = vmatpush1.msra.mxu0 0.0
        %3693 = vmatprep.subr.mxu0 0.0
        %3694 = vmatpush1.msra.mxu0 0.0
        %3695 = vmatprep.subr.mxu0 0.0
        %3696 = vmatpush1.msra.mxu0 0.0
        %3697 = vmatprep.subr.mxu0 0.0
        %3698 = vmatpush1.msra.mxu0 0.0
        %3699 = vmatprep.subr.mxu0 0.0
        %3700 = vmatpush1.msra.mxu0 0.0
        %3701 = vmatprep.subr.mxu0 0.0
        %3702 = vmatpush1.msra.mxu0 0.0
        %3703 = vmatprep.subr.mxu0 0.0
        %3704 = vmatpush1.msra.mxu0 0.0
        %3705 = vmatprep.subr.mxu0 0.0
        %3706 = vmatpush1.msra.mxu0 0.0
        %3707 = vmatprep.subr.mxu0 0.0
        %3708 = vmatpush1.msra.mxu0 0.0
        %3709 = vmatprep.subr.mxu0 0.0
        %3710 = vmatpush1.msra.mxu0 0.0
        %3711 = vmatprep.subr.mxu0 0.0
        %3712 = vmatpush1.msra.mxu0 0.0
        %3713 = vmatprep.subr.mxu0 0.0
        %3714 = vmatpush1.msra.mxu0 0.0
        %3715 = vmatprep.subr.mxu0 0.0
        %3716 = vmatpush1.msra.mxu0 0.0
        %3717 = vmatprep.subr.mxu0 0.0
        %3718 = vmatpush1.msra.mxu0 0.0
        %3719 = vmatprep.subr.mxu0 0.0
        %3720 = vmatpush1.msra.mxu0 0.0
        %3721 = vmatprep.subr.mxu0 0.0
        %3722 = vmatpush1.msra.mxu0 0.0
        %3723 = vmatprep.subr.mxu0 0.0
        %3724 = vmatpush1.msra.mxu0 0.0
        %3725 = vmatprep.mubr.f32.mxu0 0.0
        %v3726 = vand.u32 %v3240, 4294901760
        %3727 = vmatmul.mubr.f32.gmra.mrb[0].mxu0 %v3726
        %v3728 = vpop.f32.mrb[0].mxu0
        %v3729 = vadd.f32 %v3653, %v3728
        %v3730 = vpop.f32.mrb[0].mxu0
        %v3731 = vadd.f32 %v3655, %v3730
        %3732 = vdwg.mxu0
        %3733 = vmatprep.subr.mxu0 0.0
        %v3734 = vand.u32 %v3221, 4294901760
        %3735 = vmatpush1.msra.mxu0 %v3734
        %3736 = vmatprep.subr.mxu0 0.0
        %v3737 = vand.u32 %v3227, 4294901760
        %3738 = vmatpush1.msra.mxu0 %v3737
        %3739 = vmatprep.subr.mxu0 0.0
        %3740 = vmatpush1.msra.mxu0 0.0
        %3741 = vmatprep.subr.mxu0 0.0
        %3742 = vmatpush1.msra.mxu0 0.0
        %3743 = vmatprep.subr.mxu0 0.0
        %3744 = vmatpush1.msra.mxu0 0.0
        %3745 = vmatprep.subr.mxu0 0.0
        %3746 = vmatpush1.msra.mxu0 0.0
        %3747 = vmatprep.subr.mxu0 0.0
        %3748 = vmatpush1.msra.mxu0 0.0
        %3749 = vmatprep.subr.mxu0 0.0
        %3750 = vmatpush1.msra.mxu0 0.0
        %3751 = vmatprep.subr.mxu0 0.0
        %3752 = vmatpush1.msra.mxu0 0.0
        %3753 = vmatprep.subr.mxu0 0.0
        %3754 = vmatpush1.msra.mxu0 0.0
        %3755 = vmatprep.subr.mxu0 0.0
        %3756 = vmatpush1.msra.mxu0 0.0
        %3757 = vmatprep.subr.mxu0 0.0
        %3758 = vmatpush1.msra.mxu0 0.0
        %3759 = vmatprep.subr.mxu0 0.0
        %3760 = vmatpush1.msra.mxu0 0.0
        %3761 = vmatprep.subr.mxu0 0.0
        %3762 = vmatpush1.msra.mxu0 0.0
        %3763 = vmatprep.subr.mxu0 0.0
        %3764 = vmatpush1.msra.mxu0 0.0
        %3765 = vmatprep.subr.mxu0 0.0
        %3766 = vmatpush1.msra.mxu0 0.0
        %3767 = vmatprep.subr.mxu0 0.0
        %3768 = vmatpush1.msra.mxu0 0.0
        %3769 = vmatprep.subr.mxu0 0.0
        %3770 = vmatpush1.msra.mxu0 0.0
        %3771 = vmatprep.subr.mxu0 0.0
        %3772 = vmatpush1.msra.mxu0 0.0
        %3773 = vmatprep.subr.mxu0 0.0
        %3774 = vmatpush1.msra.mxu0 0.0
        %3775 = vmatprep.subr.mxu0 0.0
        %3776 = vmatpush1.msra.mxu0 0.0
        %3777 = vmatprep.subr.mxu0 0.0
        %3778 = vmatpush1.msra.mxu0 0.0
        %3779 = vmatprep.subr.mxu0 0.0
        %3780 = vmatpush1.msra.mxu0 0.0
        %3781 = vmatprep.subr.mxu0 0.0
        %3782 = vmatpush1.msra.mxu0 0.0
        %3783 = vmatprep.subr.mxu0 0.0
        %3784 = vmatpush1.msra.mxu0 0.0
        %3785 = vmatprep.subr.mxu0 0.0
        %3786 = vmatpush1.msra.mxu0 0.0
        %3787 = vmatprep.subr.mxu0 0.0
        %3788 = vmatpush1.msra.mxu0 0.0
        %3789 = vmatprep.subr.mxu0 0.0
        %3790 = vmatpush1.msra.mxu0 0.0
        %3791 = vmatprep.subr.mxu0 0.0
        %3792 = vmatpush1.msra.mxu0 0.0
        %3793 = vmatprep.subr.mxu0 0.0
        %3794 = vmatpush1.msra.mxu0 0.0
        %3795 = vmatprep.subr.mxu0 0.0
        %3796 = vmatpush1.msra.mxu0 0.0
        %3797 = vmatprep.subr.mxu0 0.0
        %3798 = vmatpush1.msra.mxu0 0.0
        %3799 = vmatprep.mubr.f32.mxu0 0.0
        %v3800 = vand.u32 %v3240, 4294901760
        %v3801 = vsub.f32 %v3240, %v3800
        %v3802 = vand.u32 %v3801, 4294901760
        %v3803 = vsub.f32 %v3801, %v3802
        %v3804 = vand.u32 %v3803, 4294901760
        %3805 = vmatmul.mubr.f32.gmra.mrb[0].mxu0 %v3804
        %v3806 = vpop.f32.mrb[0].mxu0
        %v3807 = vadd.f32 0.0, %v3806
        %v3808 = vpop.f32.mrb[0].mxu0
        %3809 = vdwg.mxu0
        %3810 = vmatprep.subr.mxu0 0.0
        %v3811 = vand.u32 %v3221, 4294901760
        %v3812 = vsub.f32 %v3221, %v3811
        %v3813 = vand.u32 %v3812, 4294901760
        %v3814 = vsub.f32 %v3812, %v3813
        %v3815 = vand.u32 %v3814, 4294901760
        %3816 = vmatpush1.msra.mxu0 %v3815
        %3817 = vmatprep.subr.mxu0 0.0
        %v3818 = vand.u32 %v3227, 4294901760
        %v3819 = vsub.f32 %v3227, %v3818
        %v3820 = vand.u32 %v3819, 4294901760
        %v3821 = vsub.f32 %v3819, %v3820
        %v3822 = vand.u32 %v3821, 4294901760
        %3823 = vmatpush1.msra.mxu0 %v3822
        %3824 = vmatprep.subr.mxu0 0.0
        %3825 = vmatpush1.msra.mxu0 0.0
        %3826 = vmatprep.subr.mxu0 0.0
        %3827 = vmatpush1.msra.mxu0 0.0
        %3828 = vmatprep.subr.mxu0 0.0
        %3829 = vmatpush1.msra.mxu0 0.0
        %3830 = vmatprep.subr.mxu0 0.0
        %3831 = vmatpush1.msra.mxu0 0.0
        %3832 = vmatprep.subr.mxu0 0.0
        %3833 = vmatpush1.msra.mxu0 0.0
        %3834 = vmatprep.subr.mxu0 0.0
        %3835 = vmatpush1.msra.mxu0 0.0
        %3836 = vmatprep.subr.mxu0 0.0
        %3837 = vmatpush1.msra.mxu0 0.0
        %3838 = vmatprep.subr.mxu0 0.0
        %3839 = vmatpush1.msra.mxu0 0.0
        %3840 = vmatprep.subr.mxu0 0.0
        %3841 = vmatpush1.msra.mxu0 0.0
        %3842 = vmatprep.subr.mxu0 0.0
        %3843 = vmatpush1.msra.mxu0 0.0
        %3844 = vmatprep.subr.mxu0 0.0
        %3845 = vmatpush1.msra.mxu0 0.0
        %3846 = vmatprep.subr.mxu0 0.0
        %3847 = vmatpush1.msra.mxu0 0.0
        %3848 = vmatprep.subr.mxu0 0.0
        %3849 = vmatpush1.msra.mxu0 0.0
        %3850 = vmatprep.subr.mxu0 0.0
        %3851 = vmatpush1.msra.mxu0 0.0
        %3852 = vmatprep.subr.mxu0 0.0
        %3853 = vmatpush1.msra.mxu0 0.0
        %3854 = vmatprep.subr.mxu0 0.0
        %3855 = vmatpush1.msra.mxu0 0.0
        %3856 = vmatprep.subr.mxu0 0.0
        %3857 = vmatpush1.msra.mxu0 0.0
        %3858 = vmatprep.subr.mxu0 0.0
        %3859 = vmatpush1.msra.mxu0 0.0
        %3860 = vmatprep.subr.mxu0 0.0
        %3861 = vmatpush1.msra.mxu0 0.0
        %3862 = vmatprep.subr.mxu0 0.0
        %3863 = vmatpush1.msra.mxu0 0.0
        %3864 = vmatprep.subr.mxu0 0.0
        %3865 = vmatpush1.msra.mxu0 0.0
        %3866 = vmatprep.subr.mxu0 0.0
        %3867 = vmatpush1.msra.mxu0 0.0
        %3868 = vmatprep.subr.mxu0 0.0
        %3869 = vmatpush1.msra.mxu0 0.0
        %3870 = vmatprep.subr.mxu0 0.0
        %3871 = vmatpush1.msra.mxu0 0.0
        %3872 = vmatprep.subr.mxu0 0.0
        %3873 = vmatpush1.msra.mxu0 0.0
        %3874 = vmatprep.subr.mxu0 0.0
        %3875 = vmatpush1.msra.mxu0 0.0
        %3876 = vmatprep.subr.mxu0 0.0
        %3877 = vmatpush1.msra.mxu0 0.0
        %3878 = vmatprep.subr.mxu0 0.0
        %3879 = vmatpush1.msra.mxu0 0.0
        %3880 = vmatprep.subr.mxu0 0.0
        %3881 = vmatpush1.msra.mxu0 0.0
        %3882 = vmatprep.subr.mxu0 0.0
        %3883 = vmatpush1.msra.mxu0 0.0
        %3884 = vmatprep.mubr.f32.mxu0 0.0
        %v3885 = vand.u32 %v3240, 4294901760
        %3886 = vmatmul.mubr.f32.gmra.mrb[0].mxu0 %v3885
        %v3887 = vpop.f32.mrb[0].mxu0
        %v3888 = vadd.f32 %v3807, %v3887
        %v3889 = vpop.f32.mrb[0].mxu0
        %3890 = vdwg.mxu0
        %3891 = vmatprep.subr.mxu0 0.0
        %v3892 = vand.u32 %v3221, 4294901760
        %v3893 = vsub.f32 %v3221, %v3892
        %3894 = vmatpush1.msra.mxu0 %v3893
        %3895 = vmatprep.subr.mxu0 0.0
        %v3896 = vand.u32 %v3227, 4294901760
        %v3897 = vsub.f32 %v3227, %v3896
        %3898 = vmatpush1.msra.mxu0 %v3897
        %3899 = vmatprep.subr.mxu0 0.0
        %3900 = vmatpush1.msra.mxu0 0.0
        %3901 = vmatprep.subr.mxu0 0.0
        %3902 = vmatpush1.msra.mxu0 0.0
        %3903 = vmatprep.subr.mxu0 0.0
        %3904 = vmatpush1.msra.mxu0 0.0
        %3905 = vmatprep.subr.mxu0 0.0
        %3906 = vmatpush1.msra.mxu0 0.0
        %3907 = vmatprep.subr.mxu0 0.0
        %3908 = vmatpush1.msra.mxu0 0.0
        %3909 = vmatprep.subr.mxu0 0.0
        %3910 = vmatpush1.msra.mxu0 0.0
        %3911 = vmatprep.subr.mxu0 0.0
        %3912 = vmatpush1.msra.mxu0 0.0
        %3913 = vmatprep.subr.mxu0 0.0
        %3914 = vmatpush1.msra.mxu0 0.0
        %3915 = vmatprep.subr.mxu0 0.0
        %3916 = vmatpush1.msra.mxu0 0.0
        %3917 = vmatprep.subr.mxu0 0.0
        %3918 = vmatpush1.msra.mxu0 0.0
        %3919 = vmatprep.subr.mxu0 0.0
        %3920 = vmatpush1.msra.mxu0 0.0
        %3921 = vmatprep.subr.mxu0 0.0
        %3922 = vmatpush1.msra.mxu0 0.0
        %3923 = vmatprep.subr.mxu0 0.0
        %3924 = vmatpush1.msra.mxu0 0.0
        %3925 = vmatprep.subr.mxu0 0.0
        %3926 = vmatpush1.msra.mxu0 0.0
        %3927 = vmatprep.subr.mxu0 0.0
        %3928 = vmatpush1.msra.mxu0 0.0
        %3929 = vmatprep.subr.mxu0 0.0
        %3930 = vmatpush1.msra.mxu0 0.0
        %3931 = vmatprep.subr.mxu0 0.0
        %3932 = vmatpush1.msra.mxu0 0.0
        %3933 = vmatprep.subr.mxu0 0.0
        %3934 = vmatpush1.msra.mxu0 0.0
        %3935 = vmatprep.subr.mxu0 0.0
        %3936 = vmatpush1.msra.mxu0 0.0
        %3937 = vmatprep.subr.mxu0 0.0
        %3938 = vmatpush1.msra.mxu0 0.0
        %3939 = vmatprep.subr.mxu0 0.0
        %3940 = vmatpush1.msra.mxu0 0.0
        %3941 = vmatprep.subr.mxu0 0.0
        %3942 = vmatpush1.msra.mxu0 0.0
        %3943 = vmatprep.subr.mxu0 0.0
        %3944 = vmatpush1.msra.mxu0 0.0
        %3945 = vmatprep.subr.mxu0 0.0
        %3946 = vmatpush1.msra.mxu0 0.0
        %3947 = vmatprep.subr.mxu0 0.0
        %3948 = vmatpush1.msra.mxu0 0.0
        %3949 = vmatprep.subr.mxu0 0.0
        %3950 = vmatpush1.msra.mxu0 0.0
        %3951 = vmatprep.subr.mxu0 0.0
        %3952 = vmatpush1.msra.mxu0 0.0
        %3953 = vmatprep.subr.mxu0 0.0
        %3954 = vmatpush1.msra.mxu0 0.0
        %3955 = vmatprep.subr.mxu0 0.0
        %3956 = vmatpush1.msra.mxu0 0.0
        %3957 = vmatprep.subr.mxu0 0.0
        %3958 = vmatpush1.msra.mxu0 0.0
        %3959 = vmatprep.mubr.f32.mxu0 0.0
        %v3960 = vand.u32 %v3240, 4294901760
        %v3961 = vsub.f32 %v3240, %v3960
        %3962 = vmatmul.mubr.f32.gmra.mrb[0].mxu0 %v3961
        %v3963 = vpop.f32.mrb[0].mxu0
        %v3964 = vadd.f32 %v3888, %v3963
        %v3965 = vpop.f32.mrb[0].mxu0
        %3966 = vdwg.mxu0
        %3967 = vmatprep.subr.mxu0 0.0
        %v3968 = vand.u32 %v3221, 4294901760
        %3969 = vmatpush1.msra.mxu0 %v3968
        %3970 = vmatprep.subr.mxu0 0.0
        %v3971 = vand.u32 %v3227, 4294901760
        %3972 = vmatpush1.msra.mxu0 %v3971
        %3973 = vmatprep.subr.mxu0 0.0
        %3974 = vmatpush1.msra.mxu0 0.0
        %3975 = vmatprep.subr.mxu0 0.0
        %3976 = vmatpush1.msra.mxu0 0.0
        %3977 = vmatprep.subr.mxu0 0.0
        %3978 = vmatpush1.msra.mxu0 0.0
        %3979 = vmatprep.subr.mxu0 0.0
        %3980 = vmatpush1.msra.mxu0 0.0
        %3981 = vmatprep.subr.mxu0 0.0
        %3982 = vmatpush1.msra.mxu0 0.0
        %3983 = vmatprep.subr.mxu0 0.0
        %3984 = vmatpush1.msra.mxu0 0.0
        %3985 = vmatprep.subr.mxu0 0.0
        %3986 = vmatpush1.msra.mxu0 0.0
        %3987 = vmatprep.subr.mxu0 0.0
        %3988 = vmatpush1.msra.mxu0 0.0
        %3989 = vmatprep.subr.mxu0 0.0
        %3990 = vmatpush1.msra.mxu0 0.0
        %3991 = vmatprep.subr.mxu0 0.0
        %3992 = vmatpush1.msra.mxu0 0.0
        %3993 = vmatprep.subr.mxu0 0.0
        %3994 = vmatpush1.msra.mxu0 0.0
        %3995 = vmatprep.subr.mxu0 0.0
        %3996 = vmatpush1.msra.mxu0 0.0
        %3997 = vmatprep.subr.mxu0 0.0
        %3998 = vmatpush1.msra.mxu0 0.0
        %3999 = vmatprep.subr.mxu0 0.0
        %4000 = vmatpush1.msra.mxu0 0.0
        %4001 = vmatprep.subr.mxu0 0.0
        %4002 = vmatpush1.msra.mxu0 0.0
        %4003 = vmatprep.subr.mxu0 0.0
        %4004 = vmatpush1.msra.mxu0 0.0
        %4005 = vmatprep.subr.mxu0 0.0
        %4006 = vmatpush1.msra.mxu0 0.0
        %4007 = vmatprep.subr.mxu0 0.0
        %4008 = vmatpush1.msra.mxu0 0.0
        %4009 = vmatprep.subr.mxu0 0.0
        %4010 = vmatpush1.msra.mxu0 0.0
        %4011 = vmatprep.subr.mxu0 0.0
        %4012 = vmatpush1.msra.mxu0 0.0
        %4013 = vmatprep.subr.mxu0 0.0
        %4014 = vmatpush1.msra.mxu0 0.0
        %4015 = vmatprep.subr.mxu0 0.0
        %4016 = vmatpush1.msra.mxu0 0.0
        %4017 = vmatprep.subr.mxu0 0.0
        %4018 = vmatpush1.msra.mxu0 0.0
        %4019 = vmatprep.subr.mxu0 0.0
        %4020 = vmatpush1.msra.mxu0 0.0
        %4021 = vmatprep.subr.mxu0 0.0
        %4022 = vmatpush1.msra.mxu0 0.0
        %4023 = vmatprep.subr.mxu0 0.0
        %4024 = vmatpush1.msra.mxu0 0.0
        %4025 = vmatprep.subr.mxu0 0.0
        %4026 = vmatpush1.msra.mxu0 0.0
        %4027 = vmatprep.subr.mxu0 0.0
        %4028 = vmatpush1.msra.mxu0 0.0
        %4029 = vmatprep.subr.mxu0 0.0
        %4030 = vmatpush1.msra.mxu0 0.0
        %4031 = vmatprep.subr.mxu0 0.0
        %4032 = vmatpush1.msra.mxu0 0.0
        %4033 = vmatprep.mubr.f32.mxu0 0.0
        %v4034 = vand.u32 %v3240, 4294901760
        %v4035 = vsub.f32 %v3240, %v4034
        %v4036 = vand.u32 %v4035, 4294901760
        %4037 = vmatmul.mubr.f32.gmra.mrb[0].mxu0 %v4036
        %v4038 = vpop.f32.mrb[0].mxu0
        %v4039 = vadd.f32 %v3964, %v4038
        %v4040 = vpop.f32.mrb[0].mxu0
        %4041 = vdwg.mxu0
        %4042 = vmatprep.subr.mxu0 0.0
        %v4043 = vand.u32 %v3221, 4294901760
        %v4044 = vsub.f32 %v3221, %v4043
        %v4045 = vand.u32 %v4044, 4294901760
        %4046 = vmatpush1.msra.mxu0 %v4045
        %4047 = vmatprep.subr.mxu0 0.0
        %v4048 = vand.u32 %v3227, 4294901760
        %v4049 = vsub.f32 %v3227, %v4048
        %v4050 = vand.u32 %v4049, 4294901760
        %4051 = vmatpush1.msra.mxu0 %v4050
        %4052 = vmatprep.subr.mxu0 0.0
        %4053 = vmatpush1.msra.mxu0 0.0
        %4054 = vmatprep.subr.mxu0 0.0
        %4055 = vmatpush1.msra.mxu0 0.0
        %4056 = vmatprep.subr.mxu0 0.0
        %4057 = vmatpush1.msra.mxu0 0.0
        %4058 = vmatprep.subr.mxu0 0.0
        %4059 = vmatpush1.msra.mxu0 0.0
        %4060 = vmatprep.subr.mxu0 0.0
        %4061 = vmatpush1.msra.mxu0 0.0
        %4062 = vmatprep.subr.mxu0 0.0
        %4063 = vmatpush1.msra.mxu0 0.0
        %4064 = vmatprep.subr.mxu0 0.0
        %4065 = vmatpush1.msra.mxu0 0.0
        %4066 = vmatprep.subr.mxu0 0.0
        %4067 = vmatpush1.msra.mxu0 0.0
        %4068 = vmatprep.subr.mxu0 0.0
        %4069 = vmatpush1.msra.mxu0 0.0
        %4070 = vmatprep.subr.mxu0 0.0
        %4071 = vmatpush1.msra.mxu0 0.0
        %4072 = vmatprep.subr.mxu0 0.0
        %4073 = vmatpush1.msra.mxu0 0.0
        %4074 = vmatprep.subr.mxu0 0.0
        %4075 = vmatpush1.msra.mxu0 0.0
        %4076 = vmatprep.subr.mxu0 0.0
        %4077 = vmatpush1.msra.mxu0 0.0
        %4078 = vmatprep.subr.mxu0 0.0
        %4079 = vmatpush1.msra.mxu0 0.0
        %4080 = vmatprep.subr.mxu0 0.0
        %4081 = vmatpush1.msra.mxu0 0.0
        %4082 = vmatprep.subr.mxu0 0.0
        %4083 = vmatpush1.msra.mxu0 0.0
        %4084 = vmatprep.subr.mxu0 0.0
        %4085 = vmatpush1.msra.mxu0 0.0
        %4086 = vmatprep.subr.mxu0 0.0
        %4087 = vmatpush1.msra.mxu0 0.0
        %4088 = vmatprep.subr.mxu0 0.0
        %4089 = vmatpush1.msra.mxu0 0.0
        %4090 = vmatprep.subr.mxu0 0.0
        %4091 = vmatpush1.msra.mxu0 0.0
        %4092 = vmatprep.subr.mxu0 0.0
        %4093 = vmatpush1.msra.mxu0 0.0
        %4094 = vmatprep.subr.mxu0 0.0
        %4095 = vmatpush1.msra.mxu0 0.0
        %4096 = vmatprep.subr.mxu0 0.0
        %4097 = vmatpush1.msra.mxu0 0.0
        %4098 = vmatprep.subr.mxu0 0.0
        %4099 = vmatpush1.msra.mxu0 0.0
        %4100 = vmatprep.subr.mxu0 0.0
        %4101 = vmatpush1.msra.mxu0 0.0
        %4102 = vmatprep.subr.mxu0 0.0
        %4103 = vmatpush1.msra.mxu0 0.0
        %4104 = vmatprep.subr.mxu0 0.0
        %4105 = vmatpush1.msra.mxu0 0.0
        %4106 = vmatprep.subr.mxu0 0.0
        %4107 = vmatpush1.msra.mxu0 0.0
        %4108 = vmatprep.subr.mxu0 0.0
        %4109 = vmatpush1.msra.mxu0 0.0
        %4110 = vmatprep.subr.mxu0 0.0
        %4111 = vmatpush1.msra.mxu0 0.0
        %4112 = vmatprep.mubr.f32.mxu0 0.0
        %v4113 = vand.u32 %v3240, 4294901760
        %4114 = vmatmul.mubr.f32.gmra.mrb[0].mxu0 %v4113
        %v4115 = vpop.f32.mrb[0].mxu0
        %v4116 = vadd.f32 %v4039, %v4115
        %v4117 = vpop.f32.mrb[0].mxu0
        %4118 = vdwg.mxu0
        %4119 = vmatprep.subr.mxu0 0.0
        %v4120 = vand.u32 %v3221, 4294901760
        %4121 = vmatpush1.msra.mxu0 %v4120
        %4122 = vmatprep.subr.mxu0 0.0
        %v4123 = vand.u32 %v3227, 4294901760
        %4124 = vmatpush1.msra.mxu0 %v4123
        %4125 = vmatprep.subr.mxu0 0.0
        %4126 = vmatpush1.msra.mxu0 0.0
        %4127 = vmatprep.subr.mxu0 0.0
        %4128 = vmatpush1.msra.mxu0 0.0
        %4129 = vmatprep.subr.mxu0 0.0
        %4130 = vmatpush1.msra.mxu0 0.0
        %4131 = vmatprep.subr.mxu0 0.0
        %4132 = vmatpush1.msra.mxu0 0.0
        %4133 = vmatprep.subr.mxu0 0.0
        %4134 = vmatpush1.msra.mxu0 0.0
        %4135 = vmatprep.subr.mxu0 0.0
        %4136 = vmatpush1.msra.mxu0 0.0
        %4137 = vmatprep.subr.mxu0 0.0
        %4138 = vmatpush1.msra.mxu0 0.0
        %4139 = vmatprep.subr.mxu0 0.0
        %4140 = vmatpush1.msra.mxu0 0.0
        %4141 = vmatprep.subr.mxu0 0.0
        %4142 = vmatpush1.msra.mxu0 0.0
        %4143 = vmatprep.subr.mxu0 0.0
        %4144 = vmatpush1.msra.mxu0 0.0
        %4145 = vmatprep.subr.mxu0 0.0
        %4146 = vmatpush1.msra.mxu0 0.0
        %4147 = vmatprep.subr.mxu0 0.0
        %4148 = vmatpush1.msra.mxu0 0.0
        %4149 = vmatprep.subr.mxu0 0.0
        %4150 = vmatpush1.msra.mxu0 0.0
        %4151 = vmatprep.subr.mxu0 0.0
        %4152 = vmatpush1.msra.mxu0 0.0
        %4153 = vmatprep.subr.mxu0 0.0
        %4154 = vmatpush1.msra.mxu0 0.0
        %4155 = vmatprep.subr.mxu0 0.0
        %4156 = vmatpush1.msra.mxu0 0.0
        %4157 = vmatprep.subr.mxu0 0.0
        %4158 = vmatpush1.msra.mxu0 0.0
        %4159 = vmatprep.subr.mxu0 0.0
        %4160 = vmatpush1.msra.mxu0 0.0
        %4161 = vmatprep.subr.mxu0 0.0
        %4162 = vmatpush1.msra.mxu0 0.0
        %4163 = vmatprep.subr.mxu0 0.0
        %4164 = vmatpush1.msra.mxu0 0.0
        %4165 = vmatprep.subr.mxu0 0.0
        %4166 = vmatpush1.msra.mxu0 0.0
        %4167 = vmatprep.subr.mxu0 0.0
        %4168 = vmatpush1.msra.mxu0 0.0
        %4169 = vmatprep.subr.mxu0 0.0
        %4170 = vmatpush1.msra.mxu0 0.0
        %4171 = vmatprep.subr.mxu0 0.0
        %4172 = vmatpush1.msra.mxu0 0.0
        %4173 = vmatprep.subr.mxu0 0.0
        %4174 = vmatpush1.msra.mxu0 0.0
        %4175 = vmatprep.subr.mxu0 0.0
        %4176 = vmatpush1.msra.mxu0 0.0
        %4177 = vmatprep.subr.mxu0 0.0
        %4178 = vmatpush1.msra.mxu0 0.0
        %4179 = vmatprep.subr.mxu0 0.0
        %4180 = vmatpush1.msra.mxu0 0.0
        %4181 = vmatprep.subr.mxu0 0.0
        %4182 = vmatpush1.msra.mxu0 0.0
        %4183 = vmatprep.subr.mxu0 0.0
        %4184 = vmatpush1.msra.mxu0 0.0
        %4185 = vmatprep.mubr.f32.mxu0 0.0
        %v4186 = vand.u32 %v3240, 4294901760
        %4187 = vmatmul.mubr.f32.gmra.mrb[0].mxu0 %v4186
        %v4188 = vpop.f32.mrb[0].mxu0
        %v4189 = vadd.f32 %v4116, %v4188
        %v4190 = vpop.f32.mrb[0].mxu0
        %4191 = vdwg.mxu0
        %v4192 = vadd.f32 %v3211, %v3729
        %v4193 = vadd.f32 %v3212, %v3731
        %v4194 = vadd.f32 %v3213, %v4189
        %s4195 = scalar_lea.vmem [#allocation5], 32
        %v4196 = vld [vmem:[%s4195] sm:$0xff]
        %4197 = vrot.lane.b32.xlu0 %v288, 109
        %v4198 = vpop.permute.xlu0 %4197
        %4199 = vrot.lane.b32.xlu0 %v289, 109
        %v4200 = vpop.permute.xlu0 %4199
        %4201 = vrot.lane.b32.xlu0 %v290, 109
        %v4202 = vpop.permute.xlu0 %4201
        %4203 = vrot.lane.b32.xlu0 %v291, 109
        %v4204 = vpop.permute.xlu0 %4203
        %4205 = vrot.lane.b32.xlu0 %v292, 109
        %v4206 = vpop.permute.xlu0 %4205
        %4207 = vrot.lane.b32.xlu0 %v293, 109
        %v4208 = vpop.permute.xlu0 %4207
        %vm4209 = vcmask 891904
        %v4210 = vsel %vm4209, %v4198, %v4200
        %v4211 = vsel %vm4209, %v4200, %v4202
        %v4212 = vsel %vm4209, %v4204, %v4206
        %v4213 = vsel %vm4209, %v4206, %v4208
        %v4221 = vsel %vm326, %v4196, 0
        %v4223 = vand.u32 %v4211, 4294901760
        %4224 = vmatprep.subr.mxu0 %v4223
        %v4225 = vand.u32 %v4210, 4294901760
        %4226 = vmatpush1.msra.mxu0 %v4225
        %v4227 = vand.u32 %v4213, 4294901760
        %4228 = vmatprep.subr.mxu0 %v4227
        %v4229 = vand.u32 %v4212, 4294901760
        %4230 = vmatpush1.msra.mxu0 %v4229
        %4231 = vmatprep.subr.mxu0 0.0
        %4232 = vmatpush1.msra.mxu0 0.0
        %4233 = vmatprep.subr.mxu0 0.0
        %4234 = vmatpush1.msra.mxu0 0.0
        %4235 = vmatprep.subr.mxu0 0.0
        %4236 = vmatpush1.msra.mxu0 0.0
        %4237 = vmatprep.subr.mxu0 0.0
        %4238 = vmatpush1.msra.mxu0 0.0
        %4239 = vmatprep.subr.mxu0 0.0
        %4240 = vmatpush1.msra.mxu0 0.0
        %4241 = vmatprep.subr.mxu0 0.0
        %4242 = vmatpush1.msra.mxu0 0.0
        %4243 = vmatprep.subr.mxu0 0.0
        %4244 = vmatpush1.msra.mxu0 0.0
        %4245 = vmatprep.subr.mxu0 0.0
        %4246 = vmatpush1.msra.mxu0 0.0
        %4247 = vmatprep.subr.mxu0 0.0
        %4248 = vmatpush1.msra.mxu0 0.0
        %4249 = vmatprep.subr.mxu0 0.0
        %4250 = vmatpush1.msra.mxu0 0.0
        %4251 = vmatprep.subr.mxu0 0.0
        %4252 = vmatpush1.msra.mxu0 0.0
        %4253 = vmatprep.subr.mxu0 0.0
        %4254 = vmatpush1.msra.mxu0 0.0
        %4255 = vmatprep.subr.mxu0 0.0
        %4256 = vmatpush1.msra.mxu0 0.0
        %4257 = vmatprep.subr.mxu0 0.0
        %4258 = vmatpush1.msra.mxu0 0.0
        %4259 = vmatprep.subr.mxu0 0.0
        %4260 = vmatpush1.msra.mxu0 0.0
        %4261 = vmatprep.subr.mxu0 0.0
        %4262 = vmatpush1.msra.mxu0 0.0
        %4263 = vmatprep.subr.mxu0 0.0
        %4264 = vmatpush1.msra.mxu0 0.0
        %4265 = vmatprep.subr.mxu0 0.0
        %4266 = vmatpush1.msra.mxu0 0.0
        %4267 = vmatprep.subr.mxu0 0.0
        %4268 = vmatpush1.msra.mxu0 0.0
        %4269 = vmatprep.subr.mxu0 0.0
        %4270 = vmatpush1.msra.mxu0 0.0
        %4271 = vmatprep.subr.mxu0 0.0
        %4272 = vmatpush1.msra.mxu0 0.0
        %4273 = vmatprep.subr.mxu0 0.0
        %4274 = vmatpush1.msra.mxu0 0.0
        %4275 = vmatprep.subr.mxu0 0.0
        %4276 = vmatpush1.msra.mxu0 0.0
        %4277 = vmatprep.subr.mxu0 0.0
        %4278 = vmatpush1.msra.mxu0 0.0
        %4279 = vmatprep.subr.mxu0 0.0
        %4280 = vmatpush1.msra.mxu0 0.0
        %4281 = vmatprep.subr.mxu0 0.0
        %4282 = vmatpush1.msra.mxu0 0.0
        %4283 = vmatprep.subr.mxu0 0.0
        %4284 = vmatpush1.msra.mxu0 0.0
        %4285 = vmatprep.subr.mxu0 0.0
        %4286 = vmatpush1.msra.mxu0 0.0
        %4287 = vmatprep.subr.mxu0 0.0
        %4288 = vmatpush1.msra.mxu0 0.0
        %4289 = vmatprep.subr.mxu0 0.0
        %4290 = vmatpush1.msra.mxu0 0.0
        %4291 = vmatprep.mubr.f32.mxu0 0.0
        %v4292 = vand.u32 %v4221, 4294901760
        %v4293 = vsub.f32 %v4221, %v4292
        %v4294 = vand.u32 %v4293, 4294901760
        %v4295 = vsub.f32 %v4293, %v4294
        %v4296 = vand.u32 %v4295, 4294901760
        %4297 = vmatmul.mubr.f32.gmra.mrb[0].mxu0 %v4296
        %v4298 = vpop.f32.mrb[0].mxu0
        %v4299 = vadd.f32 0.0, %v4298
        %v4300 = vpop.f32.mrb[0].mxu0
        %v4301 = vadd.f32 0.0, %v4300
        %4302 = vdwg.mxu0
        %v4303 = vand.u32 %v4211, 4294901760
        %v4304 = vsub.f32 %v4211, %v4303
        %v4305 = vand.u32 %v4304, 4294901760
        %v4306 = vsub.f32 %v4304, %v4305
        %v4307 = vand.u32 %v4306, 4294901760
        %4308 = vmatprep.subr.mxu0 %v4307
        %v4309 = vand.u32 %v4210, 4294901760
        %v4310 = vsub.f32 %v4210, %v4309
        %v4311 = vand.u32 %v4310, 4294901760
        %v4312 = vsub.f32 %v4310, %v4311
        %v4313 = vand.u32 %v4312, 4294901760
        %4314 = vmatpush1.msra.mxu0 %v4313
        %v4315 = vand.u32 %v4213, 4294901760
        %v4316 = vsub.f32 %v4213, %v4315
        %v4317 = vand.u32 %v4316, 4294901760
        %v4318 = vsub.f32 %v4316, %v4317
        %v4319 = vand.u32 %v4318, 4294901760
        %4320 = vmatprep.subr.mxu0 %v4319
        %v4321 = vand.u32 %v4212, 4294901760
        %v4322 = vsub.f32 %v4212, %v4321
        %v4323 = vand.u32 %v4322, 4294901760
        %v4324 = vsub.f32 %v4322, %v4323
        %v4325 = vand.u32 %v4324, 4294901760
        %4326 = vmatpush1.msra.mxu0 %v4325
        %4327 = vmatprep.subr.mxu0 0.0
        %4328 = vmatpush1.msra.mxu0 0.0
        %4329 = vmatprep.subr.mxu0 0.0
        %4330 = vmatpush1.msra.mxu0 0.0
        %4331 = vmatprep.subr.mxu0 0.0
        %4332 = vmatpush1.msra.mxu0 0.0
        %4333 = vmatprep.subr.mxu0 0.0
        %4334 = vmatpush1.msra.mxu0 0.0
        %4335 = vmatprep.subr.mxu0 0.0
        %4336 = vmatpush1.msra.mxu0 0.0
        %4337 = vmatprep.subr.mxu0 0.0
        %4338 = vmatpush1.msra.mxu0 0.0
        %4339 = vmatprep.subr.mxu0 0.0
        %4340 = vmatpush1.msra.mxu0 0.0
        %4341 = vmatprep.subr.mxu0 0.0
        %4342 = vmatpush1.msra.mxu0 0.0
        %4343 = vmatprep.subr.mxu0 0.0
        %4344 = vmatpush1.msra.mxu0 0.0
        %4345 = vmatprep.subr.mxu0 0.0
        %4346 = vmatpush1.msra.mxu0 0.0
        %4347 = vmatprep.subr.mxu0 0.0
        %4348 = vmatpush1.msra.mxu0 0.0
        %4349 = vmatprep.subr.mxu0 0.0
        %4350 = vmatpush1.msra.mxu0 0.0
        %4351 = vmatprep.subr.mxu0 0.0
        %4352 = vmatpush1.msra.mxu0 0.0
        %4353 = vmatprep.subr.mxu0 0.0
        %4354 = vmatpush1.msra.mxu0 0.0
        %4355 = vmatprep.subr.mxu0 0.0
        %4356 = vmatpush1.msra.mxu0 0.0
        %4357 = vmatprep.subr.mxu0 0.0
        %4358 = vmatpush1.msra.mxu0 0.0
        %4359 = vmatprep.subr.mxu0 0.0
        %4360 = vmatpush1.msra.mxu0 0.0
        %4361 = vmatprep.subr.mxu0 0.0
        %4362 = vmatpush1.msra.mxu0 0.0
        %4363 = vmatprep.subr.mxu0 0.0
        %4364 = vmatpush1.msra.mxu0 0.0
        %4365 = vmatprep.subr.mxu0 0.0
        %4366 = vmatpush1.msra.mxu0 0.0
        %4367 = vmatprep.subr.mxu0 0.0
        %4368 = vmatpush1.msra.mxu0 0.0
        %4369 = vmatprep.subr.mxu0 0.0
        %4370 = vmatpush1.msra.mxu0 0.0
        %4371 = vmatprep.subr.mxu0 0.0
        %4372 = vmatpush1.msra.mxu0 0.0
        %4373 = vmatprep.subr.mxu0 0.0
        %4374 = vmatpush1.msra.mxu0 0.0
        %4375 = vmatprep.subr.mxu0 0.0
        %4376 = vmatpush1.msra.mxu0 0.0
        %4377 = vmatprep.subr.mxu0 0.0
        %4378 = vmatpush1.msra.mxu0 0.0
        %4379 = vmatprep.subr.mxu0 0.0
        %4380 = vmatpush1.msra.mxu0 0.0
        %4381 = vmatprep.subr.mxu0 0.0
        %4382 = vmatpush1.msra.mxu0 0.0
        %4383 = vmatprep.subr.mxu0 0.0
        %4384 = vmatpush1.msra.mxu0 0.0
        %4385 = vmatprep.subr.mxu0 0.0
        %4386 = vmatpush1.msra.mxu0 0.0
        %4387 = vmatprep.mubr.f32.mxu0 0.0
        %v4388 = vand.u32 %v4221, 4294901760
        %4389 = vmatmul.mubr.f32.gmra.mrb[0].mxu0 %v4388
        %v4390 = vpop.f32.mrb[0].mxu0
        %v4391 = vadd.f32 %v4299, %v4390
        %v4392 = vpop.f32.mrb[0].mxu0
        %v4393 = vadd.f32 %v4301, %v4392
        %4394 = vdwg.mxu0
        %v4395 = vand.u32 %v4211, 4294901760
        %v4396 = vsub.f32 %v4211, %v4395
        %4397 = vmatprep.subr.mxu0 %v4396
        %v4398 = vand.u32 %v4210, 4294901760
        %v4399 = vsub.f32 %v4210, %v4398
        %4400 = vmatpush1.msra.mxu0 %v4399
        %v4401 = vand.u32 %v4213, 4294901760
        %v4402 = vsub.f32 %v4213, %v4401
        %4403 = vmatprep.subr.mxu0 %v4402
        %v4404 = vand.u32 %v4212, 4294901760
        %v4405 = vsub.f32 %v4212, %v4404
        %4406 = vmatpush1.msra.mxu0 %v4405
        %4407 = vmatprep.subr.mxu0 0.0
        %4408 = vmatpush1.msra.mxu0 0.0
        %4409 = vmatprep.subr.mxu0 0.0
        %4410 = vmatpush1.msra.mxu0 0.0
        %4411 = vmatprep.subr.mxu0 0.0
        %4412 = vmatpush1.msra.mxu0 0.0
        %4413 = vmatprep.subr.mxu0 0.0
        %4414 = vmatpush1.msra.mxu0 0.0
        %4415 = vmatprep.subr.mxu0 0.0
        %4416 = vmatpush1.msra.mxu0 0.0
        %4417 = vmatprep.subr.mxu0 0.0
        %4418 = vmatpush1.msra.mxu0 0.0
        %4419 = vmatprep.subr.mxu0 0.0
        %4420 = vmatpush1.msra.mxu0 0.0
        %4421 = vmatprep.subr.mxu0 0.0
        %4422 = vmatpush1.msra.mxu0 0.0
        %4423 = vmatprep.subr.mxu0 0.0
        %4424 = vmatpush1.msra.mxu0 0.0
        %4425 = vmatprep.subr.mxu0 0.0
        %4426 = vmatpush1.msra.mxu0 0.0
        %4427 = vmatprep.subr.mxu0 0.0
        %4428 = vmatpush1.msra.mxu0 0.0
        %4429 = vmatprep.subr.mxu0 0.0
        %4430 = vmatpush1.msra.mxu0 0.0
        %4431 = vmatprep.subr.mxu0 0.0
        %4432 = vmatpush1.msra.mxu0 0.0
        %4433 = vmatprep.subr.mxu0 0.0
        %4434 = vmatpush1.msra.mxu0 0.0
        %4435 = vmatprep.subr.mxu0 0.0
        %4436 = vmatpush1.msra.mxu0 0.0
        %4437 = vmatprep.subr.mxu0 0.0
        %4438 = vmatpush1.msra.mxu0 0.0
        %4439 = vmatprep.subr.mxu0 0.0
        %4440 = vmatpush1.msra.mxu0 0.0
        %4441 = vmatprep.subr.mxu0 0.0
        %4442 = vmatpush1.msra.mxu0 0.0
        %4443 = vmatprep.subr.mxu0 0.0
        %4444 = vmatpush1.msra.mxu0 0.0
        %4445 = vmatprep.subr.mxu0 0.0
        %4446 = vmatpush1.msra.mxu0 0.0
        %4447 = vmatprep.subr.mxu0 0.0
        %4448 = vmatpush1.msra.mxu0 0.0
        %4449 = vmatprep.subr.mxu0 0.0
        %4450 = vmatpush1.msra.mxu0 0.0
        %4451 = vmatprep.subr.mxu0 0.0
        %4452 = vmatpush1.msra.mxu0 0.0
        %4453 = vmatprep.subr.mxu0 0.0
        %4454 = vmatpush1.msra.mxu0 0.0
        %4455 = vmatprep.subr.mxu0 0.0
        %4456 = vmatpush1.msra.mxu0 0.0
        %4457 = vmatprep.subr.mxu0 0.0
        %4458 = vmatpush1.msra.mxu0 0.0
        %4459 = vmatprep.subr.mxu0 0.0
        %4460 = vmatpush1.msra.mxu0 0.0
        %4461 = vmatprep.subr.mxu0 0.0
        %4462 = vmatpush1.msra.mxu0 0.0
        %4463 = vmatprep.subr.mxu0 0.0
        %4464 = vmatpush1.msra.mxu0 0.0
        %4465 = vmatprep.subr.mxu0 0.0
        %4466 = vmatpush1.msra.mxu0 0.0
        %4467 = vmatprep.mubr.f32.mxu0 0.0
        %v4468 = vand.u32 %v4221, 4294901760
        %v4469 = vsub.f32 %v4221, %v4468
        %4470 = vmatmul.mubr.f32.gmra.mrb[0].mxu0 %v4469
        %v4471 = vpop.f32.mrb[0].mxu0
        %v4472 = vadd.f32 %v4391, %v4471
        %v4473 = vpop.f32.mrb[0].mxu0
        %v4474 = vadd.f32 %v4393, %v4473
        %4475 = vdwg.mxu0
        %v4476 = vand.u32 %v4211, 4294901760
        %4477 = vmatprep.subr.mxu0 %v4476
        %v4478 = vand.u32 %v4210, 4294901760
        %4479 = vmatpush1.msra.mxu0 %v4478
        %v4480 = vand.u32 %v4213, 4294901760
        %4481 = vmatprep.subr.mxu0 %v4480
        %v4482 = vand.u32 %v4212, 4294901760
        %4483 = vmatpush1.msra.mxu0 %v4482
        %4484 = vmatprep.subr.mxu0 0.0
        %4485 = vmatpush1.msra.mxu0 0.0
        %4486 = vmatprep.subr.mxu0 0.0
        %4487 = vmatpush1.msra.mxu0 0.0
        %4488 = vmatprep.subr.mxu0 0.0
        %4489 = vmatpush1.msra.mxu0 0.0
        %4490 = vmatprep.subr.mxu0 0.0
        %4491 = vmatpush1.msra.mxu0 0.0
        %4492 = vmatprep.subr.mxu0 0.0
        %4493 = vmatpush1.msra.mxu0 0.0
        %4494 = vmatprep.subr.mxu0 0.0
        %4495 = vmatpush1.msra.mxu0 0.0
        %4496 = vmatprep.subr.mxu0 0.0
        %4497 = vmatpush1.msra.mxu0 0.0
        %4498 = vmatprep.subr.mxu0 0.0
        %4499 = vmatpush1.msra.mxu0 0.0
        %4500 = vmatprep.subr.mxu0 0.0
        %4501 = vmatpush1.msra.mxu0 0.0
        %4502 = vmatprep.subr.mxu0 0.0
        %4503 = vmatpush1.msra.mxu0 0.0
        %4504 = vmatprep.subr.mxu0 0.0
        %4505 = vmatpush1.msra.mxu0 0.0
        %4506 = vmatprep.subr.mxu0 0.0
        %4507 = vmatpush1.msra.mxu0 0.0
        %4508 = vmatprep.subr.mxu0 0.0
        %4509 = vmatpush1.msra.mxu0 0.0
        %4510 = vmatprep.subr.mxu0 0.0
        %4511 = vmatpush1.msra.mxu0 0.0
        %4512 = vmatprep.subr.mxu0 0.0
        %4513 = vmatpush1.msra.mxu0 0.0
        %4514 = vmatprep.subr.mxu0 0.0
        %4515 = vmatpush1.msra.mxu0 0.0
        %4516 = vmatprep.subr.mxu0 0.0
        %4517 = vmatpush1.msra.mxu0 0.0
        %4518 = vmatprep.subr.mxu0 0.0
        %4519 = vmatpush1.msra.mxu0 0.0
        %4520 = vmatprep.subr.mxu0 0.0
        %4521 = vmatpush1.msra.mxu0 0.0
        %4522 = vmatprep.subr.mxu0 0.0
        %4523 = vmatpush1.msra.mxu0 0.0
        %4524 = vmatprep.subr.mxu0 0.0
        %4525 = vmatpush1.msra.mxu0 0.0
        %4526 = vmatprep.subr.mxu0 0.0
        %4527 = vmatpush1.msra.mxu0 0.0
        %4528 = vmatprep.subr.mxu0 0.0
        %4529 = vmatpush1.msra.mxu0 0.0
        %4530 = vmatprep.subr.mxu0 0.0
        %4531 = vmatpush1.msra.mxu0 0.0
        %4532 = vmatprep.subr.mxu0 0.0
        %4533 = vmatpush1.msra.mxu0 0.0
        %4534 = vmatprep.subr.mxu0 0.0
        %4535 = vmatpush1.msra.mxu0 0.0
        %4536 = vmatprep.subr.mxu0 0.0
        %4537 = vmatpush1.msra.mxu0 0.0
        %4538 = vmatprep.subr.mxu0 0.0
        %4539 = vmatpush1.msra.mxu0 0.0
        %4540 = vmatprep.subr.mxu0 0.0
        %4541 = vmatpush1.msra.mxu0 0.0
        %4542 = vmatprep.subr.mxu0 0.0
        %4543 = vmatpush1.msra.mxu0 0.0
        %4544 = vmatprep.mubr.f32.mxu0 0.0
        %v4545 = vand.u32 %v4221, 4294901760
        %v4546 = vsub.f32 %v4221, %v4545
        %v4547 = vand.u32 %v4546, 4294901760
        %4548 = vmatmul.mubr.f32.gmra.mrb[0].mxu0 %v4547
        %v4549 = vpop.f32.mrb[0].mxu0
        %v4550 = vadd.f32 %v4472, %v4549
        %v4551 = vpop.f32.mrb[0].mxu0
        %v4552 = vadd.f32 %v4474, %v4551
        %4553 = vdwg.mxu0
        %v4554 = vand.u32 %v4211, 4294901760
        %v4555 = vsub.f32 %v4211, %v4554
        %v4556 = vand.u32 %v4555, 4294901760
        %4557 = vmatprep.subr.mxu0 %v4556
        %v4558 = vand.u32 %v4210, 4294901760
        %v4559 = vsub.f32 %v4210, %v4558
        %v4560 = vand.u32 %v4559, 4294901760
        %4561 = vmatpush1.msra.mxu0 %v4560
        %v4562 = vand.u32 %v4213, 4294901760
        %v4563 = vsub.f32 %v4213, %v4562
        %v4564 = vand.u32 %v4563, 4294901760
        %4565 = vmatprep.subr.mxu0 %v4564
        %v4566 = vand.u32 %v4212, 4294901760
        %v4567 = vsub.f32 %v4212, %v4566
        %v4568 = vand.u32 %v4567, 4294901760
        %4569 = vmatpush1.msra.mxu0 %v4568
        %4570 = vmatprep.subr.mxu0 0.0
        %4571 = vmatpush1.msra.mxu0 0.0
        %4572 = vmatprep.subr.mxu0 0.0
        %4573 = vmatpush1.msra.mxu0 0.0
        %4574 = vmatprep.subr.mxu0 0.0
        %4575 = vmatpush1.msra.mxu0 0.0
        %4576 = vmatprep.subr.mxu0 0.0
        %4577 = vmatpush1.msra.mxu0 0.0
        %4578 = vmatprep.subr.mxu0 0.0
        %4579 = vmatpush1.msra.mxu0 0.0
        %4580 = vmatprep.subr.mxu0 0.0
        %4581 = vmatpush1.msra.mxu0 0.0
        %4582 = vmatprep.subr.mxu0 0.0
        %4583 = vmatpush1.msra.mxu0 0.0
        %4584 = vmatprep.subr.mxu0 0.0
        %4585 = vmatpush1.msra.mxu0 0.0
        %4586 = vmatprep.subr.mxu0 0.0
        %4587 = vmatpush1.msra.mxu0 0.0
        %4588 = vmatprep.subr.mxu0 0.0
        %4589 = vmatpush1.msra.mxu0 0.0
        %4590 = vmatprep.subr.mxu0 0.0
        %4591 = vmatpush1.msra.mxu0 0.0
        %4592 = vmatprep.subr.mxu0 0.0
        %4593 = vmatpush1.msra.mxu0 0.0
        %4594 = vmatprep.subr.mxu0 0.0
        %4595 = vmatpush1.msra.mxu0 0.0
        %4596 = vmatprep.subr.mxu0 0.0
        %4597 = vmatpush1.msra.mxu0 0.0
        %4598 = vmatprep.subr.mxu0 0.0
        %4599 = vmatpush1.msra.mxu0 0.0
        %4600 = vmatprep.subr.mxu0 0.0
        %4601 = vmatpush1.msra.mxu0 0.0
        %4602 = vmatprep.subr.mxu0 0.0
        %4603 = vmatpush1.msra.mxu0 0.0
        %4604 = vmatprep.subr.mxu0 0.0
        %4605 = vmatpush1.msra.mxu0 0.0
        %4606 = vmatprep.subr.mxu0 0.0
        %4607 = vmatpush1.msra.mxu0 0.0
        %4608 = vmatprep.subr.mxu0 0.0
        %4609 = vmatpush1.msra.mxu0 0.0
        %4610 = vmatprep.subr.mxu0 0.0
        %4611 = vmatpush1.msra.mxu0 0.0
        %4612 = vmatprep.subr.mxu0 0.0
        %4613 = vmatpush1.msra.mxu0 0.0
        %4614 = vmatprep.subr.mxu0 0.0
        %4615 = vmatpush1.msra.mxu0 0.0
        %4616 = vmatprep.subr.mxu0 0.0
        %4617 = vmatpush1.msra.mxu0 0.0
        %4618 = vmatprep.subr.mxu0 0.0
        %4619 = vmatpush1.msra.mxu0 0.0
        %4620 = vmatprep.subr.mxu0 0.0
        %4621 = vmatpush1.msra.mxu0 0.0
        %4622 = vmatprep.subr.mxu0 0.0
        %4623 = vmatpush1.msra.mxu0 0.0
        %4624 = vmatprep.subr.mxu0 0.0
        %4625 = vmatpush1.msra.mxu0 0.0
        %4626 = vmatprep.subr.mxu0 0.0
        %4627 = vmatpush1.msra.mxu0 0.0
        %4628 = vmatprep.subr.mxu0 0.0
        %4629 = vmatpush1.msra.mxu0 0.0
        %4630 = vmatprep.mubr.f32.mxu0 0.0
        %v4631 = vand.u32 %v4221, 4294901760
        %4632 = vmatmul.mubr.f32.gmra.mrb[0].mxu0 %v4631
        %v4633 = vpop.f32.mrb[0].mxu0
        %v4634 = vadd.f32 %v4550, %v4633
        %v4635 = vpop.f32.mrb[0].mxu0
        %v4636 = vadd.f32 %v4552, %v4635
        %4637 = vdwg.mxu0
        %v4638 = vand.u32 %v4211, 4294901760
        %4639 = vmatprep.subr.mxu0 %v4638
        %v4640 = vand.u32 %v4210, 4294901760
        %4641 = vmatpush1.msra.mxu0 %v4640
        %v4642 = vand.u32 %v4213, 4294901760
        %4643 = vmatprep.subr.mxu0 %v4642
        %v4644 = vand.u32 %v4212, 4294901760
        %4645 = vmatpush1.msra.mxu0 %v4644
        %4646 = vmatprep.subr.mxu0 0.0
        %4647 = vmatpush1.msra.mxu0 0.0
        %4648 = vmatprep.subr.mxu0 0.0
        %4649 = vmatpush1.msra.mxu0 0.0
        %4650 = vmatprep.subr.mxu0 0.0
        %4651 = vmatpush1.msra.mxu0 0.0
        %4652 = vmatprep.subr.mxu0 0.0
        %4653 = vmatpush1.msra.mxu0 0.0
        %4654 = vmatprep.subr.mxu0 0.0
        %4655 = vmatpush1.msra.mxu0 0.0
        %4656 = vmatprep.subr.mxu0 0.0
        %4657 = vmatpush1.msra.mxu0 0.0
        %4658 = vmatprep.subr.mxu0 0.0
        %4659 = vmatpush1.msra.mxu0 0.0
        %4660 = vmatprep.subr.mxu0 0.0
        %4661 = vmatpush1.msra.mxu0 0.0
        %4662 = vmatprep.subr.mxu0 0.0
        %4663 = vmatpush1.msra.mxu0 0.0
        %4664 = vmatprep.subr.mxu0 0.0
        %4665 = vmatpush1.msra.mxu0 0.0
        %4666 = vmatprep.subr.mxu0 0.0
        %4667 = vmatpush1.msra.mxu0 0.0
        %4668 = vmatprep.subr.mxu0 0.0
        %4669 = vmatpush1.msra.mxu0 0.0
        %4670 = vmatprep.subr.mxu0 0.0
        %4671 = vmatpush1.msra.mxu0 0.0
        %4672 = vmatprep.subr.mxu0 0.0
        %4673 = vmatpush1.msra.mxu0 0.0
        %4674 = vmatprep.subr.mxu0 0.0
        %4675 = vmatpush1.msra.mxu0 0.0
        %4676 = vmatprep.subr.mxu0 0.0
        %4677 = vmatpush1.msra.mxu0 0.0
        %4678 = vmatprep.subr.mxu0 0.0
        %4679 = vmatpush1.msra.mxu0 0.0
        %4680 = vmatprep.subr.mxu0 0.0
        %4681 = vmatpush1.msra.mxu0 0.0
        %4682 = vmatprep.subr.mxu0 0.0
        %4683 = vmatpush1.msra.mxu0 0.0
        %4684 = vmatprep.subr.mxu0 0.0
        %4685 = vmatpush1.msra.mxu0 0.0
        %4686 = vmatprep.subr.mxu0 0.0
        %4687 = vmatpush1.msra.mxu0 0.0
        %4688 = vmatprep.subr.mxu0 0.0
        %4689 = vmatpush1.msra.mxu0 0.0
        %4690 = vmatprep.subr.mxu0 0.0
        %4691 = vmatpush1.msra.mxu0 0.0
        %4692 = vmatprep.subr.mxu0 0.0
        %4693 = vmatpush1.msra.mxu0 0.0
        %4694 = vmatprep.subr.mxu0 0.0
        %4695 = vmatpush1.msra.mxu0 0.0
        %4696 = vmatprep.subr.mxu0 0.0
        %4697 = vmatpush1.msra.mxu0 0.0
        %4698 = vmatprep.subr.mxu0 0.0
        %4699 = vmatpush1.msra.mxu0 0.0
        %4700 = vmatprep.subr.mxu0 0.0
        %4701 = vmatpush1.msra.mxu0 0.0
        %4702 = vmatprep.subr.mxu0 0.0
        %4703 = vmatpush1.msra.mxu0 0.0
        %4704 = vmatprep.subr.mxu0 0.0
        %4705 = vmatpush1.msra.mxu0 0.0
        %4706 = vmatprep.mubr.f32.mxu0 0.0
        %v4707 = vand.u32 %v4221, 4294901760
        %4708 = vmatmul.mubr.f32.gmra.mrb[0].mxu0 %v4707
        %v4709 = vpop.f32.mrb[0].mxu0
        %v4710 = vadd.f32 %v4634, %v4709
        %v4711 = vpop.f32.mrb[0].mxu0
        %v4712 = vadd.f32 %v4636, %v4711
        %4713 = vdwg.mxu0
        %4714 = vmatprep.subr.mxu0 0.0
        %v4715 = vand.u32 %v4202, 4294901760
        %4716 = vmatpush1.msra.mxu0 %v4715
        %4717 = vmatprep.subr.mxu0 0.0
        %v4718 = vand.u32 %v4208, 4294901760
        %4719 = vmatpush1.msra.mxu0 %v4718
        %4720 = vmatprep.subr.mxu0 0.0
        %4721 = vmatpush1.msra.mxu0 0.0
        %4722 = vmatprep.subr.mxu0 0.0
        %4723 = vmatpush1.msra.mxu0 0.0
        %4724 = vmatprep.subr.mxu0 0.0
        %4725 = vmatpush1.msra.mxu0 0.0
        %4726 = vmatprep.subr.mxu0 0.0
        %4727 = vmatpush1.msra.mxu0 0.0
        %4728 = vmatprep.subr.mxu0 0.0
        %4729 = vmatpush1.msra.mxu0 0.0
        %4730 = vmatprep.subr.mxu0 0.0
        %4731 = vmatpush1.msra.mxu0 0.0
        %4732 = vmatprep.subr.mxu0 0.0
        %4733 = vmatpush1.msra.mxu0 0.0
        %4734 = vmatprep.subr.mxu0 0.0
        %4735 = vmatpush1.msra.mxu0 0.0
        %4736 = vmatprep.subr.mxu0 0.0
        %4737 = vmatpush1.msra.mxu0 0.0
        %4738 = vmatprep.subr.mxu0 0.0
        %4739 = vmatpush1.msra.mxu0 0.0
        %4740 = vmatprep.subr.mxu0 0.0
        %4741 = vmatpush1.msra.mxu0 0.0
        %4742 = vmatprep.subr.mxu0 0.0
        %4743 = vmatpush1.msra.mxu0 0.0
        %4744 = vmatprep.subr.mxu0 0.0
        %4745 = vmatpush1.msra.mxu0 0.0
        %4746 = vmatprep.subr.mxu0 0.0
        %4747 = vmatpush1.msra.mxu0 0.0
        %4748 = vmatprep.subr.mxu0 0.0
        %4749 = vmatpush1.msra.mxu0 0.0
        %4750 = vmatprep.subr.mxu0 0.0
        %4751 = vmatpush1.msra.mxu0 0.0
        %4752 = vmatprep.subr.mxu0 0.0
        %4753 = vmatpush1.msra.mxu0 0.0
        %4754 = vmatprep.subr.mxu0 0.0
        %4755 = vmatpush1.msra.mxu0 0.0
        %4756 = vmatprep.subr.mxu0 0.0
        %4757 = vmatpush1.msra.mxu0 0.0
        %4758 = vmatprep.subr.mxu0 0.0
        %4759 = vmatpush1.msra.mxu0 0.0
        %4760 = vmatprep.subr.mxu0 0.0
        %4761 = vmatpush1.msra.mxu0 0.0
        %4762 = vmatprep.subr.mxu0 0.0
        %4763 = vmatpush1.msra.mxu0 0.0
        %4764 = vmatprep.subr.mxu0 0.0
        %4765 = vmatpush1.msra.mxu0 0.0
        %4766 = vmatprep.subr.mxu0 0.0
        %4767 = vmatpush1.msra.mxu0 0.0
        %4768 = vmatprep.subr.mxu0 0.0
        %4769 = vmatpush1.msra.mxu0 0.0
        %4770 = vmatprep.subr.mxu0 0.0
        %4771 = vmatpush1.msra.mxu0 0.0
        %4772 = vmatprep.subr.mxu0 0.0
        %4773 = vmatpush1.msra.mxu0 0.0
        %4774 = vmatprep.subr.mxu0 0.0
        %4775 = vmatpush1.msra.mxu0 0.0
        %4776 = vmatprep.subr.mxu0 0.0
        %4777 = vmatpush1.msra.mxu0 0.0
        %4778 = vmatprep.subr.mxu0 0.0
        %4779 = vmatpush1.msra.mxu0 0.0
        %4780 = vmatprep.mubr.f32.mxu0 0.0
        %v4781 = vand.u32 %v4221, 4294901760
        %v4782 = vsub.f32 %v4221, %v4781
        %v4783 = vand.u32 %v4782, 4294901760
        %v4784 = vsub.f32 %v4782, %v4783
        %v4785 = vand.u32 %v4784, 4294901760
        %4786 = vmatmul.mubr.f32.gmra.mrb[0].mxu0 %v4785
        %v4787 = vpop.f32.mrb[0].mxu0
        %v4788 = vadd.f32 0.0, %v4787
        %v4789 = vpop.f32.mrb[0].mxu0
        %4790 = vdwg.mxu0
        %4791 = vmatprep.subr.mxu0 0.0
        %v4792 = vand.u32 %v4202, 4294901760
        %v4793 = vsub.f32 %v4202, %v4792
        %v4794 = vand.u32 %v4793, 4294901760
        %v4795 = vsub.f32 %v4793, %v4794
        %v4796 = vand.u32 %v4795, 4294901760
        %4797 = vmatpush1.msra.mxu0 %v4796
        %4798 = vmatprep.subr.mxu0 0.0
        %v4799 = vand.u32 %v4208, 4294901760
        %v4800 = vsub.f32 %v4208, %v4799
        %v4801 = vand.u32 %v4800, 4294901760
        %v4802 = vsub.f32 %v4800, %v4801
        %v4803 = vand.u32 %v4802, 4294901760
        %4804 = vmatpush1.msra.mxu0 %v4803
        %4805 = vmatprep.subr.mxu0 0.0
        %4806 = vmatpush1.msra.mxu0 0.0
        %4807 = vmatprep.subr.mxu0 0.0
        %4808 = vmatpush1.msra.mxu0 0.0
        %4809 = vmatprep.subr.mxu0 0.0
        %4810 = vmatpush1.msra.mxu0 0.0
        %4811 = vmatprep.subr.mxu0 0.0
        %4812 = vmatpush1.msra.mxu0 0.0
        %4813 = vmatprep.subr.mxu0 0.0
        %4814 = vmatpush1.msra.mxu0 0.0
        %4815 = vmatprep.subr.mxu0 0.0
        %4816 = vmatpush1.msra.mxu0 0.0
        %4817 = vmatprep.subr.mxu0 0.0
        %4818 = vmatpush1.msra.mxu0 0.0
        %4819 = vmatprep.subr.mxu0 0.0
        %4820 = vmatpush1.msra.mxu0 0.0
        %4821 = vmatprep.subr.mxu0 0.0
        %4822 = vmatpush1.msra.mxu0 0.0
        %4823 = vmatprep.subr.mxu0 0.0
        %4824 = vmatpush1.msra.mxu0 0.0
        %4825 = vmatprep.subr.mxu0 0.0
        %4826 = vmatpush1.msra.mxu0 0.0
        %4827 = vmatprep.subr.mxu0 0.0
        %4828 = vmatpush1.msra.mxu0 0.0
        %4829 = vmatprep.subr.mxu0 0.0
        %4830 = vmatpush1.msra.mxu0 0.0
        %4831 = vmatprep.subr.mxu0 0.0
        %4832 = vmatpush1.msra.mxu0 0.0
        %4833 = vmatprep.subr.mxu0 0.0
        %4834 = vmatpush1.msra.mxu0 0.0
        %4835 = vmatprep.subr.mxu0 0.0
        %4836 = vmatpush1.msra.mxu0 0.0
        %4837 = vmatprep.subr.mxu0 0.0
        %4838 = vmatpush1.msra.mxu0 0.0
        %4839 = vmatprep.subr.mxu0 0.0
        %4840 = vmatpush1.msra.mxu0 0.0
        %4841 = vmatprep.subr.mxu0 0.0
        %4842 = vmatpush1.msra.mxu0 0.0
        %4843 = vmatprep.subr.mxu0 0.0
        %4844 = vmatpush1.msra.mxu0 0.0
        %4845 = vmatprep.subr.mxu0 0.0
        %4846 = vmatpush1.msra.mxu0 0.0
        %4847 = vmatprep.subr.mxu0 0.0
        %4848 = vmatpush1.msra.mxu0 0.0
        %4849 = vmatprep.subr.mxu0 0.0
        %4850 = vmatpush1.msra.mxu0 0.0
        %4851 = vmatprep.subr.mxu0 0.0
        %4852 = vmatpush1.msra.mxu0 0.0
        %4853 = vmatprep.subr.mxu0 0.0
        %4854 = vmatpush1.msra.mxu0 0.0
        %4855 = vmatprep.subr.mxu0 0.0
        %4856 = vmatpush1.msra.mxu0 0.0
        %4857 = vmatprep.subr.mxu0 0.0
        %4858 = vmatpush1.msra.mxu0 0.0
        %4859 = vmatprep.subr.mxu0 0.0
        %4860 = vmatpush1.msra.mxu0 0.0
        %4861 = vmatprep.subr.mxu0 0.0
        %4862 = vmatpush1.msra.mxu0 0.0
        %4863 = vmatprep.subr.mxu0 0.0
        %4864 = vmatpush1.msra.mxu0 0.0
        %4865 = vmatprep.mubr.f32.mxu0 0.0
        %v4866 = vand.u32 %v4221, 4294901760
        %4867 = vmatmul.mubr.f32.gmra.mrb[0].mxu0 %v4866
        %v4868 = vpop.f32.mrb[0].mxu0
        %v4869 = vadd.f32 %v4788, %v4868
        %v4870 = vpop.f32.mrb[0].mxu0
        %4871 = vdwg.mxu0
        %4872 = vmatprep.subr.mxu0 0.0
        %v4873 = vand.u32 %v4202, 4294901760
        %v4874 = vsub.f32 %v4202, %v4873
        %4875 = vmatpush1.msra.mxu0 %v4874
        %4876 = vmatprep.subr.mxu0 0.0
        %v4877 = vand.u32 %v4208, 4294901760
        %v4878 = vsub.f32 %v4208, %v4877
        %4879 = vmatpush1.msra.mxu0 %v4878
        %4880 = vmatprep.subr.mxu0 0.0
        %4881 = vmatpush1.msra.mxu0 0.0
        %4882 = vmatprep.subr.mxu0 0.0
        %4883 = vmatpush1.msra.mxu0 0.0
        %4884 = vmatprep.subr.mxu0 0.0
        %4885 = vmatpush1.msra.mxu0 0.0
        %4886 = vmatprep.subr.mxu0 0.0
        %4887 = vmatpush1.msra.mxu0 0.0
        %4888 = vmatprep.subr.mxu0 0.0
        %4889 = vmatpush1.msra.mxu0 0.0
        %4890 = vmatprep.subr.mxu0 0.0
        %4891 = vmatpush1.msra.mxu0 0.0
        %4892 = vmatprep.subr.mxu0 0.0
        %4893 = vmatpush1.msra.mxu0 0.0
        %4894 = vmatprep.subr.mxu0 0.0
        %4895 = vmatpush1.msra.mxu0 0.0
        %4896 = vmatprep.subr.mxu0 0.0
        %4897 = vmatpush1.msra.mxu0 0.0
        %4898 = vmatprep.subr.mxu0 0.0
        %4899 = vmatpush1.msra.mxu0 0.0
        %4900 = vmatprep.subr.mxu0 0.0
        %4901 = vmatpush1.msra.mxu0 0.0
        %4902 = vmatprep.subr.mxu0 0.0
        %4903 = vmatpush1.msra.mxu0 0.0
        %4904 = vmatprep.subr.mxu0 0.0
        %4905 = vmatpush1.msra.mxu0 0.0
        %4906 = vmatprep.subr.mxu0 0.0
        %4907 = vmatpush1.msra.mxu0 0.0
        %4908 = vmatprep.subr.mxu0 0.0
        %4909 = vmatpush1.msra.mxu0 0.0
        %4910 = vmatprep.subr.mxu0 0.0
        %4911 = vmatpush1.msra.mxu0 0.0
        %4912 = vmatprep.subr.mxu0 0.0
        %4913 = vmatpush1.msra.mxu0 0.0
        %4914 = vmatprep.subr.mxu0 0.0
        %4915 = vmatpush1.msra.mxu0 0.0
        %4916 = vmatprep.subr.mxu0 0.0
        %4917 = vmatpush1.msra.mxu0 0.0
        %4918 = vmatprep.subr.mxu0 0.0
        %4919 = vmatpush1.msra.mxu0 0.0
        %4920 = vmatprep.subr.mxu0 0.0
        %4921 = vmatpush1.msra.mxu0 0.0
        %4922 = vmatprep.subr.mxu0 0.0
        %4923 = vmatpush1.msra.mxu0 0.0
        %4924 = vmatprep.subr.mxu0 0.0
        %4925 = vmatpush1.msra.mxu0 0.0
        %4926 = vmatprep.subr.mxu0 0.0
        %4927 = vmatpush1.msra.mxu0 0.0
        %4928 = vmatprep.subr.mxu0 0.0
        %4929 = vmatpush1.msra.mxu0 0.0
        %4930 = vmatprep.subr.mxu0 0.0
        %4931 = vmatpush1.msra.mxu0 0.0
        %4932 = vmatprep.subr.mxu0 0.0
        %4933 = vmatpush1.msra.mxu0 0.0
        %4934 = vmatprep.subr.mxu0 0.0
        %4935 = vmatpush1.msra.mxu0 0.0
        %4936 = vmatprep.subr.mxu0 0.0
        %4937 = vmatpush1.msra.mxu0 0.0
        %4938 = vmatprep.subr.mxu0 0.0
        %4939 = vmatpush1.msra.mxu0 0.0
        %4940 = vmatprep.mubr.f32.mxu0 0.0
        %v4941 = vand.u32 %v4221, 4294901760
        %v4942 = vsub.f32 %v4221, %v4941
        %4943 = vmatmul.mubr.f32.gmra.mrb[0].mxu0 %v4942
        %v4944 = vpop.f32.mrb[0].mxu0
        %v4945 = vadd.f32 %v4869, %v4944
        %v4946 = vpop.f32.mrb[0].mxu0
        %4947 = vdwg.mxu0
        %4948 = vmatprep.subr.mxu0 0.0
        %v4949 = vand.u32 %v4202, 4294901760
        %4950 = vmatpush1.msra.mxu0 %v4949
        %4951 = vmatprep.subr.mxu0 0.0
        %v4952 = vand.u32 %v4208, 4294901760
        %4953 = vmatpush1.msra.mxu0 %v4952
        %4954 = vmatprep.subr.mxu0 0.0
        %4955 = vmatpush1.msra.mxu0 0.0
        %4956 = vmatprep.subr.mxu0 0.0
        %4957 = vmatpush1.msra.mxu0 0.0
        %4958 = vmatprep.subr.mxu0 0.0
        %4959 = vmatpush1.msra.mxu0 0.0
        %4960 = vmatprep.subr.mxu0 0.0
        %4961 = vmatpush1.msra.mxu0 0.0
        %4962 = vmatprep.subr.mxu0 0.0
        %4963 = vmatpush1.msra.mxu0 0.0
        %4964 = vmatprep.subr.mxu0 0.0
        %4965 = vmatpush1.msra.mxu0 0.0
        %4966 = vmatprep.subr.mxu0 0.0
        %4967 = vmatpush1.msra.mxu0 0.0
        %4968 = vmatprep.subr.mxu0 0.0
        %4969 = vmatpush1.msra.mxu0 0.0
        %4970 = vmatprep.subr.mxu0 0.0
        %4971 = vmatpush1.msra.mxu0 0.0
        %4972 = vmatprep.subr.mxu0 0.0
        %4973 = vmatpush1.msra.mxu0 0.0
        %4974 = vmatprep.subr.mxu0 0.0
        %4975 = vmatpush1.msra.mxu0 0.0
        %4976 = vmatprep.subr.mxu0 0.0
        %4977 = vmatpush1.msra.mxu0 0.0
        %4978 = vmatprep.subr.mxu0 0.0
        %4979 = vmatpush1.msra.mxu0 0.0
        %4980 = vmatprep.subr.mxu0 0.0
        %4981 = vmatpush1.msra.mxu0 0.0
        %4982 = vmatprep.subr.mxu0 0.0
        %4983 = vmatpush1.msra.mxu0 0.0
        %4984 = vmatprep.subr.mxu0 0.0
        %4985 = vmatpush1.msra.mxu0 0.0
        %4986 = vmatprep.subr.mxu0 0.0
        %4987 = vmatpush1.msra.mxu0 0.0
        %4988 = vmatprep.subr.mxu0 0.0
        %4989 = vmatpush1.msra.mxu0 0.0
        %4990 = vmatprep.subr.mxu0 0.0
        %4991 = vmatpush1.msra.mxu0 0.0
        %4992 = vmatprep.subr.mxu0 0.0
        %4993 = vmatpush1.msra.mxu0 0.0
        %4994 = vmatprep.subr.mxu0 0.0
        %4995 = vmatpush1.msra.mxu0 0.0
        %4996 = vmatprep.subr.mxu0 0.0
        %4997 = vmatpush1.msra.mxu0 0.0
        %4998 = vmatprep.subr.mxu0 0.0
        %4999 = vmatpush1.msra.mxu0 0.0
        %5000 = vmatprep.subr.mxu0 0.0
        %5001 = vmatpush1.msra.mxu0 0.0
        %5002 = vmatprep.subr.mxu0 0.0
        %5003 = vmatpush1.msra.mxu0 0.0
        %5004 = vmatprep.subr.mxu0 0.0
        %5005 = vmatpush1.msra.mxu0 0.0
        %5006 = vmatprep.subr.mxu0 0.0
        %5007 = vmatpush1.msra.mxu0 0.0
        %5008 = vmatprep.subr.mxu0 0.0
        %5009 = vmatpush1.msra.mxu0 0.0
        %5010 = vmatprep.subr.mxu0 0.0
        %5011 = vmatpush1.msra.mxu0 0.0
        %5012 = vmatprep.subr.mxu0 0.0
        %5013 = vmatpush1.msra.mxu0 0.0
        %5014 = vmatprep.mubr.f32.mxu0 0.0
        %v5015 = vand.u32 %v4221, 4294901760
        %v5016 = vsub.f32 %v4221, %v5015
        %v5017 = vand.u32 %v5016, 4294901760
        %5018 = vmatmul.mubr.f32.gmra.mrb[0].mxu0 %v5017
        %v5019 = vpop.f32.mrb[0].mxu0
        %v5020 = vadd.f32 %v4945, %v5019
        %v5021 = vpop.f32.mrb[0].mxu0
        %5022 = vdwg.mxu0
        %5023 = vmatprep.subr.mxu0 0.0
        %v5024 = vand.u32 %v4202, 4294901760
        %v5025 = vsub.f32 %v4202, %v5024
        %v5026 = vand.u32 %v5025, 4294901760
        %5027 = vmatpush1.msra.mxu0 %v5026
        %5028 = vmatprep.subr.mxu0 0.0
        %v5029 = vand.u32 %v4208, 4294901760
        %v5030 = vsub.f32 %v4208, %v5029
        %v5031 = vand.u32 %v5030, 4294901760
        %5032 = vmatpush1.msra.mxu0 %v5031
        %5033 = vmatprep.subr.mxu0 0.0
        %5034 = vmatpush1.msra.mxu0 0.0
        %5035 = vmatprep.subr.mxu0 0.0
        %5036 = vmatpush1.msra.mxu0 0.0
        %5037 = vmatprep.subr.mxu0 0.0
        %5038 = vmatpush1.msra.mxu0 0.0
        %5039 = vmatprep.subr.mxu0 0.0
        %5040 = vmatpush1.msra.mxu0 0.0
        %5041 = vmatprep.subr.mxu0 0.0
        %5042 = vmatpush1.msra.mxu0 0.0
        %5043 = vmatprep.subr.mxu0 0.0
        %5044 = vmatpush1.msra.mxu0 0.0
        %5045 = vmatprep.subr.mxu0 0.0
        %5046 = vmatpush1.msra.mxu0 0.0
        %5047 = vmatprep.subr.mxu0 0.0
        %5048 = vmatpush1.msra.mxu0 0.0
        %5049 = vmatprep.subr.mxu0 0.0
        %5050 = vmatpush1.msra.mxu0 0.0
        %5051 = vmatprep.subr.mxu0 0.0
        %5052 = vmatpush1.msra.mxu0 0.0
        %5053 = vmatprep.subr.mxu0 0.0
        %5054 = vmatpush1.msra.mxu0 0.0
        %5055 = vmatprep.subr.mxu0 0.0
        %5056 = vmatpush1.msra.mxu0 0.0
        %5057 = vmatprep.subr.mxu0 0.0
        %5058 = vmatpush1.msra.mxu0 0.0
        %5059 = vmatprep.subr.mxu0 0.0
        %5060 = vmatpush1.msra.mxu0 0.0
        %5061 = vmatprep.subr.mxu0 0.0
        %5062 = vmatpush1.msra.mxu0 0.0
        %5063 = vmatprep.subr.mxu0 0.0
        %5064 = vmatpush1.msra.mxu0 0.0
        %5065 = vmatprep.subr.mxu0 0.0
        %5066 = vmatpush1.msra.mxu0 0.0
        %5067 = vmatprep.subr.mxu0 0.0
        %5068 = vmatpush1.msra.mxu0 0.0
        %5069 = vmatprep.subr.mxu0 0.0
        %5070 = vmatpush1.msra.mxu0 0.0
        %5071 = vmatprep.subr.mxu0 0.0
        %5072 = vmatpush1.msra.mxu0 0.0
        %5073 = vmatprep.subr.mxu0 0.0
        %5074 = vmatpush1.msra.mxu0 0.0
        %5075 = vmatprep.subr.mxu0 0.0
        %5076 = vmatpush1.msra.mxu0 0.0
        %5077 = vmatprep.subr.mxu0 0.0
        %5078 = vmatpush1.msra.mxu0 0.0
        %5079 = vmatprep.subr.mxu0 0.0
        %5080 = vmatpush1.msra.mxu0 0.0
        %5081 = vmatprep.subr.mxu0 0.0
        %5082 = vmatpush1.msra.mxu0 0.0
        %5083 = vmatprep.subr.mxu0 0.0
        %5084 = vmatpush1.msra.mxu0 0.0
        %5085 = vmatprep.subr.mxu0 0.0
        %5086 = vmatpush1.msra.mxu0 0.0
        %5087 = vmatprep.subr.mxu0 0.0
        %5088 = vmatpush1.msra.mxu0 0.0
        %5089 = vmatprep.subr.mxu0 0.0
        %5090 = vmatpush1.msra.mxu0 0.0
        %5091 = vmatprep.subr.mxu0 0.0
        %5092 = vmatpush1.msra.mxu0 0.0
        %5093 = vmatprep.mubr.f32.mxu0 0.0
        %v5094 = vand.u32 %v4221, 4294901760
        %5095 = vmatmul.mubr.f32.gmra.mrb[0].mxu0 %v5094
        %v5096 = vpop.f32.mrb[0].mxu0
        %v5097 = vadd.f32 %v5020, %v5096
        %v5098 = vpop.f32.mrb[0].mxu0
        %5099 = vdwg.mxu0
        %5100 = vmatprep.subr.mxu0 0.0
        %v5101 = vand.u32 %v4202, 4294901760
        %5102 = vmatpush1.msra.mxu0 %v5101
        %5103 = vmatprep.subr.mxu0 0.0
        %v5104 = vand.u32 %v4208, 4294901760
        %5105 = vmatpush1.msra.mxu0 %v5104
        %5106 = vmatprep.subr.mxu0 0.0
        %5107 = vmatpush1.msra.mxu0 0.0
        %5108 = vmatprep.subr.mxu0 0.0
        %5109 = vmatpush1.msra.mxu0 0.0
        %5110 = vmatprep.subr.mxu0 0.0
        %5111 = vmatpush1.msra.mxu0 0.0
        %5112 = vmatprep.subr.mxu0 0.0
        %5113 = vmatpush1.msra.mxu0 0.0
        %5114 = vmatprep.subr.mxu0 0.0
        %5115 = vmatpush1.msra.mxu0 0.0
        %5116 = vmatprep.subr.mxu0 0.0
        %5117 = vmatpush1.msra.mxu0 0.0
        %5118 = vmatprep.subr.mxu0 0.0
        %5119 = vmatpush1.msra.mxu0 0.0
        %5120 = vmatprep.subr.mxu0 0.0
        %5121 = vmatpush1.msra.mxu0 0.0
        %5122 = vmatprep.subr.mxu0 0.0
        %5123 = vmatpush1.msra.mxu0 0.0
        %5124 = vmatprep.subr.mxu0 0.0
        %5125 = vmatpush1.msra.mxu0 0.0
        %5126 = vmatprep.subr.mxu0 0.0
        %5127 = vmatpush1.msra.mxu0 0.0
        %5128 = vmatprep.subr.mxu0 0.0
        %5129 = vmatpush1.msra.mxu0 0.0
        %5130 = vmatprep.subr.mxu0 0.0
        %5131 = vmatpush1.msra.mxu0 0.0
        %5132 = vmatprep.subr.mxu0 0.0
        %5133 = vmatpush1.msra.mxu0 0.0
        %5134 = vmatprep.subr.mxu0 0.0
        %5135 = vmatpush1.msra.mxu0 0.0
        %5136 = vmatprep.subr.mxu0 0.0
        %5137 = vmatpush1.msra.mxu0 0.0
        %5138 = vmatprep.subr.mxu0 0.0
        %5139 = vmatpush1.msra.mxu0 0.0
        %5140 = vmatprep.subr.mxu0 0.0
        %5141 = vmatpush1.msra.mxu0 0.0
        %5142 = vmatprep.subr.mxu0 0.0
        %5143 = vmatpush1.msra.mxu0 0.0
        %5144 = vmatprep.subr.mxu0 0.0
        %5145 = vmatpush1.msra.mxu0 0.0
        %5146 = vmatprep.subr.mxu0 0.0
        %5147 = vmatpush1.msra.mxu0 0.0
        %5148 = vmatprep.subr.mxu0 0.0
        %5149 = vmatpush1.msra.mxu0 0.0
        %5150 = vmatprep.subr.mxu0 0.0
        %5151 = vmatpush1.msra.mxu0 0.0
        %5152 = vmatprep.subr.mxu0 0.0
        %5153 = vmatpush1.msra.mxu0 0.0
        %5154 = vmatprep.subr.mxu0 0.0
        %5155 = vmatpush1.msra.mxu0 0.0
        %5156 = vmatprep.subr.mxu0 0.0
        %5157 = vmatpush1.msra.mxu0 0.0
        %5158 = vmatprep.subr.mxu0 0.0
        %5159 = vmatpush1.msra.mxu0 0.0
        %5160 = vmatprep.subr.mxu0 0.0
        %5161 = vmatpush1.msra.mxu0 0.0
        %5162 = vmatprep.subr.mxu0 0.0
        %5163 = vmatpush1.msra.mxu0 0.0
        %5164 = vmatprep.subr.mxu0 0.0
        %5165 = vmatpush1.msra.mxu0 0.0
        %5166 = vmatprep.mubr.f32.mxu0 0.0
        %v5167 = vand.u32 %v4221, 4294901760
        %5168 = vmatmul.mubr.f32.gmra.mrb[0].mxu0 %v5167
        %v5169 = vpop.f32.mrb[0].mxu0
        %v5170 = vadd.f32 %v5097, %v5169
        %v5171 = vpop.f32.mrb[0].mxu0
        %5172 = vdwg.mxu0
        %v5173 = vadd.f32 %v4192, %v4710
        %v5174 = vadd.f32 %v4193, %v4712
        %v5175 = vadd.f32 %v4194, %v5170
        %s5176 = scalar_lea.vmem [#allocation5], 40
        %v5177 = vld [vmem:[%s5176] sm:$0xff]
        %5178 = vrot.lane.b32.xlu0 %v288, 108
        %v5179 = vpop.permute.xlu0 %5178
        %5180 = vrot.lane.b32.xlu0 %v289, 108
        %v5181 = vpop.permute.xlu0 %5180
        %5182 = vrot.lane.b32.xlu0 %v290, 108
        %v5183 = vpop.permute.xlu0 %5182
        %5184 = vrot.lane.b32.xlu0 %v291, 108
        %v5185 = vpop.permute.xlu0 %5184
        %5186 = vrot.lane.b32.xlu0 %v292, 108
        %v5187 = vpop.permute.xlu0 %5186
        %5188 = vrot.lane.b32.xlu0 %v293, 108
        %v5189 = vpop.permute.xlu0 %5188
        %vm5190 = vcmask 883712
        %v5191 = vsel %vm5190, %v5179, %v5181
        %v5192 = vsel %vm5190, %v5181, %v5183
        %v5193 = vsel %vm5190, %v5185, %v5187
        %v5194 = vsel %vm5190, %v5187, %v5189
        %v5202 = vsel %vm326, %v5177, 0
        %v5204 = vand.u32 %v5192, 4294901760
        %5205 = vmatprep.subr.mxu0 %v5204
        %v5206 = vand.u32 %v5191, 4294901760
        %5207 = vmatpush1.msra.mxu0 %v5206
        %v5208 = vand.u32 %v5194, 4294901760
        %5209 = vmatprep.subr.mxu0 %v5208
        %v5210 = vand.u32 %v5193, 4294901760
        %5211 = vmatpush1.msra.mxu0 %v5210
        %5212 = vmatprep.subr.mxu0 0.0
        %5213 = vmatpush1.msra.mxu0 0.0
        %5214 = vmatprep.subr.mxu0 0.0
        %5215 = vmatpush1.msra.mxu0 0.0
        %5216 = vmatprep.subr.mxu0 0.0
        %5217 = vmatpush1.msra.mxu0 0.0
        %5218 = vmatprep.subr.mxu0 0.0
        %5219 = vmatpush1.msra.mxu0 0.0
        %5220 = vmatprep.subr.mxu0 0.0
        %5221 = vmatpush1.msra.mxu0 0.0
        %5222 = vmatprep.subr.mxu0 0.0
        %5223 = vmatpush1.msra.mxu0 0.0
        %5224 = vmatprep.subr.mxu0 0.0
        %5225 = vmatpush1.msra.mxu0 0.0
        %5226 = vmatprep.subr.mxu0 0.0
        %5227 = vmatpush1.msra.mxu0 0.0
        %5228 = vmatprep.subr.mxu0 0.0
        %5229 = vmatpush1.msra.mxu0 0.0
        %5230 = vmatprep.subr.mxu0 0.0
        %5231 = vmatpush1.msra.mxu0 0.0
        %5232 = vmatprep.subr.mxu0 0.0
        %5233 = vmatpush1.msra.mxu0 0.0
        %5234 = vmatprep.subr.mxu0 0.0
        %5235 = vmatpush1.msra.mxu0 0.0
        %5236 = vmatprep.subr.mxu0 0.0
        %5237 = vmatpush1.msra.mxu0 0.0
        %5238 = vmatprep.subr.mxu0 0.0
        %5239 = vmatpush1.msra.mxu0 0.0
        %5240 = vmatprep.subr.mxu0 0.0
        %5241 = vmatpush1.msra.mxu0 0.0
        %5242 = vmatprep.subr.mxu0 0.0
        %5243 = vmatpush1.msra.mxu0 0.0
        %5244 = vmatprep.subr.mxu0 0.0
        %5245 = vmatpush1.msra.mxu0 0.0
        %5246 = vmatprep.subr.mxu0 0.0
        %5247 = vmatpush1.msra.mxu0 0.0
        %5248 = vmatprep.subr.mxu0 0.0
        %5249 = vmatpush1.msra.mxu0 0.0
        %5250 = vmatprep.subr.mxu0 0.0
        %5251 = vmatpush1.msra.mxu0 0.0
        %5252 = vmatprep.subr.mxu0 0.0
        %5253 = vmatpush1.msra.mxu0 0.0
        %5254 = vmatprep.subr.mxu0 0.0
        %5255 = vmatpush1.msra.mxu0 0.0
        %5256 = vmatprep.subr.mxu0 0.0
        %5257 = vmatpush1.msra.mxu0 0.0
        %5258 = vmatprep.subr.mxu0 0.0
        %5259 = vmatpush1.msra.mxu0 0.0
        %5260 = vmatprep.subr.mxu0 0.0
        %5261 = vmatpush1.msra.mxu0 0.0
        %5262 = vmatprep.subr.mxu0 0.0
        %5263 = vmatpush1.msra.mxu0 0.0
        %5264 = vmatprep.subr.mxu0 0.0
        %5265 = vmatpush1.msra.mxu0 0.0
        %5266 = vmatprep.subr.mxu0 0.0
        %5267 = vmatpush1.msra.mxu0 0.0
        %5268 = vmatprep.subr.mxu0 0.0
        %5269 = vmatpush1.msra.mxu0 0.0
        %5270 = vmatprep.subr.mxu0 0.0
        %5271 = vmatpush1.msra.mxu0 0.0
        %5272 = vmatprep.mubr.f32.mxu0 0.0
        %v5273 = vand.u32 %v5202, 4294901760
        %v5274 = vsub.f32 %v5202, %v5273
        %v5275 = vand.u32 %v5274, 4294901760
        %v5276 = vsub.f32 %v5274, %v5275
        %v5277 = vand.u32 %v5276, 4294901760
        %5278 = vmatmul.mubr.f32.gmra.mrb[0].mxu0 %v5277
        %v5279 = vpop.f32.mrb[0].mxu0
        %v5280 = vadd.f32 0.0, %v5279
        %v5281 = vpop.f32.mrb[0].mxu0
        %v5282 = vadd.f32 0.0, %v5281
        %5283 = vdwg.mxu0
        %v5284 = vand.u32 %v5192, 4294901760
        %v5285 = vsub.f32 %v5192, %v5284
        %v5286 = vand.u32 %v5285, 4294901760
        %v5287 = vsub.f32 %v5285, %v5286
        %v5288 = vand.u32 %v5287, 4294901760
        %5289 = vmatprep.subr.mxu0 %v5288
        %v5290 = vand.u32 %v5191, 4294901760
        %v5291 = vsub.f32 %v5191, %v5290
        %v5292 = vand.u32 %v5291, 4294901760
        %v5293 = vsub.f32 %v5291, %v5292
        %v5294 = vand.u32 %v5293, 4294901760
        %5295 = vmatpush1.msra.mxu0 %v5294
        %v5296 = vand.u32 %v5194, 4294901760
        %v5297 = vsub.f32 %v5194, %v5296
        %v5298 = vand.u32 %v5297, 4294901760
        %v5299 = vsub.f32 %v5297, %v5298
        %v5300 = vand.u32 %v5299, 4294901760
        %5301 = vmatprep.subr.mxu0 %v5300
        %v5302 = vand.u32 %v5193, 4294901760
        %v5303 = vsub.f32 %v5193, %v5302
        %v5304 = vand.u32 %v5303, 4294901760
        %v5305 = vsub.f32 %v5303, %v5304
        %v5306 = vand.u32 %v5305, 4294901760
        %5307 = vmatpush1.msra.mxu0 %v5306
        %5308 = vmatprep.subr.mxu0 0.0
        %5309 = vmatpush1.msra.mxu0 0.0
        %5310 = vmatprep.subr.mxu0 0.0
        %5311 = vmatpush1.msra.mxu0 0.0
        %5312 = vmatprep.subr.mxu0 0.0
        %5313 = vmatpush1.msra.mxu0 0.0
        %5314 = vmatprep.subr.mxu0 0.0
        %5315 = vmatpush1.msra.mxu0 0.0
        %5316 = vmatprep.subr.mxu0 0.0
        %5317 = vmatpush1.msra.mxu0 0.0
        %5318 = vmatprep.subr.mxu0 0.0
        %5319 = vmatpush1.msra.mxu0 0.0
        %5320 = vmatprep.subr.mxu0 0.0
        %5321 = vmatpush1.msra.mxu0 0.0
        %5322 = vmatprep.subr.mxu0 0.0
        %5323 = vmatpush1.msra.mxu0 0.0
        %5324 = vmatprep.subr.mxu0 0.0
        %5325 = vmatpush1.msra.mxu0 0.0
        %5326 = vmatprep.subr.mxu0 0.0
        %5327 = vmatpush1.msra.mxu0 0.0
        %5328 = vmatprep.subr.mxu0 0.0
        %5329 = vmatpush1.msra.mxu0 0.0
        %5330 = vmatprep.subr.mxu0 0.0
        %5331 = vmatpush1.msra.mxu0 0.0
        %5332 = vmatprep.subr.mxu0 0.0
        %5333 = vmatpush1.msra.mxu0 0.0
        %5334 = vmatprep.subr.mxu0 0.0
        %5335 = vmatpush1.msra.mxu0 0.0
        %5336 = vmatprep.subr.mxu0 0.0
        %5337 = vmatpush1.msra.mxu0 0.0
        %5338 = vmatprep.subr.mxu0 0.0
        %5339 = vmatpush1.msra.mxu0 0.0
        %5340 = vmatprep.subr.mxu0 0.0
        %5341 = vmatpush1.msra.mxu0 0.0
        %5342 = vmatprep.subr.mxu0 0.0
        %5343 = vmatpush1.msra.mxu0 0.0
        %5344 = vmatprep.subr.mxu0 0.0
        %5345 = vmatpush1.msra.mxu0 0.0
        %5346 = vmatprep.subr.mxu0 0.0
        %5347 = vmatpush1.msra.mxu0 0.0
        %5348 = vmatprep.subr.mxu0 0.0
        %5349 = vmatpush1.msra.mxu0 0.0
        %5350 = vmatprep.subr.mxu0 0.0
        %5351 = vmatpush1.msra.mxu0 0.0
        %5352 = vmatprep.subr.mxu0 0.0
        %5353 = vmatpush1.msra.mxu0 0.0
        %5354 = vmatprep.subr.mxu0 0.0
        %5355 = vmatpush1.msra.mxu0 0.0
        %5356 = vmatprep.subr.mxu0 0.0
        %5357 = vmatpush1.msra.mxu0 0.0
        %5358 = vmatprep.subr.mxu0 0.0
        %5359 = vmatpush1.msra.mxu0 0.0
        %5360 = vmatprep.subr.mxu0 0.0
        %5361 = vmatpush1.msra.mxu0 0.0
        %5362 = vmatprep.subr.mxu0 0.0
        %5363 = vmatpush1.msra.mxu0 0.0
        %5364 = vmatprep.subr.mxu0 0.0
        %5365 = vmatpush1.msra.mxu0 0.0
        %5366 = vmatprep.subr.mxu0 0.0
        %5367 = vmatpush1.msra.mxu0 0.0
        %5368 = vmatprep.mubr.f32.mxu0 0.0
        %v5369 = vand.u32 %v5202, 4294901760
        %5370 = vmatmul.mubr.f32.gmra.mrb[0].mxu0 %v5369
        %v5371 = vpop.f32.mrb[0].mxu0
        %v5372 = vadd.f32 %v5280, %v5371
        %v5373 = vpop.f32.mrb[0].mxu0
        %v5374 = vadd.f32 %v5282, %v5373
        %5375 = vdwg.mxu0
        %v5376 = vand.u32 %v5192, 4294901760
        %v5377 = vsub.f32 %v5192, %v5376
        %5378 = vmatprep.subr.mxu0 %v5377
        %v5379 = vand.u32 %v5191, 4294901760
        %v5380 = vsub.f32 %v5191, %v5379
        %5381 = vmatpush1.msra.mxu0 %v5380
        %v5382 = vand.u32 %v5194, 4294901760
        %v5383 = vsub.f32 %v5194, %v5382
        %5384 = vmatprep.subr.mxu0 %v5383
        %v5385 = vand.u32 %v5193, 4294901760
        %v5386 = vsub.f32 %v5193, %v5385
        %5387 = vmatpush1.msra.mxu0 %v5386
        %5388 = vmatprep.subr.mxu0 0.0
        %5389 = vmatpush1.msra.mxu0 0.0
        %5390 = vmatprep.subr.mxu0 0.0
        %5391 = vmatpush1.msra.mxu0 0.0
        %5392 = vmatprep.subr.mxu0 0.0
        %5393 = vmatpush1.msra.mxu0 0.0
        %5394 = vmatprep.subr.mxu0 0.0
        %5395 = vmatpush1.msra.mxu0 0.0
        %5396 = vmatprep.subr.mxu0 0.0
        %5397 = vmatpush1.msra.mxu0 0.0
        %5398 = vmatprep.subr.mxu0 0.0
        %5399 = vmatpush1.msra.mxu0 0.0
        %5400 = vmatprep.subr.mxu0 0.0
        %5401 = vmatpush1.msra.mxu0 0.0
        %5402 = vmatprep.subr.mxu0 0.0
        %5403 = vmatpush1.msra.mxu0 0.0
        %5404 = vmatprep.subr.mxu0 0.0
        %5405 = vmatpush1.msra.mxu0 0.0
        %5406 = vmatprep.subr.mxu0 0.0
        %5407 = vmatpush1.msra.mxu0 0.0
        %5408 = vmatprep.subr.mxu0 0.0
        %5409 = vmatpush1.msra.mxu0 0.0
        %5410 = vmatprep.subr.mxu0 0.0
        %5411 = vmatpush1.msra.mxu0 0.0
        %5412 = vmatprep.subr.mxu0 0.0
        %5413 = vmatpush1.msra.mxu0 0.0
        %5414 = vmatprep.subr.mxu0 0.0
        %5415 = vmatpush1.msra.mxu0 0.0
        %5416 = vmatprep.subr.mxu0 0.0
        %5417 = vmatpush1.msra.mxu0 0.0
        %5418 = vmatprep.subr.mxu0 0.0
        %5419 = vmatpush1.msra.mxu0 0.0
        %5420 = vmatprep.subr.mxu0 0.0
        %5421 = vmatpush1.msra.mxu0 0.0
        %5422 = vmatprep.subr.mxu0 0.0
        %5423 = vmatpush1.msra.mxu0 0.0
        %5424 = vmatprep.subr.mxu0 0.0
        %5425 = vmatpush1.msra.mxu0 0.0
        %5426 = vmatprep.subr.mxu0 0.0
        %5427 = vmatpush1.msra.mxu0 0.0
        %5428 = vmatprep.subr.mxu0 0.0
        %5429 = vmatpush1.msra.mxu0 0.0
        %5430 = vmatprep.subr.mxu0 0.0
        %5431 = vmatpush1.msra.mxu0 0.0
        %5432 = vmatprep.subr.mxu0 0.0
        %5433 = vmatpush1.msra.mxu0 0.0
        %5434 = vmatprep.subr.mxu0 0.0
        %5435 = vmatpush1.msra.mxu0 0.0
        %5436 = vmatprep.subr.mxu0 0.0
        %5437 = vmatpush1.msra.mxu0 0.0
        %5438 = vmatprep.subr.mxu0 0.0
        %5439 = vmatpush1.msra.mxu0 0.0
        %5440 = vmatprep.subr.mxu0 0.0
        %5441 = vmatpush1.msra.mxu0 0.0
        %5442 = vmatprep.subr.mxu0 0.0
        %5443 = vmatpush1.msra.mxu0 0.0
        %5444 = vmatprep.subr.mxu0 0.0
        %5445 = vmatpush1.msra.mxu0 0.0
        %5446 = vmatprep.subr.mxu0 0.0
        %5447 = vmatpush1.msra.mxu0 0.0
        %5448 = vmatprep.mubr.f32.mxu0 0.0
        %v5449 = vand.u32 %v5202, 4294901760
        %v5450 = vsub.f32 %v5202, %v5449
        %5451 = vmatmul.mubr.f32.gmra.mrb[0].mxu0 %v5450
        %v5452 = vpop.f32.mrb[0].mxu0
        %v5453 = vadd.f32 %v5372, %v5452
        %v5454 = vpop.f32.mrb[0].mxu0
        %v5455 = vadd.f32 %v5374, %v5454
        %5456 = vdwg.mxu0
        %v5457 = vand.u32 %v5192, 4294901760
        %5458 = vmatprep.subr.mxu0 %v5457
        %v5459 = vand.u32 %v5191, 4294901760
        %5460 = vmatpush1.msra.mxu0 %v5459
        %v5461 = vand.u32 %v5194, 4294901760
        %5462 = vmatprep.subr.mxu0 %v5461
        %v5463 = vand.u32 %v5193, 4294901760
        %5464 = vmatpush1.msra.mxu0 %v5463
        %5465 = vmatprep.subr.mxu0 0.0
        %5466 = vmatpush1.msra.mxu0 0.0
        %5467 = vmatprep.subr.mxu0 0.0
        %5468 = vmatpush1.msra.mxu0 0.0
        %5469 = vmatprep.subr.mxu0 0.0
        %5470 = vmatpush1.msra.mxu0 0.0
        %5471 = vmatprep.subr.mxu0 0.0
        %5472 = vmatpush1.msra.mxu0 0.0
        %5473 = vmatprep.subr.mxu0 0.0
        %5474 = vmatpush1.msra.mxu0 0.0
        %5475 = vmatprep.subr.mxu0 0.0
        %5476 = vmatpush1.msra.mxu0 0.0
        %5477 = vmatprep.subr.mxu0 0.0
        %5478 = vmatpush1.msra.mxu0 0.0
        %5479 = vmatprep.subr.mxu0 0.0
        %5480 = vmatpush1.msra.mxu0 0.0
        %5481 = vmatprep.subr.mxu0 0.0
        %5482 = vmatpush1.msra.mxu0 0.0
        %5483 = vmatprep.subr.mxu0 0.0
        %5484 = vmatpush1.msra.mxu0 0.0
        %5485 = vmatprep.subr.mxu0 0.0
        %5486 = vmatpush1.msra.mxu0 0.0
        %5487 = vmatprep.subr.mxu0 0.0
        %5488 = vmatpush1.msra.mxu0 0.0
        %5489 = vmatprep.subr.mxu0 0.0
        %5490 = vmatpush1.msra.mxu0 0.0
        %5491 = vmatprep.subr.mxu0 0.0
        %5492 = vmatpush1.msra.mxu0 0.0
        %5493 = vmatprep.subr.mxu0 0.0
        %5494 = vmatpush1.msra.mxu0 0.0
        %5495 = vmatprep.subr.mxu0 0.0
        %5496 = vmatpush1.msra.mxu0 0.0
        %5497 = vmatprep.subr.mxu0 0.0
        %5498 = vmatpush1.msra.mxu0 0.0
        %5499 = vmatprep.subr.mxu0 0.0
        %5500 = vmatpush1.msra.mxu0 0.0
        %5501 = vmatprep.subr.mxu0 0.0
        %5502 = vmatpush1.msra.mxu0 0.0
        %5503 = vmatprep.subr.mxu0 0.0
        %5504 = vmatpush1.msra.mxu0 0.0
        %5505 = vmatprep.subr.mxu0 0.0
        %5506 = vmatpush1.msra.mxu0 0.0
        %5507 = vmatprep.subr.mxu0 0.0
        %5508 = vmatpush1.msra.mxu0 0.0
        %5509 = vmatprep.subr.mxu0 0.0
        %5510 = vmatpush1.msra.mxu0 0.0
        %5511 = vmatprep.subr.mxu0 0.0
        %5512 = vmatpush1.msra.mxu0 0.0
        %5513 = vmatprep.subr.mxu0 0.0
        %5514 = vmatpush1.msra.mxu0 0.0
        %5515 = vmatprep.subr.mxu0 0.0
        %5516 = vmatpush1.msra.mxu0 0.0
        %5517 = vmatprep.subr.mxu0 0.0
        %5518 = vmatpush1.msra.mxu0 0.0
        %5519 = vmatprep.subr.mxu0 0.0
        %5520 = vmatpush1.msra.mxu0 0.0
        %5521 = vmatprep.subr.mxu0 0.0
        %5522 = vmatpush1.msra.mxu0 0.0
        %5523 = vmatprep.subr.mxu0 0.0
        %5524 = vmatpush1.msra.mxu0 0.0
        %5525 = vmatprep.mubr.f32.mxu0 0.0
        %v5526 = vand.u32 %v5202, 4294901760
        %v5527 = vsub.f32 %v5202, %v5526
        %v5528 = vand.u32 %v5527, 4294901760
        %5529 = vmatmul.mubr.f32.gmra.mrb[0].mxu0 %v5528
        %v5530 = vpop.f32.mrb[0].mxu0
        %v5531 = vadd.f32 %v5453, %v5530
        %v5532 = vpop.f32.mrb[0].mxu0
        %v5533 = vadd.f32 %v5455, %v5532
        %5534 = vdwg.mxu0
        %v5535 = vand.u32 %v5192, 4294901760
        %v5536 = vsub.f32 %v5192, %v5535
        %v5537 = vand.u32 %v5536, 4294901760
        %5538 = vmatprep.subr.mxu0 %v5537
        %v5539 = vand.u32 %v5191, 4294901760
        %v5540 = vsub.f32 %v5191, %v5539
        %v5541 = vand.u32 %v5540, 4294901760
        %5542 = vmatpush1.msra.mxu0 %v5541
        %v5543 = vand.u32 %v5194, 4294901760
        %v5544 = vsub.f32 %v5194, %v5543
        %v5545 = vand.u32 %v5544, 4294901760
        %5546 = vmatprep.subr.mxu0 %v5545
        %v5547 = vand.u32 %v5193, 4294901760
        %v5548 = vsub.f32 %v5193, %v5547
        %v5549 = vand.u32 %v5548, 4294901760
        %5550 = vmatpush1.msra.mxu0 %v5549
        %5551 = vmatprep.subr.mxu0 0.0
        %5552 = vmatpush1.msra.mxu0 0.0
        %5553 = vmatprep.subr.mxu0 0.0
        %5554 = vmatpush1.msra.mxu0 0.0
        %5555 = vmatprep.subr.mxu0 0.0
        %5556 = vmatpush1.msra.mxu0 0.0
        %5557 = vmatprep.subr.mxu0 0.0
        %5558 = vmatpush1.msra.mxu0 0.0
        %5559 = vmatprep.subr.mxu0 0.0
        %5560 = vmatpush1.msra.mxu0 0.0
        %5561 = vmatprep.subr.mxu0 0.0
        %5562 = vmatpush1.msra.mxu0 0.0
        %5563 = vmatprep.subr.mxu0 0.0
        %5564 = vmatpush1.msra.mxu0 0.0
        %5565 = vmatprep.subr.mxu0 0.0
        %5566 = vmatpush1.msra.mxu0 0.0
        %5567 = vmatprep.subr.mxu0 0.0
        %5568 = vmatpush1.msra.mxu0 0.0
        %5569 = vmatprep.subr.mxu0 0.0
        %5570 = vmatpush1.msra.mxu0 0.0
        %5571 = vmatprep.subr.mxu0 0.0
        %5572 = vmatpush1.msra.mxu0 0.0
        %5573 = vmatprep.subr.mxu0 0.0
        %5574 = vmatpush1.msra.mxu0 0.0
        %5575 = vmatprep.subr.mxu0 0.0
        %5576 = vmatpush1.msra.mxu0 0.0
        %5577 = vmatprep.subr.mxu0 0.0
        %5578 = vmatpush1.msra.mxu0 0.0
        %5579 = vmatprep.subr.mxu0 0.0
        %5580 = vmatpush1.msra.mxu0 0.0
        %5581 = vmatprep.subr.mxu0 0.0
        %5582 = vmatpush1.msra.mxu0 0.0
        %5583 = vmatprep.subr.mxu0 0.0
        %5584 = vmatpush1.msra.mxu0 0.0
        %5585 = vmatprep.subr.mxu0 0.0
        %5586 = vmatpush1.msra.mxu0 0.0
        %5587 = vmatprep.subr.mxu0 0.0
        %5588 = vmatpush1.msra.mxu0 0.0
        %5589 = vmatprep.subr.mxu0 0.0
        %5590 = vmatpush1.msra.mxu0 0.0
        %5591 = vmatprep.subr.mxu0 0.0
        %5592 = vmatpush1.msra.mxu0 0.0
        %5593 = vmatprep.subr.mxu0 0.0
        %5594 = vmatpush1.msra.mxu0 0.0
        %5595 = vmatprep.subr.mxu0 0.0
        %5596 = vmatpush1.msra.mxu0 0.0
        %5597 = vmatprep.subr.mxu0 0.0
        %5598 = vmatpush1.msra.mxu0 0.0
        %5599 = vmatprep.subr.mxu0 0.0
        %5600 = vmatpush1.msra.mxu0 0.0
        %5601 = vmatprep.subr.mxu0 0.0
        %5602 = vmatpush1.msra.mxu0 0.0
        %5603 = vmatprep.subr.mxu0 0.0
        %5604 = vmatpush1.msra.mxu0 0.0
        %5605 = vmatprep.subr.mxu0 0.0
        %5606 = vmatpush1.msra.mxu0 0.0
        %5607 = vmatprep.subr.mxu0 0.0
        %5608 = vmatpush1.msra.mxu0 0.0
        %5609 = vmatprep.subr.mxu0 0.0
        %5610 = vmatpush1.msra.mxu0 0.0
        %5611 = vmatprep.mubr.f32.mxu0 0.0
        %v5612 = vand.u32 %v5202, 4294901760
        %5613 = vmatmul.mubr.f32.gmra.mrb[0].mxu0 %v5612
        %v5614 = vpop.f32.mrb[0].mxu0
        %v5615 = vadd.f32 %v5531, %v5614
        %v5616 = vpop.f32.mrb[0].mxu0
        %v5617 = vadd.f32 %v5533, %v5616
        %5618 = vdwg.mxu0
        %v5619 = vand.u32 %v5192, 4294901760
        %5620 = vmatprep.subr.mxu0 %v5619
        %v5621 = vand.u32 %v5191, 4294901760
        %5622 = vmatpush1.msra.mxu0 %v5621
        %v5623 = vand.u32 %v5194, 4294901760
        %5624 = vmatprep.subr.mxu0 %v5623
        %v5625 = vand.u32 %v5193, 4294901760
        %5626 = vmatpush1.msra.mxu0 %v5625
        %5627 = vmatprep.subr.mxu0 0.0
        %5628 = vmatpush1.msra.mxu0 0.0
        %5629 = vmatprep.subr.mxu0 0.0
        %5630 = vmatpush1.msra.mxu0 0.0
        %5631 = vmatprep.subr.mxu0 0.0
        %5632 = vmatpush1.msra.mxu0 0.0
        %5633 = vmatprep.subr.mxu0 0.0
        %5634 = vmatpush1.msra.mxu0 0.0
        %5635 = vmatprep.subr.mxu0 0.0
        %5636 = vmatpush1.msra.mxu0 0.0
        %5637 = vmatprep.subr.mxu0 0.0
        %5638 = vmatpush1.msra.mxu0 0.0
        %5639 = vmatprep.subr.mxu0 0.0
        %5640 = vmatpush1.msra.mxu0 0.0
        %5641 = vmatprep.subr.mxu0 0.0
        %5642 = vmatpush1.msra.mxu0 0.0
        %5643 = vmatprep.subr.mxu0 0.0
        %5644 = vmatpush1.msra.mxu0 0.0
        %5645 = vmatprep.subr.mxu0 0.0
        %5646 = vmatpush1.msra.mxu0 0.0
        %5647 = vmatprep.subr.mxu0 0.0
        %5648 = vmatpush1.msra.mxu0 0.0
        %5649 = vmatprep.subr.mxu0 0.0
        %5650 = vmatpush1.msra.mxu0 0.0
        %5651 = vmatprep.subr.mxu0 0.0
        %5652 = vmatpush1.msra.mxu0 0.0
        %5653 = vmatprep.subr.mxu0 0.0
        %5654 = vmatpush1.msra.mxu0 0.0
        %5655 = vmatprep.subr.mxu0 0.0
        %5656 = vmatpush1.msra.mxu0 0.0
        %5657 = vmatprep.subr.mxu0 0.0
        %5658 = vmatpush1.msra.mxu0 0.0
        %5659 = vmatprep.subr.mxu0 0.0
        %5660 = vmatpush1.msra.mxu0 0.0
        %5661 = vmatprep.subr.mxu0 0.0
        %5662 = vmatpush1.msra.mxu0 0.0
        %5663 = vmatprep.subr.mxu0 0.0
        %5664 = vmatpush1.msra.mxu0 0.0
        %5665 = vmatprep.subr.mxu0 0.0
        %5666 = vmatpush1.msra.mxu0 0.0
        %5667 = vmatprep.subr.mxu0 0.0
        %5668 = vmatpush1.msra.mxu0 0.0
        %5669 = vmatprep.subr.mxu0 0.0
        %5670 = vmatpush1.msra.mxu0 0.0
        %5671 = vmatprep.subr.mxu0 0.0
        %5672 = vmatpush1.msra.mxu0 0.0
        %5673 = vmatprep.subr.mxu0 0.0
        %5674 = vmatpush1.msra.mxu0 0.0
        %5675 = vmatprep.subr.mxu0 0.0
        %5676 = vmatpush1.msra.mxu0 0.0
        %5677 = vmatprep.subr.mxu0 0.0
        %5678 = vmatpush1.msra.mxu0 0.0
        %5679 = vmatprep.subr.mxu0 0.0
        %5680 = vmatpush1.msra.mxu0 0.0
        %5681 = vmatprep.subr.mxu0 0.0
        %5682 = vmatpush1.msra.mxu0 0.0
        %5683 = vmatprep.subr.mxu0 0.0
        %5684 = vmatpush1.msra.mxu0 0.0
        %5685 = vmatprep.subr.mxu0 0.0
        %5686 = vmatpush1.msra.mxu0 0.0
        %5687 = vmatprep.mubr.f32.mxu0 0.0
        %v5688 = vand.u32 %v5202, 4294901760
        %5689 = vmatmul.mubr.f32.gmra.mrb[0].mxu0 %v5688
        %v5690 = vpop.f32.mrb[0].mxu0
        %v5691 = vadd.f32 %v5615, %v5690
        %v5692 = vpop.f32.mrb[0].mxu0
        %v5693 = vadd.f32 %v5617, %v5692
        %5694 = vdwg.mxu0
        %5695 = vmatprep.subr.mxu0 0.0
        %v5696 = vand.u32 %v5183, 4294901760
        %5697 = vmatpush1.msra.mxu0 %v5696
        %5698 = vmatprep.subr.mxu0 0.0
        %v5699 = vand.u32 %v5189, 4294901760
        %5700 = vmatpush1.msra.mxu0 %v5699
        %5701 = vmatprep.subr.mxu0 0.0
        %5702 = vmatpush1.msra.mxu0 0.0
        %5703 = vmatprep.subr.mxu0 0.0
        %5704 = vmatpush1.msra.mxu0 0.0
        %5705 = vmatprep.subr.mxu0 0.0
        %5706 = vmatpush1.msra.mxu0 0.0
        %5707 = vmatprep.subr.mxu0 0.0
        %5708 = vmatpush1.msra.mxu0 0.0
        %5709 = vmatprep.subr.mxu0 0.0
        %5710 = vmatpush1.msra.mxu0 0.0
        %5711 = vmatprep.subr.mxu0 0.0
        %5712 = vmatpush1.msra.mxu0 0.0
        %5713 = vmatprep.subr.mxu0 0.0
        %5714 = vmatpush1.msra.mxu0 0.0
        %5715 = vmatprep.subr.mxu0 0.0
        %5716 = vmatpush1.msra.mxu0 0.0
        %5717 = vmatprep.subr.mxu0 0.0
        %5718 = vmatpush1.msra.mxu0 0.0
        %5719 = vmatprep.subr.mxu0 0.0
        %5720 = vmatpush1.msra.mxu0 0.0
        %5721 = vmatprep.subr.mxu0 0.0
        %5722 = vmatpush1.msra.mxu0 0.0
        %5723 = vmatprep.subr.mxu0 0.0
        %5724 = vmatpush1.msra.mxu0 0.0
        %5725 = vmatprep.subr.mxu0 0.0
        %5726 = vmatpush1.msra.mxu0 0.0
        %5727 = vmatprep.subr.mxu0 0.0
        %5728 = vmatpush1.msra.mxu0 0.0
        %5729 = vmatprep.subr.mxu0 0.0
        %5730 = vmatpush1.msra.mxu0 0.0
        %5731 = vmatprep.subr.mxu0 0.0
        %5732 = vmatpush1.msra.mxu0 0.0
        %5733 = vmatprep.subr.mxu0 0.0
        %5734 = vmatpush1.msra.mxu0 0.0
        %5735 = vmatprep.subr.mxu0 0.0
        %5736 = vmatpush1.msra.mxu0 0.0
        %5737 = vmatprep.subr.mxu0 0.0
        %5738 = vmatpush1.msra.mxu0 0.0
        %5739 = vmatprep.subr.mxu0 0.0
        %5740 = vmatpush1.msra.mxu0 0.0
        %5741 = vmatprep.subr.mxu0 0.0
        %5742 = vmatpush1.msra.mxu0 0.0
        %5743 = vmatprep.subr.mxu0 0.0
        %5744 = vmatpush1.msra.mxu0 0.0
        %5745 = vmatprep.subr.mxu0 0.0
        %5746 = vmatpush1.msra.mxu0 0.0
        %5747 = vmatprep.subr.mxu0 0.0
        %5748 = vmatpush1.msra.mxu0 0.0
        %5749 = vmatprep.subr.mxu0 0.0
        %5750 = vmatpush1.msra.mxu0 0.0
        %5751 = vmatprep.subr.mxu0 0.0
        %5752 = vmatpush1.msra.mxu0 0.0
        %5753 = vmatprep.subr.mxu0 0.0
        %5754 = vmatpush1.msra.mxu0 0.0
        %5755 = vmatprep.subr.mxu0 0.0
        %5756 = vmatpush1.msra.mxu0 0.0
        %5757 = vmatprep.subr.mxu0 0.0
        %5758 = vmatpush1.msra.mxu0 0.0
        %5759 = vmatprep.subr.mxu0 0.0
        %5760 = vmatpush1.msra.mxu0 0.0
        %5761 = vmatprep.mubr.f32.mxu0 0.0
        %v5762 = vand.u32 %v5202, 4294901760
        %v5763 = vsub.f32 %v5202, %v5762
        %v5764 = vand.u32 %v5763, 4294901760
        %v5765 = vsub.f32 %v5763, %v5764
        %v5766 = vand.u32 %v5765, 4294901760
        %5767 = vmatmul.mubr.f32.gmra.mrb[0].mxu0 %v5766
        %v5768 = vpop.f32.mrb[0].mxu0
        %v5769 = vadd.f32 0.0, %v5768
        %v5770 = vpop.f32.mrb[0].mxu0
        %5771 = vdwg.mxu0
        %5772 = vmatprep.subr.mxu0 0.0
        %v5773 = vand.u32 %v5183, 4294901760
        %v5774 = vsub.f32 %v5183, %v5773
        %v5775 = vand.u32 %v5774, 4294901760
        %v5776 = vsub.f32 %v5774, %v5775
        %v5777 = vand.u32 %v5776, 4294901760
        %5778 = vmatpush1.msra.mxu0 %v5777
        %5779 = vmatprep.subr.mxu0 0.0
        %v5780 = vand.u32 %v5189, 4294901760
        %v5781 = vsub.f32 %v5189, %v5780
        %v5782 = vand.u32 %v5781, 4294901760
        %v5783 = vsub.f32 %v5781, %v5782
        %v5784 = vand.u32 %v5783, 4294901760
        %5785 = vmatpush1.msra.mxu0 %v5784
        %5786 = vmatprep.subr.mxu0 0.0
        %5787 = vmatpush1.msra.mxu0 0.0
        %5788 = vmatprep.subr.mxu0 0.0
        %5789 = vmatpush1.msra.mxu0 0.0
        %5790 = vmatprep.subr.mxu0 0.0
        %5791 = vmatpush1.msra.mxu0 0.0
        %5792 = vmatprep.subr.mxu0 0.0
        %5793 = vmatpush1.msra.mxu0 0.0
        %5794 = vmatprep.subr.mxu0 0.0
        %5795 = vmatpush1.msra.mxu0 0.0
        %5796 = vmatprep.subr.mxu0 0.0
        %5797 = vmatpush1.msra.mxu0 0.0
        %5798 = vmatprep.subr.mxu0 0.0
        %5799 = vmatpush1.msra.mxu0 0.0
        %5800 = vmatprep.subr.mxu0 0.0
        %5801 = vmatpush1.msra.mxu0 0.0
        %5802 = vmatprep.subr.mxu0 0.0
        %5803 = vmatpush1.msra.mxu0 0.0
        %5804 = vmatprep.subr.mxu0 0.0
        %5805 = vmatpush1.msra.mxu0 0.0
        %5806 = vmatprep.subr.mxu0 0.0
        %5807 = vmatpush1.msra.mxu0 0.0
        %5808 = vmatprep.subr.mxu0 0.0
        %5809 = vmatpush1.msra.mxu0 0.0
        %5810 = vmatprep.subr.mxu0 0.0
        %5811 = vmatpush1.msra.mxu0 0.0
        %5812 = vmatprep.subr.mxu0 0.0
        %5813 = vmatpush1.msra.mxu0 0.0
        %5814 = vmatprep.subr.mxu0 0.0
        %5815 = vmatpush1.msra.mxu0 0.0
        %5816 = vmatprep.subr.mxu0 0.0
        %5817 = vmatpush1.msra.mxu0 0.0
        %5818 = vmatprep.subr.mxu0 0.0
        %5819 = vmatpush1.msra.mxu0 0.0
        %5820 = vmatprep.subr.mxu0 0.0
        %5821 = vmatpush1.msra.mxu0 0.0
        %5822 = vmatprep.subr.mxu0 0.0
        %5823 = vmatpush1.msra.mxu0 0.0
        %5824 = vmatprep.subr.mxu0 0.0
        %5825 = vmatpush1.msra.mxu0 0.0
        %5826 = vmatprep.subr.mxu0 0.0
        %5827 = vmatpush1.msra.mxu0 0.0
        %5828 = vmatprep.subr.mxu0 0.0
        %5829 = vmatpush1.msra.mxu0 0.0
        %5830 = vmatprep.subr.mxu0 0.0
        %5831 = vmatpush1.msra.mxu0 0.0
        %5832 = vmatprep.subr.mxu0 0.0
        %5833 = vmatpush1.msra.mxu0 0.0
        %5834 = vmatprep.subr.mxu0 0.0
        %5835 = vmatpush1.msra.mxu0 0.0
        %5836 = vmatprep.subr.mxu0 0.0
        %5837 = vmatpush1.msra.mxu0 0.0
        %5838 = vmatprep.subr.mxu0 0.0
        %5839 = vmatpush1.msra.mxu0 0.0
        %5840 = vmatprep.subr.mxu0 0.0
        %5841 = vmatpush1.msra.mxu0 0.0
        %5842 = vmatprep.subr.mxu0 0.0
        %5843 = vmatpush1.msra.mxu0 0.0
        %5844 = vmatprep.subr.mxu0 0.0
        %5845 = vmatpush1.msra.mxu0 0.0
        %5846 = vmatprep.mubr.f32.mxu0 0.0
        %v5847 = vand.u32 %v5202, 4294901760
        %5848 = vmatmul.mubr.f32.gmra.mrb[0].mxu0 %v5847
        %v5849 = vpop.f32.mrb[0].mxu0
        %v5850 = vadd.f32 %v5769, %v5849
        %v5851 = vpop.f32.mrb[0].mxu0
        %5852 = vdwg.mxu0
        %5853 = vmatprep.subr.mxu0 0.0
        %v5854 = vand.u32 %v5183, 4294901760
        %v5855 = vsub.f32 %v5183, %v5854
        %5856 = vmatpush1.msra.mxu0 %v5855
        %5857 = vmatprep.subr.mxu0 0.0
        %v5858 = vand.u32 %v5189, 4294901760
        %v5859 = vsub.f32 %v5189, %v5858
        %5860 = vmatpush1.msra.mxu0 %v5859
        %5861 = vmatprep.subr.mxu0 0.0
        %5862 = vmatpush1.msra.mxu0 0.0
        %5863 = vmatprep.subr.mxu0 0.0
        %5864 = vmatpush1.msra.mxu0 0.0
        %5865 = vmatprep.subr.mxu0 0.0
        %5866 = vmatpush1.msra.mxu0 0.0
        %5867 = vmatprep.subr.mxu0 0.0
        %5868 = vmatpush1.msra.mxu0 0.0
        %5869 = vmatprep.subr.mxu0 0.0
        %5870 = vmatpush1.msra.mxu0 0.0
        %5871 = vmatprep.subr.mxu0 0.0
        %5872 = vmatpush1.msra.mxu0 0.0
        %5873 = vmatprep.subr.mxu0 0.0
        %5874 = vmatpush1.msra.mxu0 0.0
        %5875 = vmatprep.subr.mxu0 0.0
        %5876 = vmatpush1.msra.mxu0 0.0
        %5877 = vmatprep.subr.mxu0 0.0
        %5878 = vmatpush1.msra.mxu0 0.0
        %5879 = vmatprep.subr.mxu0 0.0
        %5880 = vmatpush1.msra.mxu0 0.0
        %5881 = vmatprep.subr.mxu0 0.0
        %5882 = vmatpush1.msra.mxu0 0.0
        %5883 = vmatprep.subr.mxu0 0.0
        %5884 = vmatpush1.msra.mxu0 0.0
        %5885 = vmatprep.subr.mxu0 0.0
        %5886 = vmatpush1.msra.mxu0 0.0
        %5887 = vmatprep.subr.mxu0 0.0
        %5888 = vmatpush1.msra.mxu0 0.0
        %5889 = vmatprep.subr.mxu0 0.0
        %5890 = vmatpush1.msra.mxu0 0.0
        %5891 = vmatprep.subr.mxu0 0.0
        %5892 = vmatpush1.msra.mxu0 0.0
        %5893 = vmatprep.subr.mxu0 0.0
        %5894 = vmatpush1.msra.mxu0 0.0
        %5895 = vmatprep.subr.mxu0 0.0
        %5896 = vmatpush1.msra.mxu0 0.0
        %5897 = vmatprep.subr.mxu0 0.0
        %5898 = vmatpush1.msra.mxu0 0.0
        %5899 = vmatprep.subr.mxu0 0.0
        %5900 = vmatpush1.msra.mxu0 0.0
        %5901 = vmatprep.subr.mxu0 0.0
        %5902 = vmatpush1.msra.mxu0 0.0
        %5903 = vmatprep.subr.mxu0 0.0
        %5904 = vmatpush1.msra.mxu0 0.0
        %5905 = vmatprep.subr.mxu0 0.0
        %5906 = vmatpush1.msra.mxu0 0.0
        %5907 = vmatprep.subr.mxu0 0.0
        %5908 = vmatpush1.msra.mxu0 0.0
        %5909 = vmatprep.subr.mxu0 0.0
        %5910 = vmatpush1.msra.mxu0 0.0
        %5911 = vmatprep.subr.mxu0 0.0
        %5912 = vmatpush1.msra.mxu0 0.0
        %5913 = vmatprep.subr.mxu0 0.0
        %5914 = vmatpush1.msra.mxu0 0.0
        %5915 = vmatprep.subr.mxu0 0.0
        %5916 = vmatpush1.msra.mxu0 0.0
        %5917 = vmatprep.subr.mxu0 0.0
        %5918 = vmatpush1.msra.mxu0 0.0
        %5919 = vmatprep.subr.mxu0 0.0
        %5920 = vmatpush1.msra.mxu0 0.0
        %5921 = vmatprep.mubr.f32.mxu0 0.0
        %v5922 = vand.u32 %v5202, 4294901760
        %v5923 = vsub.f32 %v5202, %v5922
        %5924 = vmatmul.mubr.f32.gmra.mrb[0].mxu0 %v5923
        %v5925 = vpop.f32.mrb[0].mxu0
        %v5926 = vadd.f32 %v5850, %v5925
        %v5927 = vpop.f32.mrb[0].mxu0
        %5928 = vdwg.mxu0
        %5929 = vmatprep.subr.mxu0 0.0
        %v5930 = vand.u32 %v5183, 4294901760
        %5931 = vmatpush1.msra.mxu0 %v5930
        %5932 = vmatprep.subr.mxu0 0.0
        %v5933 = vand.u32 %v5189, 4294901760
        %5934 = vmatpush1.msra.mxu0 %v5933
        %5935 = vmatprep.subr.mxu0 0.0
        %5936 = vmatpush1.msra.mxu0 0.0
        %5937 = vmatprep.subr.mxu0 0.0
        %5938 = vmatpush1.msra.mxu0 0.0
        %5939 = vmatprep.subr.mxu0 0.0
        %5940 = vmatpush1.msra.mxu0 0.0
        %5941 = vmatprep.subr.mxu0 0.0
        %5942 = vmatpush1.msra.mxu0 0.0
        %5943 = vmatprep.subr.mxu0 0.0
        %5944 = vmatpush1.msra.mxu0 0.0
        %5945 = vmatprep.subr.mxu0 0.0
        %5946 = vmatpush1.msra.mxu0 0.0
        %5947 = vmatprep.subr.mxu0 0.0
        %5948 = vmatpush1.msra.mxu0 0.0
        %5949 = vmatprep.subr.mxu0 0.0
        %5950 = vmatpush1.msra.mxu0 0.0
        %5951 = vmatprep.subr.mxu0 0.0
        %5952 = vmatpush1.msra.mxu0 0.0
        %5953 = vmatprep.subr.mxu0 0.0
        %5954 = vmatpush1.msra.mxu0 0.0
        %5955 = vmatprep.subr.mxu0 0.0
        %5956 = vmatpush1.msra.mxu0 0.0
        %5957 = vmatprep.subr.mxu0 0.0
        %5958 = vmatpush1.msra.mxu0 0.0
        %5959 = vmatprep.subr.mxu0 0.0
        %5960 = vmatpush1.msra.mxu0 0.0
        %5961 = vmatprep.subr.mxu0 0.0
        %5962 = vmatpush1.msra.mxu0 0.0
        %5963 = vmatprep.subr.mxu0 0.0
        %5964 = vmatpush1.msra.mxu0 0.0
        %5965 = vmatprep.subr.mxu0 0.0
        %5966 = vmatpush1.msra.mxu0 0.0
        %5967 = vmatprep.subr.mxu0 0.0
        %5968 = vmatpush1.msra.mxu0 0.0
        %5969 = vmatprep.subr.mxu0 0.0
        %5970 = vmatpush1.msra.mxu0 0.0
        %5971 = vmatprep.subr.mxu0 0.0
        %5972 = vmatpush1.msra.mxu0 0.0
        %5973 = vmatprep.subr.mxu0 0.0
        %5974 = vmatpush1.msra.mxu0 0.0
        %5975 = vmatprep.subr.mxu0 0.0
        %5976 = vmatpush1.msra.mxu0 0.0
        %5977 = vmatprep.subr.mxu0 0.0
        %5978 = vmatpush1.msra.mxu0 0.0
        %5979 = vmatprep.subr.mxu0 0.0
        %5980 = vmatpush1.msra.mxu0 0.0
        %5981 = vmatprep.subr.mxu0 0.0
        %5982 = vmatpush1.msra.mxu0 0.0
        %5983 = vmatprep.subr.mxu0 0.0
        %5984 = vmatpush1.msra.mxu0 0.0
        %5985 = vmatprep.subr.mxu0 0.0
        %5986 = vmatpush1.msra.mxu0 0.0
        %5987 = vmatprep.subr.mxu0 0.0
        %5988 = vmatpush1.msra.mxu0 0.0
        %5989 = vmatprep.subr.mxu0 0.0
        %5990 = vmatpush1.msra.mxu0 0.0
        %5991 = vmatprep.subr.mxu0 0.0
        %5992 = vmatpush1.msra.mxu0 0.0
        %5993 = vmatprep.subr.mxu0 0.0
        %5994 = vmatpush1.msra.mxu0 0.0
        %5995 = vmatprep.mubr.f32.mxu0 0.0
        %v5996 = vand.u32 %v5202, 4294901760
        %v5997 = vsub.f32 %v5202, %v5996
        %v5998 = vand.u32 %v5997, 4294901760
        %5999 = vmatmul.mubr.f32.gmra.mrb[0].mxu0 %v5998
        %v6000 = vpop.f32.mrb[0].mxu0
        %v6001 = vadd.f32 %v5926, %v6000
        %v6002 = vpop.f32.mrb[0].mxu0
        %6003 = vdwg.mxu0
        %6004 = vmatprep.subr.mxu0 0.0
        %v6005 = vand.u32 %v5183, 4294901760
        %v6006 = vsub.f32 %v5183, %v6005
        %v6007 = vand.u32 %v6006, 4294901760
        %6008 = vmatpush1.msra.mxu0 %v6007
        %6009 = vmatprep.subr.mxu0 0.0
        %v6010 = vand.u32 %v5189, 4294901760
        %v6011 = vsub.f32 %v5189, %v6010
        %v6012 = vand.u32 %v6011, 4294901760
        %6013 = vmatpush1.msra.mxu0 %v6012
        %6014 = vmatprep.subr.mxu0 0.0
        %6015 = vmatpush1.msra.mxu0 0.0
        %6016 = vmatprep.subr.mxu0 0.0
        %6017 = vmatpush1.msra.mxu0 0.0
        %6018 = vmatprep.subr.mxu0 0.0
        %6019 = vmatpush1.msra.mxu0 0.0
        %6020 = vmatprep.subr.mxu0 0.0
        %6021 = vmatpush1.msra.mxu0 0.0
        %6022 = vmatprep.subr.mxu0 0.0
        %6023 = vmatpush1.msra.mxu0 0.0
        %6024 = vmatprep.subr.mxu0 0.0
        %6025 = vmatpush1.msra.mxu0 0.0
        %6026 = vmatprep.subr.mxu0 0.0
        %6027 = vmatpush1.msra.mxu0 0.0
        %6028 = vmatprep.subr.mxu0 0.0
        %6029 = vmatpush1.msra.mxu0 0.0
        %6030 = vmatprep.subr.mxu0 0.0
        %6031 = vmatpush1.msra.mxu0 0.0
        %6032 = vmatprep.subr.mxu0 0.0
        %6033 = vmatpush1.msra.mxu0 0.0
        %6034 = vmatprep.subr.mxu0 0.0
        %6035 = vmatpush1.msra.mxu0 0.0
        %6036 = vmatprep.subr.mxu0 0.0
        %6037 = vmatpush1.msra.mxu0 0.0
        %6038 = vmatprep.subr.mxu0 0.0
        %6039 = vmatpush1.msra.mxu0 0.0
        %6040 = vmatprep.subr.mxu0 0.0
        %6041 = vmatpush1.msra.mxu0 0.0
        %6042 = vmatprep.subr.mxu0 0.0
        %6043 = vmatpush1.msra.mxu0 0.0
        %6044 = vmatprep.subr.mxu0 0.0
        %6045 = vmatpush1.msra.mxu0 0.0
        %6046 = vmatprep.subr.mxu0 0.0
        %6047 = vmatpush1.msra.mxu0 0.0
        %6048 = vmatprep.subr.mxu0 0.0
        %6049 = vmatpush1.msra.mxu0 0.0
        %6050 = vmatprep.subr.mxu0 0.0
        %6051 = vmatpush1.msra.mxu0 0.0
        %6052 = vmatprep.subr.mxu0 0.0
        %6053 = vmatpush1.msra.mxu0 0.0
        %6054 = vmatprep.subr.mxu0 0.0
        %6055 = vmatpush1.msra.mxu0 0.0
        %6056 = vmatprep.subr.mxu0 0.0
        %6057 = vmatpush1.msra.mxu0 0.0
        %6058 = vmatprep.subr.mxu0 0.0
        %6059 = vmatpush1.msra.mxu0 0.0
        %6060 = vmatprep.subr.mxu0 0.0
        %6061 = vmatpush1.msra.mxu0 0.0
        %6062 = vmatprep.subr.mxu0 0.0
        %6063 = vmatpush1.msra.mxu0 0.0
        %6064 = vmatprep.subr.mxu0 0.0
        %6065 = vmatpush1.msra.mxu0 0.0
        %6066 = vmatprep.subr.mxu0 0.0
        %6067 = vmatpush1.msra.mxu0 0.0
        %6068 = vmatprep.subr.mxu0 0.0
        %6069 = vmatpush1.msra.mxu0 0.0
        %6070 = vmatprep.subr.mxu0 0.0
        %6071 = vmatpush1.msra.mxu0 0.0
        %6072 = vmatprep.subr.mxu0 0.0
        %6073 = vmatpush1.msra.mxu0 0.0
        %6074 = vmatprep.mubr.f32.mxu0 0.0
        %v6075 = vand.u32 %v5202, 4294901760
        %6076 = vmatmul.mubr.f32.gmra.mrb[0].mxu0 %v6075
        %v6077 = vpop.f32.mrb[0].mxu0
        %v6078 = vadd.f32 %v6001, %v6077
        %v6079 = vpop.f32.mrb[0].mxu0
        %6080 = vdwg.mxu0
        %6081 = vmatprep.subr.mxu0 0.0
        %v6082 = vand.u32 %v5183, 4294901760
        %6083 = vmatpush1.msra.mxu0 %v6082
        %6084 = vmatprep.subr.mxu0 0.0
        %v6085 = vand.u32 %v5189, 4294901760
        %6086 = vmatpush1.msra.mxu0 %v6085
        %6087 = vmatprep.subr.mxu0 0.0
        %6088 = vmatpush1.msra.mxu0 0.0
        %6089 = vmatprep.subr.mxu0 0.0
        %6090 = vmatpush1.msra.mxu0 0.0
        %6091 = vmatprep.subr.mxu0 0.0
        %6092 = vmatpush1.msra.mxu0 0.0
        %6093 = vmatprep.subr.mxu0 0.0
        %6094 = vmatpush1.msra.mxu0 0.0
        %6095 = vmatprep.subr.mxu0 0.0
        %6096 = vmatpush1.msra.mxu0 0.0
        %6097 = vmatprep.subr.mxu0 0.0
        %6098 = vmatpush1.msra.mxu0 0.0
        %6099 = vmatprep.subr.mxu0 0.0
        %6100 = vmatpush1.msra.mxu0 0.0
        %6101 = vmatprep.subr.mxu0 0.0
        %6102 = vmatpush1.msra.mxu0 0.0
        %6103 = vmatprep.subr.mxu0 0.0
        %6104 = vmatpush1.msra.mxu0 0.0
        %6105 = vmatprep.subr.mxu0 0.0
        %6106 = vmatpush1.msra.mxu0 0.0
        %6107 = vmatprep.subr.mxu0 0.0
        %6108 = vmatpush1.msra.mxu0 0.0
        %6109 = vmatprep.subr.mxu0 0.0
        %6110 = vmatpush1.msra.mxu0 0.0
        %6111 = vmatprep.subr.mxu0 0.0
        %6112 = vmatpush1.msra.mxu0 0.0
        %6113 = vmatprep.subr.mxu0 0.0
        %6114 = vmatpush1.msra.mxu0 0.0
        %6115 = vmatprep.subr.mxu0 0.0
        %6116 = vmatpush1.msra.mxu0 0.0
        %6117 = vmatprep.subr.mxu0 0.0
        %6118 = vmatpush1.msra.mxu0 0.0
        %6119 = vmatprep.subr.mxu0 0.0
        %6120 = vmatpush1.msra.mxu0 0.0
        %6121 = vmatprep.subr.mxu0 0.0
        %6122 = vmatpush1.msra.mxu0 0.0
        %6123 = vmatprep.subr.mxu0 0.0
        %6124 = vmatpush1.msra.mxu0 0.0
        %6125 = vmatprep.subr.mxu0 0.0
        %6126 = vmatpush1.msra.mxu0 0.0
        %6127 = vmatprep.subr.mxu0 0.0
        %6128 = vmatpush1.msra.mxu0 0.0
        %6129 = vmatprep.subr.mxu0 0.0
        %6130 = vmatpush1.msra.mxu0 0.0
        %6131 = vmatprep.subr.mxu0 0.0
        %6132 = vmatpush1.msra.mxu0 0.0
        %6133 = vmatprep.subr.mxu0 0.0
        %6134 = vmatpush1.msra.mxu0 0.0
        %6135 = vmatprep.subr.mxu0 0.0
        %6136 = vmatpush1.msra.mxu0 0.0
        %6137 = vmatprep.subr.mxu0 0.0
        %6138 = vmatpush1.msra.mxu0 0.0
        %6139 = vmatprep.subr.mxu0 0.0
        %6140 = vmatpush1.msra.mxu0 0.0
        %6141 = vmatprep.subr.mxu0 0.0
        %6142 = vmatpush1.msra.mxu0 0.0
        %6143 = vmatprep.subr.mxu0 0.0
        %6144 = vmatpush1.msra.mxu0 0.0
        %6145 = vmatprep.subr.mxu0 0.0
        %6146 = vmatpush1.msra.mxu0 0.0
        %6147 = vmatprep.mubr.f32.mxu0 0.0
        %v6148 = vand.u32 %v5202, 4294901760
        %6149 = vmatmul.mubr.f32.gmra.mrb[0].mxu0 %v6148
        %v6150 = vpop.f32.mrb[0].mxu0
        %v6151 = vadd.f32 %v6078, %v6150
        %v6152 = vpop.f32.mrb[0].mxu0
        %6153 = vdwg.mxu0
        %v6154 = vadd.f32 %v5173, %v5691
        %v6155 = vadd.f32 %v5174, %v5693
        %v6156 = vadd.f32 %v5175, %v6151
        %s6157 = scalar_lea.vmem [#allocation5], 48
        %v6158 = vld [vmem:[%s6157] sm:$0xff]
        %6159 = vrot.lane.b32.xlu0 %v288, 92
        %v6160 = vpop.permute.xlu0 %6159
        %6161 = vrot.lane.b32.xlu0 %v289, 92
        %v6162 = vpop.permute.xlu0 %6161
        %6163 = vrot.lane.b32.xlu0 %v290, 92
        %v6164 = vpop.permute.xlu0 %6163
        %6165 = vrot.lane.b32.xlu0 %v291, 92
        %v6166 = vpop.permute.xlu0 %6165
        %6167 = vrot.lane.b32.xlu0 %v292, 92
        %v6168 = vpop.permute.xlu0 %6167
        %6169 = vrot.lane.b32.xlu0 %v293, 92
        %v6170 = vpop.permute.xlu0 %6169
        %vm6171 = vcmask 752640
        %v6172 = vsel %vm6171, %v6160, %v6162
        %v6173 = vsel %vm6171, %v6162, %v6164
        %v6174 = vsel %vm6171, %v6166, %v6168
        %v6175 = vsel %vm6171, %v6168, %v6170
        %v6183 = vsel %vm326, %v6158, 0
        %v6185 = vand.u32 %v6173, 4294901760
        %6186 = vmatprep.subr.mxu0 %v6185
        %v6187 = vand.u32 %v6172, 4294901760
        %6188 = vmatpush1.msra.mxu0 %v6187
        %v6189 = vand.u32 %v6175, 4294901760
        %6190 = vmatprep.subr.mxu0 %v6189
        %v6191 = vand.u32 %v6174, 4294901760
        %6192 = vmatpush1.msra.mxu0 %v6191
        %6193 = vmatprep.subr.mxu0 0.0
        %6194 = vmatpush1.msra.mxu0 0.0
        %6195 = vmatprep.subr.mxu0 0.0
        %6196 = vmatpush1.msra.mxu0 0.0
        %6197 = vmatprep.subr.mxu0 0.0
        %6198 = vmatpush1.msra.mxu0 0.0
        %6199 = vmatprep.subr.mxu0 0.0
        %6200 = vmatpush1.msra.mxu0 0.0
        %6201 = vmatprep.subr.mxu0 0.0
        %6202 = vmatpush1.msra.mxu0 0.0
        %6203 = vmatprep.subr.mxu0 0.0
        %6204 = vmatpush1.msra.mxu0 0.0
        %6205 = vmatprep.subr.mxu0 0.0
        %6206 = vmatpush1.msra.mxu0 0.0
        %6207 = vmatprep.subr.mxu0 0.0
        %6208 = vmatpush1.msra.mxu0 0.0
        %6209 = vmatprep.subr.mxu0 0.0
        %6210 = vmatpush1.msra.mxu0 0.0
        %6211 = vmatprep.subr.mxu0 0.0
        %6212 = vmatpush1.msra.mxu0 0.0
        %6213 = vmatprep.subr.mxu0 0.0
        %6214 = vmatpush1.msra.mxu0 0.0
        %6215 = vmatprep.subr.mxu0 0.0
        %6216 = vmatpush1.msra.mxu0 0.0
        %6217 = vmatprep.subr.mxu0 0.0
        %6218 = vmatpush1.msra.mxu0 0.0
        %6219 = vmatprep.subr.mxu0 0.0
        %6220 = vmatpush1.msra.mxu0 0.0
        %6221 = vmatprep.subr.mxu0 0.0
        %6222 = vmatpush1.msra.mxu0 0.0
        %6223 = vmatprep.subr.mxu0 0.0
        %6224 = vmatpush1.msra.mxu0 0.0
        %6225 = vmatprep.subr.mxu0 0.0
        %6226 = vmatpush1.msra.mxu0 0.0
        %6227 = vmatprep.subr.mxu0 0.0
        %6228 = vmatpush1.msra.mxu0 0.0
        %6229 = vmatprep.subr.mxu0 0.0
        %6230 = vmatpush1.msra.mxu0 0.0
        %6231 = vmatprep.subr.mxu0 0.0
        %6232 = vmatpush1.msra.mxu0 0.0
        %6233 = vmatprep.subr.mxu0 0.0
        %6234 = vmatpush1.msra.mxu0 0.0
        %6235 = vmatprep.subr.mxu0 0.0
        %6236 = vmatpush1.msra.mxu0 0.0
        %6237 = vmatprep.subr.mxu0 0.0
        %6238 = vmatpush1.msra.mxu0 0.0
        %6239 = vmatprep.subr.mxu0 0.0
        %6240 = vmatpush1.msra.mxu0 0.0
        %6241 = vmatprep.subr.mxu0 0.0
        %6242 = vmatpush1.msra.mxu0 0.0
        %6243 = vmatprep.subr.mxu0 0.0
        %6244 = vmatpush1.msra.mxu0 0.0
        %6245 = vmatprep.subr.mxu0 0.0
        %6246 = vmatpush1.msra.mxu0 0.0
        %6247 = vmatprep.subr.mxu0 0.0
        %6248 = vmatpush1.msra.mxu0 0.0
        %6249 = vmatprep.subr.mxu0 0.0
        %6250 = vmatpush1.msra.mxu0 0.0
        %6251 = vmatprep.subr.mxu0 0.0
        %6252 = vmatpush1.msra.mxu0 0.0
        %6253 = vmatprep.mubr.f32.mxu0 0.0
        %v6254 = vand.u32 %v6183, 4294901760
        %v6255 = vsub.f32 %v6183, %v6254
        %v6256 = vand.u32 %v6255, 4294901760
        %v6257 = vsub.f32 %v6255, %v6256
        %v6258 = vand.u32 %v6257, 4294901760
        %6259 = vmatmul.mubr.f32.gmra.mrb[0].mxu0 %v6258
        %v6260 = vpop.f32.mrb[0].mxu0
        %v6261 = vadd.f32 0.0, %v6260
        %v6262 = vpop.f32.mrb[0].mxu0
        %v6263 = vadd.f32 0.0, %v6262
        %6264 = vdwg.mxu0
        %v6265 = vand.u32 %v6173, 4294901760
        %v6266 = vsub.f32 %v6173, %v6265
        %v6267 = vand.u32 %v6266, 4294901760
        %v6268 = vsub.f32 %v6266, %v6267
        %v6269 = vand.u32 %v6268, 4294901760
        %6270 = vmatprep.subr.mxu0 %v6269
        %v6271 = vand.u32 %v6172, 4294901760
        %v6272 = vsub.f32 %v6172, %v6271
        %v6273 = vand.u32 %v6272, 4294901760
        %v6274 = vsub.f32 %v6272, %v6273
        %v6275 = vand.u32 %v6274, 4294901760
        %6276 = vmatpush1.msra.mxu0 %v6275
        %v6277 = vand.u32 %v6175, 4294901760
        %v6278 = vsub.f32 %v6175, %v6277
        %v6279 = vand.u32 %v6278, 4294901760
        %v6280 = vsub.f32 %v6278, %v6279
        %v6281 = vand.u32 %v6280, 4294901760
        %6282 = vmatprep.subr.mxu0 %v6281
        %v6283 = vand.u32 %v6174, 4294901760
        %v6284 = vsub.f32 %v6174, %v6283
        %v6285 = vand.u32 %v6284, 4294901760
        %v6286 = vsub.f32 %v6284, %v6285
        %v6287 = vand.u32 %v6286, 4294901760
        %6288 = vmatpush1.msra.mxu0 %v6287
        %6289 = vmatprep.subr.mxu0 0.0
        %6290 = vmatpush1.msra.mxu0 0.0
        %6291 = vmatprep.subr.mxu0 0.0
        %6292 = vmatpush1.msra.mxu0 0.0
        %6293 = vmatprep.subr.mxu0 0.0
        %6294 = vmatpush1.msra.mxu0 0.0
        %6295 = vmatprep.subr.mxu0 0.0
        %6296 = vmatpush1.msra.mxu0 0.0
        %6297 = vmatprep.subr.mxu0 0.0
        %6298 = vmatpush1.msra.mxu0 0.0
        %6299 = vmatprep.subr.mxu0 0.0
        %6300 = vmatpush1.msra.mxu0 0.0
        %6301 = vmatprep.subr.mxu0 0.0
        %6302 = vmatpush1.msra.mxu0 0.0
        %6303 = vmatprep.subr.mxu0 0.0
        %6304 = vmatpush1.msra.mxu0 0.0
        %6305 = vmatprep.subr.mxu0 0.0
        %6306 = vmatpush1.msra.mxu0 0.0
        %6307 = vmatprep.subr.mxu0 0.0
        %6308 = vmatpush1.msra.mxu0 0.0
        %6309 = vmatprep.subr.mxu0 0.0
        %6310 = vmatpush1.msra.mxu0 0.0
        %6311 = vmatprep.subr.mxu0 0.0
        %6312 = vmatpush1.msra.mxu0 0.0
        %6313 = vmatprep.subr.mxu0 0.0
        %6314 = vmatpush1.msra.mxu0 0.0
        %6315 = vmatprep.subr.mxu0 0.0
        %6316 = vmatpush1.msra.mxu0 0.0
        %6317 = vmatprep.subr.mxu0 0.0
        %6318 = vmatpush1.msra.mxu0 0.0
        %6319 = vmatprep.subr.mxu0 0.0
        %6320 = vmatpush1.msra.mxu0 0.0
        %6321 = vmatprep.subr.mxu0 0.0
        %6322 = vmatpush1.msra.mxu0 0.0
        %6323 = vmatprep.subr.mxu0 0.0
        %6324 = vmatpush1.msra.mxu0 0.0
        %6325 = vmatprep.subr.mxu0 0.0
        %6326 = vmatpush1.msra.mxu0 0.0
        %6327 = vmatprep.subr.mxu0 0.0
        %6328 = vmatpush1.msra.mxu0 0.0
        %6329 = vmatprep.subr.mxu0 0.0
        %6330 = vmatpush1.msra.mxu0 0.0
        %6331 = vmatprep.subr.mxu0 0.0
        %6332 = vmatpush1.msra.mxu0 0.0
        %6333 = vmatprep.subr.mxu0 0.0
        %6334 = vmatpush1.msra.mxu0 0.0
        %6335 = vmatprep.subr.mxu0 0.0
        %6336 = vmatpush1.msra.mxu0 0.0
        %6337 = vmatprep.subr.mxu0 0.0
        %6338 = vmatpush1.msra.mxu0 0.0
        %6339 = vmatprep.subr.mxu0 0.0
        %6340 = vmatpush1.msra.mxu0 0.0
        %6341 = vmatprep.subr.mxu0 0.0
        %6342 = vmatpush1.msra.mxu0 0.0
        %6343 = vmatprep.subr.mxu0 0.0
        %6344 = vmatpush1.msra.mxu0 0.0
        %6345 = vmatprep.subr.mxu0 0.0
        %6346 = vmatpush1.msra.mxu0 0.0
        %6347 = vmatprep.subr.mxu0 0.0
        %6348 = vmatpush1.msra.mxu0 0.0
        %6349 = vmatprep.mubr.f32.mxu0 0.0
        %v6350 = vand.u32 %v6183, 4294901760
        %6351 = vmatmul.mubr.f32.gmra.mrb[0].mxu0 %v6350
        %v6352 = vpop.f32.mrb[0].mxu0
        %v6353 = vadd.f32 %v6261, %v6352
        %v6354 = vpop.f32.mrb[0].mxu0
        %v6355 = vadd.f32 %v6263, %v6354
        %6356 = vdwg.mxu0
        %v6357 = vand.u32 %v6173, 4294901760
        %v6358 = vsub.f32 %v6173, %v6357
        %6359 = vmatprep.subr.mxu0 %v6358
        %v6360 = vand.u32 %v6172, 4294901760
        %v6361 = vsub.f32 %v6172, %v6360
        %6362 = vmatpush1.msra.mxu0 %v6361
        %v6363 = vand.u32 %v6175, 4294901760
        %v6364 = vsub.f32 %v6175, %v6363
        %6365 = vmatprep.subr.mxu0 %v6364
        %v6366 = vand.u32 %v6174, 4294901760
        %v6367 = vsub.f32 %v6174, %v6366
        %6368 = vmatpush1.msra.mxu0 %v6367
        %6369 = vmatprep.subr.mxu0 0.0
        %6370 = vmatpush1.msra.mxu0 0.0
        %6371 = vmatprep.subr.mxu0 0.0
        %6372 = vmatpush1.msra.mxu0 0.0
        %6373 = vmatprep.subr.mxu0 0.0
        %6374 = vmatpush1.msra.mxu0 0.0
        %6375 = vmatprep.subr.mxu0 0.0
        %6376 = vmatpush1.msra.mxu0 0.0
        %6377 = vmatprep.subr.mxu0 0.0
        %6378 = vmatpush1.msra.mxu0 0.0
        %6379 = vmatprep.subr.mxu0 0.0
        %6380 = vmatpush1.msra.mxu0 0.0
        %6381 = vmatprep.subr.mxu0 0.0
        %6382 = vmatpush1.msra.mxu0 0.0
        %6383 = vmatprep.subr.mxu0 0.0
        %6384 = vmatpush1.msra.mxu0 0.0
        %6385 = vmatprep.subr.mxu0 0.0
        %6386 = vmatpush1.msra.mxu0 0.0
        %6387 = vmatprep.subr.mxu0 0.0
        %6388 = vmatpush1.msra.mxu0 0.0
        %6389 = vmatprep.subr.mxu0 0.0
        %6390 = vmatpush1.msra.mxu0 0.0
        %6391 = vmatprep.subr.mxu0 0.0
        %6392 = vmatpush1.msra.mxu0 0.0
        %6393 = vmatprep.subr.mxu0 0.0
        %6394 = vmatpush1.msra.mxu0 0.0
        %6395 = vmatprep.subr.mxu0 0.0
        %6396 = vmatpush1.msra.mxu0 0.0
        %6397 = vmatprep.subr.mxu0 0.0
        %6398 = vmatpush1.msra.mxu0 0.0
        %6399 = vmatprep.subr.mxu0 0.0
        %6400 = vmatpush1.msra.mxu0 0.0
        %6401 = vmatprep.subr.mxu0 0.0
        %6402 = vmatpush1.msra.mxu0 0.0
        %6403 = vmatprep.subr.mxu0 0.0
        %6404 = vmatpush1.msra.mxu0 0.0
        %6405 = vmatprep.subr.mxu0 0.0
        %6406 = vmatpush1.msra.mxu0 0.0
        %6407 = vmatprep.subr.mxu0 0.0
        %6408 = vmatpush1.msra.mxu0 0.0
        %6409 = vmatprep.subr.mxu0 0.0
        %6410 = vmatpush1.msra.mxu0 0.0
        %6411 = vmatprep.subr.mxu0 0.0
        %6412 = vmatpush1.msra.mxu0 0.0
        %6413 = vmatprep.subr.mxu0 0.0
        %6414 = vmatpush1.msra.mxu0 0.0
        %6415 = vmatprep.subr.mxu0 0.0
        %6416 = vmatpush1.msra.mxu0 0.0
        %6417 = vmatprep.subr.mxu0 0.0
        %6418 = vmatpush1.msra.mxu0 0.0
        %6419 = vmatprep.subr.mxu0 0.0
        %6420 = vmatpush1.msra.mxu0 0.0
        %6421 = vmatprep.subr.mxu0 0.0
        %6422 = vmatpush1.msra.mxu0 0.0
        %6423 = vmatprep.subr.mxu0 0.0
        %6424 = vmatpush1.msra.mxu0 0.0
        %6425 = vmatprep.subr.mxu0 0.0
        %6426 = vmatpush1.msra.mxu0 0.0
        %6427 = vmatprep.subr.mxu0 0.0
        %6428 = vmatpush1.msra.mxu0 0.0
        %6429 = vmatprep.mubr.f32.mxu0 0.0
        %v6430 = vand.u32 %v6183, 4294901760
        %v6431 = vsub.f32 %v6183, %v6430
        %6432 = vmatmul.mubr.f32.gmra.mrb[0].mxu0 %v6431
        %v6433 = vpop.f32.mrb[0].mxu0
        %v6434 = vadd.f32 %v6353, %v6433
        %v6435 = vpop.f32.mrb[0].mxu0
        %v6436 = vadd.f32 %v6355, %v6435
        %6437 = vdwg.mxu0
        %v6438 = vand.u32 %v6173, 4294901760
        %6439 = vmatprep.subr.mxu0 %v6438
        %v6440 = vand.u32 %v6172, 4294901760
        %6441 = vmatpush1.msra.mxu0 %v6440
        %v6442 = vand.u32 %v6175, 4294901760
        %6443 = vmatprep.subr.mxu0 %v6442
        %v6444 = vand.u32 %v6174, 4294901760
        %6445 = vmatpush1.msra.mxu0 %v6444
        %6446 = vmatprep.subr.mxu0 0.0
        %6447 = vmatpush1.msra.mxu0 0.0
        %6448 = vmatprep.subr.mxu0 0.0
        %6449 = vmatpush1.msra.mxu0 0.0
        %6450 = vmatprep.subr.mxu0 0.0
        %6451 = vmatpush1.msra.mxu0 0.0
        %6452 = vmatprep.subr.mxu0 0.0
        %6453 = vmatpush1.msra.mxu0 0.0
        %6454 = vmatprep.subr.mxu0 0.0
        %6455 = vmatpush1.msra.mxu0 0.0
        %6456 = vmatprep.subr.mxu0 0.0
        %6457 = vmatpush1.msra.mxu0 0.0
        %6458 = vmatprep.subr.mxu0 0.0
        %6459 = vmatpush1.msra.mxu0 0.0
        %6460 = vmatprep.subr.mxu0 0.0
        %6461 = vmatpush1.msra.mxu0 0.0
        %6462 = vmatprep.subr.mxu0 0.0
        %6463 = vmatpush1.msra.mxu0 0.0
        %6464 = vmatprep.subr.mxu0 0.0
        %6465 = vmatpush1.msra.mxu0 0.0
        %6466 = vmatprep.subr.mxu0 0.0
        %6467 = vmatpush1.msra.mxu0 0.0
        %6468 = vmatprep.subr.mxu0 0.0
        %6469 = vmatpush1.msra.mxu0 0.0
        %6470 = vmatprep.subr.mxu0 0.0
        %6471 = vmatpush1.msra.mxu0 0.0
        %6472 = vmatprep.subr.mxu0 0.0
        %6473 = vmatpush1.msra.mxu0 0.0
        %6474 = vmatprep.subr.mxu0 0.0
        %6475 = vmatpush1.msra.mxu0 0.0
        %6476 = vmatprep.subr.mxu0 0.0
        %6477 = vmatpush1.msra.mxu0 0.0
        %6478 = vmatprep.subr.mxu0 0.0
        %6479 = vmatpush1.msra.mxu0 0.0
        %6480 = vmatprep.subr.mxu0 0.0
        %6481 = vmatpush1.msra.mxu0 0.0
        %6482 = vmatprep.subr.mxu0 0.0
        %6483 = vmatpush1.msra.mxu0 0.0
        %6484 = vmatprep.subr.mxu0 0.0
        %6485 = vmatpush1.msra.mxu0 0.0
        %6486 = vmatprep.subr.mxu0 0.0
        %6487 = vmatpush1.msra.mxu0 0.0
        %6488 = vmatprep.subr.mxu0 0.0
        %6489 = vmatpush1.msra.mxu0 0.0
        %6490 = vmatprep.subr.mxu0 0.0
        %6491 = vmatpush1.msra.mxu0 0.0
        %6492 = vmatprep.subr.mxu0 0.0
        %6493 = vmatpush1.msra.mxu0 0.0
        %6494 = vmatprep.subr.mxu0 0.0
        %6495 = vmatpush1.msra.mxu0 0.0
        %6496 = vmatprep.subr.mxu0 0.0
        %6497 = vmatpush1.msra.mxu0 0.0
        %6498 = vmatprep.subr.mxu0 0.0
        %6499 = vmatpush1.msra.mxu0 0.0
        %6500 = vmatprep.subr.mxu0 0.0
        %6501 = vmatpush1.msra.mxu0 0.0
        %6502 = vmatprep.subr.mxu0 0.0
        %6503 = vmatpush1.msra.mxu0 0.0
        %6504 = vmatprep.subr.mxu0 0.0
        %6505 = vmatpush1.msra.mxu0 0.0
        %6506 = vmatprep.mubr.f32.mxu0 0.0
        %v6507 = vand.u32 %v6183, 4294901760
        %v6508 = vsub.f32 %v6183, %v6507
        %v6509 = vand.u32 %v6508, 4294901760
        %6510 = vmatmul.mubr.f32.gmra.mrb[0].mxu0 %v6509
        %v6511 = vpop.f32.mrb[0].mxu0
        %v6512 = vadd.f32 %v6434, %v6511
        %v6513 = vpop.f32.mrb[0].mxu0
        %v6514 = vadd.f32 %v6436, %v6513
        %6515 = vdwg.mxu0
        %v6516 = vand.u32 %v6173, 4294901760
        %v6517 = vsub.f32 %v6173, %v6516
        %v6518 = vand.u32 %v6517, 4294901760
        %6519 = vmatprep.subr.mxu0 %v6518
        %v6520 = vand.u32 %v6172, 4294901760
        %v6521 = vsub.f32 %v6172, %v6520
        %v6522 = vand.u32 %v6521, 4294901760
        %6523 = vmatpush1.msra.mxu0 %v6522
        %v6524 = vand.u32 %v6175, 4294901760
        %v6525 = vsub.f32 %v6175, %v6524
        %v6526 = vand.u32 %v6525, 4294901760
        %6527 = vmatprep.subr.mxu0 %v6526
        %v6528 = vand.u32 %v6174, 4294901760
        %v6529 = vsub.f32 %v6174, %v6528
        %v6530 = vand.u32 %v6529, 4294901760
        %6531 = vmatpush1.msra.mxu0 %v6530
        %6532 = vmatprep.subr.mxu0 0.0
        %6533 = vmatpush1.msra.mxu0 0.0
        %6534 = vmatprep.subr.mxu0 0.0
        %6535 = vmatpush1.msra.mxu0 0.0
        %6536 = vmatprep.subr.mxu0 0.0
        %6537 = vmatpush1.msra.mxu0 0.0
        %6538 = vmatprep.subr.mxu0 0.0
        %6539 = vmatpush1.msra.mxu0 0.0
        %6540 = vmatprep.subr.mxu0 0.0
        %6541 = vmatpush1.msra.mxu0 0.0
        %6542 = vmatprep.subr.mxu0 0.0
        %6543 = vmatpush1.msra.mxu0 0.0
        %6544 = vmatprep.subr.mxu0 0.0
        %6545 = vmatpush1.msra.mxu0 0.0
        %6546 = vmatprep.subr.mxu0 0.0
        %6547 = vmatpush1.msra.mxu0 0.0
        %6548 = vmatprep.subr.mxu0 0.0
        %6549 = vmatpush1.msra.mxu0 0.0
        %6550 = vmatprep.subr.mxu0 0.0
        %6551 = vmatpush1.msra.mxu0 0.0
        %6552 = vmatprep.subr.mxu0 0.0
        %6553 = vmatpush1.msra.mxu0 0.0
        %6554 = vmatprep.subr.mxu0 0.0
        %6555 = vmatpush1.msra.mxu0 0.0
        %6556 = vmatprep.subr.mxu0 0.0
        %6557 = vmatpush1.msra.mxu0 0.0
        %6558 = vmatprep.subr.mxu0 0.0
        %6559 = vmatpush1.msra.mxu0 0.0
        %6560 = vmatprep.subr.mxu0 0.0
        %6561 = vmatpush1.msra.mxu0 0.0
        %6562 = vmatprep.subr.mxu0 0.0
        %6563 = vmatpush1.msra.mxu0 0.0
        %6564 = vmatprep.subr.mxu0 0.0
        %6565 = vmatpush1.msra.mxu0 0.0
        %6566 = vmatprep.subr.mxu0 0.0
        %6567 = vmatpush1.msra.mxu0 0.0
        %6568 = vmatprep.subr.mxu0 0.0
        %6569 = vmatpush1.msra.mxu0 0.0
        %6570 = vmatprep.subr.mxu0 0.0
        %6571 = vmatpush1.msra.mxu0 0.0
        %6572 = vmatprep.subr.mxu0 0.0
        %6573 = vmatpush1.msra.mxu0 0.0
        %6574 = vmatprep.subr.mxu0 0.0
        %6575 = vmatpush1.msra.mxu0 0.0
        %6576 = vmatprep.subr.mxu0 0.0
        %6577 = vmatpush1.msra.mxu0 0.0
        %6578 = vmatprep.subr.mxu0 0.0
        %6579 = vmatpush1.msra.mxu0 0.0
        %6580 = vmatprep.subr.mxu0 0.0
        %6581 = vmatpush1.msra.mxu0 0.0
        %6582 = vmatprep.subr.mxu0 0.0
        %6583 = vmatpush1.msra.mxu0 0.0
        %6584 = vmatprep.subr.mxu0 0.0
        %6585 = vmatpush1.msra.mxu0 0.0
        %6586 = vmatprep.subr.mxu0 0.0
        %6587 = vmatpush1.msra.mxu0 0.0
        %6588 = vmatprep.subr.mxu0 0.0
        %6589 = vmatpush1.msra.mxu0 0.0
        %6590 = vmatprep.subr.mxu0 0.0
        %6591 = vmatpush1.msra.mxu0 0.0
        %6592 = vmatprep.mubr.f32.mxu0 0.0
        %v6593 = vand.u32 %v6183, 4294901760
        %6594 = vmatmul.mubr.f32.gmra.mrb[0].mxu0 %v6593
        %v6595 = vpop.f32.mrb[0].mxu0
        %v6596 = vadd.f32 %v6512, %v6595
        %v6597 = vpop.f32.mrb[0].mxu0
        %v6598 = vadd.f32 %v6514, %v6597
        %6599 = vdwg.mxu0
        %v6600 = vand.u32 %v6173, 4294901760
        %6601 = vmatprep.subr.mxu0 %v6600
        %v6602 = vand.u32 %v6172, 4294901760
        %6603 = vmatpush1.msra.mxu0 %v6602
        %v6604 = vand.u32 %v6175, 4294901760
        %6605 = vmatprep.subr.mxu0 %v6604
        %v6606 = vand.u32 %v6174, 4294901760
        %6607 = vmatpush1.msra.mxu0 %v6606
        %6608 = vmatprep.subr.mxu0 0.0
        %6609 = vmatpush1.msra.mxu0 0.0
        %6610 = vmatprep.subr.mxu0 0.0
        %6611 = vmatpush1.msra.mxu0 0.0
        %6612 = vmatprep.subr.mxu0 0.0
        %6613 = vmatpush1.msra.mxu0 0.0
        %6614 = vmatprep.subr.mxu0 0.0
        %6615 = vmatpush1.msra.mxu0 0.0
        %6616 = vmatprep.subr.mxu0 0.0
        %6617 = vmatpush1.msra.mxu0 0.0
        %6618 = vmatprep.subr.mxu0 0.0
        %6619 = vmatpush1.msra.mxu0 0.0
        %6620 = vmatprep.subr.mxu0 0.0
        %6621 = vmatpush1.msra.mxu0 0.0
        %6622 = vmatprep.subr.mxu0 0.0
        %6623 = vmatpush1.msra.mxu0 0.0
        %6624 = vmatprep.subr.mxu0 0.0
        %6625 = vmatpush1.msra.mxu0 0.0
        %6626 = vmatprep.subr.mxu0 0.0
        %6627 = vmatpush1.msra.mxu0 0.0
        %6628 = vmatprep.subr.mxu0 0.0
        %6629 = vmatpush1.msra.mxu0 0.0
        %6630 = vmatprep.subr.mxu0 0.0
        %6631 = vmatpush1.msra.mxu0 0.0
        %6632 = vmatprep.subr.mxu0 0.0
        %6633 = vmatpush1.msra.mxu0 0.0
        %6634 = vmatprep.subr.mxu0 0.0
        %6635 = vmatpush1.msra.mxu0 0.0
        %6636 = vmatprep.subr.mxu0 0.0
        %6637 = vmatpush1.msra.mxu0 0.0
        %6638 = vmatprep.subr.mxu0 0.0
        %6639 = vmatpush1.msra.mxu0 0.0
        %6640 = vmatprep.subr.mxu0 0.0
        %6641 = vmatpush1.msra.mxu0 0.0
        %6642 = vmatprep.subr.mxu0 0.0
        %6643 = vmatpush1.msra.mxu0 0.0
        %6644 = vmatprep.subr.mxu0 0.0
        %6645 = vmatpush1.msra.mxu0 0.0
        %6646 = vmatprep.subr.mxu0 0.0
        %6647 = vmatpush1.msra.mxu0 0.0
        %6648 = vmatprep.subr.mxu0 0.0
        %6649 = vmatpush1.msra.mxu0 0.0
        %6650 = vmatprep.subr.mxu0 0.0
        %6651 = vmatpush1.msra.mxu0 0.0
        %6652 = vmatprep.subr.mxu0 0.0
        %6653 = vmatpush1.msra.mxu0 0.0
        %6654 = vmatprep.subr.mxu0 0.0
        %6655 = vmatpush1.msra.mxu0 0.0
        %6656 = vmatprep.subr.mxu0 0.0
        %6657 = vmatpush1.msra.mxu0 0.0
        %6658 = vmatprep.subr.mxu0 0.0
        %6659 = vmatpush1.msra.mxu0 0.0
        %6660 = vmatprep.subr.mxu0 0.0
        %6661 = vmatpush1.msra.mxu0 0.0
        %6662 = vmatprep.subr.mxu0 0.0
        %6663 = vmatpush1.msra.mxu0 0.0
        %6664 = vmatprep.subr.mxu0 0.0
        %6665 = vmatpush1.msra.mxu0 0.0
        %6666 = vmatprep.subr.mxu0 0.0
        %6667 = vmatpush1.msra.mxu0 0.0
        %6668 = vmatprep.mubr.f32.mxu0 0.0
        %v6669 = vand.u32 %v6183, 4294901760
        %6670 = vmatmul.mubr.f32.gmra.mrb[0].mxu0 %v6669
        %v6671 = vpop.f32.mrb[0].mxu0
        %v6672 = vadd.f32 %v6596, %v6671
        %v6673 = vpop.f32.mrb[0].mxu0
        %v6674 = vadd.f32 %v6598, %v6673
        %6675 = vdwg.mxu0
        %6676 = vmatprep.subr.mxu0 0.0
        %v6677 = vand.u32 %v6164, 4294901760
        %6678 = vmatpush1.msra.mxu0 %v6677
        %6679 = vmatprep.subr.mxu0 0.0
        %v6680 = vand.u32 %v6170, 4294901760
        %6681 = vmatpush1.msra.mxu0 %v6680
        %6682 = vmatprep.subr.mxu0 0.0
        %6683 = vmatpush1.msra.mxu0 0.0
        %6684 = vmatprep.subr.mxu0 0.0
        %6685 = vmatpush1.msra.mxu0 0.0
        %6686 = vmatprep.subr.mxu0 0.0
        %6687 = vmatpush1.msra.mxu0 0.0
        %6688 = vmatprep.subr.mxu0 0.0
        %6689 = vmatpush1.msra.mxu0 0.0
        %6690 = vmatprep.subr.mxu0 0.0
        %6691 = vmatpush1.msra.mxu0 0.0
        %6692 = vmatprep.subr.mxu0 0.0
        %6693 = vmatpush1.msra.mxu0 0.0
        %6694 = vmatprep.subr.mxu0 0.0
        %6695 = vmatpush1.msra.mxu0 0.0
        %6696 = vmatprep.subr.mxu0 0.0
        %6697 = vmatpush1.msra.mxu0 0.0
        %6698 = vmatprep.subr.mxu0 0.0
        %6699 = vmatpush1.msra.mxu0 0.0
        %6700 = vmatprep.subr.mxu0 0.0
        %6701 = vmatpush1.msra.mxu0 0.0
        %6702 = vmatprep.subr.mxu0 0.0
        %6703 = vmatpush1.msra.mxu0 0.0
        %6704 = vmatprep.subr.mxu0 0.0
        %6705 = vmatpush1.msra.mxu0 0.0
        %6706 = vmatprep.subr.mxu0 0.0
        %6707 = vmatpush1.msra.mxu0 0.0
        %6708 = vmatprep.subr.mxu0 0.0
        %6709 = vmatpush1.msra.mxu0 0.0
        %6710 = vmatprep.subr.mxu0 0.0
        %6711 = vmatpush1.msra.mxu0 0.0
        %6712 = vmatprep.subr.mxu0 0.0
        %6713 = vmatpush1.msra.mxu0 0.0
        %6714 = vmatprep.subr.mxu0 0.0
        %6715 = vmatpush1.msra.mxu0 0.0
        %6716 = vmatprep.subr.mxu0 0.0
        %6717 = vmatpush1.msra.mxu0 0.0
        %6718 = vmatprep.subr.mxu0 0.0
        %6719 = vmatpush1.msra.mxu0 0.0
        %6720 = vmatprep.subr.mxu0 0.0
        %6721 = vmatpush1.msra.mxu0 0.0
        %6722 = vmatprep.subr.mxu0 0.0
        %6723 = vmatpush1.msra.mxu0 0.0
        %6724 = vmatprep.subr.mxu0 0.0
        %6725 = vmatpush1.msra.mxu0 0.0
        %6726 = vmatprep.subr.mxu0 0.0
        %6727 = vmatpush1.msra.mxu0 0.0
        %6728 = vmatprep.subr.mxu0 0.0
        %6729 = vmatpush1.msra.mxu0 0.0
        %6730 = vmatprep.subr.mxu0 0.0
        %6731 = vmatpush1.msra.mxu0 0.0
        %6732 = vmatprep.subr.mxu0 0.0
        %6733 = vmatpush1.msra.mxu0 0.0
        %6734 = vmatprep.subr.mxu0 0.0
        %6735 = vmatpush1.msra.mxu0 0.0
        %6736 = vmatprep.subr.mxu0 0.0
        %6737 = vmatpush1.msra.mxu0 0.0
        %6738 = vmatprep.subr.mxu0 0.0
        %6739 = vmatpush1.msra.mxu0 0.0
        %6740 = vmatprep.subr.mxu0 0.0
        %6741 = vmatpush1.msra.mxu0 0.0
        %6742 = vmatprep.mubr.f32.mxu0 0.0
        %v6743 = vand.u32 %v6183, 4294901760
        %v6744 = vsub.f32 %v6183, %v6743
        %v6745 = vand.u32 %v6744, 4294901760
        %v6746 = vsub.f32 %v6744, %v6745
        %v6747 = vand.u32 %v6746, 4294901760
        %6748 = vmatmul.mubr.f32.gmra.mrb[0].mxu0 %v6747
        %v6749 = vpop.f32.mrb[0].mxu0
        %v6750 = vadd.f32 0.0, %v6749
        %v6751 = vpop.f32.mrb[0].mxu0
        %6752 = vdwg.mxu0
        %6753 = vmatprep.subr.mxu0 0.0
        %v6754 = vand.u32 %v6164, 4294901760
        %v6755 = vsub.f32 %v6164, %v6754
        %v6756 = vand.u32 %v6755, 4294901760
        %v6757 = vsub.f32 %v6755, %v6756
        %v6758 = vand.u32 %v6757, 4294901760
        %6759 = vmatpush1.msra.mxu0 %v6758
        %6760 = vmatprep.subr.mxu0 0.0
        %v6761 = vand.u32 %v6170, 4294901760
        %v6762 = vsub.f32 %v6170, %v6761
        %v6763 = vand.u32 %v6762, 4294901760
        %v6764 = vsub.f32 %v6762, %v6763
        %v6765 = vand.u32 %v6764, 4294901760
        %6766 = vmatpush1.msra.mxu0 %v6765
        %6767 = vmatprep.subr.mxu0 0.0
        %6768 = vmatpush1.msra.mxu0 0.0
        %6769 = vmatprep.subr.mxu0 0.0
        %6770 = vmatpush1.msra.mxu0 0.0
        %6771 = vmatprep.subr.mxu0 0.0
        %6772 = vmatpush1.msra.mxu0 0.0
        %6773 = vmatprep.subr.mxu0 0.0
        %6774 = vmatpush1.msra.mxu0 0.0
        %6775 = vmatprep.subr.mxu0 0.0
        %6776 = vmatpush1.msra.mxu0 0.0
        %6777 = vmatprep.subr.mxu0 0.0
        %6778 = vmatpush1.msra.mxu0 0.0
        %6779 = vmatprep.subr.mxu0 0.0
        %6780 = vmatpush1.msra.mxu0 0.0
        %6781 = vmatprep.subr.mxu0 0.0
        %6782 = vmatpush1.msra.mxu0 0.0
        %6783 = vmatprep.subr.mxu0 0.0
        %6784 = vmatpush1.msra.mxu0 0.0
        %6785 = vmatprep.subr.mxu0 0.0
        %6786 = vmatpush1.msra.mxu0 0.0
        %6787 = vmatprep.subr.mxu0 0.0
        %6788 = vmatpush1.msra.mxu0 0.0
        %6789 = vmatprep.subr.mxu0 0.0
        %6790 = vmatpush1.msra.mxu0 0.0
        %6791 = vmatprep.subr.mxu0 0.0
        %6792 = vmatpush1.msra.mxu0 0.0
        %6793 = vmatprep.subr.mxu0 0.0
        %6794 = vmatpush1.msra.mxu0 0.0
        %6795 = vmatprep.subr.mxu0 0.0
        %6796 = vmatpush1.msra.mxu0 0.0
        %6797 = vmatprep.subr.mxu0 0.0
        %6798 = vmatpush1.msra.mxu0 0.0
        %6799 = vmatprep.subr.mxu0 0.0
        %6800 = vmatpush1.msra.mxu0 0.0
        %6801 = vmatprep.subr.mxu0 0.0
        %6802 = vmatpush1.msra.mxu0 0.0
        %6803 = vmatprep.subr.mxu0 0.0
        %6804 = vmatpush1.msra.mxu0 0.0
        %6805 = vmatprep.subr.mxu0 0.0
        %6806 = vmatpush1.msra.mxu0 0.0
        %6807 = vmatprep.subr.mxu0 0.0
        %6808 = vmatpush1.msra.mxu0 0.0
        %6809 = vmatprep.subr.mxu0 0.0
        %6810 = vmatpush1.msra.mxu0 0.0
        %6811 = vmatprep.subr.mxu0 0.0
        %6812 = vmatpush1.msra.mxu0 0.0
        %6813 = vmatprep.subr.mxu0 0.0
        %6814 = vmatpush1.msra.mxu0 0.0
        %6815 = vmatprep.subr.mxu0 0.0
        %6816 = vmatpush1.msra.mxu0 0.0
        %6817 = vmatprep.subr.mxu0 0.0
        %6818 = vmatpush1.msra.mxu0 0.0
        %6819 = vmatprep.subr.mxu0 0.0
        %6820 = vmatpush1.msra.mxu0 0.0
        %6821 = vmatprep.subr.mxu0 0.0
        %6822 = vmatpush1.msra.mxu0 0.0
        %6823 = vmatprep.subr.mxu0 0.0
        %6824 = vmatpush1.msra.mxu0 0.0
        %6825 = vmatprep.subr.mxu0 0.0
        %6826 = vmatpush1.msra.mxu0 0.0
        %6827 = vmatprep.mubr.f32.mxu0 0.0
        %v6828 = vand.u32 %v6183, 4294901760
        %6829 = vmatmul.mubr.f32.gmra.mrb[0].mxu0 %v6828
        %v6830 = vpop.f32.mrb[0].mxu0
        %v6831 = vadd.f32 %v6750, %v6830
        %v6832 = vpop.f32.mrb[0].mxu0
        %6833 = vdwg.mxu0
        %6834 = vmatprep.subr.mxu0 0.0
        %v6835 = vand.u32 %v6164, 4294901760
        %v6836 = vsub.f32 %v6164, %v6835
        %6837 = vmatpush1.msra.mxu0 %v6836
        %6838 = vmatprep.subr.mxu0 0.0
        %v6839 = vand.u32 %v6170, 4294901760
        %v6840 = vsub.f32 %v6170, %v6839
        %6841 = vmatpush1.msra.mxu0 %v6840
        %6842 = vmatprep.subr.mxu0 0.0
        %6843 = vmatpush1.msra.mxu0 0.0
        %6844 = vmatprep.subr.mxu0 0.0
        %6845 = vmatpush1.msra.mxu0 0.0
        %6846 = vmatprep.subr.mxu0 0.0
        %6847 = vmatpush1.msra.mxu0 0.0
        %6848 = vmatprep.subr.mxu0 0.0
        %6849 = vmatpush1.msra.mxu0 0.0
        %6850 = vmatprep.subr.mxu0 0.0
        %6851 = vmatpush1.msra.mxu0 0.0
        %6852 = vmatprep.subr.mxu0 0.0
        %6853 = vmatpush1.msra.mxu0 0.0
        %6854 = vmatprep.subr.mxu0 0.0
        %6855 = vmatpush1.msra.mxu0 0.0
        %6856 = vmatprep.subr.mxu0 0.0
        %6857 = vmatpush1.msra.mxu0 0.0
        %6858 = vmatprep.subr.mxu0 0.0
        %6859 = vmatpush1.msra.mxu0 0.0
        %6860 = vmatprep.subr.mxu0 0.0
        %6861 = vmatpush1.msra.mxu0 0.0
        %6862 = vmatprep.subr.mxu0 0.0
        %6863 = vmatpush1.msra.mxu0 0.0
        %6864 = vmatprep.subr.mxu0 0.0
        %6865 = vmatpush1.msra.mxu0 0.0
        %6866 = vmatprep.subr.mxu0 0.0
        %6867 = vmatpush1.msra.mxu0 0.0
        %6868 = vmatprep.subr.mxu0 0.0
        %6869 = vmatpush1.msra.mxu0 0.0
        %6870 = vmatprep.subr.mxu0 0.0
        %6871 = vmatpush1.msra.mxu0 0.0
        %6872 = vmatprep.subr.mxu0 0.0
        %6873 = vmatpush1.msra.mxu0 0.0
        %6874 = vmatprep.subr.mxu0 0.0
        %6875 = vmatpush1.msra.mxu0 0.0
        %6876 = vmatprep.subr.mxu0 0.0
        %6877 = vmatpush1.msra.mxu0 0.0
        %6878 = vmatprep.subr.mxu0 0.0
        %6879 = vmatpush1.msra.mxu0 0.0
        %6880 = vmatprep.subr.mxu0 0.0
        %6881 = vmatpush1.msra.mxu0 0.0
        %6882 = vmatprep.subr.mxu0 0.0
        %6883 = vmatpush1.msra.mxu0 0.0
        %6884 = vmatprep.subr.mxu0 0.0
        %6885 = vmatpush1.msra.mxu0 0.0
        %6886 = vmatprep.subr.mxu0 0.0
        %6887 = vmatpush1.msra.mxu0 0.0
        %6888 = vmatprep.subr.mxu0 0.0
        %6889 = vmatpush1.msra.mxu0 0.0
        %6890 = vmatprep.subr.mxu0 0.0
        %6891 = vmatpush1.msra.mxu0 0.0
        %6892 = vmatprep.subr.mxu0 0.0
        %6893 = vmatpush1.msra.mxu0 0.0
        %6894 = vmatprep.subr.mxu0 0.0
        %6895 = vmatpush1.msra.mxu0 0.0
        %6896 = vmatprep.subr.mxu0 0.0
        %6897 = vmatpush1.msra.mxu0 0.0
        %6898 = vmatprep.subr.mxu0 0.0
        %6899 = vmatpush1.msra.mxu0 0.0
        %6900 = vmatprep.subr.mxu0 0.0
        %6901 = vmatpush1.msra.mxu0 0.0
        %6902 = vmatprep.mubr.f32.mxu0 0.0
        %v6903 = vand.u32 %v6183, 4294901760
        %v6904 = vsub.f32 %v6183, %v6903
        %6905 = vmatmul.mubr.f32.gmra.mrb[0].mxu0 %v6904
        %v6906 = vpop.f32.mrb[0].mxu0
        %v6907 = vadd.f32 %v6831, %v6906
        %v6908 = vpop.f32.mrb[0].mxu0
        %6909 = vdwg.mxu0
        %6910 = vmatprep.subr.mxu0 0.0
        %v6911 = vand.u32 %v6164, 4294901760
        %6912 = vmatpush1.msra.mxu0 %v6911
        %6913 = vmatprep.subr.mxu0 0.0
        %v6914 = vand.u32 %v6170, 4294901760
        %6915 = vmatpush1.msra.mxu0 %v6914
        %6916 = vmatprep.subr.mxu0 0.0
        %6917 = vmatpush1.msra.mxu0 0.0
        %6918 = vmatprep.subr.mxu0 0.0
        %6919 = vmatpush1.msra.mxu0 0.0
        %6920 = vmatprep.subr.mxu0 0.0
        %6921 = vmatpush1.msra.mxu0 0.0
        %6922 = vmatprep.subr.mxu0 0.0
        %6923 = vmatpush1.msra.mxu0 0.0
        %6924 = vmatprep.subr.mxu0 0.0
        %6925 = vmatpush1.msra.mxu0 0.0
        %6926 = vmatprep.subr.mxu0 0.0
        %6927 = vmatpush1.msra.mxu0 0.0
        %6928 = vmatprep.subr.mxu0 0.0
        %6929 = vmatpush1.msra.mxu0 0.0
        %6930 = vmatprep.subr.mxu0 0.0
        %6931 = vmatpush1.msra.mxu0 0.0
        %6932 = vmatprep.subr.mxu0 0.0
        %6933 = vmatpush1.msra.mxu0 0.0
        %6934 = vmatprep.subr.mxu0 0.0
        %6935 = vmatpush1.msra.mxu0 0.0
        %6936 = vmatprep.subr.mxu0 0.0
        %6937 = vmatpush1.msra.mxu0 0.0
        %6938 = vmatprep.subr.mxu0 0.0
        %6939 = vmatpush1.msra.mxu0 0.0
        %6940 = vmatprep.subr.mxu0 0.0
        %6941 = vmatpush1.msra.mxu0 0.0
        %6942 = vmatprep.subr.mxu0 0.0
        %6943 = vmatpush1.msra.mxu0 0.0
        %6944 = vmatprep.subr.mxu0 0.0
        %6945 = vmatpush1.msra.mxu0 0.0
        %6946 = vmatprep.subr.mxu0 0.0
        %6947 = vmatpush1.msra.mxu0 0.0
        %6948 = vmatprep.subr.mxu0 0.0
        %6949 = vmatpush1.msra.mxu0 0.0
        %6950 = vmatprep.subr.mxu0 0.0
        %6951 = vmatpush1.msra.mxu0 0.0
        %6952 = vmatprep.subr.mxu0 0.0
        %6953 = vmatpush1.msra.mxu0 0.0
        %6954 = vmatprep.subr.mxu0 0.0
        %6955 = vmatpush1.msra.mxu0 0.0
        %6956 = vmatprep.subr.mxu0 0.0
        %6957 = vmatpush1.msra.mxu0 0.0
        %6958 = vmatprep.subr.mxu0 0.0
        %6959 = vmatpush1.msra.mxu0 0.0
        %6960 = vmatprep.subr.mxu0 0.0
        %6961 = vmatpush1.msra.mxu0 0.0
        %6962 = vmatprep.subr.mxu0 0.0
        %6963 = vmatpush1.msra.mxu0 0.0
        %6964 = vmatprep.subr.mxu0 0.0
        %6965 = vmatpush1.msra.mxu0 0.0
        %6966 = vmatprep.subr.mxu0 0.0
        %6967 = vmatpush1.msra.mxu0 0.0
        %6968 = vmatprep.subr.mxu0 0.0
        %6969 = vmatpush1.msra.mxu0 0.0
        %6970 = vmatprep.subr.mxu0 0.0
        %6971 = vmatpush1.msra.mxu0 0.0
        %6972 = vmatprep.subr.mxu0 0.0
        %6973 = vmatpush1.msra.mxu0 0.0
        %6974 = vmatprep.subr.mxu0 0.0
        %6975 = vmatpush1.msra.mxu0 0.0
        %6976 = vmatprep.mubr.f32.mxu0 0.0
        %v6977 = vand.u32 %v6183, 4294901760
        %v6978 = vsub.f32 %v6183, %v6977
        %v6979 = vand.u32 %v6978, 4294901760
        %6980 = vmatmul.mubr.f32.gmra.mrb[0].mxu0 %v6979
        %v6981 = vpop.f32.mrb[0].mxu0
        %v6982 = vadd.f32 %v6907, %v6981
        %v6983 = vpop.f32.mrb[0].mxu0
        %6984 = vdwg.mxu0
        %6985 = vmatprep.subr.mxu0 0.0
        %v6986 = vand.u32 %v6164, 4294901760
        %v6987 = vsub.f32 %v6164, %v6986
        %v6988 = vand.u32 %v6987, 4294901760
        %6989 = vmatpush1.msra.mxu0 %v6988
        %6990 = vmatprep.subr.mxu0 0.0
        %v6991 = vand.u32 %v6170, 4294901760
        %v6992 = vsub.f32 %v6170, %v6991
        %v6993 = vand.u32 %v6992, 4294901760
        %6994 = vmatpush1.msra.mxu0 %v6993
        %6995 = vmatprep.subr.mxu0 0.0
        %6996 = vmatpush1.msra.mxu0 0.0
        %6997 = vmatprep.subr.mxu0 0.0
        %6998 = vmatpush1.msra.mxu0 0.0
        %6999 = vmatprep.subr.mxu0 0.0
        %7000 = vmatpush1.msra.mxu0 0.0
        %7001 = vmatprep.subr.mxu0 0.0
        %7002 = vmatpush1.msra.mxu0 0.0
        %7003 = vmatprep.subr.mxu0 0.0
        %7004 = vmatpush1.msra.mxu0 0.0
        %7005 = vmatprep.subr.mxu0 0.0
        %7006 = vmatpush1.msra.mxu0 0.0
        %7007 = vmatprep.subr.mxu0 0.0
        %7008 = vmatpush1.msra.mxu0 0.0
        %7009 = vmatprep.subr.mxu0 0.0
        %7010 = vmatpush1.msra.mxu0 0.0
        %7011 = vmatprep.subr.mxu0 0.0
        %7012 = vmatpush1.msra.mxu0 0.0
        %7013 = vmatprep.subr.mxu0 0.0
        %7014 = vmatpush1.msra.mxu0 0.0
        %7015 = vmatprep.subr.mxu0 0.0
        %7016 = vmatpush1.msra.mxu0 0.0
        %7017 = vmatprep.subr.mxu0 0.0
        %7018 = vmatpush1.msra.mxu0 0.0
        %7019 = vmatprep.subr.mxu0 0.0
        %7020 = vmatpush1.msra.mxu0 0.0
        %7021 = vmatprep.subr.mxu0 0.0
        %7022 = vmatpush1.msra.mxu0 0.0
        %7023 = vmatprep.subr.mxu0 0.0
        %7024 = vmatpush1.msra.mxu0 0.0
        %7025 = vmatprep.subr.mxu0 0.0
        %7026 = vmatpush1.msra.mxu0 0.0
        %7027 = vmatprep.subr.mxu0 0.0
        %7028 = vmatpush1.msra.mxu0 0.0
        %7029 = vmatprep.subr.mxu0 0.0
        %7030 = vmatpush1.msra.mxu0 0.0
        %7031 = vmatprep.subr.mxu0 0.0
        %7032 = vmatpush1.msra.mxu0 0.0
        %7033 = vmatprep.subr.mxu0 0.0
        %7034 = vmatpush1.msra.mxu0 0.0
        %7035 = vmatprep.subr.mxu0 0.0
        %7036 = vmatpush1.msra.mxu0 0.0
        %7037 = vmatprep.subr.mxu0 0.0
        %7038 = vmatpush1.msra.mxu0 0.0
        %7039 = vmatprep.subr.mxu0 0.0
        %7040 = vmatpush1.msra.mxu0 0.0
        %7041 = vmatprep.subr.mxu0 0.0
        %7042 = vmatpush1.msra.mxu0 0.0
        %7043 = vmatprep.subr.mxu0 0.0
        %7044 = vmatpush1.msra.mxu0 0.0
        %7045 = vmatprep.subr.mxu0 0.0
        %7046 = vmatpush1.msra.mxu0 0.0
        %7047 = vmatprep.subr.mxu0 0.0
        %7048 = vmatpush1.msra.mxu0 0.0
        %7049 = vmatprep.subr.mxu0 0.0
        %7050 = vmatpush1.msra.mxu0 0.0
        %7051 = vmatprep.subr.mxu0 0.0
        %7052 = vmatpush1.msra.mxu0 0.0
        %7053 = vmatprep.subr.mxu0 0.0
        %7054 = vmatpush1.msra.mxu0 0.0
        %7055 = vmatprep.mubr.f32.mxu0 0.0
        %v7056 = vand.u32 %v6183, 4294901760
        %7057 = vmatmul.mubr.f32.gmra.mrb[0].mxu0 %v7056
        %v7058 = vpop.f32.mrb[0].mxu0
        %v7059 = vadd.f32 %v6982, %v7058
        %v7060 = vpop.f32.mrb[0].mxu0
        %7061 = vdwg.mxu0
        %7062 = vmatprep.subr.mxu0 0.0
        %v7063 = vand.u32 %v6164, 4294901760
        %7064 = vmatpush1.msra.mxu0 %v7063
        %7065 = vmatprep.subr.mxu0 0.0
        %v7066 = vand.u32 %v6170, 4294901760
        %7067 = vmatpush1.msra.mxu0 %v7066
        %7068 = vmatprep.subr.mxu0 0.0
        %7069 = vmatpush1.msra.mxu0 0.0
        %7070 = vmatprep.subr.mxu0 0.0
        %7071 = vmatpush1.msra.mxu0 0.0
        %7072 = vmatprep.subr.mxu0 0.0
        %7073 = vmatpush1.msra.mxu0 0.0
        %7074 = vmatprep.subr.mxu0 0.0
        %7075 = vmatpush1.msra.mxu0 0.0
        %7076 = vmatprep.subr.mxu0 0.0
        %7077 = vmatpush1.msra.mxu0 0.0
        %7078 = vmatprep.subr.mxu0 0.0
        %7079 = vmatpush1.msra.mxu0 0.0
        %7080 = vmatprep.subr.mxu0 0.0
        %7081 = vmatpush1.msra.mxu0 0.0
        %7082 = vmatprep.subr.mxu0 0.0
        %7083 = vmatpush1.msra.mxu0 0.0
        %7084 = vmatprep.subr.mxu0 0.0
        %7085 = vmatpush1.msra.mxu0 0.0
        %7086 = vmatprep.subr.mxu0 0.0
        %7087 = vmatpush1.msra.mxu0 0.0
        %7088 = vmatprep.subr.mxu0 0.0
        %7089 = vmatpush1.msra.mxu0 0.0
        %7090 = vmatprep.subr.mxu0 0.0
        %7091 = vmatpush1.msra.mxu0 0.0
        %7092 = vmatprep.subr.mxu0 0.0
        %7093 = vmatpush1.msra.mxu0 0.0
        %7094 = vmatprep.subr.mxu0 0.0
        %7095 = vmatpush1.msra.mxu0 0.0
        %7096 = vmatprep.subr.mxu0 0.0
        %7097 = vmatpush1.msra.mxu0 0.0
        %7098 = vmatprep.subr.mxu0 0.0
        %7099 = vmatpush1.msra.mxu0 0.0
        %7100 = vmatprep.subr.mxu0 0.0
        %7101 = vmatpush1.msra.mxu0 0.0
        %7102 = vmatprep.subr.mxu0 0.0
        %7103 = vmatpush1.msra.mxu0 0.0
        %7104 = vmatprep.subr.mxu0 0.0
        %7105 = vmatpush1.msra.mxu0 0.0
        %7106 = vmatprep.subr.mxu0 0.0
        %7107 = vmatpush1.msra.mxu0 0.0
        %7108 = vmatprep.subr.mxu0 0.0
        %7109 = vmatpush1.msra.mxu0 0.0
        %7110 = vmatprep.subr.mxu0 0.0
        %7111 = vmatpush1.msra.mxu0 0.0
        %7112 = vmatprep.subr.mxu0 0.0
        %7113 = vmatpush1.msra.mxu0 0.0
        %7114 = vmatprep.subr.mxu0 0.0
        %7115 = vmatpush1.msra.mxu0 0.0
        %7116 = vmatprep.subr.mxu0 0.0
        %7117 = vmatpush1.msra.mxu0 0.0
        %7118 = vmatprep.subr.mxu0 0.0
        %7119 = vmatpush1.msra.mxu0 0.0
        %7120 = vmatprep.subr.mxu0 0.0
        %7121 = vmatpush1.msra.mxu0 0.0
        %7122 = vmatprep.subr.mxu0 0.0
        %7123 = vmatpush1.msra.mxu0 0.0
        %7124 = vmatprep.subr.mxu0 0.0
        %7125 = vmatpush1.msra.mxu0 0.0
        %7126 = vmatprep.subr.mxu0 0.0
        %7127 = vmatpush1.msra.mxu0 0.0
        %7128 = vmatprep.mubr.f32.mxu0 0.0
        %v7129 = vand.u32 %v6183, 4294901760
        %7130 = vmatmul.mubr.f32.gmra.mrb[0].mxu0 %v7129
        %v7131 = vpop.f32.mrb[0].mxu0
        %v7132 = vadd.f32 %v7059, %v7131
        %v7133 = vpop.f32.mrb[0].mxu0
        %7134 = vdwg.mxu0
        %v7135 = vadd.f32 %v6154, %v6672
        %v7136 = vadd.f32 %v6155, %v6674
        %v7137 = vadd.f32 %v6156, %v7132
        %s7138 = scalar_lea.vmem [#allocation5], 56
        %v7139 = vld [vmem:[%s7138] sm:$0xff]
        %7140 = vrot.lane.b32.xlu0 %v288, 91
        %v7141 = vpop.permute.xlu0 %7140
        %7142 = vrot.lane.b32.xlu0 %v289, 91
        %v7143 = vpop.permute.xlu0 %7142
        %7144 = vrot.lane.b32.xlu0 %v290, 91
        %v7145 = vpop.permute.xlu0 %7144
        %7146 = vrot.lane.b32.xlu0 %v291, 91
        %v7147 = vpop.permute.xlu0 %7146
        %7148 = vrot.lane.b32.xlu0 %v292, 91
        %v7149 = vpop.permute.xlu0 %7148
        %7150 = vrot.lane.b32.xlu0 %v293, 91
        %v7151 = vpop.permute.xlu0 %7150
        %vm7152 = vcmask 744448
        %v7153 = vsel %vm7152, %v7141, %v7143
        %v7154 = vsel %vm7152, %v7143, %v7145
        %v7155 = vsel %vm7152, %v7147, %v7149
        %v7156 = vsel %vm7152, %v7149, %v7151
        %v7164 = vsel %vm326, %v7139, 0
        %v7166 = vand.u32 %v7154, 4294901760
        %7167 = vmatprep.subr.mxu0 %v7166
        %v7168 = vand.u32 %v7153, 4294901760
        %7169 = vmatpush1.msra.mxu0 %v7168
        %v7170 = vand.u32 %v7156, 4294901760
        %7171 = vmatprep.subr.mxu0 %v7170
        %v7172 = vand.u32 %v7155, 4294901760
        %7173 = vmatpush1.msra.mxu0 %v7172
        %7174 = vmatprep.subr.mxu0 0.0
        %7175 = vmatpush1.msra.mxu0 0.0
        %7176 = vmatprep.subr.mxu0 0.0
        %7177 = vmatpush1.msra.mxu0 0.0
        %7178 = vmatprep.subr.mxu0 0.0
        %7179 = vmatpush1.msra.mxu0 0.0
        %7180 = vmatprep.subr.mxu0 0.0
        %7181 = vmatpush1.msra.mxu0 0.0
        %7182 = vmatprep.subr.mxu0 0.0
        %7183 = vmatpush1.msra.mxu0 0.0
        %7184 = vmatprep.subr.mxu0 0.0
        %7185 = vmatpush1.msra.mxu0 0.0
        %7186 = vmatprep.subr.mxu0 0.0
        %7187 = vmatpush1.msra.mxu0 0.0
        %7188 = vmatprep.subr.mxu0 0.0
        %7189 = vmatpush1.msra.mxu0 0.0
        %7190 = vmatprep.subr.mxu0 0.0
        %7191 = vmatpush1.msra.mxu0 0.0
        %7192 = vmatprep.subr.mxu0 0.0
        %7193 = vmatpush1.msra.mxu0 0.0
        %7194 = vmatprep.subr.mxu0 0.0
        %7195 = vmatpush1.msra.mxu0 0.0
        %7196 = vmatprep.subr.mxu0 0.0
        %7197 = vmatpush1.msra.mxu0 0.0
        %7198 = vmatprep.subr.mxu0 0.0
        %7199 = vmatpush1.msra.mxu0 0.0
        %7200 = vmatprep.subr.mxu0 0.0
        %7201 = vmatpush1.msra.mxu0 0.0
        %7202 = vmatprep.subr.mxu0 0.0
        %7203 = vmatpush1.msra.mxu0 0.0
        %7204 = vmatprep.subr.mxu0 0.0
        %7205 = vmatpush1.msra.mxu0 0.0
        %7206 = vmatprep.subr.mxu0 0.0
        %7207 = vmatpush1.msra.mxu0 0.0
        %7208 = vmatprep.subr.mxu0 0.0
        %7209 = vmatpush1.msra.mxu0 0.0
        %7210 = vmatprep.subr.mxu0 0.0
        %7211 = vmatpush1.msra.mxu0 0.0
        %7212 = vmatprep.subr.mxu0 0.0
        %7213 = vmatpush1.msra.mxu0 0.0
        %7214 = vmatprep.subr.mxu0 0.0
        %7215 = vmatpush1.msra.mxu0 0.0
        %7216 = vmatprep.subr.mxu0 0.0
        %7217 = vmatpush1.msra.mxu0 0.0
        %7218 = vmatprep.subr.mxu0 0.0
        %7219 = vmatpush1.msra.mxu0 0.0
        %7220 = vmatprep.subr.mxu0 0.0
        %7221 = vmatpush1.msra.mxu0 0.0
        %7222 = vmatprep.subr.mxu0 0.0
        %7223 = vmatpush1.msra.mxu0 0.0
        %7224 = vmatprep.subr.mxu0 0.0
        %7225 = vmatpush1.msra.mxu0 0.0
        %7226 = vmatprep.subr.mxu0 0.0
        %7227 = vmatpush1.msra.mxu0 0.0
        %7228 = vmatprep.subr.mxu0 0.0
        %7229 = vmatpush1.msra.mxu0 0.0
        %7230 = vmatprep.subr.mxu0 0.0
        %7231 = vmatpush1.msra.mxu0 0.0
        %7232 = vmatprep.subr.mxu0 0.0
        %7233 = vmatpush1.msra.mxu0 0.0
        %7234 = vmatprep.mubr.f32.mxu0 0.0
        %v7235 = vand.u32 %v7164, 4294901760
        %v7236 = vsub.f32 %v7164, %v7235
        %v7237 = vand.u32 %v7236, 4294901760
        %v7238 = vsub.f32 %v7236, %v7237
        %v7239 = vand.u32 %v7238, 4294901760
        %7240 = vmatmul.mubr.f32.gmra.mrb[0].mxu0 %v7239
        %v7241 = vpop.f32.mrb[0].mxu0
        %v7242 = vadd.f32 0.0, %v7241
        %v7243 = vpop.f32.mrb[0].mxu0
        %v7244 = vadd.f32 0.0, %v7243
        %7245 = vdwg.mxu0
        %v7246 = vand.u32 %v7154, 4294901760
        %v7247 = vsub.f32 %v7154, %v7246
        %v7248 = vand.u32 %v7247, 4294901760
        %v7249 = vsub.f32 %v7247, %v7248
        %v7250 = vand.u32 %v7249, 4294901760
        %7251 = vmatprep.subr.mxu0 %v7250
        %v7252 = vand.u32 %v7153, 4294901760
        %v7253 = vsub.f32 %v7153, %v7252
        %v7254 = vand.u32 %v7253, 4294901760
        %v7255 = vsub.f32 %v7253, %v7254
        %v7256 = vand.u32 %v7255, 4294901760
        %7257 = vmatpush1.msra.mxu0 %v7256
        %v7258 = vand.u32 %v7156, 4294901760
        %v7259 = vsub.f32 %v7156, %v7258
        %v7260 = vand.u32 %v7259, 4294901760
        %v7261 = vsub.f32 %v7259, %v7260
        %v7262 = vand.u32 %v7261, 4294901760
        %7263 = vmatprep.subr.mxu0 %v7262
        %v7264 = vand.u32 %v7155, 4294901760
        %v7265 = vsub.f32 %v7155, %v7264
        %v7266 = vand.u32 %v7265, 4294901760
        %v7267 = vsub.f32 %v7265, %v7266
        %v7268 = vand.u32 %v7267, 4294901760
        %7269 = vmatpush1.msra.mxu0 %v7268
        %7270 = vmatprep.subr.mxu0 0.0
        %7271 = vmatpush1.msra.mxu0 0.0
        %7272 = vmatprep.subr.mxu0 0.0
        %7273 = vmatpush1.msra.mxu0 0.0
        %7274 = vmatprep.subr.mxu0 0.0
        %7275 = vmatpush1.msra.mxu0 0.0
        %7276 = vmatprep.subr.mxu0 0.0
        %7277 = vmatpush1.msra.mxu0 0.0
        %7278 = vmatprep.subr.mxu0 0.0
        %7279 = vmatpush1.msra.mxu0 0.0
        %7280 = vmatprep.subr.mxu0 0.0
        %7281 = vmatpush1.msra.mxu0 0.0
        %7282 = vmatprep.subr.mxu0 0.0
        %7283 = vmatpush1.msra.mxu0 0.0
        %7284 = vmatprep.subr.mxu0 0.0
        %7285 = vmatpush1.msra.mxu0 0.0
        %7286 = vmatprep.subr.mxu0 0.0
        %7287 = vmatpush1.msra.mxu0 0.0
        %7288 = vmatprep.subr.mxu0 0.0
        %7289 = vmatpush1.msra.mxu0 0.0
        %7290 = vmatprep.subr.mxu0 0.0
        %7291 = vmatpush1.msra.mxu0 0.0
        %7292 = vmatprep.subr.mxu0 0.0
        %7293 = vmatpush1.msra.mxu0 0.0
        %7294 = vmatprep.subr.mxu0 0.0
        %7295 = vmatpush1.msra.mxu0 0.0
        %7296 = vmatprep.subr.mxu0 0.0
        %7297 = vmatpush1.msra.mxu0 0.0
        %7298 = vmatprep.subr.mxu0 0.0
        %7299 = vmatpush1.msra.mxu0 0.0
        %7300 = vmatprep.subr.mxu0 0.0
        %7301 = vmatpush1.msra.mxu0 0.0
        %7302 = vmatprep.subr.mxu0 0.0
        %7303 = vmatpush1.msra.mxu0 0.0
        %7304 = vmatprep.subr.mxu0 0.0
        %7305 = vmatpush1.msra.mxu0 0.0
        %7306 = vmatprep.subr.mxu0 0.0
        %7307 = vmatpush1.msra.mxu0 0.0
        %7308 = vmatprep.subr.mxu0 0.0
        %7309 = vmatpush1.msra.mxu0 0.0
        %7310 = vmatprep.subr.mxu0 0.0
        %7311 = vmatpush1.msra.mxu0 0.0
        %7312 = vmatprep.subr.mxu0 0.0
        %7313 = vmatpush1.msra.mxu0 0.0
        %7314 = vmatprep.subr.mxu0 0.0
        %7315 = vmatpush1.msra.mxu0 0.0
        %7316 = vmatprep.subr.mxu0 0.0
        %7317 = vmatpush1.msra.mxu0 0.0
        %7318 = vmatprep.subr.mxu0 0.0
        %7319 = vmatpush1.msra.mxu0 0.0
        %7320 = vmatprep.subr.mxu0 0.0
        %7321 = vmatpush1.msra.mxu0 0.0
        %7322 = vmatprep.subr.mxu0 0.0
        %7323 = vmatpush1.msra.mxu0 0.0
        %7324 = vmatprep.subr.mxu0 0.0
        %7325 = vmatpush1.msra.mxu0 0.0
        %7326 = vmatprep.subr.mxu0 0.0
        %7327 = vmatpush1.msra.mxu0 0.0
        %7328 = vmatprep.subr.mxu0 0.0
        %7329 = vmatpush1.msra.mxu0 0.0
        %7330 = vmatprep.mubr.f32.mxu0 0.0
        %v7331 = vand.u32 %v7164, 4294901760
        %7332 = vmatmul.mubr.f32.gmra.mrb[0].mxu0 %v7331
        %v7333 = vpop.f32.mrb[0].mxu0
        %v7334 = vadd.f32 %v7242, %v7333
        %v7335 = vpop.f32.mrb[0].mxu0
        %v7336 = vadd.f32 %v7244, %v7335
        %7337 = vdwg.mxu0
        %v7338 = vand.u32 %v7154, 4294901760
        %v7339 = vsub.f32 %v7154, %v7338
        %7340 = vmatprep.subr.mxu0 %v7339
        %v7341 = vand.u32 %v7153, 4294901760
        %v7342 = vsub.f32 %v7153, %v7341
        %7343 = vmatpush1.msra.mxu0 %v7342
        %v7344 = vand.u32 %v7156, 4294901760
        %v7345 = vsub.f32 %v7156, %v7344
        %7346 = vmatprep.subr.mxu0 %v7345
        %v7347 = vand.u32 %v7155, 4294901760
        %v7348 = vsub.f32 %v7155, %v7347
        %7349 = vmatpush1.msra.mxu0 %v7348
        %7350 = vmatprep.subr.mxu0 0.0
        %7351 = vmatpush1.msra.mxu0 0.0
        %7352 = vmatprep.subr.mxu0 0.0
        %7353 = vmatpush1.msra.mxu0 0.0
        %7354 = vmatprep.subr.mxu0 0.0
        %7355 = vmatpush1.msra.mxu0 0.0
        %7356 = vmatprep.subr.mxu0 0.0
        %7357 = vmatpush1.msra.mxu0 0.0
        %7358 = vmatprep.subr.mxu0 0.0
        %7359 = vmatpush1.msra.mxu0 0.0
        %7360 = vmatprep.subr.mxu0 0.0
        %7361 = vmatpush1.msra.mxu0 0.0
        %7362 = vmatprep.subr.mxu0 0.0
        %7363 = vmatpush1.msra.mxu0 0.0
        %7364 = vmatprep.subr.mxu0 0.0
        %7365 = vmatpush1.msra.mxu0 0.0
        %7366 = vmatprep.subr.mxu0 0.0
        %7367 = vmatpush1.msra.mxu0 0.0
        %7368 = vmatprep.subr.mxu0 0.0
        %7369 = vmatpush1.msra.mxu0 0.0
        %7370 = vmatprep.subr.mxu0 0.0
        %7371 = vmatpush1.msra.mxu0 0.0
        %7372 = vmatprep.subr.mxu0 0.0
        %7373 = vmatpush1.msra.mxu0 0.0
        %7374 = vmatprep.subr.mxu0 0.0
        %7375 = vmatpush1.msra.mxu0 0.0
        %7376 = vmatprep.subr.mxu0 0.0
        %7377 = vmatpush1.msra.mxu0 0.0
        %7378 = vmatprep.subr.mxu0 0.0
        %7379 = vmatpush1.msra.mxu0 0.0
        %7380 = vmatprep.subr.mxu0 0.0
        %7381 = vmatpush1.msra.mxu0 0.0
        %7382 = vmatprep.subr.mxu0 0.0
        %7383 = vmatpush1.msra.mxu0 0.0
        %7384 = vmatprep.subr.mxu0 0.0
        %7385 = vmatpush1.msra.mxu0 0.0
        %7386 = vmatprep.subr.mxu0 0.0
        %7387 = vmatpush1.msra.mxu0 0.0
        %7388 = vmatprep.subr.mxu0 0.0
        %7389 = vmatpush1.msra.mxu0 0.0
        %7390 = vmatprep.subr.mxu0 0.0
        %7391 = vmatpush1.msra.mxu0 0.0
        %7392 = vmatprep.subr.mxu0 0.0
        %7393 = vmatpush1.msra.mxu0 0.0
        %7394 = vmatprep.subr.mxu0 0.0
        %7395 = vmatpush1.msra.mxu0 0.0
        %7396 = vmatprep.subr.mxu0 0.0
        %7397 = vmatpush1.msra.mxu0 0.0
        %7398 = vmatprep.subr.mxu0 0.0
        %7399 = vmatpush1.msra.mxu0 0.0
        %7400 = vmatprep.subr.mxu0 0.0
        %7401 = vmatpush1.msra.mxu0 0.0
        %7402 = vmatprep.subr.mxu0 0.0
        %7403 = vmatpush1.msra.mxu0 0.0
        %7404 = vmatprep.subr.mxu0 0.0
        %7405 = vmatpush1.msra.mxu0 0.0
        %7406 = vmatprep.subr.mxu0 0.0
        %7407 = vmatpush1.msra.mxu0 0.0
        %7408 = vmatprep.subr.mxu0 0.0
        %7409 = vmatpush1.msra.mxu0 0.0
        %7410 = vmatprep.mubr.f32.mxu0 0.0
        %v7411 = vand.u32 %v7164, 4294901760
        %v7412 = vsub.f32 %v7164, %v7411
        %7413 = vmatmul.mubr.f32.gmra.mrb[0].mxu0 %v7412
        %v7414 = vpop.f32.mrb[0].mxu0
        %v7415 = vadd.f32 %v7334, %v7414
        %v7416 = vpop.f32.mrb[0].mxu0
        %v7417 = vadd.f32 %v7336, %v7416
        %7418 = vdwg.mxu0
        %v7419 = vand.u32 %v7154, 4294901760
        %7420 = vmatprep.subr.mxu0 %v7419
        %v7421 = vand.u32 %v7153, 4294901760
        %7422 = vmatpush1.msra.mxu0 %v7421
        %v7423 = vand.u32 %v7156, 4294901760
        %7424 = vmatprep.subr.mxu0 %v7423
        %v7425 = vand.u32 %v7155, 4294901760
        %7426 = vmatpush1.msra.mxu0 %v7425
        %7427 = vmatprep.subr.mxu0 0.0
        %7428 = vmatpush1.msra.mxu0 0.0
        %7429 = vmatprep.subr.mxu0 0.0
        %7430 = vmatpush1.msra.mxu0 0.0
        %7431 = vmatprep.subr.mxu0 0.0
        %7432 = vmatpush1.msra.mxu0 0.0
        %7433 = vmatprep.subr.mxu0 0.0
        %7434 = vmatpush1.msra.mxu0 0.0
        %7435 = vmatprep.subr.mxu0 0.0
        %7436 = vmatpush1.msra.mxu0 0.0
        %7437 = vmatprep.subr.mxu0 0.0
        %7438 = vmatpush1.msra.mxu0 0.0
        %7439 = vmatprep.subr.mxu0 0.0
        %7440 = vmatpush1.msra.mxu0 0.0
        %7441 = vmatprep.subr.mxu0 0.0
        %7442 = vmatpush1.msra.mxu0 0.0
        %7443 = vmatprep.subr.mxu0 0.0
        %7444 = vmatpush1.msra.mxu0 0.0
        %7445 = vmatprep.subr.mxu0 0.0
        %7446 = vmatpush1.msra.mxu0 0.0
        %7447 = vmatprep.subr.mxu0 0.0
        %7448 = vmatpush1.msra.mxu0 0.0
        %7449 = vmatprep.subr.mxu0 0.0
        %7450 = vmatpush1.msra.mxu0 0.0
        %7451 = vmatprep.subr.mxu0 0.0
        %7452 = vmatpush1.msra.mxu0 0.0
        %7453 = vmatprep.subr.mxu0 0.0
        %7454 = vmatpush1.msra.mxu0 0.0
        %7455 = vmatprep.subr.mxu0 0.0
        %7456 = vmatpush1.msra.mxu0 0.0
        %7457 = vmatprep.subr.mxu0 0.0
        %7458 = vmatpush1.msra.mxu0 0.0
        %7459 = vmatprep.subr.mxu0 0.0
        %7460 = vmatpush1.msra.mxu0 0.0
        %7461 = vmatprep.subr.mxu0 0.0
        %7462 = vmatpush1.msra.mxu0 0.0
        %7463 = vmatprep.subr.mxu0 0.0
        %7464 = vmatpush1.msra.mxu0 0.0
        %7465 = vmatprep.subr.mxu0 0.0
        %7466 = vmatpush1.msra.mxu0 0.0
        %7467 = vmatprep.subr.mxu0 0.0
        %7468 = vmatpush1.msra.mxu0 0.0
        %7469 = vmatprep.subr.mxu0 0.0
        %7470 = vmatpush1.msra.mxu0 0.0
        %7471 = vmatprep.subr.mxu0 0.0
        %7472 = vmatpush1.msra.mxu0 0.0
        %7473 = vmatprep.subr.mxu0 0.0
        %7474 = vmatpush1.msra.mxu0 0.0
        %7475 = vmatprep.subr.mxu0 0.0
        %7476 = vmatpush1.msra.mxu0 0.0
        %7477 = vmatprep.subr.mxu0 0.0
        %7478 = vmatpush1.msra.mxu0 0.0
        %7479 = vmatprep.subr.mxu0 0.0
        %7480 = vmatpush1.msra.mxu0 0.0
        %7481 = vmatprep.subr.mxu0 0.0
        %7482 = vmatpush1.msra.mxu0 0.0
        %7483 = vmatprep.subr.mxu0 0.0
        %7484 = vmatpush1.msra.mxu0 0.0
        %7485 = vmatprep.subr.mxu0 0.0
        %7486 = vmatpush1.msra.mxu0 0.0
        %7487 = vmatprep.mubr.f32.mxu0 0.0
        %v7488 = vand.u32 %v7164, 4294901760
        %v7489 = vsub.f32 %v7164, %v7488
        %v7490 = vand.u32 %v7489, 4294901760
        %7491 = vmatmul.mubr.f32.gmra.mrb[0].mxu0 %v7490
        %v7492 = vpop.f32.mrb[0].mxu0
        %v7493 = vadd.f32 %v7415, %v7492
        %v7494 = vpop.f32.mrb[0].mxu0
        %v7495 = vadd.f32 %v7417, %v7494
        %7496 = vdwg.mxu0
        %v7497 = vand.u32 %v7154, 4294901760
        %v7498 = vsub.f32 %v7154, %v7497
        %v7499 = vand.u32 %v7498, 4294901760
        %7500 = vmatprep.subr.mxu0 %v7499
        %v7501 = vand.u32 %v7153, 4294901760
        %v7502 = vsub.f32 %v7153, %v7501
        %v7503 = vand.u32 %v7502, 4294901760
        %7504 = vmatpush1.msra.mxu0 %v7503
        %v7505 = vand.u32 %v7156, 4294901760
        %v7506 = vsub.f32 %v7156, %v7505
        %v7507 = vand.u32 %v7506, 4294901760
        %7508 = vmatprep.subr.mxu0 %v7507
        %v7509 = vand.u32 %v7155, 4294901760
        %v7510 = vsub.f32 %v7155, %v7509
        %v7511 = vand.u32 %v7510, 4294901760
        %7512 = vmatpush1.msra.mxu0 %v7511
        %7513 = vmatprep.subr.mxu0 0.0
        %7514 = vmatpush1.msra.mxu0 0.0
        %7515 = vmatprep.subr.mxu0 0.0
        %7516 = vmatpush1.msra.mxu0 0.0
        %7517 = vmatprep.subr.mxu0 0.0
        %7518 = vmatpush1.msra.mxu0 0.0
        %7519 = vmatprep.subr.mxu0 0.0
        %7520 = vmatpush1.msra.mxu0 0.0
        %7521 = vmatprep.subr.mxu0 0.0
        %7522 = vmatpush1.msra.mxu0 0.0
        %7523 = vmatprep.subr.mxu0 0.0
        %7524 = vmatpush1.msra.mxu0 0.0
        %7525 = vmatprep.subr.mxu0 0.0
        %7526 = vmatpush1.msra.mxu0 0.0
        %7527 = vmatprep.subr.mxu0 0.0
        %7528 = vmatpush1.msra.mxu0 0.0
        %7529 = vmatprep.subr.mxu0 0.0
        %7530 = vmatpush1.msra.mxu0 0.0
        %7531 = vmatprep.subr.mxu0 0.0
        %7532 = vmatpush1.msra.mxu0 0.0
        %7533 = vmatprep.subr.mxu0 0.0
        %7534 = vmatpush1.msra.mxu0 0.0
        %7535 = vmatprep.subr.mxu0 0.0
        %7536 = vmatpush1.msra.mxu0 0.0
        %7537 = vmatprep.subr.mxu0 0.0
        %7538 = vmatpush1.msra.mxu0 0.0
        %7539 = vmatprep.subr.mxu0 0.0
        %7540 = vmatpush1.msra.mxu0 0.0
        %7541 = vmatprep.subr.mxu0 0.0
        %7542 = vmatpush1.msra.mxu0 0.0
        %7543 = vmatprep.subr.mxu0 0.0
        %7544 = vmatpush1.msra.mxu0 0.0
        %7545 = vmatprep.subr.mxu0 0.0
        %7546 = vmatpush1.msra.mxu0 0.0
        %7547 = vmatprep.subr.mxu0 0.0
        %7548 = vmatpush1.msra.mxu0 0.0
        %7549 = vmatprep.subr.mxu0 0.0
        %7550 = vmatpush1.msra.mxu0 0.0
        %7551 = vmatprep.subr.mxu0 0.0
        %7552 = vmatpush1.msra.mxu0 0.0
        %7553 = vmatprep.subr.mxu0 0.0
        %7554 = vmatpush1.msra.mxu0 0.0
        %7555 = vmatprep.subr.mxu0 0.0
        %7556 = vmatpush1.msra.mxu0 0.0
        %7557 = vmatprep.subr.mxu0 0.0
        %7558 = vmatpush1.msra.mxu0 0.0
        %7559 = vmatprep.subr.mxu0 0.0
        %7560 = vmatpush1.msra.mxu0 0.0
        %7561 = vmatprep.subr.mxu0 0.0
        %7562 = vmatpush1.msra.mxu0 0.0
        %7563 = vmatprep.subr.mxu0 0.0
        %7564 = vmatpush1.msra.mxu0 0.0
        %7565 = vmatprep.subr.mxu0 0.0
        %7566 = vmatpush1.msra.mxu0 0.0
        %7567 = vmatprep.subr.mxu0 0.0
        %7568 = vmatpush1.msra.mxu0 0.0
        %7569 = vmatprep.subr.mxu0 0.0
        %7570 = vmatpush1.msra.mxu0 0.0
        %7571 = vmatprep.subr.mxu0 0.0
        %7572 = vmatpush1.msra.mxu0 0.0
        %7573 = vmatprep.mubr.f32.mxu0 0.0
        %v7574 = vand.u32 %v7164, 4294901760
        %7575 = vmatmul.mubr.f32.gmra.mrb[0].mxu0 %v7574
        %v7576 = vpop.f32.mrb[0].mxu0
        %v7577 = vadd.f32 %v7493, %v7576
        %v7578 = vpop.f32.mrb[0].mxu0
        %v7579 = vadd.f32 %v7495, %v7578
        %7580 = vdwg.mxu0
        %v7581 = vand.u32 %v7154, 4294901760
        %7582 = vmatprep.subr.mxu0 %v7581
        %v7583 = vand.u32 %v7153, 4294901760
        %7584 = vmatpush1.msra.mxu0 %v7583
        %v7585 = vand.u32 %v7156, 4294901760
        %7586 = vmatprep.subr.mxu0 %v7585
        %v7587 = vand.u32 %v7155, 4294901760
        %7588 = vmatpush1.msra.mxu0 %v7587
        %7589 = vmatprep.subr.mxu0 0.0
        %7590 = vmatpush1.msra.mxu0 0.0
        %7591 = vmatprep.subr.mxu0 0.0
        %7592 = vmatpush1.msra.mxu0 0.0
        %7593 = vmatprep.subr.mxu0 0.0
        %7594 = vmatpush1.msra.mxu0 0.0
        %7595 = vmatprep.subr.mxu0 0.0
        %7596 = vmatpush1.msra.mxu0 0.0
        %7597 = vmatprep.subr.mxu0 0.0
        %7598 = vmatpush1.msra.mxu0 0.0
        %7599 = vmatprep.subr.mxu0 0.0
        %7600 = vmatpush1.msra.mxu0 0.0
        %7601 = vmatprep.subr.mxu0 0.0
        %7602 = vmatpush1.msra.mxu0 0.0
        %7603 = vmatprep.subr.mxu0 0.0
        %7604 = vmatpush1.msra.mxu0 0.0
        %7605 = vmatprep.subr.mxu0 0.0
        %7606 = vmatpush1.msra.mxu0 0.0
        %7607 = vmatprep.subr.mxu0 0.0
        %7608 = vmatpush1.msra.mxu0 0.0
        %7609 = vmatprep.subr.mxu0 0.0
        %7610 = vmatpush1.msra.mxu0 0.0
        %7611 = vmatprep.subr.mxu0 0.0
        %7612 = vmatpush1.msra.mxu0 0.0
        %7613 = vmatprep.subr.mxu0 0.0
        %7614 = vmatpush1.msra.mxu0 0.0
        %7615 = vmatprep.subr.mxu0 0.0
        %7616 = vmatpush1.msra.mxu0 0.0
        %7617 = vmatprep.subr.mxu0 0.0
        %7618 = vmatpush1.msra.mxu0 0.0
        %7619 = vmatprep.subr.mxu0 0.0
        %7620 = vmatpush1.msra.mxu0 0.0
        %7621 = vmatprep.subr.mxu0 0.0
        %7622 = vmatpush1.msra.mxu0 0.0
        %7623 = vmatprep.subr.mxu0 0.0
        %7624 = vmatpush1.msra.mxu0 0.0
        %7625 = vmatprep.subr.mxu0 0.0
        %7626 = vmatpush1.msra.mxu0 0.0
        %7627 = vmatprep.subr.mxu0 0.0
        %7628 = vmatpush1.msra.mxu0 0.0
        %7629 = vmatprep.subr.mxu0 0.0
        %7630 = vmatpush1.msra.mxu0 0.0
        %7631 = vmatprep.subr.mxu0 0.0
        %7632 = vmatpush1.msra.mxu0 0.0
        %7633 = vmatprep.subr.mxu0 0.0
        %7634 = vmatpush1.msra.mxu0 0.0
        %7635 = vmatprep.subr.mxu0 0.0
        %7636 = vmatpush1.msra.mxu0 0.0
        %7637 = vmatprep.subr.mxu0 0.0
        %7638 = vmatpush1.msra.mxu0 0.0
        %7639 = vmatprep.subr.mxu0 0.0
        %7640 = vmatpush1.msra.mxu0 0.0
        %7641 = vmatprep.subr.mxu0 0.0
        %7642 = vmatpush1.msra.mxu0 0.0
        %7643 = vmatprep.subr.mxu0 0.0
        %7644 = vmatpush1.msra.mxu0 0.0
        %7645 = vmatprep.subr.mxu0 0.0
        %7646 = vmatpush1.msra.mxu0 0.0
        %7647 = vmatprep.subr.mxu0 0.0
        %7648 = vmatpush1.msra.mxu0 0.0
        %7649 = vmatprep.mubr.f32.mxu0 0.0
        %v7650 = vand.u32 %v7164, 4294901760
        %7651 = vmatmul.mubr.f32.gmra.mrb[0].mxu0 %v7650
        %v7652 = vpop.f32.mrb[0].mxu0
        %v7653 = vadd.f32 %v7577, %v7652
        %v7654 = vpop.f32.mrb[0].mxu0
        %v7655 = vadd.f32 %v7579, %v7654
        %7656 = vdwg.mxu0
        %7657 = vmatprep.subr.mxu0 0.0
        %v7658 = vand.u32 %v7145, 4294901760
        %7659 = vmatpush1.msra.mxu0 %v7658
        %7660 = vmatprep.subr.mxu0 0.0
        %v7661 = vand.u32 %v7151, 4294901760
        %7662 = vmatpush1.msra.mxu0 %v7661
        %7663 = vmatprep.subr.mxu0 0.0
        %7664 = vmatpush1.msra.mxu0 0.0
        %7665 = vmatprep.subr.mxu0 0.0
        %7666 = vmatpush1.msra.mxu0 0.0
        %7667 = vmatprep.subr.mxu0 0.0
        %7668 = vmatpush1.msra.mxu0 0.0
        %7669 = vmatprep.subr.mxu0 0.0
        %7670 = vmatpush1.msra.mxu0 0.0
        %7671 = vmatprep.subr.mxu0 0.0
        %7672 = vmatpush1.msra.mxu0 0.0
        %7673 = vmatprep.subr.mxu0 0.0
        %7674 = vmatpush1.msra.mxu0 0.0
        %7675 = vmatprep.subr.mxu0 0.0
        %7676 = vmatpush1.msra.mxu0 0.0
        %7677 = vmatprep.subr.mxu0 0.0
        %7678 = vmatpush1.msra.mxu0 0.0
        %7679 = vmatprep.subr.mxu0 0.0
        %7680 = vmatpush1.msra.mxu0 0.0
        %7681 = vmatprep.subr.mxu0 0.0
        %7682 = vmatpush1.msra.mxu0 0.0
        %7683 = vmatprep.subr.mxu0 0.0
        %7684 = vmatpush1.msra.mxu0 0.0
        %7685 = vmatprep.subr.mxu0 0.0
        %7686 = vmatpush1.msra.mxu0 0.0
        %7687 = vmatprep.subr.mxu0 0.0
        %7688 = vmatpush1.msra.mxu0 0.0
        %7689 = vmatprep.subr.mxu0 0.0
        %7690 = vmatpush1.msra.mxu0 0.0
        %7691 = vmatprep.subr.mxu0 0.0
        %7692 = vmatpush1.msra.mxu0 0.0
        %7693 = vmatprep.subr.mxu0 0.0
        %7694 = vmatpush1.msra.mxu0 0.0
        %7695 = vmatprep.subr.mxu0 0.0
        %7696 = vmatpush1.msra.mxu0 0.0
        %7697 = vmatprep.subr.mxu0 0.0
        %7698 = vmatpush1.msra.mxu0 0.0
        %7699 = vmatprep.subr.mxu0 0.0
        %7700 = vmatpush1.msra.mxu0 0.0
        %7701 = vmatprep.subr.mxu0 0.0
        %7702 = vmatpush1.msra.mxu0 0.0
        %7703 = vmatprep.subr.mxu0 0.0
        %7704 = vmatpush1.msra.mxu0 0.0
        %7705 = vmatprep.subr.mxu0 0.0
        %7706 = vmatpush1.msra.mxu0 0.0
        %7707 = vmatprep.subr.mxu0 0.0
        %7708 = vmatpush1.msra.mxu0 0.0
        %7709 = vmatprep.subr.mxu0 0.0
        %7710 = vmatpush1.msra.mxu0 0.0
        %7711 = vmatprep.subr.mxu0 0.0
        %7712 = vmatpush1.msra.mxu0 0.0
        %7713 = vmatprep.subr.mxu0 0.0
        %7714 = vmatpush1.msra.mxu0 0.0
        %7715 = vmatprep.subr.mxu0 0.0
        %7716 = vmatpush1.msra.mxu0 0.0
        %7717 = vmatprep.subr.mxu0 0.0
        %7718 = vmatpush1.msra.mxu0 0.0
        %7719 = vmatprep.subr.mxu0 0.0
        %7720 = vmatpush1.msra.mxu0 0.0
        %7721 = vmatprep.subr.mxu0 0.0
        %7722 = vmatpush1.msra.mxu0 0.0
        %7723 = vmatprep.mubr.f32.mxu0 0.0
        %v7724 = vand.u32 %v7164, 4294901760
        %v7725 = vsub.f32 %v7164, %v7724
        %v7726 = vand.u32 %v7725, 4294901760
        %v7727 = vsub.f32 %v7725, %v7726
        %v7728 = vand.u32 %v7727, 4294901760
        %7729 = vmatmul.mubr.f32.gmra.mrb[0].mxu0 %v7728
        %v7730 = vpop.f32.mrb[0].mxu0
        %v7731 = vadd.f32 0.0, %v7730
        %v7732 = vpop.f32.mrb[0].mxu0
        %7733 = vdwg.mxu0
        %7734 = vmatprep.subr.mxu0 0.0
        %v7735 = vand.u32 %v7145, 4294901760
        %v7736 = vsub.f32 %v7145, %v7735
        %v7737 = vand.u32 %v7736, 4294901760
        %v7738 = vsub.f32 %v7736, %v7737
        %v7739 = vand.u32 %v7738, 4294901760
        %7740 = vmatpush1.msra.mxu0 %v7739
        %7741 = vmatprep.subr.mxu0 0.0
        %v7742 = vand.u32 %v7151, 4294901760
        %v7743 = vsub.f32 %v7151, %v7742
        %v7744 = vand.u32 %v7743, 4294901760
        %v7745 = vsub.f32 %v7743, %v7744
        %v7746 = vand.u32 %v7745, 4294901760
        %7747 = vmatpush1.msra.mxu0 %v7746
        %7748 = vmatprep.subr.mxu0 0.0
        %7749 = vmatpush1.msra.mxu0 0.0
        %7750 = vmatprep.subr.mxu0 0.0
        %7751 = vmatpush1.msra.mxu0 0.0
        %7752 = vmatprep.subr.mxu0 0.0
        %7753 = vmatpush1.msra.mxu0 0.0
        %7754 = vmatprep.subr.mxu0 0.0
        %7755 = vmatpush1.msra.mxu0 0.0
        %7756 = vmatprep.subr.mxu0 0.0
        %7757 = vmatpush1.msra.mxu0 0.0
        %7758 = vmatprep.subr.mxu0 0.0
        %7759 = vmatpush1.msra.mxu0 0.0
        %7760 = vmatprep.subr.mxu0 0.0
        %7761 = vmatpush1.msra.mxu0 0.0
        %7762 = vmatprep.subr.mxu0 0.0
        %7763 = vmatpush1.msra.mxu0 0.0
        %7764 = vmatprep.subr.mxu0 0.0
        %7765 = vmatpush1.msra.mxu0 0.0
        %7766 = vmatprep.subr.mxu0 0.0
        %7767 = vmatpush1.msra.mxu0 0.0
        %7768 = vmatprep.subr.mxu0 0.0
        %7769 = vmatpush1.msra.mxu0 0.0
        %7770 = vmatprep.subr.mxu0 0.0
        %7771 = vmatpush1.msra.mxu0 0.0
        %7772 = vmatprep.subr.mxu0 0.0
        %7773 = vmatpush1.msra.mxu0 0.0
        %7774 = vmatprep.subr.mxu0 0.0
        %7775 = vmatpush1.msra.mxu0 0.0
        %7776 = vmatprep.subr.mxu0 0.0
        %7777 = vmatpush1.msra.mxu0 0.0
        %7778 = vmatprep.subr.mxu0 0.0
        %7779 = vmatpush1.msra.mxu0 0.0
        %7780 = vmatprep.subr.mxu0 0.0
        %7781 = vmatpush1.msra.mxu0 0.0
        %7782 = vmatprep.subr.mxu0 0.0
        %7783 = vmatpush1.msra.mxu0 0.0
        %7784 = vmatprep.subr.mxu0 0.0
        %7785 = vmatpush1.msra.mxu0 0.0
        %7786 = vmatprep.subr.mxu0 0.0
        %7787 = vmatpush1.msra.mxu0 0.0
        %7788 = vmatprep.subr.mxu0 0.0
        %7789 = vmatpush1.msra.mxu0 0.0
        %7790 = vmatprep.subr.mxu0 0.0
        %7791 = vmatpush1.msra.mxu0 0.0
        %7792 = vmatprep.subr.mxu0 0.0
        %7793 = vmatpush1.msra.mxu0 0.0
        %7794 = vmatprep.subr.mxu0 0.0
        %7795 = vmatpush1.msra.mxu0 0.0
        %7796 = vmatprep.subr.mxu0 0.0
        %7797 = vmatpush1.msra.mxu0 0.0
        %7798 = vmatprep.subr.mxu0 0.0
        %7799 = vmatpush1.msra.mxu0 0.0
        %7800 = vmatprep.subr.mxu0 0.0
        %7801 = vmatpush1.msra.mxu0 0.0
        %7802 = vmatprep.subr.mxu0 0.0
        %7803 = vmatpush1.msra.mxu0 0.0
        %7804 = vmatprep.subr.mxu0 0.0
        %7805 = vmatpush1.msra.mxu0 0.0
        %7806 = vmatprep.subr.mxu0 0.0
        %7807 = vmatpush1.msra.mxu0 0.0
        %7808 = vmatprep.mubr.f32.mxu0 0.0
        %v7809 = vand.u32 %v7164, 4294901760
        %7810 = vmatmul.mubr.f32.gmra.mrb[0].mxu0 %v7809
        %v7811 = vpop.f32.mrb[0].mxu0
        %v7812 = vadd.f32 %v7731, %v7811
        %v7813 = vpop.f32.mrb[0].mxu0
        %7814 = vdwg.mxu0
        %7815 = vmatprep.subr.mxu0 0.0
        %v7816 = vand.u32 %v7145, 4294901760
        %v7817 = vsub.f32 %v7145, %v7816
        %7818 = vmatpush1.msra.mxu0 %v7817
        %7819 = vmatprep.subr.mxu0 0.0
        %v7820 = vand.u32 %v7151, 4294901760
        %v7821 = vsub.f32 %v7151, %v7820
        %7822 = vmatpush1.msra.mxu0 %v7821
        %7823 = vmatprep.subr.mxu0 0.0
        %7824 = vmatpush1.msra.mxu0 0.0
        %7825 = vmatprep.subr.mxu0 0.0
        %7826 = vmatpush1.msra.mxu0 0.0
        %7827 = vmatprep.subr.mxu0 0.0
        %7828 = vmatpush1.msra.mxu0 0.0
        %7829 = vmatprep.subr.mxu0 0.0
        %7830 = vmatpush1.msra.mxu0 0.0
        %7831 = vmatprep.subr.mxu0 0.0
        %7832 = vmatpush1.msra.mxu0 0.0
        %7833 = vmatprep.subr.mxu0 0.0
        %7834 = vmatpush1.msra.mxu0 0.0
        %7835 = vmatprep.subr.mxu0 0.0
        %7836 = vmatpush1.msra.mxu0 0.0
        %7837 = vmatprep.subr.mxu0 0.0
        %7838 = vmatpush1.msra.mxu0 0.0
        %7839 = vmatprep.subr.mxu0 0.0
        %7840 = vmatpush1.msra.mxu0 0.0
        %7841 = vmatprep.subr.mxu0 0.0
        %7842 = vmatpush1.msra.mxu0 0.0
        %7843 = vmatprep.subr.mxu0 0.0
        %7844 = vmatpush1.msra.mxu0 0.0
        %7845 = vmatprep.subr.mxu0 0.0
        %7846 = vmatpush1.msra.mxu0 0.0
        %7847 = vmatprep.subr.mxu0 0.0
        %7848 = vmatpush1.msra.mxu0 0.0
        %7849 = vmatprep.subr.mxu0 0.0
        %7850 = vmatpush1.msra.mxu0 0.0
        %7851 = vmatprep.subr.mxu0 0.0
        %7852 = vmatpush1.msra.mxu0 0.0
        %7853 = vmatprep.subr.mxu0 0.0
        %7854 = vmatpush1.msra.mxu0 0.0
        %7855 = vmatprep.subr.mxu0 0.0
        %7856 = vmatpush1.msra.mxu0 0.0
        %7857 = vmatprep.subr.mxu0 0.0
        %7858 = vmatpush1.msra.mxu0 0.0
        %7859 = vmatprep.subr.mxu0 0.0
        %7860 = vmatpush1.msra.mxu0 0.0
        %7861 = vmatprep.subr.mxu0 0.0
        %7862 = vmatpush1.msra.mxu0 0.0
        %7863 = vmatprep.subr.mxu0 0.0
        %7864 = vmatpush1.msra.mxu0 0.0
        %7865 = vmatprep.subr.mxu0 0.0
        %7866 = vmatpush1.msra.mxu0 0.0
        %7867 = vmatprep.subr.mxu0 0.0
        %7868 = vmatpush1.msra.mxu0 0.0
        %7869 = vmatprep.subr.mxu0 0.0
        %7870 = vmatpush1.msra.mxu0 0.0
        %7871 = vmatprep.subr.mxu0 0.0
        %7872 = vmatpush1.msra.mxu0 0.0
        %7873 = vmatprep.subr.mxu0 0.0
        %7874 = vmatpush1.msra.mxu0 0.0
        %7875 = vmatprep.subr.mxu0 0.0
        %7876 = vmatpush1.msra.mxu0 0.0
        %7877 = vmatprep.subr.mxu0 0.0
        %7878 = vmatpush1.msra.mxu0 0.0
        %7879 = vmatprep.subr.mxu0 0.0
        %7880 = vmatpush1.msra.mxu0 0.0
        %7881 = vmatprep.subr.mxu0 0.0
        %7882 = vmatpush1.msra.mxu0 0.0
        %7883 = vmatprep.mubr.f32.mxu0 0.0
        %v7884 = vand.u32 %v7164, 4294901760
        %v7885 = vsub.f32 %v7164, %v7884
        %7886 = vmatmul.mubr.f32.gmra.mrb[0].mxu0 %v7885
        %v7887 = vpop.f32.mrb[0].mxu0
        %v7888 = vadd.f32 %v7812, %v7887
        %v7889 = vpop.f32.mrb[0].mxu0
        %7890 = vdwg.mxu0
        %7891 = vmatprep.subr.mxu0 0.0
        %v7892 = vand.u32 %v7145, 4294901760
        %7893 = vmatpush1.msra.mxu0 %v7892
        %7894 = vmatprep.subr.mxu0 0.0
        %v7895 = vand.u32 %v7151, 4294901760
        %7896 = vmatpush1.msra.mxu0 %v7895
        %7897 = vmatprep.subr.mxu0 0.0
        %7898 = vmatpush1.msra.mxu0 0.0
        %7899 = vmatprep.subr.mxu0 0.0
        %7900 = vmatpush1.msra.mxu0 0.0
        %7901 = vmatprep.subr.mxu0 0.0
        %7902 = vmatpush1.msra.mxu0 0.0
        %7903 = vmatprep.subr.mxu0 0.0
        %7904 = vmatpush1.msra.mxu0 0.0
        %7905 = vmatprep.subr.mxu0 0.0
        %7906 = vmatpush1.msra.mxu0 0.0
        %7907 = vmatprep.subr.mxu0 0.0
        %7908 = vmatpush1.msra.mxu0 0.0
        %7909 = vmatprep.subr.mxu0 0.0
        %7910 = vmatpush1.msra.mxu0 0.0
        %7911 = vmatprep.subr.mxu0 0.0
        %7912 = vmatpush1.msra.mxu0 0.0
        %7913 = vmatprep.subr.mxu0 0.0
        %7914 = vmatpush1.msra.mxu0 0.0
        %7915 = vmatprep.subr.mxu0 0.0
        %7916 = vmatpush1.msra.mxu0 0.0
        %7917 = vmatprep.subr.mxu0 0.0
        %7918 = vmatpush1.msra.mxu0 0.0
        %7919 = vmatprep.subr.mxu0 0.0
        %7920 = vmatpush1.msra.mxu0 0.0
        %7921 = vmatprep.subr.mxu0 0.0
        %7922 = vmatpush1.msra.mxu0 0.0
        %7923 = vmatprep.subr.mxu0 0.0
        %7924 = vmatpush1.msra.mxu0 0.0
        %7925 = vmatprep.subr.mxu0 0.0
        %7926 = vmatpush1.msra.mxu0 0.0
        %7927 = vmatprep.subr.mxu0 0.0
        %7928 = vmatpush1.msra.mxu0 0.0
        %7929 = vmatprep.subr.mxu0 0.0
        %7930 = vmatpush1.msra.mxu0 0.0
        %7931 = vmatprep.subr.mxu0 0.0
        %7932 = vmatpush1.msra.mxu0 0.0
        %7933 = vmatprep.subr.mxu0 0.0
        %7934 = vmatpush1.msra.mxu0 0.0
        %7935 = vmatprep.subr.mxu0 0.0
        %7936 = vmatpush1.msra.mxu0 0.0
        %7937 = vmatprep.subr.mxu0 0.0
        %7938 = vmatpush1.msra.mxu0 0.0
        %7939 = vmatprep.subr.mxu0 0.0
        %7940 = vmatpush1.msra.mxu0 0.0
        %7941 = vmatprep.subr.mxu0 0.0
        %7942 = vmatpush1.msra.mxu0 0.0
        %7943 = vmatprep.subr.mxu0 0.0
        %7944 = vmatpush1.msra.mxu0 0.0
        %7945 = vmatprep.subr.mxu0 0.0
        %7946 = vmatpush1.msra.mxu0 0.0
        %7947 = vmatprep.subr.mxu0 0.0
        %7948 = vmatpush1.msra.mxu0 0.0
        %7949 = vmatprep.subr.mxu0 0.0
        %7950 = vmatpush1.msra.mxu0 0.0
        %7951 = vmatprep.subr.mxu0 0.0
        %7952 = vmatpush1.msra.mxu0 0.0
        %7953 = vmatprep.subr.mxu0 0.0
        %7954 = vmatpush1.msra.mxu0 0.0
        %7955 = vmatprep.subr.mxu0 0.0
        %7956 = vmatpush1.msra.mxu0 0.0
        %7957 = vmatprep.mubr.f32.mxu0 0.0
        %v7958 = vand.u32 %v7164, 4294901760
        %v7959 = vsub.f32 %v7164, %v7958
        %v7960 = vand.u32 %v7959, 4294901760
        %7961 = vmatmul.mubr.f32.gmra.mrb[0].mxu0 %v7960
        %v7962 = vpop.f32.mrb[0].mxu0
        %v7963 = vadd.f32 %v7888, %v7962
        %v7964 = vpop.f32.mrb[0].mxu0
        %7965 = vdwg.mxu0
        %7966 = vmatprep.subr.mxu0 0.0
        %v7967 = vand.u32 %v7145, 4294901760
        %v7968 = vsub.f32 %v7145, %v7967
        %v7969 = vand.u32 %v7968, 4294901760
        %7970 = vmatpush1.msra.mxu0 %v7969
        %7971 = vmatprep.subr.mxu0 0.0
        %v7972 = vand.u32 %v7151, 4294901760
        %v7973 = vsub.f32 %v7151, %v7972
        %v7974 = vand.u32 %v7973, 4294901760
        %7975 = vmatpush1.msra.mxu0 %v7974
        %7976 = vmatprep.subr.mxu0 0.0
        %7977 = vmatpush1.msra.mxu0 0.0
        %7978 = vmatprep.subr.mxu0 0.0
        %7979 = vmatpush1.msra.mxu0 0.0
        %7980 = vmatprep.subr.mxu0 0.0
        %7981 = vmatpush1.msra.mxu0 0.0
        %7982 = vmatprep.subr.mxu0 0.0
        %7983 = vmatpush1.msra.mxu0 0.0
        %7984 = vmatprep.subr.mxu0 0.0
        %7985 = vmatpush1.msra.mxu0 0.0
        %7986 = vmatprep.subr.mxu0 0.0
        %7987 = vmatpush1.msra.mxu0 0.0
        %7988 = vmatprep.subr.mxu0 0.0
        %7989 = vmatpush1.msra.mxu0 0.0
        %7990 = vmatprep.subr.mxu0 0.0
        %7991 = vmatpush1.msra.mxu0 0.0
        %7992 = vmatprep.subr.mxu0 0.0
        %7993 = vmatpush1.msra.mxu0 0.0
        %7994 = vmatprep.subr.mxu0 0.0
        %7995 = vmatpush1.msra.mxu0 0.0
        %7996 = vmatprep.subr.mxu0 0.0
        %7997 = vmatpush1.msra.mxu0 0.0
        %7998 = vmatprep.subr.mxu0 0.0
        %7999 = vmatpush1.msra.mxu0 0.0
        %8000 = vmatprep.subr.mxu0 0.0
        %8001 = vmatpush1.msra.mxu0 0.0
        %8002 = vmatprep.subr.mxu0 0.0
        %8003 = vmatpush1.msra.mxu0 0.0
        %8004 = vmatprep.subr.mxu0 0.0
        %8005 = vmatpush1.msra.mxu0 0.0
        %8006 = vmatprep.subr.mxu0 0.0
        %8007 = vmatpush1.msra.mxu0 0.0
        %8008 = vmatprep.subr.mxu0 0.0
        %8009 = vmatpush1.msra.mxu0 0.0
        %8010 = vmatprep.subr.mxu0 0.0
        %8011 = vmatpush1.msra.mxu0 0.0
        %8012 = vmatprep.subr.mxu0 0.0
        %8013 = vmatpush1.msra.mxu0 0.0
        %8014 = vmatprep.subr.mxu0 0.0
        %8015 = vmatpush1.msra.mxu0 0.0
        %8016 = vmatprep.subr.mxu0 0.0
        %8017 = vmatpush1.msra.mxu0 0.0
        %8018 = vmatprep.subr.mxu0 0.0
        %8019 = vmatpush1.msra.mxu0 0.0
        %8020 = vmatprep.subr.mxu0 0.0
        %8021 = vmatpush1.msra.mxu0 0.0
        %8022 = vmatprep.subr.mxu0 0.0
        %8023 = vmatpush1.msra.mxu0 0.0
        %8024 = vmatprep.subr.mxu0 0.0
        %8025 = vmatpush1.msra.mxu0 0.0
        %8026 = vmatprep.subr.mxu0 0.0
        %8027 = vmatpush1.msra.mxu0 0.0
        %8028 = vmatprep.subr.mxu0 0.0
        %8029 = vmatpush1.msra.mxu0 0.0
        %8030 = vmatprep.subr.mxu0 0.0
        %8031 = vmatpush1.msra.mxu0 0.0
        %8032 = vmatprep.subr.mxu0 0.0
        %8033 = vmatpush1.msra.mxu0 0.0
        %8034 = vmatprep.subr.mxu0 0.0
        %8035 = vmatpush1.msra.mxu0 0.0
        %8036 = vmatprep.mubr.f32.mxu0 0.0
        %v8037 = vand.u32 %v7164, 4294901760
        %8038 = vmatmul.mubr.f32.gmra.mrb[0].mxu0 %v8037
        %v8039 = vpop.f32.mrb[0].mxu0
        %v8040 = vadd.f32 %v7963, %v8039
        %v8041 = vpop.f32.mrb[0].mxu0
        %8042 = vdwg.mxu0
        %8043 = vmatprep.subr.mxu0 0.0
        %v8044 = vand.u32 %v7145, 4294901760
        %8045 = vmatpush1.msra.mxu0 %v8044
        %8046 = vmatprep.subr.mxu0 0.0
        %v8047 = vand.u32 %v7151, 4294901760
        %8048 = vmatpush1.msra.mxu0 %v8047
        %8049 = vmatprep.subr.mxu0 0.0
        %8050 = vmatpush1.msra.mxu0 0.0
        %8051 = vmatprep.subr.mxu0 0.0
        %8052 = vmatpush1.msra.mxu0 0.0
        %8053 = vmatprep.subr.mxu0 0.0
        %8054 = vmatpush1.msra.mxu0 0.0
        %8055 = vmatprep.subr.mxu0 0.0
        %8056 = vmatpush1.msra.mxu0 0.0
        %8057 = vmatprep.subr.mxu0 0.0
        %8058 = vmatpush1.msra.mxu0 0.0
        %8059 = vmatprep.subr.mxu0 0.0
        %8060 = vmatpush1.msra.mxu0 0.0
        %8061 = vmatprep.subr.mxu0 0.0
        %8062 = vmatpush1.msra.mxu0 0.0
        %8063 = vmatprep.subr.mxu0 0.0
        %8064 = vmatpush1.msra.mxu0 0.0
        %8065 = vmatprep.subr.mxu0 0.0
        %8066 = vmatpush1.msra.mxu0 0.0
        %8067 = vmatprep.subr.mxu0 0.0
        %8068 = vmatpush1.msra.mxu0 0.0
        %8069 = vmatprep.subr.mxu0 0.0
        %8070 = vmatpush1.msra.mxu0 0.0
        %8071 = vmatprep.subr.mxu0 0.0
        %8072 = vmatpush1.msra.mxu0 0.0
        %8073 = vmatprep.subr.mxu0 0.0
        %8074 = vmatpush1.msra.mxu0 0.0
        %8075 = vmatprep.subr.mxu0 0.0
        %8076 = vmatpush1.msra.mxu0 0.0
        %8077 = vmatprep.subr.mxu0 0.0
        %8078 = vmatpush1.msra.mxu0 0.0
        %8079 = vmatprep.subr.mxu0 0.0
        %8080 = vmatpush1.msra.mxu0 0.0
        %8081 = vmatprep.subr.mxu0 0.0
        %8082 = vmatpush1.msra.mxu0 0.0
        %8083 = vmatprep.subr.mxu0 0.0
        %8084 = vmatpush1.msra.mxu0 0.0
        %8085 = vmatprep.subr.mxu0 0.0
        %8086 = vmatpush1.msra.mxu0 0.0
        %8087 = vmatprep.subr.mxu0 0.0
        %8088 = vmatpush1.msra.mxu0 0.0
        %8089 = vmatprep.subr.mxu0 0.0
        %8090 = vmatpush1.msra.mxu0 0.0
        %8091 = vmatprep.subr.mxu0 0.0
        %8092 = vmatpush1.msra.mxu0 0.0
        %8093 = vmatprep.subr.mxu0 0.0
        %8094 = vmatpush1.msra.mxu0 0.0
        %8095 = vmatprep.subr.mxu0 0.0
        %8096 = vmatpush1.msra.mxu0 0.0
        %8097 = vmatprep.subr.mxu0 0.0
        %8098 = vmatpush1.msra.mxu0 0.0
        %8099 = vmatprep.subr.mxu0 0.0
        %8100 = vmatpush1.msra.mxu0 0.0
        %8101 = vmatprep.subr.mxu0 0.0
        %8102 = vmatpush1.msra.mxu0 0.0
        %8103 = vmatprep.subr.mxu0 0.0
        %8104 = vmatpush1.msra.mxu0 0.0
        %8105 = vmatprep.subr.mxu0 0.0
        %8106 = vmatpush1.msra.mxu0 0.0
        %8107 = vmatprep.subr.mxu0 0.0
        %8108 = vmatpush1.msra.mxu0 0.0
        %8109 = vmatprep.mubr.f32.mxu0 0.0
        %v8110 = vand.u32 %v7164, 4294901760
        %8111 = vmatmul.mubr.f32.gmra.mrb[0].mxu0 %v8110
        %v8112 = vpop.f32.mrb[0].mxu0
        %v8113 = vadd.f32 %v8040, %v8112
        %v8114 = vpop.f32.mrb[0].mxu0
        %8115 = vdwg.mxu0
        %v8116 = vadd.f32 %v7135, %v7653
        %v8117 = vadd.f32 %v7136, %v7655
        %v8118 = vadd.f32 %v7137, %v8113
        %s8119 = scalar_lea.vmem [#allocation5], 64
        %v8120 = vld [vmem:[%s8119] sm:$0xff]
        %8121 = vrot.lane.b32.xlu0 %v288, 90
        %v8122 = vpop.permute.xlu0 %8121
        %8123 = vrot.lane.b32.xlu0 %v289, 90
        %v8124 = vpop.permute.xlu0 %8123
        %8125 = vrot.lane.b32.xlu0 %v290, 90
        %v8126 = vpop.permute.xlu0 %8125
        %8127 = vrot.lane.b32.xlu0 %v291, 90
        %v8128 = vpop.permute.xlu0 %8127
        %8129 = vrot.lane.b32.xlu0 %v292, 90
        %v8130 = vpop.permute.xlu0 %8129
        %8131 = vrot.lane.b32.xlu0 %v293, 90
        %v8132 = vpop.permute.xlu0 %8131
        %vm8133 = vcmask 736256
        %v8134 = vsel %vm8133, %v8122, %v8124
        %v8135 = vsel %vm8133, %v8124, %v8126
        %v8136 = vsel %vm8133, %v8128, %v8130
        %v8137 = vsel %vm8133, %v8130, %v8132
        %v8145 = vsel %vm326, %v8120, 0
        %v8147 = vand.u32 %v8135, 4294901760
        %8148 = vmatprep.subr.mxu0 %v8147
        %v8149 = vand.u32 %v8134, 4294901760
        %8150 = vmatpush1.msra.mxu0 %v8149
        %v8151 = vand.u32 %v8137, 4294901760
        %8152 = vmatprep.subr.mxu0 %v8151
        %v8153 = vand.u32 %v8136, 4294901760
        %8154 = vmatpush1.msra.mxu0 %v8153
        %8155 = vmatprep.subr.mxu0 0.0
        %8156 = vmatpush1.msra.mxu0 0.0
        %8157 = vmatprep.subr.mxu0 0.0
        %8158 = vmatpush1.msra.mxu0 0.0
        %8159 = vmatprep.subr.mxu0 0.0
        %8160 = vmatpush1.msra.mxu0 0.0
        %8161 = vmatprep.subr.mxu0 0.0
        %8162 = vmatpush1.msra.mxu0 0.0
        %8163 = vmatprep.subr.mxu0 0.0
        %8164 = vmatpush1.msra.mxu0 0.0
        %8165 = vmatprep.subr.mxu0 0.0
        %8166 = vmatpush1.msra.mxu0 0.0
        %8167 = vmatprep.subr.mxu0 0.0
        %8168 = vmatpush1.msra.mxu0 0.0
        %8169 = vmatprep.subr.mxu0 0.0
        %8170 = vmatpush1.msra.mxu0 0.0
        %8171 = vmatprep.subr.mxu0 0.0
        %8172 = vmatpush1.msra.mxu0 0.0
        %8173 = vmatprep.subr.mxu0 0.0
        %8174 = vmatpush1.msra.mxu0 0.0
        %8175 = vmatprep.subr.mxu0 0.0
        %8176 = vmatpush1.msra.mxu0 0.0
        %8177 = vmatprep.subr.mxu0 0.0
        %8178 = vmatpush1.msra.mxu0 0.0
        %8179 = vmatprep.subr.mxu0 0.0
        %8180 = vmatpush1.msra.mxu0 0.0
        %8181 = vmatprep.subr.mxu0 0.0
        %8182 = vmatpush1.msra.mxu0 0.0
        %8183 = vmatprep.subr.mxu0 0.0
        %8184 = vmatpush1.msra.mxu0 0.0
        %8185 = vmatprep.subr.mxu0 0.0
        %8186 = vmatpush1.msra.mxu0 0.0
        %8187 = vmatprep.subr.mxu0 0.0
        %8188 = vmatpush1.msra.mxu0 0.0
        %8189 = vmatprep.subr.mxu0 0.0
        %8190 = vmatpush1.msra.mxu0 0.0
        %8191 = vmatprep.subr.mxu0 0.0
        %8192 = vmatpush1.msra.mxu0 0.0
        %8193 = vmatprep.subr.mxu0 0.0
        %8194 = vmatpush1.msra.mxu0 0.0
        %8195 = vmatprep.subr.mxu0 0.0
        %8196 = vmatpush1.msra.mxu0 0.0
        %8197 = vmatprep.subr.mxu0 0.0
        %8198 = vmatpush1.msra.mxu0 0.0
        %8199 = vmatprep.subr.mxu0 0.0
        %8200 = vmatpush1.msra.mxu0 0.0
        %8201 = vmatprep.subr.mxu0 0.0
        %8202 = vmatpush1.msra.mxu0 0.0
        %8203 = vmatprep.subr.mxu0 0.0
        %8204 = vmatpush1.msra.mxu0 0.0
        %8205 = vmatprep.subr.mxu0 0.0
        %8206 = vmatpush1.msra.mxu0 0.0
        %8207 = vmatprep.subr.mxu0 0.0
        %8208 = vmatpush1.msra.mxu0 0.0
        %8209 = vmatprep.subr.mxu0 0.0
        %8210 = vmatpush1.msra.mxu0 0.0
        %8211 = vmatprep.subr.mxu0 0.0
        %8212 = vmatpush1.msra.mxu0 0.0
        %8213 = vmatprep.subr.mxu0 0.0
        %8214 = vmatpush1.msra.mxu0 0.0
        %8215 = vmatprep.mubr.f32.mxu0 0.0
        %v8216 = vand.u32 %v8145, 4294901760
        %v8217 = vsub.f32 %v8145, %v8216
        %v8218 = vand.u32 %v8217, 4294901760
        %v8219 = vsub.f32 %v8217, %v8218
        %v8220 = vand.u32 %v8219, 4294901760
        %8221 = vmatmul.mubr.f32.gmra.mrb[0].mxu0 %v8220
        %v8222 = vpop.f32.mrb[0].mxu0
        %v8223 = vadd.f32 0.0, %v8222
        %v8224 = vpop.f32.mrb[0].mxu0
        %v8225 = vadd.f32 0.0, %v8224
        %8226 = vdwg.mxu0
        %v8227 = vand.u32 %v8135, 4294901760
        %v8228 = vsub.f32 %v8135, %v8227
        %v8229 = vand.u32 %v8228, 4294901760
        %v8230 = vsub.f32 %v8228, %v8229
        %v8231 = vand.u32 %v8230, 4294901760
        %8232 = vmatprep.subr.mxu0 %v8231
        %v8233 = vand.u32 %v8134, 4294901760
        %v8234 = vsub.f32 %v8134, %v8233
        %v8235 = vand.u32 %v8234, 4294901760
        %v8236 = vsub.f32 %v8234, %v8235
        %v8237 = vand.u32 %v8236, 4294901760
        %8238 = vmatpush1.msra.mxu0 %v8237
        %v8239 = vand.u32 %v8137, 4294901760
        %v8240 = vsub.f32 %v8137, %v8239
        %v8241 = vand.u32 %v8240, 4294901760
        %v8242 = vsub.f32 %v8240, %v8241
        %v8243 = vand.u32 %v8242, 4294901760
        %8244 = vmatprep.subr.mxu0 %v8243
        %v8245 = vand.u32 %v8136, 4294901760
        %v8246 = vsub.f32 %v8136, %v8245
        %v8247 = vand.u32 %v8246, 4294901760
        %v8248 = vsub.f32 %v8246, %v8247
        %v8249 = vand.u32 %v8248, 4294901760
        %8250 = vmatpush1.msra.mxu0 %v8249
        %8251 = vmatprep.subr.mxu0 0.0
        %8252 = vmatpush1.msra.mxu0 0.0
        %8253 = vmatprep.subr.mxu0 0.0
        %8254 = vmatpush1.msra.mxu0 0.0
        %8255 = vmatprep.subr.mxu0 0.0
        %8256 = vmatpush1.msra.mxu0 0.0
        %8257 = vmatprep.subr.mxu0 0.0
        %8258 = vmatpush1.msra.mxu0 0.0
        %8259 = vmatprep.subr.mxu0 0.0
        %8260 = vmatpush1.msra.mxu0 0.0
        %8261 = vmatprep.subr.mxu0 0.0
        %8262 = vmatpush1.msra.mxu0 0.0
        %8263 = vmatprep.subr.mxu0 0.0
        %8264 = vmatpush1.msra.mxu0 0.0
        %8265 = vmatprep.subr.mxu0 0.0
        %8266 = vmatpush1.msra.mxu0 0.0
        %8267 = vmatprep.subr.mxu0 0.0
        %8268 = vmatpush1.msra.mxu0 0.0
        %8269 = vmatprep.subr.mxu0 0.0
        %8270 = vmatpush1.msra.mxu0 0.0
        %8271 = vmatprep.subr.mxu0 0.0
        %8272 = vmatpush1.msra.mxu0 0.0
        %8273 = vmatprep.subr.mxu0 0.0
        %8274 = vmatpush1.msra.mxu0 0.0
        %8275 = vmatprep.subr.mxu0 0.0
        %8276 = vmatpush1.msra.mxu0 0.0
        %8277 = vmatprep.subr.mxu0 0.0
        %8278 = vmatpush1.msra.mxu0 0.0
        %8279 = vmatprep.subr.mxu0 0.0
        %8280 = vmatpush1.msra.mxu0 0.0
        %8281 = vmatprep.subr.mxu0 0.0
        %8282 = vmatpush1.msra.mxu0 0.0
        %8283 = vmatprep.subr.mxu0 0.0
        %8284 = vmatpush1.msra.mxu0 0.0
        %8285 = vmatprep.subr.mxu0 0.0
        %8286 = vmatpush1.msra.mxu0 0.0
        %8287 = vmatprep.subr.mxu0 0.0
        %8288 = vmatpush1.msra.mxu0 0.0
        %8289 = vmatprep.subr.mxu0 0.0
        %8290 = vmatpush1.msra.mxu0 0.0
        %8291 = vmatprep.subr.mxu0 0.0
        %8292 = vmatpush1.msra.mxu0 0.0
        %8293 = vmatprep.subr.mxu0 0.0
        %8294 = vmatpush1.msra.mxu0 0.0
        %8295 = vmatprep.subr.mxu0 0.0
        %8296 = vmatpush1.msra.mxu0 0.0
        %8297 = vmatprep.subr.mxu0 0.0
        %8298 = vmatpush1.msra.mxu0 0.0
        %8299 = vmatprep.subr.mxu0 0.0
        %8300 = vmatpush1.msra.mxu0 0.0
        %8301 = vmatprep.subr.mxu0 0.0
        %8302 = vmatpush1.msra.mxu0 0.0
        %8303 = vmatprep.subr.mxu0 0.0
        %8304 = vmatpush1.msra.mxu0 0.0
        %8305 = vmatprep.subr.mxu0 0.0
        %8306 = vmatpush1.msra.mxu0 0.0
        %8307 = vmatprep.subr.mxu0 0.0
        %8308 = vmatpush1.msra.mxu0 0.0
        %8309 = vmatprep.subr.mxu0 0.0
        %8310 = vmatpush1.msra.mxu0 0.0
        %8311 = vmatprep.mubr.f32.mxu0 0.0
        %v8312 = vand.u32 %v8145, 4294901760
        %8313 = vmatmul.mubr.f32.gmra.mrb[0].mxu0 %v8312
        %v8314 = vpop.f32.mrb[0].mxu0
        %v8315 = vadd.f32 %v8223, %v8314
        %v8316 = vpop.f32.mrb[0].mxu0
        %v8317 = vadd.f32 %v8225, %v8316
        %8318 = vdwg.mxu0
        %v8319 = vand.u32 %v8135, 4294901760
        %v8320 = vsub.f32 %v8135, %v8319
        %8321 = vmatprep.subr.mxu0 %v8320
        %v8322 = vand.u32 %v8134, 4294901760
        %v8323 = vsub.f32 %v8134, %v8322
        %8324 = vmatpush1.msra.mxu0 %v8323
        %v8325 = vand.u32 %v8137, 4294901760
        %v8326 = vsub.f32 %v8137, %v8325
        %8327 = vmatprep.subr.mxu0 %v8326
        %v8328 = vand.u32 %v8136, 4294901760
        %v8329 = vsub.f32 %v8136, %v8328
        %8330 = vmatpush1.msra.mxu0 %v8329
        %8331 = vmatprep.subr.mxu0 0.0
        %8332 = vmatpush1.msra.mxu0 0.0
        %8333 = vmatprep.subr.mxu0 0.0
        %8334 = vmatpush1.msra.mxu0 0.0
        %8335 = vmatprep.subr.mxu0 0.0
        %8336 = vmatpush1.msra.mxu0 0.0
        %8337 = vmatprep.subr.mxu0 0.0
        %8338 = vmatpush1.msra.mxu0 0.0
        %8339 = vmatprep.subr.mxu0 0.0
        %8340 = vmatpush1.msra.mxu0 0.0
        %8341 = vmatprep.subr.mxu0 0.0
        %8342 = vmatpush1.msra.mxu0 0.0
        %8343 = vmatprep.subr.mxu0 0.0
        %8344 = vmatpush1.msra.mxu0 0.0
        %8345 = vmatprep.subr.mxu0 0.0
        %8346 = vmatpush1.msra.mxu0 0.0
        %8347 = vmatprep.subr.mxu0 0.0
        %8348 = vmatpush1.msra.mxu0 0.0
        %8349 = vmatprep.subr.mxu0 0.0
        %8350 = vmatpush1.msra.mxu0 0.0
        %8351 = vmatprep.subr.mxu0 0.0
        %8352 = vmatpush1.msra.mxu0 0.0
        %8353 = vmatprep.subr.mxu0 0.0
        %8354 = vmatpush1.msra.mxu0 0.0
        %8355 = vmatprep.subr.mxu0 0.0
        %8356 = vmatpush1.msra.mxu0 0.0
        %8357 = vmatprep.subr.mxu0 0.0
        %8358 = vmatpush1.msra.mxu0 0.0
        %8359 = vmatprep.subr.mxu0 0.0
        %8360 = vmatpush1.msra.mxu0 0.0
        %8361 = vmatprep.subr.mxu0 0.0
        %8362 = vmatpush1.msra.mxu0 0.0
        %8363 = vmatprep.subr.mxu0 0.0
        %8364 = vmatpush1.msra.mxu0 0.0
        %8365 = vmatprep.subr.mxu0 0.0
        %8366 = vmatpush1.msra.mxu0 0.0
        %8367 = vmatprep.subr.mxu0 0.0
        %8368 = vmatpush1.msra.mxu0 0.0
        %8369 = vmatprep.subr.mxu0 0.0
        %8370 = vmatpush1.msra.mxu0 0.0
        %8371 = vmatprep.subr.mxu0 0.0
        %8372 = vmatpush1.msra.mxu0 0.0
        %8373 = vmatprep.subr.mxu0 0.0
        %8374 = vmatpush1.msra.mxu0 0.0
        %8375 = vmatprep.subr.mxu0 0.0
        %8376 = vmatpush1.msra.mxu0 0.0
        %8377 = vmatprep.subr.mxu0 0.0
        %8378 = vmatpush1.msra.mxu0 0.0
        %8379 = vmatprep.subr.mxu0 0.0
        %8380 = vmatpush1.msra.mxu0 0.0
        %8381 = vmatprep.subr.mxu0 0.0
        %8382 = vmatpush1.msra.mxu0 0.0
        %8383 = vmatprep.subr.mxu0 0.0
        %8384 = vmatpush1.msra.mxu0 0.0
        %8385 = vmatprep.subr.mxu0 0.0
        %8386 = vmatpush1.msra.mxu0 0.0
        %8387 = vmatprep.subr.mxu0 0.0
        %8388 = vmatpush1.msra.mxu0 0.0
        %8389 = vmatprep.subr.mxu0 0.0
        %8390 = vmatpush1.msra.mxu0 0.0
        %8391 = vmatprep.mubr.f32.mxu0 0.0
        %v8392 = vand.u32 %v8145, 4294901760
        %v8393 = vsub.f32 %v8145, %v8392
        %8394 = vmatmul.mubr.f32.gmra.mrb[0].mxu0 %v8393
        %v8395 = vpop.f32.mrb[0].mxu0
        %v8396 = vadd.f32 %v8315, %v8395
        %v8397 = vpop.f32.mrb[0].mxu0
        %v8398 = vadd.f32 %v8317, %v8397
        %8399 = vdwg.mxu0
        %v8400 = vand.u32 %v8135, 4294901760
        %8401 = vmatprep.subr.mxu0 %v8400
        %v8402 = vand.u32 %v8134, 4294901760
        %8403 = vmatpush1.msra.mxu0 %v8402
        %v8404 = vand.u32 %v8137, 4294901760
        %8405 = vmatprep.subr.mxu0 %v8404
        %v8406 = vand.u32 %v8136, 4294901760
        %8407 = vmatpush1.msra.mxu0 %v8406
        %8408 = vmatprep.subr.mxu0 0.0
        %8409 = vmatpush1.msra.mxu0 0.0
        %8410 = vmatprep.subr.mxu0 0.0
        %8411 = vmatpush1.msra.mxu0 0.0
        %8412 = vmatprep.subr.mxu0 0.0
        %8413 = vmatpush1.msra.mxu0 0.0
        %8414 = vmatprep.subr.mxu0 0.0
        %8415 = vmatpush1.msra.mxu0 0.0
        %8416 = vmatprep.subr.mxu0 0.0
        %8417 = vmatpush1.msra.mxu0 0.0
        %8418 = vmatprep.subr.mxu0 0.0
        %8419 = vmatpush1.msra.mxu0 0.0
        %8420 = vmatprep.subr.mxu0 0.0
        %8421 = vmatpush1.msra.mxu0 0.0
        %8422 = vmatprep.subr.mxu0 0.0
        %8423 = vmatpush1.msra.mxu0 0.0
        %8424 = vmatprep.subr.mxu0 0.0
        %8425 = vmatpush1.msra.mxu0 0.0
        %8426 = vmatprep.subr.mxu0 0.0
        %8427 = vmatpush1.msra.mxu0 0.0
        %8428 = vmatprep.subr.mxu0 0.0
        %8429 = vmatpush1.msra.mxu0 0.0
        %8430 = vmatprep.subr.mxu0 0.0
        %8431 = vmatpush1.msra.mxu0 0.0
        %8432 = vmatprep.subr.mxu0 0.0
        %8433 = vmatpush1.msra.mxu0 0.0
        %8434 = vmatprep.subr.mxu0 0.0
        %8435 = vmatpush1.msra.mxu0 0.0
        %8436 = vmatprep.subr.mxu0 0.0
        %8437 = vmatpush1.msra.mxu0 0.0
        %8438 = vmatprep.subr.mxu0 0.0
        %8439 = vmatpush1.msra.mxu0 0.0
        %8440 = vmatprep.subr.mxu0 0.0
        %8441 = vmatpush1.msra.mxu0 0.0
        %8442 = vmatprep.subr.mxu0 0.0
        %8443 = vmatpush1.msra.mxu0 0.0
        %8444 = vmatprep.subr.mxu0 0.0
        %8445 = vmatpush1.msra.mxu0 0.0
        %8446 = vmatprep.subr.mxu0 0.0
        %8447 = vmatpush1.msra.mxu0 0.0
        %8448 = vmatprep.subr.mxu0 0.0
        %8449 = vmatpush1.msra.mxu0 0.0
        %8450 = vmatprep.subr.mxu0 0.0
        %8451 = vmatpush1.msra.mxu0 0.0
        %8452 = vmatprep.subr.mxu0 0.0
        %8453 = vmatpush1.msra.mxu0 0.0
        %8454 = vmatprep.subr.mxu0 0.0
        %8455 = vmatpush1.msra.mxu0 0.0
        %8456 = vmatprep.subr.mxu0 0.0
        %8457 = vmatpush1.msra.mxu0 0.0
        %8458 = vmatprep.subr.mxu0 0.0
        %8459 = vmatpush1.msra.mxu0 0.0
        %8460 = vmatprep.subr.mxu0 0.0
        %8461 = vmatpush1.msra.mxu0 0.0
        %8462 = vmatprep.subr.mxu0 0.0
        %8463 = vmatpush1.msra.mxu0 0.0
        %8464 = vmatprep.subr.mxu0 0.0
        %8465 = vmatpush1.msra.mxu0 0.0
        %8466 = vmatprep.subr.mxu0 0.0
        %8467 = vmatpush1.msra.mxu0 0.0
        %8468 = vmatprep.mubr.f32.mxu0 0.0
        %v8469 = vand.u32 %v8145, 4294901760
        %v8470 = vsub.f32 %v8145, %v8469
        %v8471 = vand.u32 %v8470, 4294901760
        %8472 = vmatmul.mubr.f32.gmra.mrb[0].mxu0 %v8471
        %v8473 = vpop.f32.mrb[0].mxu0
        %v8474 = vadd.f32 %v8396, %v8473
        %v8475 = vpop.f32.mrb[0].mxu0
        %v8476 = vadd.f32 %v8398, %v8475
        %8477 = vdwg.mxu0
        %v8478 = vand.u32 %v8135, 4294901760
        %v8479 = vsub.f32 %v8135, %v8478
        %v8480 = vand.u32 %v8479, 4294901760
        %8481 = vmatprep.subr.mxu0 %v8480
        %v8482 = vand.u32 %v8134, 4294901760
        %v8483 = vsub.f32 %v8134, %v8482
        %v8484 = vand.u32 %v8483, 4294901760
        %8485 = vmatpush1.msra.mxu0 %v8484
        %v8486 = vand.u32 %v8137, 4294901760
        %v8487 = vsub.f32 %v8137, %v8486
        %v8488 = vand.u32 %v8487, 4294901760
        %8489 = vmatprep.subr.mxu0 %v8488
        %v8490 = vand.u32 %v8136, 4294901760
        %v8491 = vsub.f32 %v8136, %v8490
        %v8492 = vand.u32 %v8491, 4294901760
        %8493 = vmatpush1.msra.mxu0 %v8492
        %8494 = vmatprep.subr.mxu0 0.0
        %8495 = vmatpush1.msra.mxu0 0.0
        %8496 = vmatprep.subr.mxu0 0.0
        %8497 = vmatpush1.msra.mxu0 0.0
        %8498 = vmatprep.subr.mxu0 0.0
        %8499 = vmatpush1.msra.mxu0 0.0
        %8500 = vmatprep.subr.mxu0 0.0
        %8501 = vmatpush1.msra.mxu0 0.0
        %8502 = vmatprep.subr.mxu0 0.0
        %8503 = vmatpush1.msra.mxu0 0.0
        %8504 = vmatprep.subr.mxu0 0.0
        %8505 = vmatpush1.msra.mxu0 0.0
        %8506 = vmatprep.subr.mxu0 0.0
        %8507 = vmatpush1.msra.mxu0 0.0
        %8508 = vmatprep.subr.mxu0 0.0
        %8509 = vmatpush1.msra.mxu0 0.0
        %8510 = vmatprep.subr.mxu0 0.0
        %8511 = vmatpush1.msra.mxu0 0.0
        %8512 = vmatprep.subr.mxu0 0.0
        %8513 = vmatpush1.msra.mxu0 0.0
        %8514 = vmatprep.subr.mxu0 0.0
        %8515 = vmatpush1.msra.mxu0 0.0
        %8516 = vmatprep.subr.mxu0 0.0
        %8517 = vmatpush1.msra.mxu0 0.0
        %8518 = vmatprep.subr.mxu0 0.0
        %8519 = vmatpush1.msra.mxu0 0.0
        %8520 = vmatprep.subr.mxu0 0.0
        %8521 = vmatpush1.msra.mxu0 0.0
        %8522 = vmatprep.subr.mxu0 0.0
        %8523 = vmatpush1.msra.mxu0 0.0
        %8524 = vmatprep.subr.mxu0 0.0
        %8525 = vmatpush1.msra.mxu0 0.0
        %8526 = vmatprep.subr.mxu0 0.0
        %8527 = vmatpush1.msra.mxu0 0.0
        %8528 = vmatprep.subr.mxu0 0.0
        %8529 = vmatpush1.msra.mxu0 0.0
        %8530 = vmatprep.subr.mxu0 0.0
        %8531 = vmatpush1.msra.mxu0 0.0
        %8532 = vmatprep.subr.mxu0 0.0
        %8533 = vmatpush1.msra.mxu0 0.0
        %8534 = vmatprep.subr.mxu0 0.0
        %8535 = vmatpush1.msra.mxu0 0.0
        %8536 = vmatprep.subr.mxu0 0.0
        %8537 = vmatpush1.msra.mxu0 0.0
        %8538 = vmatprep.subr.mxu0 0.0
        %8539 = vmatpush1.msra.mxu0 0.0
        %8540 = vmatprep.subr.mxu0 0.0
        %8541 = vmatpush1.msra.mxu0 0.0
        %8542 = vmatprep.subr.mxu0 0.0
        %8543 = vmatpush1.msra.mxu0 0.0
        %8544 = vmatprep.subr.mxu0 0.0
        %8545 = vmatpush1.msra.mxu0 0.0
        %8546 = vmatprep.subr.mxu0 0.0
        %8547 = vmatpush1.msra.mxu0 0.0
        %8548 = vmatprep.subr.mxu0 0.0
        %8549 = vmatpush1.msra.mxu0 0.0
        %8550 = vmatprep.subr.mxu0 0.0
        %8551 = vmatpush1.msra.mxu0 0.0
        %8552 = vmatprep.subr.mxu0 0.0
        %8553 = vmatpush1.msra.mxu0 0.0
        %8554 = vmatprep.mubr.f32.mxu0 0.0
        %v8555 = vand.u32 %v8145, 4294901760
        %8556 = vmatmul.mubr.f32.gmra.mrb[0].mxu0 %v8555
        %v8557 = vpop.f32.mrb[0].mxu0
        %v8558 = vadd.f32 %v8474, %v8557
        %v8559 = vpop.f32.mrb[0].mxu0
        %v8560 = vadd.f32 %v8476, %v8559
        %8561 = vdwg.mxu0
        %v8562 = vand.u32 %v8135, 4294901760
        %8563 = vmatprep.subr.mxu0 %v8562
        %v8564 = vand.u32 %v8134, 4294901760
        %8565 = vmatpush1.msra.mxu0 %v8564
        %v8566 = vand.u32 %v8137, 4294901760
        %8567 = vmatprep.subr.mxu0 %v8566
        %v8568 = vand.u32 %v8136, 4294901760
        %8569 = vmatpush1.msra.mxu0 %v8568
        %8570 = vmatprep.subr.mxu0 0.0
        %8571 = vmatpush1.msra.mxu0 0.0
        %8572 = vmatprep.subr.mxu0 0.0
        %8573 = vmatpush1.msra.mxu0 0.0
        %8574 = vmatprep.subr.mxu0 0.0
        %8575 = vmatpush1.msra.mxu0 0.0
        %8576 = vmatprep.subr.mxu0 0.0
        %8577 = vmatpush1.msra.mxu0 0.0
        %8578 = vmatprep.subr.mxu0 0.0
        %8579 = vmatpush1.msra.mxu0 0.0
        %8580 = vmatprep.subr.mxu0 0.0
        %8581 = vmatpush1.msra.mxu0 0.0
        %8582 = vmatprep.subr.mxu0 0.0
        %8583 = vmatpush1.msra.mxu0 0.0
        %8584 = vmatprep.subr.mxu0 0.0
        %8585 = vmatpush1.msra.mxu0 0.0
        %8586 = vmatprep.subr.mxu0 0.0
        %8587 = vmatpush1.msra.mxu0 0.0
        %8588 = vmatprep.subr.mxu0 0.0
        %8589 = vmatpush1.msra.mxu0 0.0
        %8590 = vmatprep.subr.mxu0 0.0
        %8591 = vmatpush1.msra.mxu0 0.0
        %8592 = vmatprep.subr.mxu0 0.0
        %8593 = vmatpush1.msra.mxu0 0.0
        %8594 = vmatprep.subr.mxu0 0.0
        %8595 = vmatpush1.msra.mxu0 0.0
        %8596 = vmatprep.subr.mxu0 0.0
        %8597 = vmatpush1.msra.mxu0 0.0
        %8598 = vmatprep.subr.mxu0 0.0
        %8599 = vmatpush1.msra.mxu0 0.0
        %8600 = vmatprep.subr.mxu0 0.0
        %8601 = vmatpush1.msra.mxu0 0.0
        %8602 = vmatprep.subr.mxu0 0.0
        %8603 = vmatpush1.msra.mxu0 0.0
        %8604 = vmatprep.subr.mxu0 0.0
        %8605 = vmatpush1.msra.mxu0 0.0
        %8606 = vmatprep.subr.mxu0 0.0
        %8607 = vmatpush1.msra.mxu0 0.0
        %8608 = vmatprep.subr.mxu0 0.0
        %8609 = vmatpush1.msra.mxu0 0.0
        %8610 = vmatprep.subr.mxu0 0.0
        %8611 = vmatpush1.msra.mxu0 0.0
        %8612 = vmatprep.subr.mxu0 0.0
        %8613 = vmatpush1.msra.mxu0 0.0
        %8614 = vmatprep.subr.mxu0 0.0
        %8615 = vmatpush1.msra.mxu0 0.0
        %8616 = vmatprep.subr.mxu0 0.0
        %8617 = vmatpush1.msra.mxu0 0.0
        %8618 = vmatprep.subr.mxu0 0.0
        %8619 = vmatpush1.msra.mxu0 0.0
        %8620 = vmatprep.subr.mxu0 0.0
        %8621 = vmatpush1.msra.mxu0 0.0
        %8622 = vmatprep.subr.mxu0 0.0
        %8623 = vmatpush1.msra.mxu0 0.0
        %8624 = vmatprep.subr.mxu0 0.0
        %8625 = vmatpush1.msra.mxu0 0.0
        %8626 = vmatprep.subr.mxu0 0.0
        %8627 = vmatpush1.msra.mxu0 0.0
        %8628 = vmatprep.subr.mxu0 0.0
        %8629 = vmatpush1.msra.mxu0 0.0
        %8630 = vmatprep.mubr.f32.mxu0 0.0
        %v8631 = vand.u32 %v8145, 4294901760
        %8632 = vmatmul.mubr.f32.gmra.mrb[0].mxu0 %v8631
        %v8633 = vpop.f32.mrb[0].mxu0
        %v8634 = vadd.f32 %v8558, %v8633
        %v8635 = vpop.f32.mrb[0].mxu0
        %v8636 = vadd.f32 %v8560, %v8635
        %8637 = vdwg.mxu0
        %8638 = vmatprep.subr.mxu0 0.0
        %v8639 = vand.u32 %v8126, 4294901760
        %8640 = vmatpush1.msra.mxu0 %v8639
        %8641 = vmatprep.subr.mxu0 0.0
        %v8642 = vand.u32 %v8132, 4294901760
        %8643 = vmatpush1.msra.mxu0 %v8642
        %8644 = vmatprep.subr.mxu0 0.0
        %8645 = vmatpush1.msra.mxu0 0.0
        %8646 = vmatprep.subr.mxu0 0.0
        %8647 = vmatpush1.msra.mxu0 0.0
        %8648 = vmatprep.subr.mxu0 0.0
        %8649 = vmatpush1.msra.mxu0 0.0
        %8650 = vmatprep.subr.mxu0 0.0
        %8651 = vmatpush1.msra.mxu0 0.0
        %8652 = vmatprep.subr.mxu0 0.0
        %8653 = vmatpush1.msra.mxu0 0.0
        %8654 = vmatprep.subr.mxu0 0.0
        %8655 = vmatpush1.msra.mxu0 0.0
        %8656 = vmatprep.subr.mxu0 0.0
        %8657 = vmatpush1.msra.mxu0 0.0
        %8658 = vmatprep.subr.mxu0 0.0
        %8659 = vmatpush1.msra.mxu0 0.0
        %8660 = vmatprep.subr.mxu0 0.0
        %8661 = vmatpush1.msra.mxu0 0.0
        %8662 = vmatprep.subr.mxu0 0.0
        %8663 = vmatpush1.msra.mxu0 0.0
        %8664 = vmatprep.subr.mxu0 0.0
        %8665 = vmatpush1.msra.mxu0 0.0
        %8666 = vmatprep.subr.mxu0 0.0
        %8667 = vmatpush1.msra.mxu0 0.0
        %8668 = vmatprep.subr.mxu0 0.0
        %8669 = vmatpush1.msra.mxu0 0.0
        %8670 = vmatprep.subr.mxu0 0.0
        %8671 = vmatpush1.msra.mxu0 0.0
        %8672 = vmatprep.subr.mxu0 0.0
        %8673 = vmatpush1.msra.mxu0 0.0
        %8674 = vmatprep.subr.mxu0 0.0
        %8675 = vmatpush1.msra.mxu0 0.0
        %8676 = vmatprep.subr.mxu0 0.0
        %8677 = vmatpush1.msra.mxu0 0.0
        %8678 = vmatprep.subr.mxu0 0.0
        %8679 = vmatpush1.msra.mxu0 0.0
        %8680 = vmatprep.subr.mxu0 0.0
        %8681 = vmatpush1.msra.mxu0 0.0
        %8682 = vmatprep.subr.mxu0 0.0
        %8683 = vmatpush1.msra.mxu0 0.0
        %8684 = vmatprep.subr.mxu0 0.0
        %8685 = vmatpush1.msra.mxu0 0.0
        %8686 = vmatprep.subr.mxu0 0.0
        %8687 = vmatpush1.msra.mxu0 0.0
        %8688 = vmatprep.subr.mxu0 0.0
        %8689 = vmatpush1.msra.mxu0 0.0
        %8690 = vmatprep.subr.mxu0 0.0
        %8691 = vmatpush1.msra.mxu0 0.0
        %8692 = vmatprep.subr.mxu0 0.0
        %8693 = vmatpush1.msra.mxu0 0.0
        %8694 = vmatprep.subr.mxu0 0.0
        %8695 = vmatpush1.msra.mxu0 0.0
        %8696 = vmatprep.subr.mxu0 0.0
        %8697 = vmatpush1.msra.mxu0 0.0
        %8698 = vmatprep.subr.mxu0 0.0
        %8699 = vmatpush1.msra.mxu0 0.0
        %8700 = vmatprep.subr.mxu0 0.0
        %8701 = vmatpush1.msra.mxu0 0.0
        %8702 = vmatprep.subr.mxu0 0.0
        %8703 = vmatpush1.msra.mxu0 0.0
        %8704 = vmatprep.mubr.f32.mxu0 0.0
        %v8705 = vand.u32 %v8145, 4294901760
        %v8706 = vsub.f32 %v8145, %v8705
        %v8707 = vand.u32 %v8706, 4294901760
        %v8708 = vsub.f32 %v8706, %v8707
        %v8709 = vand.u32 %v8708, 4294901760
        %8710 = vmatmul.mubr.f32.gmra.mrb[0].mxu0 %v8709
        %v8711 = vpop.f32.mrb[0].mxu0
        %v8712 = vadd.f32 0.0, %v8711
        %v8713 = vpop.f32.mrb[0].mxu0
        %8714 = vdwg.mxu0
        %8715 = vmatprep.subr.mxu0 0.0
        %v8716 = vand.u32 %v8126, 4294901760
        %v8717 = vsub.f32 %v8126, %v8716
        %v8718 = vand.u32 %v8717, 4294901760
        %v8719 = vsub.f32 %v8717, %v8718
        %v8720 = vand.u32 %v8719, 4294901760
        %8721 = vmatpush1.msra.mxu0 %v8720
        %8722 = vmatprep.subr.mxu0 0.0
        %v8723 = vand.u32 %v8132, 4294901760
        %v8724 = vsub.f32 %v8132, %v8723
        %v8725 = vand.u32 %v8724, 4294901760
        %v8726 = vsub.f32 %v8724, %v8725
        %v8727 = vand.u32 %v8726, 4294901760
        %8728 = vmatpush1.msra.mxu0 %v8727
        %8729 = vmatprep.subr.mxu0 0.0
        %8730 = vmatpush1.msra.mxu0 0.0
        %8731 = vmatprep.subr.mxu0 0.0
        %8732 = vmatpush1.msra.mxu0 0.0
        %8733 = vmatprep.subr.mxu0 0.0
        %8734 = vmatpush1.msra.mxu0 0.0
        %8735 = vmatprep.subr.mxu0 0.0
        %8736 = vmatpush1.msra.mxu0 0.0
        %8737 = vmatprep.subr.mxu0 0.0
        %8738 = vmatpush1.msra.mxu0 0.0
        %8739 = vmatprep.subr.mxu0 0.0
        %8740 = vmatpush1.msra.mxu0 0.0
        %8741 = vmatprep.subr.mxu0 0.0
        %8742 = vmatpush1.msra.mxu0 0.0
        %8743 = vmatprep.subr.mxu0 0.0
        %8744 = vmatpush1.msra.mxu0 0.0
        %8745 = vmatprep.subr.mxu0 0.0
        %8746 = vmatpush1.msra.mxu0 0.0
        %8747 = vmatprep.subr.mxu0 0.0
        %8748 = vmatpush1.msra.mxu0 0.0
        %8749 = vmatprep.subr.mxu0 0.0
        %8750 = vmatpush1.msra.mxu0 0.0
        %8751 = vmatprep.subr.mxu0 0.0
        %8752 = vmatpush1.msra.mxu0 0.0
        %8753 = vmatprep.subr.mxu0 0.0
        %8754 = vmatpush1.msra.mxu0 0.0
        %8755 = vmatprep.subr.mxu0 0.0
        %8756 = vmatpush1.msra.mxu0 0.0
        %8757 = vmatprep.subr.mxu0 0.0
        %8758 = vmatpush1.msra.mxu0 0.0
        %8759 = vmatprep.subr.mxu0 0.0
        %8760 = vmatpush1.msra.mxu0 0.0
        %8761 = vmatprep.subr.mxu0 0.0
        %8762 = vmatpush1.msra.mxu0 0.0
        %8763 = vmatprep.subr.mxu0 0.0
        %8764 = vmatpush1.msra.mxu0 0.0
        %8765 = vmatprep.subr.mxu0 0.0
        %8766 = vmatpush1.msra.mxu0 0.0
        %8767 = vmatprep.subr.mxu0 0.0
        %8768 = vmatpush1.msra.mxu0 0.0
        %8769 = vmatprep.subr.mxu0 0.0
        %8770 = vmatpush1.msra.mxu0 0.0
        %8771 = vmatprep.subr.mxu0 0.0
        %8772 = vmatpush1.msra.mxu0 0.0
        %8773 = vmatprep.subr.mxu0 0.0
        %8774 = vmatpush1.msra.mxu0 0.0
        %8775 = vmatprep.subr.mxu0 0.0
        %8776 = vmatpush1.msra.mxu0 0.0
        %8777 = vmatprep.subr.mxu0 0.0
        %8778 = vmatpush1.msra.mxu0 0.0
        %8779 = vmatprep.subr.mxu0 0.0
        %8780 = vmatpush1.msra.mxu0 0.0
        %8781 = vmatprep.subr.mxu0 0.0
        %8782 = vmatpush1.msra.mxu0 0.0
        %8783 = vmatprep.subr.mxu0 0.0
        %8784 = vmatpush1.msra.mxu0 0.0
        %8785 = vmatprep.subr.mxu0 0.0
        %8786 = vmatpush1.msra.mxu0 0.0
        %8787 = vmatprep.subr.mxu0 0.0
        %8788 = vmatpush1.msra.mxu0 0.0
        %8789 = vmatprep.mubr.f32.mxu0 0.0
        %v8790 = vand.u32 %v8145, 4294901760
        %8791 = vmatmul.mubr.f32.gmra.mrb[0].mxu0 %v8790
        %v8792 = vpop.f32.mrb[0].mxu0
        %v8793 = vadd.f32 %v8712, %v8792
        %v8794 = vpop.f32.mrb[0].mxu0
        %8795 = vdwg.mxu0
        %8796 = vmatprep.subr.mxu0 0.0
        %v8797 = vand.u32 %v8126, 4294901760
        %v8798 = vsub.f32 %v8126, %v8797
        %8799 = vmatpush1.msra.mxu0 %v8798
        %8800 = vmatprep.subr.mxu0 0.0
        %v8801 = vand.u32 %v8132, 4294901760
        %v8802 = vsub.f32 %v8132, %v8801
        %8803 = vmatpush1.msra.mxu0 %v8802
        %8804 = vmatprep.subr.mxu0 0.0
        %8805 = vmatpush1.msra.mxu0 0.0
        %8806 = vmatprep.subr.mxu0 0.0
        %8807 = vmatpush1.msra.mxu0 0.0
        %8808 = vmatprep.subr.mxu0 0.0
        %8809 = vmatpush1.msra.mxu0 0.0
        %8810 = vmatprep.subr.mxu0 0.0
        %8811 = vmatpush1.msra.mxu0 0.0
        %8812 = vmatprep.subr.mxu0 0.0
        %8813 = vmatpush1.msra.mxu0 0.0
        %8814 = vmatprep.subr.mxu0 0.0
        %8815 = vmatpush1.msra.mxu0 0.0
        %8816 = vmatprep.subr.mxu0 0.0
        %8817 = vmatpush1.msra.mxu0 0.0
        %8818 = vmatprep.subr.mxu0 0.0
        %8819 = vmatpush1.msra.mxu0 0.0
        %8820 = vmatprep.subr.mxu0 0.0
        %8821 = vmatpush1.msra.mxu0 0.0
        %8822 = vmatprep.subr.mxu0 0.0
        %8823 = vmatpush1.msra.mxu0 0.0
        %8824 = vmatprep.subr.mxu0 0.0
        %8825 = vmatpush1.msra.mxu0 0.0
        %8826 = vmatprep.subr.mxu0 0.0
        %8827 = vmatpush1.msra.mxu0 0.0
        %8828 = vmatprep.subr.mxu0 0.0
        %8829 = vmatpush1.msra.mxu0 0.0
        %8830 = vmatprep.subr.mxu0 0.0
        %8831 = vmatpush1.msra.mxu0 0.0
        %8832 = vmatprep.subr.mxu0 0.0
        %8833 = vmatpush1.msra.mxu0 0.0
        %8834 = vmatprep.subr.mxu0 0.0
        %8835 = vmatpush1.msra.mxu0 0.0
        %8836 = vmatprep.subr.mxu0 0.0
        %8837 = vmatpush1.msra.mxu0 0.0
        %8838 = vmatprep.subr.mxu0 0.0
        %8839 = vmatpush1.msra.mxu0 0.0
        %8840 = vmatprep.subr.mxu0 0.0
        %8841 = vmatpush1.msra.mxu0 0.0
        %8842 = vmatprep.subr.mxu0 0.0
        %8843 = vmatpush1.msra.mxu0 0.0
        %8844 = vmatprep.subr.mxu0 0.0
        %8845 = vmatpush1.msra.mxu0 0.0
        %8846 = vmatprep.subr.mxu0 0.0
        %8847 = vmatpush1.msra.mxu0 0.0
        %8848 = vmatprep.subr.mxu0 0.0
        %8849 = vmatpush1.msra.mxu0 0.0
        %8850 = vmatprep.subr.mxu0 0.0
        %8851 = vmatpush1.msra.mxu0 0.0
        %8852 = vmatprep.subr.mxu0 0.0
        %8853 = vmatpush1.msra.mxu0 0.0
        %8854 = vmatprep.subr.mxu0 0.0
        %8855 = vmatpush1.msra.mxu0 0.0
        %8856 = vmatprep.subr.mxu0 0.0
        %8857 = vmatpush1.msra.mxu0 0.0
        %8858 = vmatprep.subr.mxu0 0.0
        %8859 = vmatpush1.msra.mxu0 0.0
        %8860 = vmatprep.subr.mxu0 0.0
        %8861 = vmatpush1.msra.mxu0 0.0
        %8862 = vmatprep.subr.mxu0 0.0
        %8863 = vmatpush1.msra.mxu0 0.0
        %8864 = vmatprep.mubr.f32.mxu0 0.0
        %v8865 = vand.u32 %v8145, 4294901760
        %v8866 = vsub.f32 %v8145, %v8865
        %8867 = vmatmul.mubr.f32.gmra.mrb[0].mxu0 %v8866
        %v8868 = vpop.f32.mrb[0].mxu0
        %v8869 = vadd.f32 %v8793, %v8868
        %v8870 = vpop.f32.mrb[0].mxu0
        %8871 = vdwg.mxu0
        %8872 = vmatprep.subr.mxu0 0.0
        %v8873 = vand.u32 %v8126, 4294901760
        %8874 = vmatpush1.msra.mxu0 %v8873
        %8875 = vmatprep.subr.mxu0 0.0
        %v8876 = vand.u32 %v8132, 4294901760
        %8877 = vmatpush1.msra.mxu0 %v8876
        %8878 = vmatprep.subr.mxu0 0.0
        %8879 = vmatpush1.msra.mxu0 0.0
        %8880 = vmatprep.subr.mxu0 0.0
        %8881 = vmatpush1.msra.mxu0 0.0
        %8882 = vmatprep.subr.mxu0 0.0
        %8883 = vmatpush1.msra.mxu0 0.0
        %8884 = vmatprep.subr.mxu0 0.0
        %8885 = vmatpush1.msra.mxu0 0.0
        %8886 = vmatprep.subr.mxu0 0.0
        %8887 = vmatpush1.msra.mxu0 0.0
        %8888 = vmatprep.subr.mxu0 0.0
        %8889 = vmatpush1.msra.mxu0 0.0
        %8890 = vmatprep.subr.mxu0 0.0
        %8891 = vmatpush1.msra.mxu0 0.0
        %8892 = vmatprep.subr.mxu0 0.0
        %8893 = vmatpush1.msra.mxu0 0.0
        %8894 = vmatprep.subr.mxu0 0.0
        %8895 = vmatpush1.msra.mxu0 0.0
        %8896 = vmatprep.subr.mxu0 0.0
        %8897 = vmatpush1.msra.mxu0 0.0
        %8898 = vmatprep.subr.mxu0 0.0
        %8899 = vmatpush1.msra.mxu0 0.0
        %8900 = vmatprep.subr.mxu0 0.0
        %8901 = vmatpush1.msra.mxu0 0.0
        %8902 = vmatprep.subr.mxu0 0.0
        %8903 = vmatpush1.msra.mxu0 0.0
        %8904 = vmatprep.subr.mxu0 0.0
        %8905 = vmatpush1.msra.mxu0 0.0
        %8906 = vmatprep.subr.mxu0 0.0
        %8907 = vmatpush1.msra.mxu0 0.0
        %8908 = vmatprep.subr.mxu0 0.0
        %8909 = vmatpush1.msra.mxu0 0.0
        %8910 = vmatprep.subr.mxu0 0.0
        %8911 = vmatpush1.msra.mxu0 0.0
        %8912 = vmatprep.subr.mxu0 0.0
        %8913 = vmatpush1.msra.mxu0 0.0
        %8914 = vmatprep.subr.mxu0 0.0
        %8915 = vmatpush1.msra.mxu0 0.0
        %8916 = vmatprep.subr.mxu0 0.0
        %8917 = vmatpush1.msra.mxu0 0.0
        %8918 = vmatprep.subr.mxu0 0.0
        %8919 = vmatpush1.msra.mxu0 0.0
        %8920 = vmatprep.subr.mxu0 0.0
        %8921 = vmatpush1.msra.mxu0 0.0
        %8922 = vmatprep.subr.mxu0 0.0
        %8923 = vmatpush1.msra.mxu0 0.0
        %8924 = vmatprep.subr.mxu0 0.0
        %8925 = vmatpush1.msra.mxu0 0.0
        %8926 = vmatprep.subr.mxu0 0.0
        %8927 = vmatpush1.msra.mxu0 0.0
        %8928 = vmatprep.subr.mxu0 0.0
        %8929 = vmatpush1.msra.mxu0 0.0
        %8930 = vmatprep.subr.mxu0 0.0
        %8931 = vmatpush1.msra.mxu0 0.0
        %8932 = vmatprep.subr.mxu0 0.0
        %8933 = vmatpush1.msra.mxu0 0.0
        %8934 = vmatprep.subr.mxu0 0.0
        %8935 = vmatpush1.msra.mxu0 0.0
        %8936 = vmatprep.subr.mxu0 0.0
        %8937 = vmatpush1.msra.mxu0 0.0
        %8938 = vmatprep.mubr.f32.mxu0 0.0
        %v8939 = vand.u32 %v8145, 4294901760
        %v8940 = vsub.f32 %v8145, %v8939
        %v8941 = vand.u32 %v8940, 4294901760
        %8942 = vmatmul.mubr.f32.gmra.mrb[0].mxu0 %v8941
        %v8943 = vpop.f32.mrb[0].mxu0
        %v8944 = vadd.f32 %v8869, %v8943
        %v8945 = vpop.f32.mrb[0].mxu0
        %8946 = vdwg.mxu0
        %8947 = vmatprep.subr.mxu0 0.0
        %v8948 = vand.u32 %v8126, 4294901760
        %v8949 = vsub.f32 %v8126, %v8948
        %v8950 = vand.u32 %v8949, 4294901760
        %8951 = vmatpush1.msra.mxu0 %v8950
        %8952 = vmatprep.subr.mxu0 0.0
        %v8953 = vand.u32 %v8132, 4294901760
        %v8954 = vsub.f32 %v8132, %v8953
        %v8955 = vand.u32 %v8954, 4294901760
        %8956 = vmatpush1.msra.mxu0 %v8955
        %8957 = vmatprep.subr.mxu0 0.0
        %8958 = vmatpush1.msra.mxu0 0.0
        %8959 = vmatprep.subr.mxu0 0.0
        %8960 = vmatpush1.msra.mxu0 0.0
        %8961 = vmatprep.subr.mxu0 0.0
        %8962 = vmatpush1.msra.mxu0 0.0
        %8963 = vmatprep.subr.mxu0 0.0
        %8964 = vmatpush1.msra.mxu0 0.0
        %8965 = vmatprep.subr.mxu0 0.0
        %8966 = vmatpush1.msra.mxu0 0.0
        %8967 = vmatprep.subr.mxu0 0.0
        %8968 = vmatpush1.msra.mxu0 0.0
        %8969 = vmatprep.subr.mxu0 0.0
        %8970 = vmatpush1.msra.mxu0 0.0
        %8971 = vmatprep.subr.mxu0 0.0
        %8972 = vmatpush1.msra.mxu0 0.0
        %8973 = vmatprep.subr.mxu0 0.0
        %8974 = vmatpush1.msra.mxu0 0.0
        %8975 = vmatprep.subr.mxu0 0.0
        %8976 = vmatpush1.msra.mxu0 0.0
        %8977 = vmatprep.subr.mxu0 0.0
        %8978 = vmatpush1.msra.mxu0 0.0
        %8979 = vmatprep.subr.mxu0 0.0
        %8980 = vmatpush1.msra.mxu0 0.0
        %8981 = vmatprep.subr.mxu0 0.0
        %8982 = vmatpush1.msra.mxu0 0.0
        %8983 = vmatprep.subr.mxu0 0.0
        %8984 = vmatpush1.msra.mxu0 0.0
        %8985 = vmatprep.subr.mxu0 0.0
        %8986 = vmatpush1.msra.mxu0 0.0
        %8987 = vmatprep.subr.mxu0 0.0
        %8988 = vmatpush1.msra.mxu0 0.0
        %8989 = vmatprep.subr.mxu0 0.0
        %8990 = vmatpush1.msra.mxu0 0.0
        %8991 = vmatprep.subr.mxu0 0.0
        %8992 = vmatpush1.msra.mxu0 0.0
        %8993 = vmatprep.subr.mxu0 0.0
        %8994 = vmatpush1.msra.mxu0 0.0
        %8995 = vmatprep.subr.mxu0 0.0
        %8996 = vmatpush1.msra.mxu0 0.0
        %8997 = vmatprep.subr.mxu0 0.0
        %8998 = vmatpush1.msra.mxu0 0.0
        %8999 = vmatprep.subr.mxu0 0.0
        %9000 = vmatpush1.msra.mxu0 0.0
        %9001 = vmatprep.subr.mxu0 0.0
        %9002 = vmatpush1.msra.mxu0 0.0
        %9003 = vmatprep.subr.mxu0 0.0
        %9004 = vmatpush1.msra.mxu0 0.0
        %9005 = vmatprep.subr.mxu0 0.0
        %9006 = vmatpush1.msra.mxu0 0.0
        %9007 = vmatprep.subr.mxu0 0.0
        %9008 = vmatpush1.msra.mxu0 0.0
        %9009 = vmatprep.subr.mxu0 0.0
        %9010 = vmatpush1.msra.mxu0 0.0
        %9011 = vmatprep.subr.mxu0 0.0
        %9012 = vmatpush1.msra.mxu0 0.0
        %9013 = vmatprep.subr.mxu0 0.0
        %9014 = vmatpush1.msra.mxu0 0.0
        %9015 = vmatprep.subr.mxu0 0.0
        %9016 = vmatpush1.msra.mxu0 0.0
        %9017 = vmatprep.mubr.f32.mxu0 0.0
        %v9018 = vand.u32 %v8145, 4294901760
        %9019 = vmatmul.mubr.f32.gmra.mrb[0].mxu0 %v9018
        %v9020 = vpop.f32.mrb[0].mxu0
        %v9021 = vadd.f32 %v8944, %v9020
        %v9022 = vpop.f32.mrb[0].mxu0
        %9023 = vdwg.mxu0
        %9024 = vmatprep.subr.mxu0 0.0
        %v9025 = vand.u32 %v8126, 4294901760
        %9026 = vmatpush1.msra.mxu0 %v9025
        %9027 = vmatprep.subr.mxu0 0.0
        %v9028 = vand.u32 %v8132, 4294901760
        %9029 = vmatpush1.msra.mxu0 %v9028
        %9030 = vmatprep.subr.mxu0 0.0
        %9031 = vmatpush1.msra.mxu0 0.0
        %9032 = vmatprep.subr.mxu0 0.0
        %9033 = vmatpush1.msra.mxu0 0.0
        %9034 = vmatprep.subr.mxu0 0.0
        %9035 = vmatpush1.msra.mxu0 0.0
        %9036 = vmatprep.subr.mxu0 0.0
        %9037 = vmatpush1.msra.mxu0 0.0
        %9038 = vmatprep.subr.mxu0 0.0
        %9039 = vmatpush1.msra.mxu0 0.0
        %9040 = vmatprep.subr.mxu0 0.0
        %9041 = vmatpush1.msra.mxu0 0.0
        %9042 = vmatprep.subr.mxu0 0.0
        %9043 = vmatpush1.msra.mxu0 0.0
        %9044 = vmatprep.subr.mxu0 0.0
        %9045 = vmatpush1.msra.mxu0 0.0
        %9046 = vmatprep.subr.mxu0 0.0
        %9047 = vmatpush1.msra.mxu0 0.0
        %9048 = vmatprep.subr.mxu0 0.0
        %9049 = vmatpush1.msra.mxu0 0.0
        %9050 = vmatprep.subr.mxu0 0.0
        %9051 = vmatpush1.msra.mxu0 0.0
        %9052 = vmatprep.subr.mxu0 0.0
        %9053 = vmatpush1.msra.mxu0 0.0
        %9054 = vmatprep.subr.mxu0 0.0
        %9055 = vmatpush1.msra.mxu0 0.0
        %9056 = vmatprep.subr.mxu0 0.0
        %9057 = vmatpush1.msra.mxu0 0.0
        %9058 = vmatprep.subr.mxu0 0.0
        %9059 = vmatpush1.msra.mxu0 0.0
        %9060 = vmatprep.subr.mxu0 0.0
        %9061 = vmatpush1.msra.mxu0 0.0
        %9062 = vmatprep.subr.mxu0 0.0
        %9063 = vmatpush1.msra.mxu0 0.0
        %9064 = vmatprep.subr.mxu0 0.0
        %9065 = vmatpush1.msra.mxu0 0.0
        %9066 = vmatprep.subr.mxu0 0.0
        %9067 = vmatpush1.msra.mxu0 0.0
        %9068 = vmatprep.subr.mxu0 0.0
        %9069 = vmatpush1.msra.mxu0 0.0
        %9070 = vmatprep.subr.mxu0 0.0
        %9071 = vmatpush1.msra.mxu0 0.0
        %9072 = vmatprep.subr.mxu0 0.0
        %9073 = vmatpush1.msra.mxu0 0.0
        %9074 = vmatprep.subr.mxu0 0.0
        %9075 = vmatpush1.msra.mxu0 0.0
        %9076 = vmatprep.subr.mxu0 0.0
        %9077 = vmatpush1.msra.mxu0 0.0
        %9078 = vmatprep.subr.mxu0 0.0
        %9079 = vmatpush1.msra.mxu0 0.0
        %9080 = vmatprep.subr.mxu0 0.0
        %9081 = vmatpush1.msra.mxu0 0.0
        %9082 = vmatprep.subr.mxu0 0.0
        %9083 = vmatpush1.msra.mxu0 0.0
        %9084 = vmatprep.subr.mxu0 0.0
        %9085 = vmatpush1.msra.mxu0 0.0
        %9086 = vmatprep.subr.mxu0 0.0
        %9087 = vmatpush1.msra.mxu0 0.0
        %9088 = vmatprep.subr.mxu0 0.0
        %9089 = vmatpush1.msra.mxu0 0.0
        %9090 = vmatprep.mubr.f32.mxu0 0.0
        %v9091 = vand.u32 %v8145, 4294901760
        %9092 = vmatmul.mubr.f32.gmra.mrb[0].mxu0 %v9091
        %v9093 = vpop.f32.mrb[0].mxu0
        %v9094 = vadd.f32 %v9021, %v9093
        %v9095 = vpop.f32.mrb[0].mxu0
        %9096 = vdwg.mxu0
        %v9097 = vadd.f32 %v8116, %v8634
        %v9098 = vadd.f32 %v8117, %v8636
        %v9099 = vadd.f32 %v8118, %v9094
        %v9100 = vld [vmem:[%s280] sm:$0xff]
        %9102 = vset.pattern.permute.xlu0 0
        %9103 = vperm.xlu0 %9102, %v9100
        %v9104 = vpop.permute.xlu0 %9103
        %v9106 = vadd.f32 %v9097, %v9104
        %v9107 = vadd.f32 %v9098, %v9104
        %v9108 = vadd.f32 %v9099, %v9104
        %9109 = vst [vmem:[%s267] sm:$0xff] %v9106
        %9110 = vst [vmem:[%s267 + $0x8] sm:$0xff] %v9107
        %vm9111 = vcmask 244736
        %9112 = vst.msk [vmem:[%s267 + $0x10] sm:$0xff] %vm9111, %v9108
        %v9113 = vld [vmem:[%s237 + $0x10] sm:$0xff]
        %v9114 = vld [vmem:[%s237 + $0x28] sm:$0xff]
        %s9115 = scalar_lea.vmem [#allocation5], 72
        %v9116 = vld [vmem:[%s9115] sm:$0xff]
        %s9117 = scalar_lea.vmem [#allocation5], 80
        %v9118 = vld [vmem:[%s9117] sm:$0xff]
        %9121 = vrot.lane.b32.xlu0 %v9113, 59
        %v9122 = vpop.permute.xlu0 %9121
        %9123 = vrot.lane.b32.xlu0 %v9114, 59
        %v9124 = vpop.permute.xlu0 %9123
        %v9128 = vsel %vm326, %v9118, 0
        %9130 = vmatprep.subr.mxu0 0.0
        %v9131 = vand.u32 %v9122, 4294901760
        %9132 = vmatpush1.msra.mxu0 %v9131
        %9133 = vmatprep.subr.mxu0 0.0
        %v9134 = vand.u32 %v9124, 4294901760
        %9135 = vmatpush1.msra.mxu0 %v9134
        %9136 = vmatprep.subr.mxu0 0.0
        %9137 = vmatpush1.msra.mxu0 0.0
        %9138 = vmatprep.subr.mxu0 0.0
        %9139 = vmatpush1.msra.mxu0 0.0
        %9140 = vmatprep.subr.mxu0 0.0
        %9141 = vmatpush1.msra.mxu0 0.0
        %9142 = vmatprep.subr.mxu0 0.0
        %9143 = vmatpush1.msra.mxu0 0.0
        %9144 = vmatprep.subr.mxu0 0.0
        %9145 = vmatpush1.msra.mxu0 0.0
        %9146 = vmatprep.subr.mxu0 0.0
        %9147 = vmatpush1.msra.mxu0 0.0
        %9148 = vmatprep.subr.mxu0 0.0
        %9149 = vmatpush1.msra.mxu0 0.0
        %9150 = vmatprep.subr.mxu0 0.0
        %9151 = vmatpush1.msra.mxu0 0.0
        %9152 = vmatprep.subr.mxu0 0.0
        %9153 = vmatpush1.msra.mxu0 0.0
        %9154 = vmatprep.subr.mxu0 0.0
        %9155 = vmatpush1.msra.mxu0 0.0
        %9156 = vmatprep.subr.mxu0 0.0
        %9157 = vmatpush1.msra.mxu0 0.0
        %9158 = vmatprep.subr.mxu0 0.0
        %9159 = vmatpush1.msra.mxu0 0.0
        %9160 = vmatprep.subr.mxu0 0.0
        %9161 = vmatpush1.msra.mxu0 0.0
        %9162 = vmatprep.subr.mxu0 0.0
        %9163 = vmatpush1.msra.mxu0 0.0
        %9164 = vmatprep.subr.mxu0 0.0
        %9165 = vmatpush1.msra.mxu0 0.0
        %9166 = vmatprep.subr.mxu0 0.0
        %9167 = vmatpush1.msra.mxu0 0.0
        %9168 = vmatprep.subr.mxu0 0.0
        %9169 = vmatpush1.msra.mxu0 0.0
        %9170 = vmatprep.subr.mxu0 0.0
        %9171 = vmatpush1.msra.mxu0 0.0
        %9172 = vmatprep.subr.mxu0 0.0
        %9173 = vmatpush1.msra.mxu0 0.0
        %9174 = vmatprep.subr.mxu0 0.0
        %9175 = vmatpush1.msra.mxu0 0.0
        %9176 = vmatprep.subr.mxu0 0.0
        %9177 = vmatpush1.msra.mxu0 0.0
        %9178 = vmatprep.subr.mxu0 0.0
        %9179 = vmatpush1.msra.mxu0 0.0
        %9180 = vmatprep.subr.mxu0 0.0
        %9181 = vmatpush1.msra.mxu0 0.0
        %9182 = vmatprep.subr.mxu0 0.0
        %9183 = vmatpush1.msra.mxu0 0.0
        %9184 = vmatprep.subr.mxu0 0.0
        %9185 = vmatpush1.msra.mxu0 0.0
        %9186 = vmatprep.subr.mxu0 0.0
        %9187 = vmatpush1.msra.mxu0 0.0
        %9188 = vmatprep.subr.mxu0 0.0
        %9189 = vmatpush1.msra.mxu0 0.0
        %9190 = vmatprep.subr.mxu0 0.0
        %9191 = vmatpush1.msra.mxu0 0.0
        %9192 = vmatprep.subr.mxu0 0.0
        %9193 = vmatpush1.msra.mxu0 0.0
        %9194 = vmatprep.subr.mxu0 0.0
        %9195 = vmatpush1.msra.mxu0 0.0
        %9196 = vmatprep.mubr.f32.mxu0 0.0
        %v9197 = vand.u32 %v9128, 4294901760
        %v9198 = vsub.f32 %v9128, %v9197
        %v9199 = vand.u32 %v9198, 4294901760
        %v9200 = vsub.f32 %v9198, %v9199
        %v9201 = vand.u32 %v9200, 4294901760
        %9202 = vmatmul.mubr.f32.gmra.mrb[0].mxu0 %v9201
        %v9203 = vpop.f32.mrb[0].mxu0
        %v9204 = vadd.f32 0.0, %v9203
        %v9205 = vpop.f32.mrb[0].mxu0
        %9206 = vdwg.mxu0
        %9207 = vmatprep.subr.mxu0 0.0
        %v9208 = vand.u32 %v9122, 4294901760
        %v9209 = vsub.f32 %v9122, %v9208
        %v9210 = vand.u32 %v9209, 4294901760
        %v9211 = vsub.f32 %v9209, %v9210
        %v9212 = vand.u32 %v9211, 4294901760
        %9213 = vmatpush1.msra.mxu0 %v9212
        %9214 = vmatprep.subr.mxu0 0.0
        %v9215 = vand.u32 %v9124, 4294901760
        %v9216 = vsub.f32 %v9124, %v9215
        %v9217 = vand.u32 %v9216, 4294901760
        %v9218 = vsub.f32 %v9216, %v9217
        %v9219 = vand.u32 %v9218, 4294901760
        %9220 = vmatpush1.msra.mxu0 %v9219
        %9221 = vmatprep.subr.mxu0 0.0
        %9222 = vmatpush1.msra.mxu0 0.0
        %9223 = vmatprep.subr.mxu0 0.0
        %9224 = vmatpush1.msra.mxu0 0.0
        %9225 = vmatprep.subr.mxu0 0.0
        %9226 = vmatpush1.msra.mxu0 0.0
        %9227 = vmatprep.subr.mxu0 0.0
        %9228 = vmatpush1.msra.mxu0 0.0
        %9229 = vmatprep.subr.mxu0 0.0
        %9230 = vmatpush1.msra.mxu0 0.0
        %9231 = vmatprep.subr.mxu0 0.0
        %9232 = vmatpush1.msra.mxu0 0.0
        %9233 = vmatprep.subr.mxu0 0.0
        %9234 = vmatpush1.msra.mxu0 0.0
        %9235 = vmatprep.subr.mxu0 0.0
        %9236 = vmatpush1.msra.mxu0 0.0
        %9237 = vmatprep.subr.mxu0 0.0
        %9238 = vmatpush1.msra.mxu0 0.0
        %9239 = vmatprep.subr.mxu0 0.0
        %9240 = vmatpush1.msra.mxu0 0.0
        %9241 = vmatprep.subr.mxu0 0.0
        %9242 = vmatpush1.msra.mxu0 0.0
        %9243 = vmatprep.subr.mxu0 0.0
        %9244 = vmatpush1.msra.mxu0 0.0
        %9245 = vmatprep.subr.mxu0 0.0
        %9246 = vmatpush1.msra.mxu0 0.0
        %9247 = vmatprep.subr.mxu0 0.0
        %9248 = vmatpush1.msra.mxu0 0.0
        %9249 = vmatprep.subr.mxu0 0.0
        %9250 = vmatpush1.msra.mxu0 0.0
        %9251 = vmatprep.subr.mxu0 0.0
        %9252 = vmatpush1.msra.mxu0 0.0
        %9253 = vmatprep.subr.mxu0 0.0
        %9254 = vmatpush1.msra.mxu0 0.0
        %9255 = vmatprep.subr.mxu0 0.0
        %9256 = vmatpush1.msra.mxu0 0.0
        %9257 = vmatprep.subr.mxu0 0.0
        %9258 = vmatpush1.msra.mxu0 0.0
        %9259 = vmatprep.subr.mxu0 0.0
        %9260 = vmatpush1.msra.mxu0 0.0
        %9261 = vmatprep.subr.mxu0 0.0
        %9262 = vmatpush1.msra.mxu0 0.0
        %9263 = vmatprep.subr.mxu0 0.0
        %9264 = vmatpush1.msra.mxu0 0.0
        %9265 = vmatprep.subr.mxu0 0.0
        %9266 = vmatpush1.msra.mxu0 0.0
        %9267 = vmatprep.subr.mxu0 0.0
        %9268 = vmatpush1.msra.mxu0 0.0
        %9269 = vmatprep.subr.mxu0 0.0
        %9270 = vmatpush1.msra.mxu0 0.0
        %9271 = vmatprep.subr.mxu0 0.0
        %9272 = vmatpush1.msra.mxu0 0.0
        %9273 = vmatprep.subr.mxu0 0.0
        %9274 = vmatpush1.msra.mxu0 0.0
        %9275 = vmatprep.subr.mxu0 0.0
        %9276 = vmatpush1.msra.mxu0 0.0
        %9277 = vmatprep.subr.mxu0 0.0
        %9278 = vmatpush1.msra.mxu0 0.0
        %9279 = vmatprep.subr.mxu0 0.0
        %9280 = vmatpush1.msra.mxu0 0.0
        %9281 = vmatprep.mubr.f32.mxu0 0.0
        %v9282 = vand.u32 %v9128, 4294901760
        %9283 = vmatmul.mubr.f32.gmra.mrb[0].mxu0 %v9282
        %v9284 = vpop.f32.mrb[0].mxu0
        %v9285 = vadd.f32 %v9204, %v9284
        %v9286 = vpop.f32.mrb[0].mxu0
        %9287 = vdwg.mxu0
        %9288 = vmatprep.subr.mxu0 0.0
        %v9289 = vand.u32 %v9122, 4294901760
        %v9290 = vsub.f32 %v9122, %v9289
        %9291 = vmatpush1.msra.mxu0 %v9290
        %9292 = vmatprep.subr.mxu0 0.0
        %v9293 = vand.u32 %v9124, 4294901760
        %v9294 = vsub.f32 %v9124, %v9293
        %9295 = vmatpush1.msra.mxu0 %v9294
        %9296 = vmatprep.subr.mxu0 0.0
        %9297 = vmatpush1.msra.mxu0 0.0
        %9298 = vmatprep.subr.mxu0 0.0
        %9299 = vmatpush1.msra.mxu0 0.0
        %9300 = vmatprep.subr.mxu0 0.0
        %9301 = vmatpush1.msra.mxu0 0.0
        %9302 = vmatprep.subr.mxu0 0.0
        %9303 = vmatpush1.msra.mxu0 0.0
        %9304 = vmatprep.subr.mxu0 0.0
        %9305 = vmatpush1.msra.mxu0 0.0
        %9306 = vmatprep.subr.mxu0 0.0
        %9307 = vmatpush1.msra.mxu0 0.0
        %9308 = vmatprep.subr.mxu0 0.0
        %9309 = vmatpush1.msra.mxu0 0.0
        %9310 = vmatprep.subr.mxu0 0.0
        %9311 = vmatpush1.msra.mxu0 0.0
        %9312 = vmatprep.subr.mxu0 0.0
        %9313 = vmatpush1.msra.mxu0 0.0
        %9314 = vmatprep.subr.mxu0 0.0
        %9315 = vmatpush1.msra.mxu0 0.0
        %9316 = vmatprep.subr.mxu0 0.0
        %9317 = vmatpush1.msra.mxu0 0.0
        %9318 = vmatprep.subr.mxu0 0.0
        %9319 = vmatpush1.msra.mxu0 0.0
        %9320 = vmatprep.subr.mxu0 0.0
        %9321 = vmatpush1.msra.mxu0 0.0
        %9322 = vmatprep.subr.mxu0 0.0
        %9323 = vmatpush1.msra.mxu0 0.0
        %9324 = vmatprep.subr.mxu0 0.0
        %9325 = vmatpush1.msra.mxu0 0.0
        %9326 = vmatprep.subr.mxu0 0.0
        %9327 = vmatpush1.msra.mxu0 0.0
        %9328 = vmatprep.subr.mxu0 0.0
        %9329 = vmatpush1.msra.mxu0 0.0
        %9330 = vmatprep.subr.mxu0 0.0
        %9331 = vmatpush1.msra.mxu0 0.0
        %9332 = vmatprep.subr.mxu0 0.0
        %9333 = vmatpush1.msra.mxu0 0.0
        %9334 = vmatprep.subr.mxu0 0.0
        %9335 = vmatpush1.msra.mxu0 0.0
        %9336 = vmatprep.subr.mxu0 0.0
        %9337 = vmatpush1.msra.mxu0 0.0
        %9338 = vmatprep.subr.mxu0 0.0
        %9339 = vmatpush1.msra.mxu0 0.0
        %9340 = vmatprep.subr.mxu0 0.0
        %9341 = vmatpush1.msra.mxu0 0.0
        %9342 = vmatprep.subr.mxu0 0.0
        %9343 = vmatpush1.msra.mxu0 0.0
        %9344 = vmatprep.subr.mxu0 0.0
        %9345 = vmatpush1.msra.mxu0 0.0
        %9346 = vmatprep.subr.mxu0 0.0
        %9347 = vmatpush1.msra.mxu0 0.0
        %9348 = vmatprep.subr.mxu0 0.0
        %9349 = vmatpush1.msra.mxu0 0.0
        %9350 = vmatprep.subr.mxu0 0.0
        %9351 = vmatpush1.msra.mxu0 0.0
        %9352 = vmatprep.subr.mxu0 0.0
        %9353 = vmatpush1.msra.mxu0 0.0
        %9354 = vmatprep.subr.mxu0 0.0
        %9355 = vmatpush1.msra.mxu0 0.0
        %9356 = vmatprep.mubr.f32.mxu0 0.0
        %v9357 = vand.u32 %v9128, 4294901760
        %v9358 = vsub.f32 %v9128, %v9357
        %9359 = vmatmul.mubr.f32.gmra.mrb[0].mxu0 %v9358
        %v9360 = vpop.f32.mrb[0].mxu0
        %v9361 = vadd.f32 %v9285, %v9360
        %v9362 = vpop.f32.mrb[0].mxu0
        %9363 = vdwg.mxu0
        %9364 = vmatprep.subr.mxu0 0.0
        %v9365 = vand.u32 %v9122, 4294901760
        %9366 = vmatpush1.msra.mxu0 %v9365
        %9367 = vmatprep.subr.mxu0 0.0
        %v9368 = vand.u32 %v9124, 4294901760
        %9369 = vmatpush1.msra.mxu0 %v9368
        %9370 = vmatprep.subr.mxu0 0.0
        %9371 = vmatpush1.msra.mxu0 0.0
        %9372 = vmatprep.subr.mxu0 0.0
        %9373 = vmatpush1.msra.mxu0 0.0
        %9374 = vmatprep.subr.mxu0 0.0
        %9375 = vmatpush1.msra.mxu0 0.0
        %9376 = vmatprep.subr.mxu0 0.0
        %9377 = vmatpush1.msra.mxu0 0.0
        %9378 = vmatprep.subr.mxu0 0.0
        %9379 = vmatpush1.msra.mxu0 0.0
        %9380 = vmatprep.subr.mxu0 0.0
        %9381 = vmatpush1.msra.mxu0 0.0
        %9382 = vmatprep.subr.mxu0 0.0
        %9383 = vmatpush1.msra.mxu0 0.0
        %9384 = vmatprep.subr.mxu0 0.0
        %9385 = vmatpush1.msra.mxu0 0.0
        %9386 = vmatprep.subr.mxu0 0.0
        %9387 = vmatpush1.msra.mxu0 0.0
        %9388 = vmatprep.subr.mxu0 0.0
        %9389 = vmatpush1.msra.mxu0 0.0
        %9390 = vmatprep.subr.mxu0 0.0
        %9391 = vmatpush1.msra.mxu0 0.0
        %9392 = vmatprep.subr.mxu0 0.0
        %9393 = vmatpush1.msra.mxu0 0.0
        %9394 = vmatprep.subr.mxu0 0.0
        %9395 = vmatpush1.msra.mxu0 0.0
        %9396 = vmatprep.subr.mxu0 0.0
        %9397 = vmatpush1.msra.mxu0 0.0
        %9398 = vmatprep.subr.mxu0 0.0
        %9399 = vmatpush1.msra.mxu0 0.0
        %9400 = vmatprep.subr.mxu0 0.0
        %9401 = vmatpush1.msra.mxu0 0.0
        %9402 = vmatprep.subr.mxu0 0.0
        %9403 = vmatpush1.msra.mxu0 0.0
        %9404 = vmatprep.subr.mxu0 0.0
        %9405 = vmatpush1.msra.mxu0 0.0
        %9406 = vmatprep.subr.mxu0 0.0
        %9407 = vmatpush1.msra.mxu0 0.0
        %9408 = vmatprep.subr.mxu0 0.0
        %9409 = vmatpush1.msra.mxu0 0.0
        %9410 = vmatprep.subr.mxu0 0.0
        %9411 = vmatpush1.msra.mxu0 0.0
        %9412 = vmatprep.subr.mxu0 0.0
        %9413 = vmatpush1.msra.mxu0 0.0
        %9414 = vmatprep.subr.mxu0 0.0
        %9415 = vmatpush1.msra.mxu0 0.0
        %9416 = vmatprep.subr.mxu0 0.0
        %9417 = vmatpush1.msra.mxu0 0.0
        %9418 = vmatprep.subr.mxu0 0.0
        %9419 = vmatpush1.msra.mxu0 0.0
        %9420 = vmatprep.subr.mxu0 0.0
        %9421 = vmatpush1.msra.mxu0 0.0
        %9422 = vmatprep.subr.mxu0 0.0
        %9423 = vmatpush1.msra.mxu0 0.0
        %9424 = vmatprep.subr.mxu0 0.0
        %9425 = vmatpush1.msra.mxu0 0.0
        %9426 = vmatprep.subr.mxu0 0.0
        %9427 = vmatpush1.msra.mxu0 0.0
        %9428 = vmatprep.subr.mxu0 0.0
        %9429 = vmatpush1.msra.mxu0 0.0
        %9430 = vmatprep.mubr.f32.mxu0 0.0
        %v9431 = vand.u32 %v9128, 4294901760
        %v9432 = vsub.f32 %v9128, %v9431
        %v9433 = vand.u32 %v9432, 4294901760
        %9434 = vmatmul.mubr.f32.gmra.mrb[0].mxu0 %v9433
        %v9435 = vpop.f32.mrb[0].mxu0
        %v9436 = vadd.f32 %v9361, %v9435
        %v9437 = vpop.f32.mrb[0].mxu0
        %9438 = vdwg.mxu0
        %9439 = vmatprep.subr.mxu0 0.0
        %v9440 = vand.u32 %v9122, 4294901760
        %v9441 = vsub.f32 %v9122, %v9440
        %v9442 = vand.u32 %v9441, 4294901760
        %9443 = vmatpush1.msra.mxu0 %v9442
        %9444 = vmatprep.subr.mxu0 0.0
        %v9445 = vand.u32 %v9124, 4294901760
        %v9446 = vsub.f32 %v9124, %v9445
        %v9447 = vand.u32 %v9446, 4294901760
        %9448 = vmatpush1.msra.mxu0 %v9447
        %9449 = vmatprep.subr.mxu0 0.0
        %9450 = vmatpush1.msra.mxu0 0.0
        %9451 = vmatprep.subr.mxu0 0.0
        %9452 = vmatpush1.msra.mxu0 0.0
        %9453 = vmatprep.subr.mxu0 0.0
        %9454 = vmatpush1.msra.mxu0 0.0
        %9455 = vmatprep.subr.mxu0 0.0
        %9456 = vmatpush1.msra.mxu0 0.0
        %9457 = vmatprep.subr.mxu0 0.0
        %9458 = vmatpush1.msra.mxu0 0.0
        %9459 = vmatprep.subr.mxu0 0.0
        %9460 = vmatpush1.msra.mxu0 0.0
        %9461 = vmatprep.subr.mxu0 0.0
        %9462 = vmatpush1.msra.mxu0 0.0
        %9463 = vmatprep.subr.mxu0 0.0
        %9464 = vmatpush1.msra.mxu0 0.0
        %9465 = vmatprep.subr.mxu0 0.0
        %9466 = vmatpush1.msra.mxu0 0.0
        %9467 = vmatprep.subr.mxu0 0.0
        %9468 = vmatpush1.msra.mxu0 0.0
        %9469 = vmatprep.subr.mxu0 0.0
        %9470 = vmatpush1.msra.mxu0 0.0
        %9471 = vmatprep.subr.mxu0 0.0
        %9472 = vmatpush1.msra.mxu0 0.0
        %9473 = vmatprep.subr.mxu0 0.0
        %9474 = vmatpush1.msra.mxu0 0.0
        %9475 = vmatprep.subr.mxu0 0.0
        %9476 = vmatpush1.msra.mxu0 0.0
        %9477 = vmatprep.subr.mxu0 0.0
        %9478 = vmatpush1.msra.mxu0 0.0
        %9479 = vmatprep.subr.mxu0 0.0
        %9480 = vmatpush1.msra.mxu0 0.0
        %9481 = vmatprep.subr.mxu0 0.0
        %9482 = vmatpush1.msra.mxu0 0.0
        %9483 = vmatprep.subr.mxu0 0.0
        %9484 = vmatpush1.msra.mxu0 0.0
        %9485 = vmatprep.subr.mxu0 0.0
        %9486 = vmatpush1.msra.mxu0 0.0
        %9487 = vmatprep.subr.mxu0 0.0
        %9488 = vmatpush1.msra.mxu0 0.0
        %9489 = vmatprep.subr.mxu0 0.0
        %9490 = vmatpush1.msra.mxu0 0.0
        %9491 = vmatprep.subr.mxu0 0.0
        %9492 = vmatpush1.msra.mxu0 0.0
        %9493 = vmatprep.subr.mxu0 0.0
        %9494 = vmatpush1.msra.mxu0 0.0
        %9495 = vmatprep.subr.mxu0 0.0
        %9496 = vmatpush1.msra.mxu0 0.0
        %9497 = vmatprep.subr.mxu0 0.0
        %9498 = vmatpush1.msra.mxu0 0.0
        %9499 = vmatprep.subr.mxu0 0.0
        %9500 = vmatpush1.msra.mxu0 0.0
        %9501 = vmatprep.subr.mxu0 0.0
        %9502 = vmatpush1.msra.mxu0 0.0
        %9503 = vmatprep.subr.mxu0 0.0
        %9504 = vmatpush1.msra.mxu0 0.0
        %9505 = vmatprep.subr.mxu0 0.0
        %9506 = vmatpush1.msra.mxu0 0.0
        %9507 = vmatprep.subr.mxu0 0.0
        %9508 = vmatpush1.msra.mxu0 0.0
        %9509 = vmatprep.mubr.f32.mxu0 0.0
        %v9510 = vand.u32 %v9128, 4294901760
        %9511 = vmatmul.mubr.f32.gmra.mrb[0].mxu0 %v9510
        %v9512 = vpop.f32.mrb[0].mxu0
        %v9513 = vadd.f32 %v9436, %v9512
        %v9514 = vpop.f32.mrb[0].mxu0
        %9515 = vdwg.mxu0
        %9516 = vmatprep.subr.mxu0 0.0
        %v9517 = vand.u32 %v9122, 4294901760
        %9518 = vmatpush1.msra.mxu0 %v9517
        %9519 = vmatprep.subr.mxu0 0.0
        %v9520 = vand.u32 %v9124, 4294901760
        %9521 = vmatpush1.msra.mxu0 %v9520
        %9522 = vmatprep.subr.mxu0 0.0
        %9523 = vmatpush1.msra.mxu0 0.0
        %9524 = vmatprep.subr.mxu0 0.0
        %9525 = vmatpush1.msra.mxu0 0.0
        %9526 = vmatprep.subr.mxu0 0.0
        %9527 = vmatpush1.msra.mxu0 0.0
        %9528 = vmatprep.subr.mxu0 0.0
        %9529 = vmatpush1.msra.mxu0 0.0
        %9530 = vmatprep.subr.mxu0 0.0
        %9531 = vmatpush1.msra.mxu0 0.0
        %9532 = vmatprep.subr.mxu0 0.0
        %9533 = vmatpush1.msra.mxu0 0.0
        %9534 = vmatprep.subr.mxu0 0.0
        %9535 = vmatpush1.msra.mxu0 0.0
        %9536 = vmatprep.subr.mxu0 0.0
        %9537 = vmatpush1.msra.mxu0 0.0
        %9538 = vmatprep.subr.mxu0 0.0
        %9539 = vmatpush1.msra.mxu0 0.0
        %9540 = vmatprep.subr.mxu0 0.0
        %9541 = vmatpush1.msra.mxu0 0.0
        %9542 = vmatprep.subr.mxu0 0.0
        %9543 = vmatpush1.msra.mxu0 0.0
        %9544 = vmatprep.subr.mxu0 0.0
        %9545 = vmatpush1.msra.mxu0 0.0
        %9546 = vmatprep.subr.mxu0 0.0
        %9547 = vmatpush1.msra.mxu0 0.0
        %9548 = vmatprep.subr.mxu0 0.0
        %9549 = vmatpush1.msra.mxu0 0.0
        %9550 = vmatprep.subr.mxu0 0.0
        %9551 = vmatpush1.msra.mxu0 0.0
        %9552 = vmatprep.subr.mxu0 0.0
        %9553 = vmatpush1.msra.mxu0 0.0
        %9554 = vmatprep.subr.mxu0 0.0
        %9555 = vmatpush1.msra.mxu0 0.0
        %9556 = vmatprep.subr.mxu0 0.0
        %9557 = vmatpush1.msra.mxu0 0.0
        %9558 = vmatprep.subr.mxu0 0.0
        %9559 = vmatpush1.msra.mxu0 0.0
        %9560 = vmatprep.subr.mxu0 0.0
        %9561 = vmatpush1.msra.mxu0 0.0
        %9562 = vmatprep.subr.mxu0 0.0
        %9563 = vmatpush1.msra.mxu0 0.0
        %9564 = vmatprep.subr.mxu0 0.0
        %9565 = vmatpush1.msra.mxu0 0.0
        %9566 = vmatprep.subr.mxu0 0.0
        %9567 = vmatpush1.msra.mxu0 0.0
        %9568 = vmatprep.subr.mxu0 0.0
        %9569 = vmatpush1.msra.mxu0 0.0
        %9570 = vmatprep.subr.mxu0 0.0
        %9571 = vmatpush1.msra.mxu0 0.0
        %9572 = vmatprep.subr.mxu0 0.0
        %9573 = vmatpush1.msra.mxu0 0.0
        %9574 = vmatprep.subr.mxu0 0.0
        %9575 = vmatpush1.msra.mxu0 0.0
        %9576 = vmatprep.subr.mxu0 0.0
        %9577 = vmatpush1.msra.mxu0 0.0
        %9578 = vmatprep.subr.mxu0 0.0
        %9579 = vmatpush1.msra.mxu0 0.0
        %9580 = vmatprep.subr.mxu0 0.0
        %9581 = vmatpush1.msra.mxu0 0.0
        %9582 = vmatprep.mubr.f32.mxu0 0.0
        %v9583 = vand.u32 %v9128, 4294901760
        %9584 = vmatmul.mubr.f32.gmra.mrb[0].mxu0 %v9583
        %v9585 = vpop.f32.mrb[0].mxu0
        %v9586 = vadd.f32 %v9513, %v9585
        %v9587 = vpop.f32.mrb[0].mxu0
        %9588 = vdwg.mxu0
        %9589 = vrot.lane.b32.xlu0 %v9113, 60
        %v9590 = vpop.permute.xlu0 %9589
        %9591 = vrot.lane.b32.xlu0 %v9114, 60
        %v9592 = vpop.permute.xlu0 %9591
        %v9596 = vsel %vm326, %v9116, 0
        %9598 = vmatprep.subr.mxu0 0.0
        %v9599 = vand.u32 %v9590, 4294901760
        %9600 = vmatpush1.msra.mxu0 %v9599
        %9601 = vmatprep.subr.mxu0 0.0
        %v9602 = vand.u32 %v9592, 4294901760
        %9603 = vmatpush1.msra.mxu0 %v9602
        %9604 = vmatprep.subr.mxu0 0.0
        %9605 = vmatpush1.msra.mxu0 0.0
        %9606 = vmatprep.subr.mxu0 0.0
        %9607 = vmatpush1.msra.mxu0 0.0
        %9608 = vmatprep.subr.mxu0 0.0
        %9609 = vmatpush1.msra.mxu0 0.0
        %9610 = vmatprep.subr.mxu0 0.0
        %9611 = vmatpush1.msra.mxu0 0.0
        %9612 = vmatprep.subr.mxu0 0.0
        %9613 = vmatpush1.msra.mxu0 0.0
        %9614 = vmatprep.subr.mxu0 0.0
        %9615 = vmatpush1.msra.mxu0 0.0
        %9616 = vmatprep.subr.mxu0 0.0
        %9617 = vmatpush1.msra.mxu0 0.0
        %9618 = vmatprep.subr.mxu0 0.0
        %9619 = vmatpush1.msra.mxu0 0.0
        %9620 = vmatprep.subr.mxu0 0.0
        %9621 = vmatpush1.msra.mxu0 0.0
        %9622 = vmatprep.subr.mxu0 0.0
        %9623 = vmatpush1.msra.mxu0 0.0
        %9624 = vmatprep.subr.mxu0 0.0
        %9625 = vmatpush1.msra.mxu0 0.0
        %9626 = vmatprep.subr.mxu0 0.0
        %9627 = vmatpush1.msra.mxu0 0.0
        %9628 = vmatprep.subr.mxu0 0.0
        %9629 = vmatpush1.msra.mxu0 0.0
        %9630 = vmatprep.subr.mxu0 0.0
        %9631 = vmatpush1.msra.mxu0 0.0
        %9632 = vmatprep.subr.mxu0 0.0
        %9633 = vmatpush1.msra.mxu0 0.0
        %9634 = vmatprep.subr.mxu0 0.0
        %9635 = vmatpush1.msra.mxu0 0.0
        %9636 = vmatprep.subr.mxu0 0.0
        %9637 = vmatpush1.msra.mxu0 0.0
        %9638 = vmatprep.subr.mxu0 0.0
        %9639 = vmatpush1.msra.mxu0 0.0
        %9640 = vmatprep.subr.mxu0 0.0
        %9641 = vmatpush1.msra.mxu0 0.0
        %9642 = vmatprep.subr.mxu0 0.0
        %9643 = vmatpush1.msra.mxu0 0.0
        %9644 = vmatprep.subr.mxu0 0.0
        %9645 = vmatpush1.msra.mxu0 0.0
        %9646 = vmatprep.subr.mxu0 0.0
        %9647 = vmatpush1.msra.mxu0 0.0
        %9648 = vmatprep.subr.mxu0 0.0
        %9649 = vmatpush1.msra.mxu0 0.0
        %9650 = vmatprep.subr.mxu0 0.0
        %9651 = vmatpush1.msra.mxu0 0.0
        %9652 = vmatprep.subr.mxu0 0.0
        %9653 = vmatpush1.msra.mxu0 0.0
        %9654 = vmatprep.subr.mxu0 0.0
        %9655 = vmatpush1.msra.mxu0 0.0
        %9656 = vmatprep.subr.mxu0 0.0
        %9657 = vmatpush1.msra.mxu0 0.0
        %9658 = vmatprep.subr.mxu0 0.0
        %9659 = vmatpush1.msra.mxu0 0.0
        %9660 = vmatprep.subr.mxu0 0.0
        %9661 = vmatpush1.msra.mxu0 0.0
        %9662 = vmatprep.subr.mxu0 0.0
        %9663 = vmatpush1.msra.mxu0 0.0
        %9664 = vmatprep.mubr.f32.mxu0 0.0
        %v9665 = vand.u32 %v9596, 4294901760
        %v9666 = vsub.f32 %v9596, %v9665
        %v9667 = vand.u32 %v9666, 4294901760
        %v9668 = vsub.f32 %v9666, %v9667
        %v9669 = vand.u32 %v9668, 4294901760
        %9670 = vmatmul.mubr.f32.gmra.mrb[0].mxu0 %v9669
        %v9671 = vpop.f32.mrb[0].mxu0
        %v9672 = vadd.f32 %v9586, %v9671
        %v9673 = vpop.f32.mrb[0].mxu0
        %9674 = vdwg.mxu0
        %9675 = vmatprep.subr.mxu0 0.0
        %v9676 = vand.u32 %v9590, 4294901760
        %v9677 = vsub.f32 %v9590, %v9676
        %v9678 = vand.u32 %v9677, 4294901760
        %v9679 = vsub.f32 %v9677, %v9678
        %v9680 = vand.u32 %v9679, 4294901760
        %9681 = vmatpush1.msra.mxu0 %v9680
        %9682 = vmatprep.subr.mxu0 0.0
        %v9683 = vand.u32 %v9592, 4294901760
        %v9684 = vsub.f32 %v9592, %v9683
        %v9685 = vand.u32 %v9684, 4294901760
        %v9686 = vsub.f32 %v9684, %v9685
        %v9687 = vand.u32 %v9686, 4294901760
        %9688 = vmatpush1.msra.mxu0 %v9687
        %9689 = vmatprep.subr.mxu0 0.0
        %9690 = vmatpush1.msra.mxu0 0.0
        %9691 = vmatprep.subr.mxu0 0.0
        %9692 = vmatpush1.msra.mxu0 0.0
        %9693 = vmatprep.subr.mxu0 0.0
        %9694 = vmatpush1.msra.mxu0 0.0
        %9695 = vmatprep.subr.mxu0 0.0
        %9696 = vmatpush1.msra.mxu0 0.0
        %9697 = vmatprep.subr.mxu0 0.0
        %9698 = vmatpush1.msra.mxu0 0.0
        %9699 = vmatprep.subr.mxu0 0.0
        %9700 = vmatpush1.msra.mxu0 0.0
        %9701 = vmatprep.subr.mxu0 0.0
        %9702 = vmatpush1.msra.mxu0 0.0
        %9703 = vmatprep.subr.mxu0 0.0
        %9704 = vmatpush1.msra.mxu0 0.0
        %9705 = vmatprep.subr.mxu0 0.0
        %9706 = vmatpush1.msra.mxu0 0.0
        %9707 = vmatprep.subr.mxu0 0.0
        %9708 = vmatpush1.msra.mxu0 0.0
        %9709 = vmatprep.subr.mxu0 0.0
        %9710 = vmatpush1.msra.mxu0 0.0
        %9711 = vmatprep.subr.mxu0 0.0
        %9712 = vmatpush1.msra.mxu0 0.0
        %9713 = vmatprep.subr.mxu0 0.0
        %9714 = vmatpush1.msra.mxu0 0.0
        %9715 = vmatprep.subr.mxu0 0.0
        %9716 = vmatpush1.msra.mxu0 0.0
        %9717 = vmatprep.subr.mxu0 0.0
        %9718 = vmatpush1.msra.mxu0 0.0
        %9719 = vmatprep.subr.mxu0 0.0
        %9720 = vmatpush1.msra.mxu0 0.0
        %9721 = vmatprep.subr.mxu0 0.0
        %9722 = vmatpush1.msra.mxu0 0.0
        %9723 = vmatprep.subr.mxu0 0.0
        %9724 = vmatpush1.msra.mxu0 0.0
        %9725 = vmatprep.subr.mxu0 0.0
        %9726 = vmatpush1.msra.mxu0 0.0
        %9727 = vmatprep.subr.mxu0 0.0
        %9728 = vmatpush1.msra.mxu0 0.0
        %9729 = vmatprep.subr.mxu0 0.0
        %9730 = vmatpush1.msra.mxu0 0.0
        %9731 = vmatprep.subr.mxu0 0.0
        %9732 = vmatpush1.msra.mxu0 0.0
        %9733 = vmatprep.subr.mxu0 0.0
        %9734 = vmatpush1.msra.mxu0 0.0
        %9735 = vmatprep.subr.mxu0 0.0
        %9736 = vmatpush1.msra.mxu0 0.0
        %9737 = vmatprep.subr.mxu0 0.0
        %9738 = vmatpush1.msra.mxu0 0.0
        %9739 = vmatprep.subr.mxu0 0.0
        %9740 = vmatpush1.msra.mxu0 0.0
        %9741 = vmatprep.subr.mxu0 0.0
        %9742 = vmatpush1.msra.mxu0 0.0
        %9743 = vmatprep.subr.mxu0 0.0
        %9744 = vmatpush1.msra.mxu0 0.0
        %9745 = vmatprep.subr.mxu0 0.0
        %9746 = vmatpush1.msra.mxu0 0.0
        %9747 = vmatprep.subr.mxu0 0.0
        %9748 = vmatpush1.msra.mxu0 0.0
        %9749 = vmatprep.mubr.f32.mxu0 0.0
        %v9750 = vand.u32 %v9596, 4294901760
        %9751 = vmatmul.mubr.f32.gmra.mrb[0].mxu0 %v9750
        %v9752 = vpop.f32.mrb[0].mxu0
        %v9753 = vadd.f32 %v9672, %v9752
        %v9754 = vpop.f32.mrb[0].mxu0
        %9755 = vdwg.mxu0
        %9756 = vmatprep.subr.mxu0 0.0
        %v9757 = vand.u32 %v9590, 4294901760
        %v9758 = vsub.f32 %v9590, %v9757
        %9759 = vmatpush1.msra.mxu0 %v9758
        %9760 = vmatprep.subr.mxu0 0.0
        %v9761 = vand.u32 %v9592, 4294901760
        %v9762 = vsub.f32 %v9592, %v9761
        %9763 = vmatpush1.msra.mxu0 %v9762
        %9764 = vmatprep.subr.mxu0 0.0
        %9765 = vmatpush1.msra.mxu0 0.0
        %9766 = vmatprep.subr.mxu0 0.0
        %9767 = vmatpush1.msra.mxu0 0.0
        %9768 = vmatprep.subr.mxu0 0.0
        %9769 = vmatpush1.msra.mxu0 0.0
        %9770 = vmatprep.subr.mxu0 0.0
        %9771 = vmatpush1.msra.mxu0 0.0
        %9772 = vmatprep.subr.mxu0 0.0
        %9773 = vmatpush1.msra.mxu0 0.0
        %9774 = vmatprep.subr.mxu0 0.0
        %9775 = vmatpush1.msra.mxu0 0.0
        %9776 = vmatprep.subr.mxu0 0.0
        %9777 = vmatpush1.msra.mxu0 0.0
        %9778 = vmatprep.subr.mxu0 0.0
        %9779 = vmatpush1.msra.mxu0 0.0
        %9780 = vmatprep.subr.mxu0 0.0
        %9781 = vmatpush1.msra.mxu0 0.0
        %9782 = vmatprep.subr.mxu0 0.0
        %9783 = vmatpush1.msra.mxu0 0.0
        %9784 = vmatprep.subr.mxu0 0.0
        %9785 = vmatpush1.msra.mxu0 0.0
        %9786 = vmatprep.subr.mxu0 0.0
        %9787 = vmatpush1.msra.mxu0 0.0
        %9788 = vmatprep.subr.mxu0 0.0
        %9789 = vmatpush1.msra.mxu0 0.0
        %9790 = vmatprep.subr.mxu0 0.0
        %9791 = vmatpush1.msra.mxu0 0.0
        %9792 = vmatprep.subr.mxu0 0.0
        %9793 = vmatpush1.msra.mxu0 0.0
        %9794 = vmatprep.subr.mxu0 0.0
        %9795 = vmatpush1.msra.mxu0 0.0
        %9796 = vmatprep.subr.mxu0 0.0
        %9797 = vmatpush1.msra.mxu0 0.0
        %9798 = vmatprep.subr.mxu0 0.0
        %9799 = vmatpush1.msra.mxu0 0.0
        %9800 = vmatprep.subr.mxu0 0.0
        %9801 = vmatpush1.msra.mxu0 0.0
        %9802 = vmatprep.subr.mxu0 0.0
        %9803 = vmatpush1.msra.mxu0 0.0
        %9804 = vmatprep.subr.mxu0 0.0
        %9805 = vmatpush1.msra.mxu0 0.0
        %9806 = vmatprep.subr.mxu0 0.0
        %9807 = vmatpush1.msra.mxu0 0.0
        %9808 = vmatprep.subr.mxu0 0.0
        %9809 = vmatpush1.msra.mxu0 0.0
        %9810 = vmatprep.subr.mxu0 0.0
        %9811 = vmatpush1.msra.mxu0 0.0
        %9812 = vmatprep.subr.mxu0 0.0
        %9813 = vmatpush1.msra.mxu0 0.0
        %9814 = vmatprep.subr.mxu0 0.0
        %9815 = vmatpush1.msra.mxu0 0.0
        %9816 = vmatprep.subr.mxu0 0.0
        %9817 = vmatpush1.msra.mxu0 0.0
        %9818 = vmatprep.subr.mxu0 0.0
        %9819 = vmatpush1.msra.mxu0 0.0
        %9820 = vmatprep.subr.mxu0 0.0
        %9821 = vmatpush1.msra.mxu0 0.0
        %9822 = vmatprep.subr.mxu0 0.0
        %9823 = vmatpush1.msra.mxu0 0.0
        %9824 = vmatprep.mubr.f32.mxu0 0.0
        %v9825 = vand.u32 %v9596, 4294901760
        %v9826 = vsub.f32 %v9596, %v9825
        %9827 = vmatmul.mubr.f32.gmra.mrb[0].mxu0 %v9826
        %v9828 = vpop.f32.mrb[0].mxu0
        %v9829 = vadd.f32 %v9753, %v9828
        %v9830 = vpop.f32.mrb[0].mxu0
        %9831 = vdwg.mxu0
        %9832 = vmatprep.subr.mxu0 0.0
        %v9833 = vand.u32 %v9590, 4294901760
        %9834 = vmatpush1.msra.mxu0 %v9833
        %9835 = vmatprep.subr.mxu0 0.0
        %v9836 = vand.u32 %v9592, 4294901760
        %9837 = vmatpush1.msra.mxu0 %v9836
        %9838 = vmatprep.subr.mxu0 0.0
        %9839 = vmatpush1.msra.mxu0 0.0
        %9840 = vmatprep.subr.mxu0 0.0
        %9841 = vmatpush1.msra.mxu0 0.0
        %9842 = vmatprep.subr.mxu0 0.0
        %9843 = vmatpush1.msra.mxu0 0.0
        %9844 = vmatprep.subr.mxu0 0.0
        %9845 = vmatpush1.msra.mxu0 0.0
        %9846 = vmatprep.subr.mxu0 0.0
        %9847 = vmatpush1.msra.mxu0 0.0
        %9848 = vmatprep.subr.mxu0 0.0
        %9849 = vmatpush1.msra.mxu0 0.0
        %9850 = vmatprep.subr.mxu0 0.0
        %9851 = vmatpush1.msra.mxu0 0.0
        %9852 = vmatprep.subr.mxu0 0.0
        %9853 = vmatpush1.msra.mxu0 0.0
        %9854 = vmatprep.subr.mxu0 0.0
        %9855 = vmatpush1.msra.mxu0 0.0
        %9856 = vmatprep.subr.mxu0 0.0
        %9857 = vmatpush1.msra.mxu0 0.0
        %9858 = vmatprep.subr.mxu0 0.0
        %9859 = vmatpush1.msra.mxu0 0.0
        %9860 = vmatprep.subr.mxu0 0.0
        %9861 = vmatpush1.msra.mxu0 0.0
        %9862 = vmatprep.subr.mxu0 0.0
        %9863 = vmatpush1.msra.mxu0 0.0
        %9864 = vmatprep.subr.mxu0 0.0
        %9865 = vmatpush1.msra.mxu0 0.0
        %9866 = vmatprep.subr.mxu0 0.0
        %9867 = vmatpush1.msra.mxu0 0.0
        %9868 = vmatprep.subr.mxu0 0.0
        %9869 = vmatpush1.msra.mxu0 0.0
        %9870 = vmatprep.subr.mxu0 0.0
        %9871 = vmatpush1.msra.mxu0 0.0
        %9872 = vmatprep.subr.mxu0 0.0
        %9873 = vmatpush1.msra.mxu0 0.0
        %9874 = vmatprep.subr.mxu0 0.0
        %9875 = vmatpush1.msra.mxu0 0.0
        %9876 = vmatprep.subr.mxu0 0.0
        %9877 = vmatpush1.msra.mxu0 0.0
        %9878 = vmatprep.subr.mxu0 0.0
        %9879 = vmatpush1.msra.mxu0 0.0
        %9880 = vmatprep.subr.mxu0 0.0
        %9881 = vmatpush1.msra.mxu0 0.0
        %9882 = vmatprep.subr.mxu0 0.0
        %9883 = vmatpush1.msra.mxu0 0.0
        %9884 = vmatprep.subr.mxu0 0.0
        %9885 = vmatpush1.msra.mxu0 0.0
        %9886 = vmatprep.subr.mxu0 0.0
        %9887 = vmatpush1.msra.mxu0 0.0
        %9888 = vmatprep.subr.mxu0 0.0
        %9889 = vmatpush1.msra.mxu0 0.0
        %9890 = vmatprep.subr.mxu0 0.0
        %9891 = vmatpush1.msra.mxu0 0.0
        %9892 = vmatprep.subr.mxu0 0.0
        %9893 = vmatpush1.msra.mxu0 0.0
        %9894 = vmatprep.subr.mxu0 0.0
        %9895 = vmatpush1.msra.mxu0 0.0
        %9896 = vmatprep.subr.mxu0 0.0
        %9897 = vmatpush1.msra.mxu0 0.0
        %9898 = vmatprep.mubr.f32.mxu0 0.0
        %v9899 = vand.u32 %v9596, 4294901760
        %v9900 = vsub.f32 %v9596, %v9899
        %v9901 = vand.u32 %v9900, 4294901760
        %9902 = vmatmul.mubr.f32.gmra.mrb[0].mxu0 %v9901
        %v9903 = vpop.f32.mrb[0].mxu0
        %v9904 = vadd.f32 %v9829, %v9903
        %v9905 = vpop.f32.mrb[0].mxu0
        %9906 = vdwg.mxu0
        %9907 = vmatprep.subr.mxu0 0.0
        %v9908 = vand.u32 %v9590, 4294901760
        %v9909 = vsub.f32 %v9590, %v9908
        %v9910 = vand.u32 %v9909, 4294901760
        %9911 = vmatpush1.msra.mxu0 %v9910
        %9912 = vmatprep.subr.mxu0 0.0
        %v9913 = vand.u32 %v9592, 4294901760
        %v9914 = vsub.f32 %v9592, %v9913
        %v9915 = vand.u32 %v9914, 4294901760
        %9916 = vmatpush1.msra.mxu0 %v9915
        %9917 = vmatprep.subr.mxu0 0.0
        %9918 = vmatpush1.msra.mxu0 0.0
        %9919 = vmatprep.subr.mxu0 0.0
        %9920 = vmatpush1.msra.mxu0 0.0
        %9921 = vmatprep.subr.mxu0 0.0
        %9922 = vmatpush1.msra.mxu0 0.0
        %9923 = vmatprep.subr.mxu0 0.0
        %9924 = vmatpush1.msra.mxu0 0.0
        %9925 = vmatprep.subr.mxu0 0.0
        %9926 = vmatpush1.msra.mxu0 0.0
        %9927 = vmatprep.subr.mxu0 0.0
        %9928 = vmatpush1.msra.mxu0 0.0
        %9929 = vmatprep.subr.mxu0 0.0
        %9930 = vmatpush1.msra.mxu0 0.0
        %9931 = vmatprep.subr.mxu0 0.0
        %9932 = vmatpush1.msra.mxu0 0.0
        %9933 = vmatprep.subr.mxu0 0.0
        %9934 = vmatpush1.msra.mxu0 0.0
        %9935 = vmatprep.subr.mxu0 0.0
        %9936 = vmatpush1.msra.mxu0 0.0
        %9937 = vmatprep.subr.mxu0 0.0
        %9938 = vmatpush1.msra.mxu0 0.0
        %9939 = vmatprep.subr.mxu0 0.0
        %9940 = vmatpush1.msra.mxu0 0.0
        %9941 = vmatprep.subr.mxu0 0.0
        %9942 = vmatpush1.msra.mxu0 0.0
        %9943 = vmatprep.subr.mxu0 0.0
        %9944 = vmatpush1.msra.mxu0 0.0
        %9945 = vmatprep.subr.mxu0 0.0
        %9946 = vmatpush1.msra.mxu0 0.0
        %9947 = vmatprep.subr.mxu0 0.0
        %9948 = vmatpush1.msra.mxu0 0.0
        %9949 = vmatprep.subr.mxu0 0.0
        %9950 = vmatpush1.msra.mxu0 0.0
        %9951 = vmatprep.subr.mxu0 0.0
        %9952 = vmatpush1.msra.mxu0 0.0
        %9953 = vmatprep.subr.mxu0 0.0
        %9954 = vmatpush1.msra.mxu0 0.0
        %9955 = vmatprep.subr.mxu0 0.0
        %9956 = vmatpush1.msra.mxu0 0.0
        %9957 = vmatprep.subr.mxu0 0.0
        %9958 = vmatpush1.msra.mxu0 0.0
        %9959 = vmatprep.subr.mxu0 0.0
        %9960 = vmatpush1.msra.mxu0 0.0
        %9961 = vmatprep.subr.mxu0 0.0
        %9962 = vmatpush1.msra.mxu0 0.0
        %9963 = vmatprep.subr.mxu0 0.0
        %9964 = vmatpush1.msra.mxu0 0.0
        %9965 = vmatprep.subr.mxu0 0.0
        %9966 = vmatpush1.msra.mxu0 0.0
        %9967 = vmatprep.subr.mxu0 0.0
        %9968 = vmatpush1.msra.mxu0 0.0
        %9969 = vmatprep.subr.mxu0 0.0
        %9970 = vmatpush1.msra.mxu0 0.0
        %9971 = vmatprep.subr.mxu0 0.0
        %9972 = vmatpush1.msra.mxu0 0.0
        %9973 = vmatprep.subr.mxu0 0.0
        %9974 = vmatpush1.msra.mxu0 0.0
        %9975 = vmatprep.subr.mxu0 0.0
        %9976 = vmatpush1.msra.mxu0 0.0
        %9977 = vmatprep.mubr.f32.mxu0 0.0
        %v9978 = vand.u32 %v9596, 4294901760
        %9979 = vmatmul.mubr.f32.gmra.mrb[0].mxu0 %v9978
        %v9980 = vpop.f32.mrb[0].mxu0
        %v9981 = vadd.f32 %v9904, %v9980
        %v9982 = vpop.f32.mrb[0].mxu0
        %9983 = vdwg.mxu0
        %9984 = vmatprep.subr.mxu0 0.0
        %v9985 = vand.u32 %v9590, 4294901760
        %9986 = vmatpush1.msra.mxu0 %v9985
        %9987 = vmatprep.subr.mxu0 0.0
        %v9988 = vand.u32 %v9592, 4294901760
        %9989 = vmatpush1.msra.mxu0 %v9988
        %9990 = vmatprep.subr.mxu0 0.0
        %9991 = vmatpush1.msra.mxu0 0.0
        %9992 = vmatprep.subr.mxu0 0.0
        %9993 = vmatpush1.msra.mxu0 0.0
        %9994 = vmatprep.subr.mxu0 0.0
        %9995 = vmatpush1.msra.mxu0 0.0
        %9996 = vmatprep.subr.mxu0 0.0
        %9997 = vmatpush1.msra.mxu0 0.0
        %9998 = vmatprep.subr.mxu0 0.0
        %9999 = vmatpush1.msra.mxu0 0.0
        %10000 = vmatprep.subr.mxu0 0.0
        %10001 = vmatpush1.msra.mxu0 0.0
        %10002 = vmatprep.subr.mxu0 0.0
        %10003 = vmatpush1.msra.mxu0 0.0
        %10004 = vmatprep.subr.mxu0 0.0
        %10005 = vmatpush1.msra.mxu0 0.0
        %10006 = vmatprep.subr.mxu0 0.0
        %10007 = vmatpush1.msra.mxu0 0.0
        %10008 = vmatprep.subr.mxu0 0.0
        %10009 = vmatpush1.msra.mxu0 0.0
        %10010 = vmatprep.subr.mxu0 0.0
        %10011 = vmatpush1.msra.mxu0 0.0
        %10012 = vmatprep.subr.mxu0 0.0
        %10013 = vmatpush1.msra.mxu0 0.0
        %10014 = vmatprep.subr.mxu0 0.0
        %10015 = vmatpush1.msra.mxu0 0.0
        %10016 = vmatprep.subr.mxu0 0.0
        %10017 = vmatpush1.msra.mxu0 0.0
        %10018 = vmatprep.subr.mxu0 0.0
        %10019 = vmatpush1.msra.mxu0 0.0
        %10020 = vmatprep.subr.mxu0 0.0
        %10021 = vmatpush1.msra.mxu0 0.0
        %10022 = vmatprep.subr.mxu0 0.0
        %10023 = vmatpush1.msra.mxu0 0.0
        %10024 = vmatprep.subr.mxu0 0.0
        %10025 = vmatpush1.msra.mxu0 0.0
        %10026 = vmatprep.subr.mxu0 0.0
        %10027 = vmatpush1.msra.mxu0 0.0
        %10028 = vmatprep.subr.mxu0 0.0
        %10029 = vmatpush1.msra.mxu0 0.0
        %10030 = vmatprep.subr.mxu0 0.0
        %10031 = vmatpush1.msra.mxu0 0.0
        %10032 = vmatprep.subr.mxu0 0.0
        %10033 = vmatpush1.msra.mxu0 0.0
        %10034 = vmatprep.subr.mxu0 0.0
        %10035 = vmatpush1.msra.mxu0 0.0
        %10036 = vmatprep.subr.mxu0 0.0
        %10037 = vmatpush1.msra.mxu0 0.0
        %10038 = vmatprep.subr.mxu0 0.0
        %10039 = vmatpush1.msra.mxu0 0.0
        %10040 = vmatprep.subr.mxu0 0.0
        %10041 = vmatpush1.msra.mxu0 0.0
        %10042 = vmatprep.subr.mxu0 0.0
        %10043 = vmatpush1.msra.mxu0 0.0
        %10044 = vmatprep.subr.mxu0 0.0
        %10045 = vmatpush1.msra.mxu0 0.0
        %10046 = vmatprep.subr.mxu0 0.0
        %10047 = vmatpush1.msra.mxu0 0.0
        %10048 = vmatprep.subr.mxu0 0.0
        %10049 = vmatpush1.msra.mxu0 0.0
        %10050 = vmatprep.mubr.f32.mxu0 0.0
        %v10051 = vand.u32 %v9596, 4294901760
        %10052 = vmatmul.mubr.f32.gmra.mrb[0].mxu0 %v10051
        %v10053 = vpop.f32.mrb[0].mxu0
        %v10054 = vadd.f32 %v9981, %v10053
        %v10055 = vpop.f32.mrb[0].mxu0
        %10056 = vdwg.mxu0
        %s10057 = scalar_lea.vmem [#allocation5], 88
        %v10058 = vld [vmem:[%s10057] sm:$0xff]
        %10059 = vrot.lane.b32.xlu0 %v9113, 58
        %v10060 = vpop.permute.xlu0 %10059
        %10061 = vrot.lane.b32.xlu0 %v9114, 58
        %v10062 = vpop.permute.xlu0 %10061
        %v10066 = vsel %vm326, %v10058, 0
        %10068 = vmatprep.subr.mxu0 0.0
        %v10069 = vand.u32 %v10060, 4294901760
        %10070 = vmatpush1.msra.mxu0 %v10069
        %10071 = vmatprep.subr.mxu0 0.0
        %v10072 = vand.u32 %v10062, 4294901760
        %10073 = vmatpush1.msra.mxu0 %v10072
        %10074 = vmatprep.subr.mxu0 0.0
        %10075 = vmatpush1.msra.mxu0 0.0
        %10076 = vmatprep.subr.mxu0 0.0
        %10077 = vmatpush1.msra.mxu0 0.0
        %10078 = vmatprep.subr.mxu0 0.0
        %10079 = vmatpush1.msra.mxu0 0.0
        %10080 = vmatprep.subr.mxu0 0.0
        %10081 = vmatpush1.msra.mxu0 0.0
        %10082 = vmatprep.subr.mxu0 0.0
        %10083 = vmatpush1.msra.mxu0 0.0
        %10084 = vmatprep.subr.mxu0 0.0
        %10085 = vmatpush1.msra.mxu0 0.0
        %10086 = vmatprep.subr.mxu0 0.0
        %10087 = vmatpush1.msra.mxu0 0.0
        %10088 = vmatprep.subr.mxu0 0.0
        %10089 = vmatpush1.msra.mxu0 0.0
        %10090 = vmatprep.subr.mxu0 0.0
        %10091 = vmatpush1.msra.mxu0 0.0
        %10092 = vmatprep.subr.mxu0 0.0
        %10093 = vmatpush1.msra.mxu0 0.0
        %10094 = vmatprep.subr.mxu0 0.0
        %10095 = vmatpush1.msra.mxu0 0.0
        %10096 = vmatprep.subr.mxu0 0.0
        %10097 = vmatpush1.msra.mxu0 0.0
        %10098 = vmatprep.subr.mxu0 0.0
        %10099 = vmatpush1.msra.mxu0 0.0
        %10100 = vmatprep.subr.mxu0 0.0
        %10101 = vmatpush1.msra.mxu0 0.0
        %10102 = vmatprep.subr.mxu0 0.0
        %10103 = vmatpush1.msra.mxu0 0.0
        %10104 = vmatprep.subr.mxu0 0.0
        %10105 = vmatpush1.msra.mxu0 0.0
        %10106 = vmatprep.subr.mxu0 0.0
        %10107 = vmatpush1.msra.mxu0 0.0
        %10108 = vmatprep.subr.mxu0 0.0
        %10109 = vmatpush1.msra.mxu0 0.0
        %10110 = vmatprep.subr.mxu0 0.0
        %10111 = vmatpush1.msra.mxu0 0.0
        %10112 = vmatprep.subr.mxu0 0.0
        %10113 = vmatpush1.msra.mxu0 0.0
        %10114 = vmatprep.subr.mxu0 0.0
        %10115 = vmatpush1.msra.mxu0 0.0
        %10116 = vmatprep.subr.mxu0 0.0
        %10117 = vmatpush1.msra.mxu0 0.0
        %10118 = vmatprep.subr.mxu0 0.0
        %10119 = vmatpush1.msra.mxu0 0.0
        %10120 = vmatprep.subr.mxu0 0.0
        %10121 = vmatpush1.msra.mxu0 0.0
        %10122 = vmatprep.subr.mxu0 0.0
        %10123 = vmatpush1.msra.mxu0 0.0
        %10124 = vmatprep.subr.mxu0 0.0
        %10125 = vmatpush1.msra.mxu0 0.0
        %10126 = vmatprep.subr.mxu0 0.0
        %10127 = vmatpush1.msra.mxu0 0.0
        %10128 = vmatprep.subr.mxu0 0.0
        %10129 = vmatpush1.msra.mxu0 0.0
        %10130 = vmatprep.subr.mxu0 0.0
        %10131 = vmatpush1.msra.mxu0 0.0
        %10132 = vmatprep.subr.mxu0 0.0
        %10133 = vmatpush1.msra.mxu0 0.0
        %10134 = vmatprep.mubr.f32.mxu0 0.0
        %v10135 = vand.u32 %v10066, 4294901760
        %v10136 = vsub.f32 %v10066, %v10135
        %v10137 = vand.u32 %v10136, 4294901760
        %v10138 = vsub.f32 %v10136, %v10137
        %v10139 = vand.u32 %v10138, 4294901760
        %10140 = vmatmul.mubr.f32.gmra.mrb[0].mxu0 %v10139
        %v10141 = vpop.f32.mrb[0].mxu0
        %v10142 = vadd.f32 0.0, %v10141
        %v10143 = vpop.f32.mrb[0].mxu0
        %10144 = vdwg.mxu0
        %10145 = vmatprep.subr.mxu0 0.0
        %v10146 = vand.u32 %v10060, 4294901760
        %v10147 = vsub.f32 %v10060, %v10146
        %v10148 = vand.u32 %v10147, 4294901760
        %v10149 = vsub.f32 %v10147, %v10148
        %v10150 = vand.u32 %v10149, 4294901760
        %10151 = vmatpush1.msra.mxu0 %v10150
        %10152 = vmatprep.subr.mxu0 0.0
        %v10153 = vand.u32 %v10062, 4294901760
        %v10154 = vsub.f32 %v10062, %v10153
        %v10155 = vand.u32 %v10154, 4294901760
        %v10156 = vsub.f32 %v10154, %v10155
        %v10157 = vand.u32 %v10156, 4294901760
        %10158 = vmatpush1.msra.mxu0 %v10157
        %10159 = vmatprep.subr.mxu0 0.0
        %10160 = vmatpush1.msra.mxu0 0.0
        %10161 = vmatprep.subr.mxu0 0.0
        %10162 = vmatpush1.msra.mxu0 0.0
        %10163 = vmatprep.subr.mxu0 0.0
        %10164 = vmatpush1.msra.mxu0 0.0
        %10165 = vmatprep.subr.mxu0 0.0
        %10166 = vmatpush1.msra.mxu0 0.0
        %10167 = vmatprep.subr.mxu0 0.0
        %10168 = vmatpush1.msra.mxu0 0.0
        %10169 = vmatprep.subr.mxu0 0.0
        %10170 = vmatpush1.msra.mxu0 0.0
        %10171 = vmatprep.subr.mxu0 0.0
        %10172 = vmatpush1.msra.mxu0 0.0
        %10173 = vmatprep.subr.mxu0 0.0
        %10174 = vmatpush1.msra.mxu0 0.0
        %10175 = vmatprep.subr.mxu0 0.0
        %10176 = vmatpush1.msra.mxu0 0.0
        %10177 = vmatprep.subr.mxu0 0.0
        %10178 = vmatpush1.msra.mxu0 0.0
        %10179 = vmatprep.subr.mxu0 0.0
        %10180 = vmatpush1.msra.mxu0 0.0
        %10181 = vmatprep.subr.mxu0 0.0
        %10182 = vmatpush1.msra.mxu0 0.0
        %10183 = vmatprep.subr.mxu0 0.0
        %10184 = vmatpush1.msra.mxu0 0.0
        %10185 = vmatprep.subr.mxu0 0.0
        %10186 = vmatpush1.msra.mxu0 0.0
        %10187 = vmatprep.subr.mxu0 0.0
        %10188 = vmatpush1.msra.mxu0 0.0
        %10189 = vmatprep.subr.mxu0 0.0
        %10190 = vmatpush1.msra.mxu0 0.0
        %10191 = vmatprep.subr.mxu0 0.0
        %10192 = vmatpush1.msra.mxu0 0.0
        %10193 = vmatprep.subr.mxu0 0.0
        %10194 = vmatpush1.msra.mxu0 0.0
        %10195 = vmatprep.subr.mxu0 0.0
        %10196 = vmatpush1.msra.mxu0 0.0
        %10197 = vmatprep.subr.mxu0 0.0
        %10198 = vmatpush1.msra.mxu0 0.0
        %10199 = vmatprep.subr.mxu0 0.0
        %10200 = vmatpush1.msra.mxu0 0.0
        %10201 = vmatprep.subr.mxu0 0.0
        %10202 = vmatpush1.msra.mxu0 0.0
        %10203 = vmatprep.subr.mxu0 0.0
        %10204 = vmatpush1.msra.mxu0 0.0
        %10205 = vmatprep.subr.mxu0 0.0
        %10206 = vmatpush1.msra.mxu0 0.0
        %10207 = vmatprep.subr.mxu0 0.0
        %10208 = vmatpush1.msra.mxu0 0.0
        %10209 = vmatprep.subr.mxu0 0.0
        %10210 = vmatpush1.msra.mxu0 0.0
        %10211 = vmatprep.subr.mxu0 0.0
        %10212 = vmatpush1.msra.mxu0 0.0
        %10213 = vmatprep.subr.mxu0 0.0
        %10214 = vmatpush1.msra.mxu0 0.0
        %10215 = vmatprep.subr.mxu0 0.0
        %10216 = vmatpush1.msra.mxu0 0.0
        %10217 = vmatprep.subr.mxu0 0.0
        %10218 = vmatpush1.msra.mxu0 0.0
        %10219 = vmatprep.mubr.f32.mxu0 0.0
        %v10220 = vand.u32 %v10066, 4294901760
        %10221 = vmatmul.mubr.f32.gmra.mrb[0].mxu0 %v10220
        %v10222 = vpop.f32.mrb[0].mxu0
        %v10223 = vadd.f32 %v10142, %v10222
        %v10224 = vpop.f32.mrb[0].mxu0
        %10225 = vdwg.mxu0
        %10226 = vmatprep.subr.mxu0 0.0
        %v10227 = vand.u32 %v10060, 4294901760
        %v10228 = vsub.f32 %v10060, %v10227
        %10229 = vmatpush1.msra.mxu0 %v10228
        %10230 = vmatprep.subr.mxu0 0.0
        %v10231 = vand.u32 %v10062, 4294901760
        %v10232 = vsub.f32 %v10062, %v10231
        %10233 = vmatpush1.msra.mxu0 %v10232
        %10234 = vmatprep.subr.mxu0 0.0
        %10235 = vmatpush1.msra.mxu0 0.0
        %10236 = vmatprep.subr.mxu0 0.0
        %10237 = vmatpush1.msra.mxu0 0.0
        %10238 = vmatprep.subr.mxu0 0.0
        %10239 = vmatpush1.msra.mxu0 0.0
        %10240 = vmatprep.subr.mxu0 0.0
        %10241 = vmatpush1.msra.mxu0 0.0
        %10242 = vmatprep.subr.mxu0 0.0
        %10243 = vmatpush1.msra.mxu0 0.0
        %10244 = vmatprep.subr.mxu0 0.0
        %10245 = vmatpush1.msra.mxu0 0.0
        %10246 = vmatprep.subr.mxu0 0.0
        %10247 = vmatpush1.msra.mxu0 0.0
        %10248 = vmatprep.subr.mxu0 0.0
        %10249 = vmatpush1.msra.mxu0 0.0
        %10250 = vmatprep.subr.mxu0 0.0
        %10251 = vmatpush1.msra.mxu0 0.0
        %10252 = vmatprep.subr.mxu0 0.0
        %10253 = vmatpush1.msra.mxu0 0.0
        %10254 = vmatprep.subr.mxu0 0.0
        %10255 = vmatpush1.msra.mxu0 0.0
        %10256 = vmatprep.subr.mxu0 0.0
        %10257 = vmatpush1.msra.mxu0 0.0
        %10258 = vmatprep.subr.mxu0 0.0
        %10259 = vmatpush1.msra.mxu0 0.0
        %10260 = vmatprep.subr.mxu0 0.0
        %10261 = vmatpush1.msra.mxu0 0.0
        %10262 = vmatprep.subr.mxu0 0.0
        %10263 = vmatpush1.msra.mxu0 0.0
        %10264 = vmatprep.subr.mxu0 0.0
        %10265 = vmatpush1.msra.mxu0 0.0
        %10266 = vmatprep.subr.mxu0 0.0
        %10267 = vmatpush1.msra.mxu0 0.0
        %10268 = vmatprep.subr.mxu0 0.0
        %10269 = vmatpush1.msra.mxu0 0.0
        %10270 = vmatprep.subr.mxu0 0.0
        %10271 = vmatpush1.msra.mxu0 0.0
        %10272 = vmatprep.subr.mxu0 0.0
        %10273 = vmatpush1.msra.mxu0 0.0
        %10274 = vmatprep.subr.mxu0 0.0
        %10275 = vmatpush1.msra.mxu0 0.0
        %10276 = vmatprep.subr.mxu0 0.0
        %10277 = vmatpush1.msra.mxu0 0.0
        %10278 = vmatprep.subr.mxu0 0.0
        %10279 = vmatpush1.msra.mxu0 0.0
        %10280 = vmatprep.subr.mxu0 0.0
        %10281 = vmatpush1.msra.mxu0 0.0
        %10282 = vmatprep.subr.mxu0 0.0
        %10283 = vmatpush1.msra.mxu0 0.0
        %10284 = vmatprep.subr.mxu0 0.0
        %10285 = vmatpush1.msra.mxu0 0.0
        %10286 = vmatprep.subr.mxu0 0.0
        %10287 = vmatpush1.msra.mxu0 0.0
        %10288 = vmatprep.subr.mxu0 0.0
        %10289 = vmatpush1.msra.mxu0 0.0
        %10290 = vmatprep.subr.mxu0 0.0
        %10291 = vmatpush1.msra.mxu0 0.0
        %10292 = vmatprep.subr.mxu0 0.0
        %10293 = vmatpush1.msra.mxu0 0.0
        %10294 = vmatprep.mubr.f32.mxu0 0.0
        %v10295 = vand.u32 %v10066, 4294901760
        %v10296 = vsub.f32 %v10066, %v10295
        %10297 = vmatmul.mubr.f32.gmra.mrb[0].mxu0 %v10296
        %v10298 = vpop.f32.mrb[0].mxu0
        %v10299 = vadd.f32 %v10223, %v10298
        %v10300 = vpop.f32.mrb[0].mxu0
        %10301 = vdwg.mxu0
        %10302 = vmatprep.subr.mxu0 0.0
        %v10303 = vand.u32 %v10060, 4294901760
        %10304 = vmatpush1.msra.mxu0 %v10303
        %10305 = vmatprep.subr.mxu0 0.0
        %v10306 = vand.u32 %v10062, 4294901760
        %10307 = vmatpush1.msra.mxu0 %v10306
        %10308 = vmatprep.subr.mxu0 0.0
        %10309 = vmatpush1.msra.mxu0 0.0
        %10310 = vmatprep.subr.mxu0 0.0
        %10311 = vmatpush1.msra.mxu0 0.0
        %10312 = vmatprep.subr.mxu0 0.0
        %10313 = vmatpush1.msra.mxu0 0.0
        %10314 = vmatprep.subr.mxu0 0.0
        %10315 = vmatpush1.msra.mxu0 0.0
        %10316 = vmatprep.subr.mxu0 0.0
        %10317 = vmatpush1.msra.mxu0 0.0
        %10318 = vmatprep.subr.mxu0 0.0
        %10319 = vmatpush1.msra.mxu0 0.0
        %10320 = vmatprep.subr.mxu0 0.0
        %10321 = vmatpush1.msra.mxu0 0.0
        %10322 = vmatprep.subr.mxu0 0.0
        %10323 = vmatpush1.msra.mxu0 0.0
        %10324 = vmatprep.subr.mxu0 0.0
        %10325 = vmatpush1.msra.mxu0 0.0
        %10326 = vmatprep.subr.mxu0 0.0
        %10327 = vmatpush1.msra.mxu0 0.0
        %10328 = vmatprep.subr.mxu0 0.0
        %10329 = vmatpush1.msra.mxu0 0.0
        %10330 = vmatprep.subr.mxu0 0.0
        %10331 = vmatpush1.msra.mxu0 0.0
        %10332 = vmatprep.subr.mxu0 0.0
        %10333 = vmatpush1.msra.mxu0 0.0
        %10334 = vmatprep.subr.mxu0 0.0
        %10335 = vmatpush1.msra.mxu0 0.0
        %10336 = vmatprep.subr.mxu0 0.0
        %10337 = vmatpush1.msra.mxu0 0.0
        %10338 = vmatprep.subr.mxu0 0.0
        %10339 = vmatpush1.msra.mxu0 0.0
        %10340 = vmatprep.subr.mxu0 0.0
        %10341 = vmatpush1.msra.mxu0 0.0
        %10342 = vmatprep.subr.mxu0 0.0
        %10343 = vmatpush1.msra.mxu0 0.0
        %10344 = vmatprep.subr.mxu0 0.0
        %10345 = vmatpush1.msra.mxu0 0.0
        %10346 = vmatprep.subr.mxu0 0.0
        %10347 = vmatpush1.msra.mxu0 0.0
        %10348 = vmatprep.subr.mxu0 0.0
        %10349 = vmatpush1.msra.mxu0 0.0
        %10350 = vmatprep.subr.mxu0 0.0
        %10351 = vmatpush1.msra.mxu0 0.0
        %10352 = vmatprep.subr.mxu0 0.0
        %10353 = vmatpush1.msra.mxu0 0.0
        %10354 = vmatprep.subr.mxu0 0.0
        %10355 = vmatpush1.msra.mxu0 0.0
        %10356 = vmatprep.subr.mxu0 0.0
        %10357 = vmatpush1.msra.mxu0 0.0
        %10358 = vmatprep.subr.mxu0 0.0
        %10359 = vmatpush1.msra.mxu0 0.0
        %10360 = vmatprep.subr.mxu0 0.0
        %10361 = vmatpush1.msra.mxu0 0.0
        %10362 = vmatprep.subr.mxu0 0.0
        %10363 = vmatpush1.msra.mxu0 0.0
        %10364 = vmatprep.subr.mxu0 0.0
        %10365 = vmatpush1.msra.mxu0 0.0
        %10366 = vmatprep.subr.mxu0 0.0
        %10367 = vmatpush1.msra.mxu0 0.0
        %10368 = vmatprep.mubr.f32.mxu0 0.0
        %v10369 = vand.u32 %v10066, 4294901760
        %v10370 = vsub.f32 %v10066, %v10369
        %v10371 = vand.u32 %v10370, 4294901760
        %10372 = vmatmul.mubr.f32.gmra.mrb[0].mxu0 %v10371
        %v10373 = vpop.f32.mrb[0].mxu0
        %v10374 = vadd.f32 %v10299, %v10373
        %v10375 = vpop.f32.mrb[0].mxu0
        %10376 = vdwg.mxu0
        %10377 = vmatprep.subr.mxu0 0.0
        %v10378 = vand.u32 %v10060, 4294901760
        %v10379 = vsub.f32 %v10060, %v10378
        %v10380 = vand.u32 %v10379, 4294901760
        %10381 = vmatpush1.msra.mxu0 %v10380
        %10382 = vmatprep.subr.mxu0 0.0
        %v10383 = vand.u32 %v10062, 4294901760
        %v10384 = vsub.f32 %v10062, %v10383
        %v10385 = vand.u32 %v10384, 4294901760
        %10386 = vmatpush1.msra.mxu0 %v10385
        %10387 = vmatprep.subr.mxu0 0.0
        %10388 = vmatpush1.msra.mxu0 0.0
        %10389 = vmatprep.subr.mxu0 0.0
        %10390 = vmatpush1.msra.mxu0 0.0
        %10391 = vmatprep.subr.mxu0 0.0
        %10392 = vmatpush1.msra.mxu0 0.0
        %10393 = vmatprep.subr.mxu0 0.0
        %10394 = vmatpush1.msra.mxu0 0.0
        %10395 = vmatprep.subr.mxu0 0.0
        %10396 = vmatpush1.msra.mxu0 0.0
        %10397 = vmatprep.subr.mxu0 0.0
        %10398 = vmatpush1.msra.mxu0 0.0
        %10399 = vmatprep.subr.mxu0 0.0
        %10400 = vmatpush1.msra.mxu0 0.0
        %10401 = vmatprep.subr.mxu0 0.0
        %10402 = vmatpush1.msra.mxu0 0.0
        %10403 = vmatprep.subr.mxu0 0.0
        %10404 = vmatpush1.msra.mxu0 0.0
        %10405 = vmatprep.subr.mxu0 0.0
        %10406 = vmatpush1.msra.mxu0 0.0
        %10407 = vmatprep.subr.mxu0 0.0
        %10408 = vmatpush1.msra.mxu0 0.0
        %10409 = vmatprep.subr.mxu0 0.0
        %10410 = vmatpush1.msra.mxu0 0.0
        %10411 = vmatprep.subr.mxu0 0.0
        %10412 = vmatpush1.msra.mxu0 0.0
        %10413 = vmatprep.subr.mxu0 0.0
        %10414 = vmatpush1.msra.mxu0 0.0
        %10415 = vmatprep.subr.mxu0 0.0
        %10416 = vmatpush1.msra.mxu0 0.0
        %10417 = vmatprep.subr.mxu0 0.0
        %10418 = vmatpush1.msra.mxu0 0.0
        %10419 = vmatprep.subr.mxu0 0.0
        %10420 = vmatpush1.msra.mxu0 0.0
        %10421 = vmatprep.subr.mxu0 0.0
        %10422 = vmatpush1.msra.mxu0 0.0
        %10423 = vmatprep.subr.mxu0 0.0
        %10424 = vmatpush1.msra.mxu0 0.0
        %10425 = vmatprep.subr.mxu0 0.0
        %10426 = vmatpush1.msra.mxu0 0.0
        %10427 = vmatprep.subr.mxu0 0.0
        %10428 = vmatpush1.msra.mxu0 0.0
        %10429 = vmatprep.subr.mxu0 0.0
        %10430 = vmatpush1.msra.mxu0 0.0
        %10431 = vmatprep.subr.mxu0 0.0
        %10432 = vmatpush1.msra.mxu0 0.0
        %10433 = vmatprep.subr.mxu0 0.0
        %10434 = vmatpush1.msra.mxu0 0.0
        %10435 = vmatprep.subr.mxu0 0.0
        %10436 = vmatpush1.msra.mxu0 0.0
        %10437 = vmatprep.subr.mxu0 0.0
        %10438 = vmatpush1.msra.mxu0 0.0
        %10439 = vmatprep.subr.mxu0 0.0
        %10440 = vmatpush1.msra.mxu0 0.0
        %10441 = vmatprep.subr.mxu0 0.0
        %10442 = vmatpush1.msra.mxu0 0.0
        %10443 = vmatprep.subr.mxu0 0.0
        %10444 = vmatpush1.msra.mxu0 0.0
        %10445 = vmatprep.subr.mxu0 0.0
        %10446 = vmatpush1.msra.mxu0 0.0
        %10447 = vmatprep.mubr.f32.mxu0 0.0
        %v10448 = vand.u32 %v10066, 4294901760
        %10449 = vmatmul.mubr.f32.gmra.mrb[0].mxu0 %v10448
        %v10450 = vpop.f32.mrb[0].mxu0
        %v10451 = vadd.f32 %v10374, %v10450
        %v10452 = vpop.f32.mrb[0].mxu0
        %10453 = vdwg.mxu0
        %10454 = vmatprep.subr.mxu0 0.0
        %v10455 = vand.u32 %v10060, 4294901760
        %10456 = vmatpush1.msra.mxu0 %v10455
        %10457 = vmatprep.subr.mxu0 0.0
        %v10458 = vand.u32 %v10062, 4294901760
        %10459 = vmatpush1.msra.mxu0 %v10458
        %10460 = vmatprep.subr.mxu0 0.0
        %10461 = vmatpush1.msra.mxu0 0.0
        %10462 = vmatprep.subr.mxu0 0.0
        %10463 = vmatpush1.msra.mxu0 0.0
        %10464 = vmatprep.subr.mxu0 0.0
        %10465 = vmatpush1.msra.mxu0 0.0
        %10466 = vmatprep.subr.mxu0 0.0
        %10467 = vmatpush1.msra.mxu0 0.0
        %10468 = vmatprep.subr.mxu0 0.0
        %10469 = vmatpush1.msra.mxu0 0.0
        %10470 = vmatprep.subr.mxu0 0.0
        %10471 = vmatpush1.msra.mxu0 0.0
        %10472 = vmatprep.subr.mxu0 0.0
        %10473 = vmatpush1.msra.mxu0 0.0
        %10474 = vmatprep.subr.mxu0 0.0
        %10475 = vmatpush1.msra.mxu0 0.0
        %10476 = vmatprep.subr.mxu0 0.0
        %10477 = vmatpush1.msra.mxu0 0.0
        %10478 = vmatprep.subr.mxu0 0.0
        %10479 = vmatpush1.msra.mxu0 0.0
        %10480 = vmatprep.subr.mxu0 0.0
        %10481 = vmatpush1.msra.mxu0 0.0
        %10482 = vmatprep.subr.mxu0 0.0
        %10483 = vmatpush1.msra.mxu0 0.0
        %10484 = vmatprep.subr.mxu0 0.0
        %10485 = vmatpush1.msra.mxu0 0.0
        %10486 = vmatprep.subr.mxu0 0.0
        %10487 = vmatpush1.msra.mxu0 0.0
        %10488 = vmatprep.subr.mxu0 0.0
        %10489 = vmatpush1.msra.mxu0 0.0
        %10490 = vmatprep.subr.mxu0 0.0
        %10491 = vmatpush1.msra.mxu0 0.0
        %10492 = vmatprep.subr.mxu0 0.0
        %10493 = vmatpush1.msra.mxu0 0.0
        %10494 = vmatprep.subr.mxu0 0.0
        %10495 = vmatpush1.msra.mxu0 0.0
        %10496 = vmatprep.subr.mxu0 0.0
        %10497 = vmatpush1.msra.mxu0 0.0
        %10498 = vmatprep.subr.mxu0 0.0
        %10499 = vmatpush1.msra.mxu0 0.0
        %10500 = vmatprep.subr.mxu0 0.0
        %10501 = vmatpush1.msra.mxu0 0.0
        %10502 = vmatprep.subr.mxu0 0.0
        %10503 = vmatpush1.msra.mxu0 0.0
        %10504 = vmatprep.subr.mxu0 0.0
        %10505 = vmatpush1.msra.mxu0 0.0
        %10506 = vmatprep.subr.mxu0 0.0
        %10507 = vmatpush1.msra.mxu0 0.0
        %10508 = vmatprep.subr.mxu0 0.0
        %10509 = vmatpush1.msra.mxu0 0.0
        %10510 = vmatprep.subr.mxu0 0.0
        %10511 = vmatpush1.msra.mxu0 0.0
        %10512 = vmatprep.subr.mxu0 0.0
        %10513 = vmatpush1.msra.mxu0 0.0
        %10514 = vmatprep.subr.mxu0 0.0
        %10515 = vmatpush1.msra.mxu0 0.0
        %10516 = vmatprep.subr.mxu0 0.0
        %10517 = vmatpush1.msra.mxu0 0.0
        %10518 = vmatprep.subr.mxu0 0.0
        %10519 = vmatpush1.msra.mxu0 0.0
        %10520 = vmatprep.mubr.f32.mxu0 0.0
        %v10521 = vand.u32 %v10066, 4294901760
        %10522 = vmatmul.mubr.f32.gmra.mrb[0].mxu0 %v10521
        %v10523 = vpop.f32.mrb[0].mxu0
        %v10524 = vadd.f32 %v10451, %v10523
        %v10525 = vpop.f32.mrb[0].mxu0
        %10526 = vdwg.mxu0
        %v10527 = vadd.f32 %v10054, %v10524
        %v10528 = vld [vmem:[%s280] sm:$0xff]
        %10530 = vset.pattern.permute.xlu0 1
        %10531 = vperm.xlu0 %10530, %v10528
        %v10532 = vpop.permute.xlu0 %10531
        %v10534 = vadd.f32 %v10527, %v10532
        %vm10535 = vcmask 15360
        %10536 = vst.msk [vmem:[%s287] sm:$0xff] %vm10535, %v10534
        %s10537 = sand.u32 %s123, 1
        %s10538 = scalar_lea.sflag [#allocation4], %s10537
        %s10539 = sand.u32 %s123, 1
        %s10540 = smul.addr %s10539, 24
        %s10541 = scalar_lea.vmem [#allocation7], %s10540
        %p10542 = scmp.lt.s32.totalorder %s27, 1
        %s10543 = scalar_select %p10542, %s27, 1
        %p10544 = scmp.lt.s32.totalorder %s28, 0
        %s10545 = scalar_select %p10544, %s28, 0
        %s10546 = sadd.s32 %s10545, %s10543
        %s10547 = smul.addr %s10546, 8
        %s10548 = scalar_lea.vmem %s4, %s10547
        // Predicated region
        $region41: #{tpu_custom_call.1} parent=31 // pred_check
          %p10549 = pneg %p133
        $region42: #{tpu_custom_call.1} parent=31 // pred_check_branch
          %10551 = sbr.rel (%p10549) target = $region44
        $region43: #{tpu_custom_call.1} parent=31 // pred_region
          %s10553 = ssub.s32 384, 384
          %10554 = vsyncadd %s10538, %s10553
          %s10555 = smul.addr %s28, 3
          %s10556 = smul.addr %s27, 3
          %s10557 = sadd.s32 %s10555, %s10556
          %s10558 = smul.addr %s10557, 128
          %s10559 = scalar_lea.hbm %s3, %s10558
          %s10561 = sshll.u32 %s10541, 4
          %s10562 = int_to_ptr.vmem [resolvable:$true] %s10561
          %10564 = dma.vmem_to_hbm [thread:$0]  %s10562, 384, %s10559, %s10538
        $region44: #{tpu_custom_call.1} parent=31 // pred_fallthru
          _
        // Predicated region
        $region45: #{tpu_custom_call.1} parent=31 // pred_check
          %p10565 = pneg %p161
        $region46: #{tpu_custom_call.1} parent=31 // pred_check_branch
          %10567 = sbr.rel (%p10565) target = $region48
        $region47: #{tpu_custom_call.1} parent=31 // pred_region
          _
        $region48: #{tpu_custom_call.1} parent=31 // pred_fallthru
          _
      $region32: #{tpu_custom_call.1} parent=5 // pred_fallthru
        _
      %p10568 = scmp.le.s32.totalorder 2, %s18
      // Predicated region
      $region49: #{tpu_custom_call.1} parent=5 // pred_check
        %p10569 = pneg %p10568
      $region50: #{tpu_custom_call.1} parent=5 // pred_check_branch
        %10571 = sbr.rel (%p10569) target = $region52
      $region51: #{tpu_custom_call.1} parent=5 // pred_region
        %s10572 = ssub.s32 %s18, 2
        // Predicated region
        $region53: #{tpu_custom_call.1} parent=51 // pred_check
          %p10573 = pneg %p139
        $region54: #{tpu_custom_call.1} parent=51 // pred_check_branch
          %10575 = sbr.rel (%p10573) target = $region56
        $region55: #{tpu_custom_call.1} parent=51 // pred_region
          %s10576 = sand.u32 %s124, 1
          %s10577 = scalar_lea.sflag [#allocation4], %s10576
          %s10578 = sand.u32 %s124, 1
          %s10579 = smul.addr %s10578, 24
          %s10580 = scalar_lea.vmem [#allocation7], %s10579
          %10581 = dma.done %s10577, 384
        $region56: #{tpu_custom_call.1} parent=51 // pred_fallthru
          _
        // Predicated region
        $region57: #{tpu_custom_call.1} parent=51 // pred_check
          %p10582 = pneg %p167
        $region58: #{tpu_custom_call.1} parent=51 // pred_check_branch
          %10584 = sbr.rel (%p10582) target = $region60
        $region59: #{tpu_custom_call.1} parent=51 // pred_region
          %p10585 = scmp.lt.s32.totalorder %s29, 1
          %s10586 = scalar_select %p10585, %s29, 1
          %p10587 = scmp.lt.s32.totalorder %s30, 0
          %s10588 = scalar_select %p10587, %s30, 0
          %s10589 = sadd.s32 %s10588, %s10586
          %s10590 = smul.addr %s10589, 8
          %s10591 = scalar_lea.vmem %s4, %s10590
        $region60: #{tpu_custom_call.1} parent=51 // pred_fallthru
          _
      $region52: #{tpu_custom_call.1} parent=5 // pred_fallthru
        _
    $region6: #{tpu_custom_call.1} parent=1 // loop_footer
      %s22 = sadd.s32 1, %s18
    $region7: #{tpu_custom_call.1} parent=1 // loop_footer_branch
      %17 = sbr.rel target = $region3
    $region8: #{tpu_custom_call.1} parent=1 // loop_exit
      _
    %10592 = vsyncpa [#allocation3], 1
    %s10593 = scalar_lea.sflag [#allocation3], 1
    %10594 = vsyncpa %s10593, 1
    %10595 = vsyncpa [#allocation6], 1
    %10596 = vsyncpa [#allocation4], 1
    %s10597 = scalar_lea.sflag [#allocation4], 1
    %10598 = vsyncpa %s10597, 1

</llo_original>
